<compile_context>
chip_gen: v7x
topology: tpu7x:2x2x1
jax: 0.10.0
libtpu: 0.0.40
codegen_flags: <defaults>
</compile_context>

<pallas_src>
import functools

import jax
import jax.numpy as jnp
from jax import lax
from jax.experimental import pallas as pl
from jax.experimental.pallas import tpu as pltpu

EPS = 1e-5
LANE = 128
MB = 1024 * 1024


def _round_up(x, m):
    return (x + m - 1) // m * m


def _divisor_tile(n, cap):
    """Largest divisor of n that is <= cap (>= 1)."""
    cap = max(1, min(n, cap))
    for t in range(cap, 0, -1):
        if n % t == 0:
            return t
    return 1


def _m_tile(m, cap=2048):
    """Largest multiple-of-128 divisor of m that is <= cap, else m (full extent)."""
    t = (min(cap, m) // LANE) * LANE
    while t >= LANE:
        if m % t == 0:
            return t
        t -= LANE
    return m


def _vmem_limit_bytes(per_step_bytes):
    """Scoped-VMEM budget derived from the actual per-step working set."""
    phys = 64 * MB
    try:
        phys = int(pltpu.get_tpu_info().vmem_capacity_bytes)
    except Exception:
        pass
    if phys <= 0:
        phys = 64 * MB
    cap = (phys * 3) // 4                      # <= 48 MiB on v7x, <= 96 MiB on v5e/v6e
    want = max(48 * MB, 4 * int(per_step_bytes))
    return int(min(cap, want))


# ----------------------------- Pallas kernels ------------------------------ #

def conv1_conv3_kernel(pm_ref, ph_ref, w1_ref, w3_ref,
                       y1_ref, y3_ref, st1_ref, st3_ref, *, th, wo):
    """Fused conv1 (3x3 / stride 2) + conv3 (1x1 / stride 2) for one row tile.

    pm_ref: (4, th, Wh, cin_p) main stride-2 phase rows of the padded image.
    ph_ref: (4, 1,  Wh, cin_p) one extra (halo) phase row below the tile.
    Writes pre-BN outputs (th, Wo, nt) and per-tile per-channel [sum; sumsq].
    """
    cin = pm_ref.shape[-1]
    nt = w1_ref.shape[-1]
    m = th * wo

    # Only phases 0/1 (row-parity 0) are read with a +1 row offset (di == 2).
    p0 = jnp.concatenate([pm_ref[0], ph_ref[0]], axis=0)   # (th+1, Wh, cin)
    p1 = jnp.concatenate([pm_ref[1], ph_ref[1]], axis=0)
    p2 = pm_ref[2]
    p3 = pm_ref[3]
    planes = (p0, p1, p2, p3)

    def tap(di, dj):
        p = planes[(di % 2) * 2 + (dj % 2)]
        rr, cc = di // 2, dj // 2
        return p[rr:rr + th, cc:cc + wo, :].reshape(m, cin)

    acc1 = jnp.zeros((m, nt), jnp.float32)
    for di in range(3):
        for dj in range(3):
            acc1 = acc1 + jnp.dot(tap(di, dj), w1_ref[di * 3 + dj],
                                  preferred_element_type=jnp.float32)

    # conv3 (1x1, stride 2, no pad) reads exactly the (odd, odd) phase.
    acc3 = jnp.dot(tap(1, 1), w3_ref[...], preferred_element_type=jnp.float32)

    # Per-channel BN partials via MXU ones-matmuls (keeps the VPU/XLU free).
    ones = jnp.ones((1, m), jnp.float32)
    st1_ref[...] = jnp.concatenate(
        [jnp.dot(ones, acc1, preferred_element_type=jnp.float32),
         jnp.dot(ones, acc1 * acc1, preferred_element_type=jnp.float32)], axis=0)
    st3_ref[...] = jnp.concatenate(
        [jnp.dot(ones, acc3, preferred_element_type=jnp.float32),
         jnp.dot(ones, acc3 * acc3, preferred_element_type=jnp.float32)], axis=0)

    y1_ref[...] = acc1.reshape(th, wo, nt).astype(y1_ref.dtype)
    y3_ref[...] = acc3.reshape(th, wo, nt).astype(y3_ref.dtype)


def conv2_kernel(ym_ref, yt_ref, yb_ref, w2_ref, bias_ref,
                 y2_ref, st2_ref, *, th, wo):
    """conv2 (3x3 / stride 1) on raw y1 with bn1 folded into weights + bias field.

    ym_ref: (th, Wo, C)  main y1 rows of this tile.
    yt_ref: (1,  Wo, C)  row above (masked to zero for the first tile).
    yb_ref: (1,  Wo, C)  row below (masked to zero for the last tile).
    bias_ref: (th, Wo, nt) f32 — conv2(sh1 * interior_mask) precomputed in XLA.
    """
    c = ym_ref.shape[-1]
    nt = w2_ref.shape[-1]
    m = th * wo
    i = pl.program_id(2)
    nrt = pl.num_programs(2)

    top_v = yt_ref[...]
    bot_v = yb_ref[...]
    top = jnp.where(i > 0, top_v, jnp.zeros_like(top_v))
    bot = jnp.where(i < nrt - 1, bot_v, jnp.zeros_like(bot_v))

    rows = jnp.concatenate([top, ym_ref[...], bot], axis=0)       # (th+2, Wo, C)
    zc = jnp.zeros((th + 2, 1, c), rows.dtype)
    xt = jnp.concatenate([zc, rows, zc], axis=1)                  # (th+2, Wo+2, C)

    acc = bias_ref[...].reshape(m, nt)                            # f32 init = bias field
    for di in range(3):
        for dj in range(3):
            patch = xt[di:di + th, dj:dj + wo, :].reshape(m, c)
            acc = acc + jnp.dot(patch, w2_ref[di * 3 + dj],
                                preferred_element_type=jnp.float32)

    ones = jnp.ones((1, m), jnp.float32)
    st2_ref[...] = jnp.concatenate(
        [jnp.dot(ones, acc, preferred_element_type=jnp.float32),
         jnp.dot(ones, acc * acc, preferred_element_type=jnp.float32)], axis=0)
    y2_ref[...] = acc.reshape(th, wo, nt).astype(y2_ref.dtype)


def bn_add_relu_nchw_kernel(y2_ref, y3_ref, sc2_ref, sh2_ref, sc3_ref, sh3_ref,
                            o_ref):
    """Fused bn2 + bn3 + residual add + relu; writes the tile in NCHW layout."""
    o = (y2_ref[...].astype(jnp.float32) * sc2_ref[...] + sh2_ref[...]
         + y3_ref[...].astype(jnp.float32) * sc3_ref[...] + sh3_ref[...])
    o = jnp.maximum(o, 0.0)
    o_ref[...] = o.T.astype(o_ref.dtype)      # (nt, tm): channel-major block


# --------------------------- pallas_call wrappers --------------------------- #

def conv1_conv3_pallas(phase, w1m, w3m, ho, wo, th, nt, store_dtype):
    B = phase.shape[0]
    wh, cin_p = phase.shape[3], phase.shape[4]
    cout_p = w1m.shape[-1]
    nh, nn = ho // th, cout_p // nt
    m = th * wo
    ci = jnp.dtype(phase.dtype).itemsize
    si = jnp.dtype(store_dtype).itemsize

    in_bytes = (4 * (th + 1) * wh * cin_p + 10 * cin_p * nt) * ci
    out_bytes = 2 * m * nt * si + 4 * nt * 4
    scratch = 2 * m * nt * 4 + 4 * (th + 1) * wh * cin_p * ci + 2 * m * cin_p * ci
    est = 2 * (in_bytes + out_bytes) + scratch

    flops = 2 * B * ho * wo * cin_p * cout_p * 10
    bytes_accessed = int(phase.size * ci + (w1m.size + w3m.size) * ci
                         + 2 * B * ho * wo * cout_p * si + 4 * B * nh * cout_p * 4)

    return pl.pallas_call(
        functools.partial(conv1_conv3_kernel, th=th, wo=wo),
        out_shape=(jax.ShapeDtypeStruct((B, ho, wo, cout_p), store_dtype),
                   jax.ShapeDtypeStruct((B, ho, wo, cout_p), store_dtype),
                   jax.ShapeDtypeStruct((B, nh, 2, cout_p), jnp.float32),
                   jax.ShapeDtypeStruct((B, nh, 2, cout_p), jnp.float32)),
        grid=(nn, B, nh),
        in_specs=[
            pl.BlockSpec((None, 4, th, wh, cin_p), lambda n, b, i: (b, 0, i, 0, 0)),
            pl.BlockSpec((None, 4, 1, wh, cin_p),
                         lambda n, b, i: (b, 0, i * th + th, 0, 0)),
            pl.BlockSpec((9, cin_p, nt), lambda n, b, i: (0, 0, n)),
            pl.BlockSpec((cin_p, nt), lambda n, b, i: (0, n)),
        ],
        out_specs=(
            pl.BlockSpec((None, th, wo, nt), lambda n, b, i: (b, i, 0, n)),
            pl.BlockSpec((None, th, wo, nt), lambda n, b, i: (b, i, 0, n)),
            pl.BlockSpec((None, None, 2, nt), lambda n, b, i: (b, i, 0, n)),
            pl.BlockSpec((None, None, 2, nt), lambda n, b, i: (b, i, 0, n)),
        ),
        compiler_params=pltpu.CompilerParams(
            dimension_semantics=("parallel", "parallel", "parallel"),
            vmem_limit_bytes=_vmem_limit_bytes(est)),
        cost_estimate=pl.CostEstimate(flops=flops, transcendentals=0,
                                      bytes_accessed=bytes_accessed),
    )(phase, phase, w1m, w3m)


def conv2_pallas(y1, w2s, bias, ho, wo, th, nt):
    B = y1.shape[0]
    c = y1.shape[-1]
    cout_p = w2s.shape[-1]
    nh, nn = ho // th, cout_p // nt
    m = th * wo
    cdt = y1.dtype
    ci = jnp.dtype(cdt).itemsize

    in_bytes = ((th + 2) * wo * c + 9 * c * nt) * ci + th * wo * nt * 4
    out_bytes = m * nt * ci + 2 * nt * 4
    scratch = m * nt * 4 + (th + 2) * (wo + 2) * c * ci + m * c * ci
    est = 2 * (in_bytes + out_bytes) + scratch

    flops = 2 * B * ho * wo * c * cout_p * 9
    bytes_accessed = int(y1.size * ci * nn + w2s.size * ci + bias.size * 4 * B
                         + B * ho * wo * cout_p * ci + 2 * B * nh * cout_p * 4)

    return pl.pallas_call(
        functools.partial(conv2_kernel, th=th, wo=wo),
        out_shape=(jax.ShapeDtypeStruct((B, ho, wo, cout_p), cdt),
                   jax.ShapeDtypeStruct((B, nh, 2, cout_p), jnp.float32)),
        grid=(nn, B, nh),
        in_specs=[
            pl.BlockSpec((None, th, wo, c), lambda n, b, i: (b, i, 0, 0)),
            pl.BlockSpec((None, 1, wo, c),
                         lambda n, b, i: (b, jnp.maximum(i * th - 1, 0), 0, 0)),
            pl.BlockSpec((None, 1, wo, c),
                         lambda n, b, i: (b, jnp.minimum(i * th + th, ho - 1), 0, 0)),
            pl.BlockSpec((9, c, nt), lambda n, b, i: (0, 0, n)),
            pl.BlockSpec((th, wo, nt), lambda n, b, i: (i, 0, n)),
        ],
        out_specs=(
            pl.BlockSpec((None, th, wo, nt), lambda n, b, i: (b, i, 0, n)),
            pl.BlockSpec((None, None, 2, nt), lambda n, b, i: (b, i, 0, n)),
        ),
        compiler_params=pltpu.CompilerParams(
            dimension_semantics=("parallel", "parallel", "parallel"),
            vmem_limit_bytes=_vmem_limit_bytes(est)),
        cost_estimate=pl.CostEstimate(flops=flops, transcendentals=0,
                                      bytes_accessed=bytes_accessed),
    )(y1, y1, y1, w2s, bias)


def bn_add_relu_nchw_pallas(y2, y3, sc2, sh2, sc3, sh3):
    B, M, cout_p = y2.shape
    nt = 512 if cout_p % 512 == 0 else (256 if cout_p % 256 == 0 else 128)
    nt = min(nt, cout_p)
    tm = _m_tile(M, 2048)
    nn, nm = cout_p // nt, M // tm
    it = jnp.dtype(y2.dtype).itemsize

    est = 2 * (2 * tm * nt * it + 4 * nt * 4 + nt * tm * 4) + tm * nt * 4

    ytile = pl.BlockSpec((None, tm, nt), lambda b, n, j: (b, j, n))
    vec = pl.BlockSpec((1, nt), lambda b, n, j: (0, n))
    return pl.pallas_call(
        bn_add_relu_nchw_kernel,
        out_shape=jax.ShapeDtypeStruct((B, cout_p, M), jnp.float32),
        grid=(B, nn, nm),
        in_specs=[ytile, ytile, vec, vec, vec, vec],
        out_specs=pl.BlockSpec((None, nt, tm), lambda b, n, j: (b, n, j)),
        compiler_params=pltpu.CompilerParams(
            dimension_semantics=("parallel", "parallel", "parallel"),
            vmem_limit_bytes=_vmem_limit_bytes(est)),
    )(y2, y3, sc2, sh2, sc3, sh3)


# ------------------------------- JAX glue ---------------------------------- #

def _bn_scale_shift(stats, gamma, beta, count):
    """Fold per-tile batch-stat partials + affine params into (scale, shift)."""
    c = stats.shape[-1]
    s = jnp.sum(stats.reshape(-1, 2, c), axis=0)           # (2, C) f32
    mean = s[0:1] / count
    var = jnp.maximum(s[1:2] / count - mean * mean, 0.0)    # guard cancellation
    inv = lax.rsqrt(var + EPS)
    scale = gamma * inv
    shift = beta - mean * scale
    return scale, shift


def basic_down_block(x, params, kernel_size=(3, 1), stride=(2, 1),
                     compute_dtype=jnp.bfloat16):
    """x: (B, Cin, H, W) float32 NCHW.  Returns (B, Cout, H//2, W//2) float32."""
    assert tuple(kernel_size) == (3, 1) and tuple(stride) == (2, 1)
    B, Cin, H, W = x.shape
    assert H % 2 == 0 and W % 2 == 0
    Cout = params["w1"].shape[0]
    Ho, Wo = H // 2, W // 2
    M = Ho * Wo
    cin_p = _round_up(Cin, LANE)
    cout_p = _round_up(Cout, LANE)
    nt = 256 if cout_p % 256 == 0 else 128        # wider MXU columns on v6e/v7x
    th = _divisor_tile(Ho, max(1, 2048 // Wo))    # output-row tile (VMEM-bounded)
    f32 = jnp.float32

    # ---- layout prep (cheap XLA glue; all heavy math runs in Pallas) ----
    xh = jnp.transpose(x, (0, 2, 3, 1)).astype(f32)                  # NHWC
    xh = jnp.pad(xh, ((0, 0), (0, 0), (0, 0), (0, cin_p - Cin)))     # lane pad
    xp = jnp.pad(xh, ((0, 0), (1, 1), (1, 1), (0, 0)))               # spatial pad 1
    Hh, Wh = Ho + 1, Wo + 1
    # stride-2 phase split: phase[b, 2p+q, a, c] = xp[b, 2a+p, 2c+q]
    phase = xp.reshape(B, Hh, 2, Wh, 2, cin_p)
    phase = jnp.transpose(phase, (0, 2, 4, 1, 3, 5)).reshape(B, 4, Hh, Wh, cin_p)
    phase = phase.astype(compute_dtype)

    def conv_w(w, ci_pad, co_pad):   # OIHW -> (kh*kw, Cin_p, Cout_p) f32
        co, ci, kh, kw = w.shape
        wm = jnp.transpose(w, (2, 3, 1, 0)).astype(f32)
        wm = jnp.pad(wm, ((0, 0), (0, 0), (0, ci_pad - ci), (0, co_pad - co)))
        return wm.reshape(kh * kw, ci_pad, co_pad)

    w1f = conv_w(params["w1"], cin_p, cout_p)          # (9, cin_p, cout_p)
    w2f = conv_w(params["w2"], cout_p, cout_p)         # (9, cout_p, cout_p)
    w3f = conv_w(params["w3"], cin_p, cout_p)[0]       # (cin_p, cout_p)

    def bn_vec(v):
        return jnp.pad(v.astype(f32).reshape(1, -1), ((0, 0), (0, cout_p - Cout)))

    g1, b1 = bn_vec(params["g1"]), bn_vec(params["b1"])
    g2, b2 = bn_vec(params["g2"]), bn_vec(params["b2"])
    g3, b3 = bn_vec(params["g3"]), bn_vec(params["b3"])
    count = B * M

    # pass 1: fused conv1 + conv3 (row-tiled), bf16 pre-BN outputs + f32 stats
    y1, y3, st1, st3 = conv1_conv3_pallas(
        phase, w1f.astype(compute_dtype), w3f.astype(compute_dtype),
        Ho, Wo, th, nt, compute_dtype)

    # bn1 folded into conv2: scale w2 by sc1; sh1 through the zero padding becomes
    # a small (Ho, Wo, C) bias field (per-tap validity x sh1 @ w2[tap]).
    sc1, sh1 = _bn_scale_shift(st1, g1, b1, count)
    w2s = (w2f * sc1.reshape(1, cout_p, 1)).astype(compute_dtype)
    t9 = jnp.einsum('c,tcn->tn', sh1[0], w2f).reshape(3, 3, cout_p)
    r_idx = jnp.arange(Ho)[:, None] + jnp.arange(3)[None, :]
    c_idx = jnp.arange(Wo)[:, None] + jnp.arange(3)[None, :]
    vr = ((r_idx >= 1) & (r_idx <= Ho)).astype(f32)                 # (Ho, 3)
    vc = ((c_idx >= 1) & (c_idx <= Wo)).astype(f32)                 # (Wo, 3)
    bias = jnp.einsum('pi,qj,ijc->pqc', vr, vc, t9)                 # (Ho, Wo, C) f32

    # pass 2: conv2 on raw y1 (halo rows via BlockSpec, zero-pad built in VMEM)
    y2, st2 = conv2_pallas(y1, w2s, bias, Ho, Wo, th, nt)

    # pass 3: fused bn2 + bn3 + residual add + relu, written directly in NCHW
    sc2, sh2 = _bn_scale_shift(st2, g2, b2, count)
    sc3, sh3 = _bn_scale_shift(st3, g3, b3, count)
    out = bn_add_relu_nchw_pallas(y2.reshape(B, M, cout_p),
                                  y3.reshape(B, M, cout_p),
                                  sc2, sh2, sc3, sh3)               # (B, cout_p, M)
    return out[:, :Cout, :].reshape(B, Cout, Ho, Wo)


# ----------------------------- reference (JAX) ------------------------------ #

def _ref_conv(x, w, stride, pad):
    return lax.conv_general_dilated(
        x, w, (stride, stride), [(pad, pad), (pad, pad)],
        dimension_numbers=("NCHW", "OIHW", "NCHW"),
        precision=lax.Precision.HIGHEST)


def _ref_bn(y, gamma, beta):
    mean = jnp.mean(y, axis=(0, 2, 3), keepdims=True)
    var = jnp.mean((y - mean) ** 2, axis=(0, 2, 3), keepdims=True)
    return ((y - mean) * lax.rsqrt(var + EPS)
            * gamma.reshape(1, -1, 1, 1) + beta.reshape(1, -1, 1, 1))


def basic_down_block_ref(x, params):
    out = _ref_bn(_ref_conv(x, params["w1"], 2, 1), params["g1"], params["b1"])
    out = _ref_bn(_ref_conv(out, params["w2"], 1, 1), params["g2"], params["b2"])
    out1 = _ref_bn(_ref_conv(x, params["w3"], 2, 0), params["g3"], params["b3"])
    return jax.nn.relu(out1 + out)


# ---------------------------------- main ------------------------------------ #

if __name__ == "__main__":
    B, Cin, Cout, H, W = 2, 4, 8, 16, 16
    kernel_size, stride = (3, 1), (2, 1)

    key = jax.random.PRNGKey(0)
    ks = jax.random.split(key, 10)
    params = {
        "w1": jax.random.normal(ks[0], (Cout, Cin, 3, 3), jnp.float32) * 0.1,
        "w2": jax.random.normal(ks[1], (Cout, Cout, 3, 3), jnp.float32) * 0.1,
        "w3": jax.random.normal(ks[2], (Cout, Cin, 1, 1), jnp.float32) * 0.1,
        "g1": 1.0 + 0.1 * jax.random.normal(ks[3], (Cout,), jnp.float32),
        "b1": 0.1 * jax.random.normal(ks[4], (Cout,), jnp.float32),
        "g2": 1.0 + 0.1 * jax.random.normal(ks[5], (Cout,), jnp.float32),
        "b2": 0.1 * jax.random.normal(ks[6], (Cout,), jnp.float32),
        "g3": 1.0 + 0.1 * jax.random.normal(ks[7], (Cout,), jnp.float32),
        "b3": 0.1 * jax.random.normal(ks[8], (Cout,), jnp.float32),
    }
    x = jax.random.normal(ks[9], (B, Cin, H, W), jnp.float32)

    ref = jax.block_until_ready(basic_down_block_ref(x, params))

    # f32 MXU path: tight check against the XLA reference.
    fwd32 = jax.jit(functools.partial(basic_down_block, kernel_size=kernel_size,
                                      stride=stride, compute_dtype=jnp.float32))
    out32 = jax.block_until_ready(fwd32(x, params))
    assert out32.shape == (B, Cout, H // 2, W // 2), out32.shape
    err32 = float(jnp.max(jnp.abs(out32 - ref)))
    assert err32 < 5e-3, f"f32 path max |err| = {err32}"

    # bf16 MXU path (default performance config): looser check.
    fwd16 = jax.jit(functools.partial(basic_down_block, kernel_size=kernel_size,
                                      stride=stride, compute_dtype=jnp.bfloat16))
    out16 = jax.block_until_ready(fwd16(x, params))
    assert out16.shape == (B, Cout, H // 2, W // 2), out16.shape
    err16_max = float(jnp.max(jnp.abs(out16 - ref)))
    err16_mean = float(jnp.mean(jnp.abs(out16 - ref)))
    assert err16_max < 2e-1 and err16_mean < 4e-2, (err16_max, err16_mean)

    print("KERNEL_OK")
</pallas_src>

<mosaic_0001>
module attributes {stable_mosaic.version = 11 : i64} {
  func.func @conv1_conv3_kernel(%arg0: i32, %arg1: i32, %arg2: i32, %arg3: memref<1x4x8x9x128xf32, #tpu.memory_space<vmem>>, %arg4: memref<1x4x1x9x128xf32, #tpu.memory_space<vmem>>, %arg5: memref<9x128x128xf32, #tpu.memory_space<vmem>>, %arg6: memref<128x128xf32, #tpu.memory_space<vmem>>, %arg7: memref<1x8x8x128xf32, #tpu.memory_space<vmem>>, %arg8: memref<1x8x8x128xf32, #tpu.memory_space<vmem>>, %arg9: memref<1x1x2x128xf32, #tpu.memory_space<vmem>>, %arg10: memref<1x1x2x128xf32, #tpu.memory_space<vmem>>) attributes {dimension_semantics = [#tpu.dimension_semantics<parallel>, #tpu.dimension_semantics<parallel>, #tpu.dimension_semantics<parallel>], iteration_bounds = array<i64: 1, 2, 1>, scalar_prefetch = 0 : i64, scratch_operands = 0 : i64, tpu.core_type = #tpu.core_type<tc>, window_params = [{transform_indices = @transform_0, window_bounds = array<i64: 1, 4, 8, 9, 128>}, {transform_indices = @transform_1, window_bounds = array<i64: 1, 4, 1, 9, 128>}, {transform_indices = @transform_2, window_bounds = array<i64: 9, 128, 128>}, {transform_indices = @transform_3, window_bounds = array<i64: 128, 128>}, {transform_indices = @transform_4, window_bounds = array<i64: 1, 8, 8, 128>}, {transform_indices = @transform_5, window_bounds = array<i64: 1, 8, 8, 128>}, {transform_indices = @transform_6, window_bounds = array<i64: 1, 1, 2, 128>}, {transform_indices = @transform_7, window_bounds = array<i64: 1, 1, 2, 128>}]} {
    %c0 = arith.constant 0 : index
    %c0_0 = arith.constant 0 : index
    %c0_1 = arith.constant 0 : index
    %c0_2 = arith.constant 0 : index
    %c0_3 = arith.constant 0 : index
    %0 = vector.load %arg3[%c0, %c0_0, %c0_1, %c0_2, %c0_3] : memref<1x4x8x9x128xf32, #tpu.memory_space<vmem>>, vector<1x1x8x9x128xf32>
    %1 = vector.shape_cast %0 : vector<1x1x8x9x128xf32> to vector<8x9x128xf32>
    %c0_4 = arith.constant 0 : index
    %c0_5 = arith.constant 0 : index
    %c0_6 = arith.constant 0 : index
    %c0_7 = arith.constant 0 : index
    %c0_8 = arith.constant 0 : index
    %2 = vector.load %arg4[%c0_4, %c0_5, %c0_6, %c0_7, %c0_8] : memref<1x4x1x9x128xf32, #tpu.memory_space<vmem>>, vector<1x1x1x9x128xf32>
    %3 = vector.shape_cast %2 : vector<1x1x1x9x128xf32> to vector<1x9x128xf32>
    %4 = tpu.concatenate %1, %3 in 0 : vector<8x9x128xf32>, vector<1x9x128xf32> -> vector<9x9x128xf32>
    %c0_9 = arith.constant 0 : index
    %c1 = arith.constant 1 : index
    %c0_10 = arith.constant 0 : index
    %c0_11 = arith.constant 0 : index
    %c0_12 = arith.constant 0 : index
    %5 = vector.load %arg3[%c0_9, %c1, %c0_10, %c0_11, %c0_12] : memref<1x4x8x9x128xf32, #tpu.memory_space<vmem>>, vector<1x1x8x9x128xf32>
    %6 = vector.shape_cast %5 : vector<1x1x8x9x128xf32> to vector<8x9x128xf32>
    %c0_13 = arith.constant 0 : index
    %c1_14 = arith.constant 1 : index
    %c0_15 = arith.constant 0 : index
    %c0_16 = arith.constant 0 : index
    %c0_17 = arith.constant 0 : index
    %7 = vector.load %arg4[%c0_13, %c1_14, %c0_15, %c0_16, %c0_17] : memref<1x4x1x9x128xf32, #tpu.memory_space<vmem>>, vector<1x1x1x9x128xf32>
    %8 = vector.shape_cast %7 : vector<1x1x1x9x128xf32> to vector<1x9x128xf32>
    %9 = tpu.concatenate %6, %8 in 0 : vector<8x9x128xf32>, vector<1x9x128xf32> -> vector<9x9x128xf32>
    %c0_18 = arith.constant 0 : index
    %c2 = arith.constant 2 : index
    %c0_19 = arith.constant 0 : index
    %c0_20 = arith.constant 0 : index
    %c0_21 = arith.constant 0 : index
    %10 = vector.load %arg3[%c0_18, %c2, %c0_19, %c0_20, %c0_21] : memref<1x4x8x9x128xf32, #tpu.memory_space<vmem>>, vector<1x1x8x9x128xf32>
    %11 = vector.shape_cast %10 : vector<1x1x8x9x128xf32> to vector<8x9x128xf32>
    %c0_22 = arith.constant 0 : index
    %c3 = arith.constant 3 : index
    %c0_23 = arith.constant 0 : index
    %c0_24 = arith.constant 0 : index
    %c0_25 = arith.constant 0 : index
    %12 = vector.load %arg3[%c0_22, %c3, %c0_23, %c0_24, %c0_25] : memref<1x4x8x9x128xf32, #tpu.memory_space<vmem>>, vector<1x1x8x9x128xf32>
    %13 = vector.shape_cast %12 : vector<1x1x8x9x128xf32> to vector<8x9x128xf32>
    %cst = arith.constant 0.000000e+00 : f32
    %14 = vector.broadcast %cst : f32 to vector<64x128xf32>
    %15 = vector.extract_strided_slice %4 {offsets = [0, 0, 0], sizes = [8, 8, 128], strides = [1, 1, 1]} : vector<9x9x128xf32> to vector<8x8x128xf32>
    %16 = vector.shape_cast %15 : vector<8x8x128xf32> to vector<64x128xf32>
    %c0_26 = arith.constant 0 : index
    %c0_27 = arith.constant 0 : index
    %c0_28 = arith.constant 0 : index
    %17 = vector.load %arg5[%c0_26, %c0_27, %c0_28] : memref<9x128x128xf32, #tpu.memory_space<vmem>>, vector<1x128x128xf32>
    %18 = vector.shape_cast %17 : vector<1x128x128xf32> to vector<128x128xf32>
    %cst_29 = arith.constant dense<0.000000e+00> : vector<64x128xf32>
    %19 = tpu.matmul %16, %18, %cst_29 {dimension_numbers = #tpu.dot_dimension_numbers<[1], [0], [0], [1], [0, 0, 1, 1], [], []>} : vector<64x128xf32>, vector<128x128xf32>, vector<64x128xf32> -> vector<64x128xf32>
    %20 = arith.addf %14, %19 : vector<64x128xf32>
    %21 = vector.extract_strided_slice %9 {offsets = [0, 0, 0], sizes = [8, 8, 128], strides = [1, 1, 1]} : vector<9x9x128xf32> to vector<8x8x128xf32>
    %22 = vector.shape_cast %21 : vector<8x8x128xf32> to vector<64x128xf32>
    %c1_30 = arith.constant 1 : index
    %c0_31 = arith.constant 0 : index
    %c0_32 = arith.constant 0 : index
    %23 = vector.load %arg5[%c1_30, %c0_31, %c0_32] : memref<9x128x128xf32, #tpu.memory_space<vmem>>, vector<1x128x128xf32>
    %24 = vector.shape_cast %23 : vector<1x128x128xf32> to vector<128x128xf32>
    %cst_33 = arith.constant dense<0.000000e+00> : vector<64x128xf32>
    %25 = tpu.matmul %22, %24, %cst_33 {dimension_numbers = #tpu.dot_dimension_numbers<[1], [0], [0], [1], [0, 0, 1, 1], [], []>} : vector<64x128xf32>, vector<128x128xf32>, vector<64x128xf32> -> vector<64x128xf32>
    %26 = arith.addf %20, %25 : vector<64x128xf32>
    %27 = vector.extract_strided_slice %4 {offsets = [0, 1, 0], sizes = [8, 8, 128], strides = [1, 1, 1]} : vector<9x9x128xf32> to vector<8x8x128xf32>
    %28 = vector.shape_cast %27 : vector<8x8x128xf32> to vector<64x128xf32>
    %c2_34 = arith.constant 2 : index
    %c0_35 = arith.constant 0 : index
    %c0_36 = arith.constant 0 : index
    %29 = vector.load %arg5[%c2_34, %c0_35, %c0_36] : memref<9x128x128xf32, #tpu.memory_space<vmem>>, vector<1x128x128xf32>
    %30 = vector.shape_cast %29 : vector<1x128x128xf32> to vector<128x128xf32>
    %cst_37 = arith.constant dense<0.000000e+00> : vector<64x128xf32>
    %31 = tpu.matmul %28, %30, %cst_37 {dimension_numbers = #tpu.dot_dimension_numbers<[1], [0], [0], [1], [0, 0, 1, 1], [], []>} : vector<64x128xf32>, vector<128x128xf32>, vector<64x128xf32> -> vector<64x128xf32>
    %32 = arith.addf %26, %31 : vector<64x128xf32>
    %33 = vector.extract_strided_slice %11 {offsets = [0, 0, 0], sizes = [8, 8, 128], strides = [1, 1, 1]} : vector<8x9x128xf32> to vector<8x8x128xf32>
    %34 = vector.shape_cast %33 : vector<8x8x128xf32> to vector<64x128xf32>
    %c3_38 = arith.constant 3 : index
    %c0_39 = arith.constant 0 : index
    %c0_40 = arith.constant 0 : index
    %35 = vector.load %arg5[%c3_38, %c0_39, %c0_40] : memref<9x128x128xf32, #tpu.memory_space<vmem>>, vector<1x128x128xf32>
    %36 = vector.shape_cast %35 : vector<1x128x128xf32> to vector<128x128xf32>
    %cst_41 = arith.constant dense<0.000000e+00> : vector<64x128xf32>
    %37 = tpu.matmul %34, %36, %cst_41 {dimension_numbers = #tpu.dot_dimension_numbers<[1], [0], [0], [1], [0, 0, 1, 1], [], []>} : vector<64x128xf32>, vector<128x128xf32>, vector<64x128xf32> -> vector<64x128xf32>
    %38 = arith.addf %32, %37 : vector<64x128xf32>
    %39 = vector.extract_strided_slice %13 {offsets = [0, 0, 0], sizes = [8, 8, 128], strides = [1, 1, 1]} : vector<8x9x128xf32> to vector<8x8x128xf32>
    %40 = vector.shape_cast %39 : vector<8x8x128xf32> to vector<64x128xf32>
    %c4 = arith.constant 4 : index
    %c0_42 = arith.constant 0 : index
    %c0_43 = arith.constant 0 : index
    %41 = vector.load %arg5[%c4, %c0_42, %c0_43] : memref<9x128x128xf32, #tpu.memory_space<vmem>>, vector<1x128x128xf32>
    %42 = vector.shape_cast %41 : vector<1x128x128xf32> to vector<128x128xf32>
    %cst_44 = arith.constant dense<0.000000e+00> : vector<64x128xf32>
    %43 = tpu.matmul %40, %42, %cst_44 {dimension_numbers = #tpu.dot_dimension_numbers<[1], [0], [0], [1], [0, 0, 1, 1], [], []>} : vector<64x128xf32>, vector<128x128xf32>, vector<64x128xf32> -> vector<64x128xf32>
    %44 = arith.addf %38, %43 : vector<64x128xf32>
    %45 = vector.extract_strided_slice %11 {offsets = [0, 1, 0], sizes = [8, 8, 128], strides = [1, 1, 1]} : vector<8x9x128xf32> to vector<8x8x128xf32>
    %46 = vector.shape_cast %45 : vector<8x8x128xf32> to vector<64x128xf32>
    %c5 = arith.constant 5 : index
    %c0_45 = arith.constant 0 : index
    %c0_46 = arith.constant 0 : index
    %47 = vector.load %arg5[%c5, %c0_45, %c0_46] : memref<9x128x128xf32, #tpu.memory_space<vmem>>, vector<1x128x128xf32>
    %48 = vector.shape_cast %47 : vector<1x128x128xf32> to vector<128x128xf32>
    %cst_47 = arith.constant dense<0.000000e+00> : vector<64x128xf32>
    %49 = tpu.matmul %46, %48, %cst_47 {dimension_numbers = #tpu.dot_dimension_numbers<[1], [0], [0], [1], [0, 0, 1, 1], [], []>} : vector<64x128xf32>, vector<128x128xf32>, vector<64x128xf32> -> vector<64x128xf32>
    %50 = arith.addf %44, %49 : vector<64x128xf32>
    %51 = vector.extract_strided_slice %4 {offsets = [1, 0, 0], sizes = [8, 8, 128], strides = [1, 1, 1]} : vector<9x9x128xf32> to vector<8x8x128xf32>
    %52 = vector.shape_cast %51 : vector<8x8x128xf32> to vector<64x128xf32>
    %c6 = arith.constant 6 : index
    %c0_48 = arith.constant 0 : index
    %c0_49 = arith.constant 0 : index
    %53 = vector.load %arg5[%c6, %c0_48, %c0_49] : memref<9x128x128xf32, #tpu.memory_space<vmem>>, vector<1x128x128xf32>
    %54 = vector.shape_cast %53 : vector<1x128x128xf32> to vector<128x128xf32>
    %cst_50 = arith.constant dense<0.000000e+00> : vector<64x128xf32>
    %55 = tpu.matmul %52, %54, %cst_50 {dimension_numbers = #tpu.dot_dimension_numbers<[1], [0], [0], [1], [0, 0, 1, 1], [], []>} : vector<64x128xf32>, vector<128x128xf32>, vector<64x128xf32> -> vector<64x128xf32>
    %56 = arith.addf %50, %55 : vector<64x128xf32>
    %57 = vector.extract_strided_slice %9 {offsets = [1, 0, 0], sizes = [8, 8, 128], strides = [1, 1, 1]} : vector<9x9x128xf32> to vector<8x8x128xf32>
    %58 = vector.shape_cast %57 : vector<8x8x128xf32> to vector<64x128xf32>
    %c7 = arith.constant 7 : index
    %c0_51 = arith.constant 0 : index
    %c0_52 = arith.constant 0 : index
    %59 = vector.load %arg5[%c7, %c0_51, %c0_52] : memref<9x128x128xf32, #tpu.memory_space<vmem>>, vector<1x128x128xf32>
    %60 = vector.shape_cast %59 : vector<1x128x128xf32> to vector<128x128xf32>
    %cst_53 = arith.constant dense<0.000000e+00> : vector<64x128xf32>
    %61 = tpu.matmul %58, %60, %cst_53 {dimension_numbers = #tpu.dot_dimension_numbers<[1], [0], [0], [1], [0, 0, 1, 1], [], []>} : vector<64x128xf32>, vector<128x128xf32>, vector<64x128xf32> -> vector<64x128xf32>
    %62 = arith.addf %56, %61 : vector<64x128xf32>
    %63 = vector.extract_strided_slice %4 {offsets = [1, 1, 0], sizes = [8, 8, 128], strides = [1, 1, 1]} : vector<9x9x128xf32> to vector<8x8x128xf32>
    %64 = vector.shape_cast %63 : vector<8x8x128xf32> to vector<64x128xf32>
    %c8 = arith.constant 8 : index
    %c0_54 = arith.constant 0 : index
    %c0_55 = arith.constant 0 : index
    %65 = vector.load %arg5[%c8, %c0_54, %c0_55] : memref<9x128x128xf32, #tpu.memory_space<vmem>>, vector<1x128x128xf32>
    %66 = vector.shape_cast %65 : vector<1x128x128xf32> to vector<128x128xf32>
    %cst_56 = arith.constant dense<0.000000e+00> : vector<64x128xf32>
    %67 = tpu.matmul %64, %66, %cst_56 {dimension_numbers = #tpu.dot_dimension_numbers<[1], [0], [0], [1], [0, 0, 1, 1], [], []>} : vector<64x128xf32>, vector<128x128xf32>, vector<64x128xf32> -> vector<64x128xf32>
    %68 = arith.addf %62, %67 : vector<64x128xf32>
    %69 = vector.extract_strided_slice %13 {offsets = [0, 0, 0], sizes = [8, 8, 128], strides = [1, 1, 1]} : vector<8x9x128xf32> to vector<8x8x128xf32>
    %70 = vector.shape_cast %69 : vector<8x8x128xf32> to vector<64x128xf32>
    %c0_57 = arith.constant 0 : index
    %c0_58 = arith.constant 0 : index
    %71 = vector.load %arg6[%c0_57, %c0_58] : memref<128x128xf32, #tpu.memory_space<vmem>>, vector<128x128xf32>
    %cst_59 = arith.constant dense<0.000000e+00> : vector<64x128xf32>
    %72 = tpu.matmul %70, %71, %cst_59 {dimension_numbers = #tpu.dot_dimension_numbers<[1], [0], [0], [1], [0, 0, 1, 1], [], []>} : vector<64x128xf32>, vector<128x128xf32>, vector<64x128xf32> -> vector<64x128xf32>
    %cst_60 = arith.constant 1.000000e+00 : f32
    %73 = vector.broadcast %cst_60 : f32 to vector<1x64xf32>
    %cst_61 = arith.constant dense<0.000000e+00> : vector<1x128xf32>
    %74 = tpu.matmul %73, %68, %cst_61 {dimension_numbers = #tpu.dot_dimension_numbers<[1], [0], [0], [1], [0, 0, 1, 1], [], []>} : vector<1x64xf32>, vector<64x128xf32>, vector<1x128xf32> -> vector<1x128xf32>
    %75 = arith.mulf %68, %68 : vector<64x128xf32>
    %cst_62 = arith.constant dense<0.000000e+00> : vector<1x128xf32>
    %76 = tpu.matmul %73, %75, %cst_62 {dimension_numbers = #tpu.dot_dimension_numbers<[1], [0], [0], [1], [0, 0, 1, 1], [], []>} : vector<1x64xf32>, vector<64x128xf32>, vector<1x128xf32> -> vector<1x128xf32>
    %77 = tpu.concatenate %74, %76 in 0 : vector<1x128xf32>, vector<1x128xf32> -> vector<2x128xf32>
    %c0_63 = arith.constant 0 : index
    %c0_64 = arith.constant 0 : index
    %c0_65 = arith.constant 0 : index
    %c0_66 = arith.constant 0 : index
    %78 = vector.load %arg9[%c0_63, %c0_64, %c0_65, %c0_66] : memref<1x1x2x128xf32, #tpu.memory_space<vmem>>, vector<1x1x2x128xf32>
    %79 = vector.shape_cast %78 : vector<1x1x2x128xf32> to vector<2x128xf32>
    %80 = vector.shape_cast %77 : vector<2x128xf32> to vector<1x1x2x128xf32>
    tpu.vector_store %arg9[%c0_63, %c0_64, %c0_65, %c0_66], %80 {strides = array<i32>} : memref<1x1x2x128xf32, #tpu.memory_space<vmem>>, vector<1x1x2x128xf32>,
    %cst_67 = arith.constant dense<0.000000e+00> : vector<1x128xf32>
    %81 = tpu.matmul %73, %72, %cst_67 {dimension_numbers = #tpu.dot_dimension_numbers<[1], [0], [0], [1], [0, 0, 1, 1], [], []>} : vector<1x64xf32>, vector<64x128xf32>, vector<1x128xf32> -> vector<1x128xf32>
    %82 = arith.mulf %72, %72 : vector<64x128xf32>
    %cst_68 = arith.constant dense<0.000000e+00> : vector<1x128xf32>
    %83 = tpu.matmul %73, %82, %cst_68 {dimension_numbers = #tpu.dot_dimension_numbers<[1], [0], [0], [1], [0, 0, 1, 1], [], []>} : vector<1x64xf32>, vector<64x128xf32>, vector<1x128xf32> -> vector<1x128xf32>
    %84 = tpu.concatenate %81, %83 in 0 : vector<1x128xf32>, vector<1x128xf32> -> vector<2x128xf32>
    %c0_69 = arith.constant 0 : index
    %c0_70 = arith.constant 0 : index
    %c0_71 = arith.constant 0 : index
    %c0_72 = arith.constant 0 : index
    %85 = vector.load %arg10[%c0_69, %c0_70, %c0_71, %c0_72] : memref<1x1x2x128xf32, #tpu.memory_space<vmem>>, vector<1x1x2x128xf32>
    %86 = vector.shape_cast %85 : vector<1x1x2x128xf32> to vector<2x128xf32>
    %87 = vector.shape_cast %84 : vector<2x128xf32> to vector<1x1x2x128xf32>
    tpu.vector_store %arg10[%c0_69, %c0_70, %c0_71, %c0_72], %87 {strides = array<i32>} : memref<1x1x2x128xf32, #tpu.memory_space<vmem>>, vector<1x1x2x128xf32>,
    %88 = vector.shape_cast %68 : vector<64x128xf32> to vector<8x8x128xf32>
    %c0_73 = arith.constant 0 : index
    %c0_74 = arith.constant 0 : index
    %c0_75 = arith.constant 0 : index
    %c0_76 = arith.constant 0 : index
    %89 = vector.load %arg7[%c0_73, %c0_74, %c0_75, %c0_76] : memref<1x8x8x128xf32, #tpu.memory_space<vmem>>, vector<1x8x8x128xf32>
    %90 = vector.shape_cast %89 : vector<1x8x8x128xf32> to vector<8x8x128xf32>
    %91 = vector.shape_cast %88 : vector<8x8x128xf32> to vector<1x8x8x128xf32>
    tpu.vector_store %arg7[%c0_73, %c0_74, %c0_75, %c0_76], %91 {strides = array<i32>} : memref<1x8x8x128xf32, #tpu.memory_space<vmem>>, vector<1x8x8x128xf32>,
    %92 = vector.shape_cast %72 : vector<64x128xf32> to vector<8x8x128xf32>
    %c0_77 = arith.constant 0 : index
    %c0_78 = arith.constant 0 : index
    %c0_79 = arith.constant 0 : index
    %c0_80 = arith.constant 0 : index
    %93 = vector.load %arg8[%c0_77, %c0_78, %c0_79, %c0_80] : memref<1x8x8x128xf32, #tpu.memory_space<vmem>>, vector<1x8x8x128xf32>
    %94 = vector.shape_cast %93 : vector<1x8x8x128xf32> to vector<8x8x128xf32>
    %95 = vector.shape_cast %92 : vector<8x8x128xf32> to vector<1x8x8x128xf32>
    tpu.vector_store %arg8[%c0_77, %c0_78, %c0_79, %c0_80], %95 {strides = array<i32>} : memref<1x8x8x128xf32, #tpu.memory_space<vmem>>, vector<1x8x8x128xf32>,
    return
  }
  func.func @transform_0(%arg0: i32, %arg1: i32, %arg2: i32) -> (i32, i32, i32, i32, i32) {
    %c0_i32 = arith.constant 0 : i32
    %c0_i32_0 = arith.constant 0 : i32
    %c0_i32_1 = arith.constant 0 : i32
    %c0_i32_2 = arith.constant 0 : i32
    return %arg1, %c0_i32, %arg2, %c0_i32_0, %c0_i32_1 : i32, i32, i32, i32, i32
  }
  func.func @transform_1(%arg0: i32, %arg1: i32, %arg2: i32) -> (i32, i32, i32, i32, i32) {
    %c8_i32 = arith.constant 8 : i32
    %0 = arith.muli %arg2, %c8_i32 : i32
    %c8_i32_0 = arith.constant 8 : i32
    %1 = arith.addi %0, %c8_i32_0 : i32
    %c0_i32 = arith.constant 0 : i32
    %c0_i32_1 = arith.constant 0 : i32
    %c0_i32_2 = arith.constant 0 : i32
    %c0_i32_3 = arith.constant 0 : i32
    return %arg1, %c0_i32, %1, %c0_i32_1, %c0_i32_2 : i32, i32, i32, i32, i32
  }
  func.func @transform_2(%arg0: i32, %arg1: i32, %arg2: i32) -> (i32, i32, i32) {
    %c0_i32 = arith.constant 0 : i32
    %c0_i32_0 = arith.constant 0 : i32
    %c0_i32_1 = arith.constant 0 : i32
    return %c0_i32, %c0_i32_0, %arg0 : i32, i32, i32
  }
  func.func @transform_3(%arg0: i32, %arg1: i32, %arg2: i32) -> (i32, i32) {
    %c0_i32 = arith.constant 0 : i32
    %c0_i32_0 = arith.constant 0 : i32
    return %c0_i32, %arg0 : i32, i32
  }
  func.func @transform_4(%arg0: i32, %arg1: i32, %arg2: i32) -> (i32, i32, i32, i32) {
    %c0_i32 = arith.constant 0 : i32
    %c0_i32_0 = arith.constant 0 : i32
    return %arg1, %arg2, %c0_i32, %arg0 : i32, i32, i32, i32
  }
  func.func @transform_5(%arg0: i32, %arg1: i32, %arg2: i32) -> (i32, i32, i32, i32) {
    %c0_i32 = arith.constant 0 : i32
    %c0_i32_0 = arith.constant 0 : i32
    return %arg1, %arg2, %c0_i32, %arg0 : i32, i32, i32, i32
  }
  func.func @transform_6(%arg0: i32, %arg1: i32, %arg2: i32) -> (i32, i32, i32, i32) {
    %c0_i32 = arith.constant 0 : i32
    %c0_i32_0 = arith.constant 0 : i32
    return %arg1, %arg2, %c0_i32, %arg0 : i32, i32, i32, i32
  }
  func.func @transform_7(%arg0: i32, %arg1: i32, %arg2: i32) -> (i32, i32, i32, i32) {
    %c0_i32 = arith.constant 0 : i32
    %c0_i32_0 = arith.constant 0 : i32
    return %arg1, %arg2, %c0_i32, %arg0 : i32, i32, i32, i32
  }
}

module attributes {stable_mosaic.version = 11 : i64} {
  func.func @conv2_kernel(%arg0: i32, %arg1: i32, %arg2: i32, %arg3: memref<1x8x8x128xf32, #tpu.memory_space<vmem>>, %arg4: memref<1x1x8x128xf32, #tpu.memory_space<vmem>>, %arg5: memref<1x1x8x128xf32, #tpu.memory_space<vmem>>, %arg6: memref<9x128x128xf32, #tpu.memory_space<vmem>>, %arg7: memref<8x8x128xf32, #tpu.memory_space<vmem>>, %arg8: memref<1x8x8x128xf32, #tpu.memory_space<vmem>>, %arg9: memref<1x1x2x128xf32, #tpu.memory_space<vmem>>) attributes {dimension_semantics = [#tpu.dimension_semantics<parallel>, #tpu.dimension_semantics<parallel>, #tpu.dimension_semantics<parallel>], iteration_bounds = array<i64: 1, 2, 1>, scalar_prefetch = 0 : i64, scratch_operands = 0 : i64, tpu.core_type = #tpu.core_type<tc>, window_params = [{transform_indices = @transform_0, window_bounds = array<i64: 1, 8, 8, 128>}, {transform_indices = @transform_1, window_bounds = array<i64: 1, 1, 8, 128>}, {transform_indices = @transform_2, window_bounds = array<i64: 1, 1, 8, 128>}, {transform_indices = @transform_3, window_bounds = array<i64: 9, 128, 128>}, {transform_indices = @transform_4, window_bounds = array<i64: 8, 8, 128>}, {transform_indices = @transform_5, window_bounds = array<i64: 1, 8, 8, 128>}, {transform_indices = @transform_6, window_bounds = array<i64: 1, 1, 2, 128>}]} {
    %c0 = arith.constant 0 : index
    %c0_0 = arith.constant 0 : index
    %c0_1 = arith.constant 0 : index
    %c0_2 = arith.constant 0 : index
    %0 = vector.load %arg4[%c0, %c0_0, %c0_1, %c0_2] : memref<1x1x8x128xf32, #tpu.memory_space<vmem>>, vector<1x1x8x128xf32>
    %1 = vector.shape_cast %0 : vector<1x1x8x128xf32> to vector<1x8x128xf32>
    %c0_3 = arith.constant 0 : index
    %c0_4 = arith.constant 0 : index
    %c0_5 = arith.constant 0 : index
    %c0_6 = arith.constant 0 : index
    %2 = vector.load %arg5[%c0_3, %c0_4, %c0_5, %c0_6] : memref<1x1x8x128xf32, #tpu.memory_space<vmem>>, vector<1x1x8x128xf32>
    %3 = vector.shape_cast %2 : vector<1x1x8x128xf32> to vector<1x8x128xf32>
    %c0_i32 = arith.constant 0 : i32
    %4 = arith.cmpi sgt, %arg2, %c0_i32 : i32
    %cst = arith.constant 0.000000e+00 : f32
    %5 = vector.broadcast %cst : f32 to vector<1x8x128xf32>
    %6 = arith.select %4, %1, %5 : vector<1x8x128xf32>
    %c0_i32_7 = arith.constant 0 : i32
    %7 = arith.cmpi slt, %arg2, %c0_i32_7 : i32
    %cst_8 = arith.constant 0.000000e+00 : f32
    %8 = vector.broadcast %cst_8 : f32 to vector<1x8x128xf32>
    %9 = arith.select %7, %3, %8 : vector<1x8x128xf32>
    %c0_9 = arith.constant 0 : index
    %c0_10 = arith.constant 0 : index
    %c0_11 = arith.constant 0 : index
    %c0_12 = arith.constant 0 : index
    %10 = vector.load %arg3[%c0_9, %c0_10, %c0_11, %c0_12] : memref<1x8x8x128xf32, #tpu.memory_space<vmem>>, vector<1x8x8x128xf32>
    %11 = vector.shape_cast %10 : vector<1x8x8x128xf32> to vector<8x8x128xf32>
    %12 = tpu.concatenate %6, %11, %9 in 0 : vector<1x8x128xf32>, vector<8x8x128xf32>, vector<1x8x128xf32> -> vector<10x8x128xf32>
    %cst_13 = arith.constant 0.000000e+00 : f32
    %13 = vector.broadcast %cst_13 : f32 to vector<10x1x128xf32>
    %14 = tpu.concatenate %13, %12, %13 in 1 : vector<10x1x128xf32>, vector<10x8x128xf32>, vector<10x1x128xf32> -> vector<10x10x128xf32>
    %c0_14 = arith.constant 0 : index
    %c0_15 = arith.constant 0 : index
    %c0_16 = arith.constant 0 : index
    %15 = vector.load %arg7[%c0_14, %c0_15, %c0_16] : memref<8x8x128xf32, #tpu.memory_space<vmem>>, vector<8x8x128xf32>
    %16 = vector.shape_cast %15 : vector<8x8x128xf32> to vector<64x128xf32>
    %17 = vector.extract_strided_slice %14 {offsets = [0, 0, 0], sizes = [8, 8, 128], strides = [1, 1, 1]} : vector<10x10x128xf32> to vector<8x8x128xf32>
    %18 = vector.shape_cast %17 : vector<8x8x128xf32> to vector<64x128xf32>
    %c0_17 = arith.constant 0 : index
    %c0_18 = arith.constant 0 : index
    %c0_19 = arith.constant 0 : index
    %19 = vector.load %arg6[%c0_17, %c0_18, %c0_19] : memref<9x128x128xf32, #tpu.memory_space<vmem>>, vector<1x128x128xf32>
    %20 = vector.shape_cast %19 : vector<1x128x128xf32> to vector<128x128xf32>
    %cst_20 = arith.constant dense<0.000000e+00> : vector<64x128xf32>
    %21 = tpu.matmul %18, %20, %cst_20 {dimension_numbers = #tpu.dot_dimension_numbers<[1], [0], [0], [1], [0, 0, 1, 1], [], []>} : vector<64x128xf32>, vector<128x128xf32>, vector<64x128xf32> -> vector<64x128xf32>
    %22 = arith.addf %16, %21 : vector<64x128xf32>
    %23 = vector.extract_strided_slice %14 {offsets = [0, 1, 0], sizes = [8, 8, 128], strides = [1, 1, 1]} : vector<10x10x128xf32> to vector<8x8x128xf32>
    %24 = vector.shape_cast %23 : vector<8x8x128xf32> to vector<64x128xf32>
    %c1 = arith.constant 1 : index
    %c0_21 = arith.constant 0 : index
    %c0_22 = arith.constant 0 : index
    %25 = vector.load %arg6[%c1, %c0_21, %c0_22] : memref<9x128x128xf32, #tpu.memory_space<vmem>>, vector<1x128x128xf32>
    %26 = vector.shape_cast %25 : vector<1x128x128xf32> to vector<128x128xf32>
    %cst_23 = arith.constant dense<0.000000e+00> : vector<64x128xf32>
    %27 = tpu.matmul %24, %26, %cst_23 {dimension_numbers = #tpu.dot_dimension_numbers<[1], [0], [0], [1], [0, 0, 1, 1], [], []>} : vector<64x128xf32>, vector<128x128xf32>, vector<64x128xf32> -> vector<64x128xf32>
    %28 = arith.addf %22, %27 : vector<64x128xf32>
    %29 = vector.extract_strided_slice %14 {offsets = [0, 2, 0], sizes = [8, 8, 128], strides = [1, 1, 1]} : vector<10x10x128xf32> to vector<8x8x128xf32>
    %30 = vector.shape_cast %29 : vector<8x8x128xf32> to vector<64x128xf32>
    %c2 = arith.constant 2 : index
    %c0_24 = arith.constant 0 : index
    %c0_25 = arith.constant 0 : index
    %31 = vector.load %arg6[%c2, %c0_24, %c0_25] : memref<9x128x128xf32, #tpu.memory_space<vmem>>, vector<1x128x128xf32>
    %32 = vector.shape_cast %31 : vector<1x128x128xf32> to vector<128x128xf32>
    %cst_26 = arith.constant dense<0.000000e+00> : vector<64x128xf32>
    %33 = tpu.matmul %30, %32, %cst_26 {dimension_numbers = #tpu.dot_dimension_numbers<[1], [0], [0], [1], [0, 0, 1, 1], [], []>} : vector<64x128xf32>, vector<128x128xf32>, vector<64x128xf32> -> vector<64x128xf32>
    %34 = arith.addf %28, %33 : vector<64x128xf32>
    %35 = vector.extract_strided_slice %14 {offsets = [1, 0, 0], sizes = [8, 8, 128], strides = [1, 1, 1]} : vector<10x10x128xf32> to vector<8x8x128xf32>
    %36 = vector.shape_cast %35 : vector<8x8x128xf32> to vector<64x128xf32>
    %c3 = arith.constant 3 : index
    %c0_27 = arith.constant 0 : index
    %c0_28 = arith.constant 0 : index
    %37 = vector.load %arg6[%c3, %c0_27, %c0_28] : memref<9x128x128xf32, #tpu.memory_space<vmem>>, vector<1x128x128xf32>
    %38 = vector.shape_cast %37 : vector<1x128x128xf32> to vector<128x128xf32>
    %cst_29 = arith.constant dense<0.000000e+00> : vector<64x128xf32>
    %39 = tpu.matmul %36, %38, %cst_29 {dimension_numbers = #tpu.dot_dimension_numbers<[1], [0], [0], [1], [0, 0, 1, 1], [], []>} : vector<64x128xf32>, vector<128x128xf32>, vector<64x128xf32> -> vector<64x128xf32>
    %40 = arith.addf %34, %39 : vector<64x128xf32>
    %41 = vector.extract_strided_slice %14 {offsets = [1, 1, 0], sizes = [8, 8, 128], strides = [1, 1, 1]} : vector<10x10x128xf32> to vector<8x8x128xf32>
    %42 = vector.shape_cast %41 : vector<8x8x128xf32> to vector<64x128xf32>
    %c4 = arith.constant 4 : index
    %c0_30 = arith.constant 0 : index
    %c0_31 = arith.constant 0 : index
    %43 = vector.load %arg6[%c4, %c0_30, %c0_31] : memref<9x128x128xf32, #tpu.memory_space<vmem>>, vector<1x128x128xf32>
    %44 = vector.shape_cast %43 : vector<1x128x128xf32> to vector<128x128xf32>
    %cst_32 = arith.constant dense<0.000000e+00> : vector<64x128xf32>
    %45 = tpu.matmul %42, %44, %cst_32 {dimension_numbers = #tpu.dot_dimension_numbers<[1], [0], [0], [1], [0, 0, 1, 1], [], []>} : vector<64x128xf32>, vector<128x128xf32>, vector<64x128xf32> -> vector<64x128xf32>
    %46 = arith.addf %40, %45 : vector<64x128xf32>
    %47 = vector.extract_strided_slice %14 {offsets = [1, 2, 0], sizes = [8, 8, 128], strides = [1, 1, 1]} : vector<10x10x128xf32> to vector<8x8x128xf32>
    %48 = vector.shape_cast %47 : vector<8x8x128xf32> to vector<64x128xf32>
    %c5 = arith.constant 5 : index
    %c0_33 = arith.constant 0 : index
    %c0_34 = arith.constant 0 : index
    %49 = vector.load %arg6[%c5, %c0_33, %c0_34] : memref<9x128x128xf32, #tpu.memory_space<vmem>>, vector<1x128x128xf32>
    %50 = vector.shape_cast %49 : vector<1x128x128xf32> to vector<128x128xf32>
    %cst_35 = arith.constant dense<0.000000e+00> : vector<64x128xf32>
    %51 = tpu.matmul %48, %50, %cst_35 {dimension_numbers = #tpu.dot_dimension_numbers<[1], [0], [0], [1], [0, 0, 1, 1], [], []>} : vector<64x128xf32>, vector<128x128xf32>, vector<64x128xf32> -> vector<64x128xf32>
    %52 = arith.addf %46, %51 : vector<64x128xf32>
    %53 = vector.extract_strided_slice %14 {offsets = [2, 0, 0], sizes = [8, 8, 128], strides = [1, 1, 1]} : vector<10x10x128xf32> to vector<8x8x128xf32>
    %54 = vector.shape_cast %53 : vector<8x8x128xf32> to vector<64x128xf32>
    %c6 = arith.constant 6 : index
    %c0_36 = arith.constant 0 : index
    %c0_37 = arith.constant 0 : index
    %55 = vector.load %arg6[%c6, %c0_36, %c0_37] : memref<9x128x128xf32, #tpu.memory_space<vmem>>, vector<1x128x128xf32>
    %56 = vector.shape_cast %55 : vector<1x128x128xf32> to vector<128x128xf32>
    %cst_38 = arith.constant dense<0.000000e+00> : vector<64x128xf32>
    %57 = tpu.matmul %54, %56, %cst_38 {dimension_numbers = #tpu.dot_dimension_numbers<[1], [0], [0], [1], [0, 0, 1, 1], [], []>} : vector<64x128xf32>, vector<128x128xf32>, vector<64x128xf32> -> vector<64x128xf32>
    %58 = arith.addf %52, %57 : vector<64x128xf32>
    %59 = vector.extract_strided_slice %14 {offsets = [2, 1, 0], sizes = [8, 8, 128], strides = [1, 1, 1]} : vector<10x10x128xf32> to vector<8x8x128xf32>
    %60 = vector.shape_cast %59 : vector<8x8x128xf32> to vector<64x128xf32>
    %c7 = arith.constant 7 : index
    %c0_39 = arith.constant 0 : index
    %c0_40 = arith.constant 0 : index
    %61 = vector.load %arg6[%c7, %c0_39, %c0_40] : memref<9x128x128xf32, #tpu.memory_space<vmem>>, vector<1x128x128xf32>
    %62 = vector.shape_cast %61 : vector<1x128x128xf32> to vector<128x128xf32>
    %cst_41 = arith.constant dense<0.000000e+00> : vector<64x128xf32>
    %63 = tpu.matmul %60, %62, %cst_41 {dimension_numbers = #tpu.dot_dimension_numbers<[1], [0], [0], [1], [0, 0, 1, 1], [], []>} : vector<64x128xf32>, vector<128x128xf32>, vector<64x128xf32> -> vector<64x128xf32>
    %64 = arith.addf %58, %63 : vector<64x128xf32>
    %65 = vector.extract_strided_slice %14 {offsets = [2, 2, 0], sizes = [8, 8, 128], strides = [1, 1, 1]} : vector<10x10x128xf32> to vector<8x8x128xf32>
    %66 = vector.shape_cast %65 : vector<8x8x128xf32> to vector<64x128xf32>
    %c8 = arith.constant 8 : index
    %c0_42 = arith.constant 0 : index
    %c0_43 = arith.constant 0 : index
    %67 = vector.load %arg6[%c8, %c0_42, %c0_43] : memref<9x128x128xf32, #tpu.memory_space<vmem>>, vector<1x128x128xf32>
    %68 = vector.shape_cast %67 : vector<1x128x128xf32> to vector<128x128xf32>
    %cst_44 = arith.constant dense<0.000000e+00> : vector<64x128xf32>
    %69 = tpu.matmul %66, %68, %cst_44 {dimension_numbers = #tpu.dot_dimension_numbers<[1], [0], [0], [1], [0, 0, 1, 1], [], []>} : vector<64x128xf32>, vector<128x128xf32>, vector<64x128xf32> -> vector<64x128xf32>
    %70 = arith.addf %64, %69 : vector<64x128xf32>
    %cst_45 = arith.constant 1.000000e+00 : f32
    %71 = vector.broadcast %cst_45 : f32 to vector<1x64xf32>
    %cst_46 = arith.constant dense<0.000000e+00> : vector<1x128xf32>
    %72 = tpu.matmul %71, %70, %cst_46 {dimension_numbers = #tpu.dot_dimension_numbers<[1], [0], [0], [1], [0, 0, 1, 1], [], []>} : vector<1x64xf32>, vector<64x128xf32>, vector<1x128xf32> -> vector<1x128xf32>
    %73 = arith.mulf %70, %70 : vector<64x128xf32>
    %cst_47 = arith.constant dense<0.000000e+00> : vector<1x128xf32>
    %74 = tpu.matmul %71, %73, %cst_47 {dimension_numbers = #tpu.dot_dimension_numbers<[1], [0], [0], [1], [0, 0, 1, 1], [], []>} : vector<1x64xf32>, vector<64x128xf32>, vector<1x128xf32> -> vector<1x128xf32>
    %75 = tpu.concatenate %72, %74 in 0 : vector<1x128xf32>, vector<1x128xf32> -> vector<2x128xf32>
    %c0_48 = arith.constant 0 : index
    %c0_49 = arith.constant 0 : index
    %c0_50 = arith.constant 0 : index
    %c0_51 = arith.constant 0 : index
    %76 = vector.load %arg9[%c0_48, %c0_49, %c0_50, %c0_51] : memref<1x1x2x128xf32, #tpu.memory_space<vmem>>, vector<1x1x2x128xf32>
    %77 = vector.shape_cast %76 : vector<1x1x2x128xf32> to vector<2x128xf32>
    %78 = vector.shape_cast %75 : vector<2x128xf32> to vector<1x1x2x128xf32>
    tpu.vector_store %arg9[%c0_48, %c0_49, %c0_50, %c0_51], %78 {strides = array<i32>} : memref<1x1x2x128xf32, #tpu.memory_space<vmem>>, vector<1x1x2x128xf32>,
    %79 = vector.shape_cast %70 : vector<64x128xf32> to vector<8x8x128xf32>
    %c0_52 = arith.constant 0 : index
    %c0_53 = arith.constant 0 : index
    %c0_54 = arith.constant 0 : index
    %c0_55 = arith.constant 0 : index
    %80 = vector.load %arg8[%c0_52, %c0_53, %c0_54, %c0_55] : memref<1x8x8x128xf32, #tpu.memory_space<vmem>>, vector<1x8x8x128xf32>
    %81 = vector.shape_cast %80 : vector<1x8x8x128xf32> to vector<8x8x128xf32>
    %82 = vector.shape_cast %79 : vector<8x8x128xf32> to vector<1x8x8x128xf32>
    tpu.vector_store %arg8[%c0_52, %c0_53, %c0_54, %c0_55], %82 {strides = array<i32>} : memref<1x8x8x128xf32, #tpu.memory_space<vmem>>, vector<1x8x8x128xf32>,
    return
  }
  func.func @transform_0(%arg0: i32, %arg1: i32, %arg2: i32) -> (i32, i32, i32, i32) {
    %c0_i32 = arith.constant 0 : i32
    %c0_i32_0 = arith.constant 0 : i32
    %c0_i32_1 = arith.constant 0 : i32
    return %arg1, %arg2, %c0_i32, %c0_i32_0 : i32, i32, i32, i32
  }
  func.func @transform_1(%arg0: i32, %arg1: i32, %arg2: i32) -> (i32, i32, i32, i32) {
    %c8_i32 = arith.constant 8 : i32
    %0 = arith.muli %arg2, %c8_i32 : i32
    %c1_i32 = arith.constant 1 : i32
    %1 = arith.subi %0, %c1_i32 : i32
    %c0_i32 = arith.constant 0 : i32
    %2 = arith.maxsi %1, %c0_i32 : i32
    %c0_i32_0 = arith.constant 0 : i32
    %c0_i32_1 = arith.constant 0 : i32
    %c0_i32_2 = arith.constant 0 : i32
    return %arg1, %2, %c0_i32_0, %c0_i32_1 : i32, i32, i32, i32
  }
  func.func @transform_2(%arg0: i32, %arg1: i32, %arg2: i32) -> (i32, i32, i32, i32) {
    %c8_i32 = arith.constant 8 : i32
    %0 = arith.muli %arg2, %c8_i32 : i32
    %c8_i32_0 = arith.constant 8 : i32
    %1 = arith.addi %0, %c8_i32_0 : i32
    %c7_i32 = arith.constant 7 : i32
    %2 = arith.minsi %1, %c7_i32 : i32
    %c0_i32 = arith.constant 0 : i32
    %c0_i32_1 = arith.constant 0 : i32
    %c0_i32_2 = arith.constant 0 : i32
    return %arg1, %2, %c0_i32, %c0_i32_1 : i32, i32, i32, i32
  }
  func.func @transform_3(%arg0: i32, %arg1: i32, %arg2: i32) -> (i32, i32, i32) {
    %c0_i32 = arith.constant 0 : i32
    %c0_i32_0 = arith.constant 0 : i32
    %c0_i32_1 = arith.constant 0 : i32
    return %c0_i32, %c0_i32_0, %arg0 : i32, i32, i32
  }
  func.func @transform_4(%arg0: i32, %arg1: i32, %arg2: i32) -> (i32, i32, i32) {
    %c0_i32 = arith.constant 0 : i32
    %c0_i32_0 = arith.constant 0 : i32
    return %arg2, %c0_i32, %arg0 : i32, i32, i32
  }
  func.func @transform_5(%arg0: i32, %arg1: i32, %arg2: i32) -> (i32, i32, i32, i32) {
    %c0_i32 = arith.constant 0 : i32
    %c0_i32_0 = arith.constant 0 : i32
    return %arg1, %arg2, %c0_i32, %arg0 : i32, i32, i32, i32
  }
  func.func @transform_6(%arg0: i32, %arg1: i32, %arg2: i32) -> (i32, i32, i32, i32) {
    %c0_i32 = arith.constant 0 : i32
    %c0_i32_0 = arith.constant 0 : i32
    return %arg1, %arg2, %c0_i32, %arg0 : i32, i32, i32, i32
  }
}

module attributes {stable_mosaic.version = 11 : i64} {
  func.func @bn_add_relu_nchw_kernel(%arg0: i32, %arg1: i32, %arg2: i32, %arg3: memref<1x64x128xf32, #tpu.memory_space<vmem>>, %arg4: memref<1x64x128xf32, #tpu.memory_space<vmem>>, %arg5: memref<1x128xf32, #tpu.memory_space<vmem>>, %arg6: memref<1x128xf32, #tpu.memory_space<vmem>>, %arg7: memref<1x128xf32, #tpu.memory_space<vmem>>, %arg8: memref<1x128xf32, #tpu.memory_space<vmem>>, %arg9: memref<1x128x64xf32, #tpu.memory_space<vmem>>) attributes {dimension_semantics = [#tpu.dimension_semantics<parallel>, #tpu.dimension_semantics<parallel>, #tpu.dimension_semantics<parallel>], iteration_bounds = array<i64: 2, 1, 1>, scalar_prefetch = 0 : i64, scratch_operands = 0 : i64, tpu.core_type = #tpu.core_type<tc>, window_params = [{transform_indices = @transform_0, window_bounds = array<i64: 1, 64, 128>}, {transform_indices = @transform_1, window_bounds = array<i64: 1, 64, 128>}, {transform_indices = @transform_2, window_bounds = array<i64: 1, 128>}, {transform_indices = @transform_3, window_bounds = array<i64: 1, 128>}, {transform_indices = @transform_4, window_bounds = array<i64: 1, 128>}, {transform_indices = @transform_5, window_bounds = array<i64: 1, 128>}, {transform_indices = @transform_6, window_bounds = array<i64: 1, 128, 64>}]} {
    %c0 = arith.constant 0 : index
    %c0_0 = arith.constant 0 : index
    %c0_1 = arith.constant 0 : index
    %0 = vector.load %arg3[%c0, %c0_0, %c0_1] : memref<1x64x128xf32, #tpu.memory_space<vmem>>, vector<1x64x128xf32>
    %1 = vector.shape_cast %0 : vector<1x64x128xf32> to vector<64x128xf32>
    %c0_2 = arith.constant 0 : index
    %c0_3 = arith.constant 0 : index
    %2 = vector.load %arg5[%c0_2, %c0_3] : memref<1x128xf32, #tpu.memory_space<vmem>>, vector<1x128xf32>
    %3 = vector.broadcast %2 : vector<1x128xf32> to vector<64x128xf32>
    %4 = arith.mulf %1, %3 : vector<64x128xf32>
    %c0_4 = arith.constant 0 : index
    %c0_5 = arith.constant 0 : index
    %5 = vector.load %arg6[%c0_4, %c0_5] : memref<1x128xf32, #tpu.memory_space<vmem>>, vector<1x128xf32>
    %6 = vector.broadcast %5 : vector<1x128xf32> to vector<64x128xf32>
    %7 = arith.addf %4, %6 : vector<64x128xf32>
    %c0_6 = arith.constant 0 : index
    %c0_7 = arith.constant 0 : index
    %c0_8 = arith.constant 0 : index
    %8 = vector.load %arg4[%c0_6, %c0_7, %c0_8] : memref<1x64x128xf32, #tpu.memory_space<vmem>>, vector<1x64x128xf32>
    %9 = vector.shape_cast %8 : vector<1x64x128xf32> to vector<64x128xf32>
    %c0_9 = arith.constant 0 : index
    %c0_10 = arith.constant 0 : index
    %10 = vector.load %arg7[%c0_9, %c0_10] : memref<1x128xf32, #tpu.memory_space<vmem>>, vector<1x128xf32>
    %11 = vector.broadcast %10 : vector<1x128xf32> to vector<64x128xf32>
    %12 = arith.mulf %9, %11 : vector<64x128xf32>
    %13 = arith.addf %7, %12 : vector<64x128xf32>
    %c0_11 = arith.constant 0 : index
    %c0_12 = arith.constant 0 : index
    %14 = vector.load %arg8[%c0_11, %c0_12] : memref<1x128xf32, #tpu.memory_space<vmem>>, vector<1x128xf32>
    %15 = vector.broadcast %14 : vector<1x128xf32> to vector<64x128xf32>
    %16 = arith.addf %13, %15 : vector<64x128xf32>
    %cst = arith.constant 0.000000e+00 : f32
    %17 = vector.broadcast %cst : f32 to vector<64x128xf32>
    %18 = arith.maximumf %16, %17 : vector<64x128xf32>
    %19 = tpu.transpose %18, [1, 0] : vector<64x128xf32> -> vector<128x64xf32>
    %c0_13 = arith.constant 0 : index
    %c0_14 = arith.constant 0 : index
    %c0_15 = arith.constant 0 : index
    %20 = vector.load %arg9[%c0_13, %c0_14, %c0_15] : memref<1x128x64xf32, #tpu.memory_space<vmem>>, vector<1x128x64xf32>
    %21 = vector.shape_cast %20 : vector<1x128x64xf32> to vector<128x64xf32>
    %22 = vector.shape_cast %19 : vector<128x64xf32> to vector<1x128x64xf32>
    tpu.vector_store %arg9[%c0_13, %c0_14, %c0_15], %22 {strides = array<i32>} : memref<1x128x64xf32, #tpu.memory_space<vmem>>, vector<1x128x64xf32>,
    return
  }
  func.func @transform_0(%arg0: i32, %arg1: i32, %arg2: i32) -> (i32, i32, i32) {
    %c0_i32 = arith.constant 0 : i32
    return %arg0, %arg2, %arg1 : i32, i32, i32
  }
  func.func @transform_1(%arg0: i32, %arg1: i32, %arg2: i32) -> (i32, i32, i32) {
    %c0_i32 = arith.constant 0 : i32
    return %arg0, %arg2, %arg1 : i32, i32, i32
  }
  func.func @transform_2(%arg0: i32, %arg1: i32, %arg2: i32) -> (i32, i32) {
    %c0_i32 = arith.constant 0 : i32
    %c0_i32_0 = arith.constant 0 : i32
    return %c0_i32, %arg1 : i32, i32
  }
  func.func @transform_3(%arg0: i32, %arg1: i32, %arg2: i32) -> (i32, i32) {
    %c0_i32 = arith.constant 0 : i32
    %c0_i32_0 = arith.constant 0 : i32
    return %c0_i32, %arg1 : i32, i32
  }
  func.func @transform_4(%arg0: i32, %arg1: i32, %arg2: i32) -> (i32, i32) {
    %c0_i32 = arith.constant 0 : i32
    %c0_i32_0 = arith.constant 0 : i32
    return %c0_i32, %arg1 : i32, i32
  }
  func.func @transform_5(%arg0: i32, %arg1: i32, %arg2: i32) -> (i32, i32) {
    %c0_i32 = arith.constant 0 : i32
    %c0_i32_0 = arith.constant 0 : i32
    return %c0_i32, %arg1 : i32, i32
  }
  func.func @transform_6(%arg0: i32, %arg1: i32, %arg2: i32) -> (i32, i32, i32) {
    %c0_i32 = arith.constant 0 : i32
    return %arg0, %arg1, %arg2 : i32, i32, i32
  }
}

</mosaic_0001>

<llo_original>
// kernel: basic_down_block.5
$region0: #{basic_down_block.5}
  #allocation0 [shape = 'u32[]', space=smem, size = 0x4, offset = 0x4, fixed_abs, tag = 'smem constant byte address 0x4 - core index']
  #allocation1 [shape = 'u32[144,128]{1,0:T(1,128)}', space=vmem, size = 0x12000, scoped, tag = 'internal scratch']
  %s0 = inlined_call_operand.vmem [shape: f32[2,64,128], index: 0, kind: input, shape index: {}]
  %s1 = inlined_call_operand.vmem [shape: f32[2,64,128], index: 1, kind: input, shape index: {}]
  %s2 = inlined_call_operand.vmem [shape: f32[1,128], index: 2, kind: input, shape index: {}]
  %s3 = inlined_call_operand.vmem [shape: f32[1,128], index: 3, kind: input, shape index: {}]
  %s4 = inlined_call_operand.vmem [shape: f32[1,128], index: 4, kind: input, shape index: {}]
  %s5 = inlined_call_operand.vmem [shape: f32[1,128], index: 5, kind: input, shape index: {}]
  %s6 = inlined_call_operand.vmem [shape: f32[2,128,64], index: 6, kind: output, shape index: {}]
  %s7 = sld [smem:[#allocation0]]
  $region57: #{basic_down_block.5} parent=0
    _
  %s9 = ssub.s32 1, %s7
  %s10 = scalar_select 0, %s9, %s7
  loop: start=0, step=1, limit=4
  $region2: #{basic_down_block.5} parent=0 // loop_pre_header
    _
  $region3: #{basic_down_block.5} parent=0 // loop_header
    %s12 = sphi 0, %s16
    %p13 = scmp.ge.s32.totalorder %s12, 4
    %s19 = sphi 0, %s38
    %s20 = sphi 0, %s34
    %s21 = sphi 0, %s30
    %s22 = sphi 0, %s19
    %s23 = sphi 0, %s20
    %s24 = sphi 0, %s21
    %s25 = sphi 0, %s22
    %s26 = sphi 0, %s23
    %s27 = sphi 0, %s24
    %s45 = sphi 0, %s47
    %s48 = sphi 0, %s45
    %s49 = sphi 0, %s48
    %s65 = sphi 0, %s49
    %s75 = sphi 0, %s77
    %s78 = sphi 0, %s75
    %s79 = sphi 0, %s78
    %s95 = sphi 0, %s79
    %s101 = sphi 0, %s103
    %s104 = sphi 0, %s101
    %s105 = sphi 0, %s104
    %s121 = sphi 0, %s105
    %s127 = sphi 0, %s129
    %s130 = sphi 0, %s127
    %s131 = sphi 0, %s130
    %s147 = sphi 0, %s131
    %s153 = sphi 0, %s155
    %s156 = sphi 0, %s153
    %s157 = sphi 0, %s156
    %s173 = sphi 0, %s157
    %s179 = sphi 0, %s181
    %s182 = sphi 0, %s179
    %s183 = sphi 0, %s182
    %s199 = sphi 0, %s183
    %s209 = sphi 0, %s211
    %s212 = sphi 0, %s209
    %s213 = sphi 0, %s212
    %s229 = sphi 0, %s213
  $region4: #{basic_down_block.5} parent=0 // loop_header_branch
    %15 = sbr.rel (%p13) target = $region8
  $region5: #{basic_down_block.5} parent=0 // loop_body
    %s17 = ssub.s32 %s12, 1
    %s18 = ssub.s32 %s12, 2
    %s28 = sadd.s32 1, %s21
    %p29 = scmp.ge.s32.totalorder %s28, 1
    %s30 = scalar_select %p29, 0, %s28
    %s31 = sadd.s32 1, %s20
    %s32 = scalar_select %p29, %s31, %s20
    %p33 = scmp.ge.s32.totalorder %s32, 1
    %s34 = scalar_select %p33, 0, %s32
    %s35 = sadd.s32 1, %s19
    %s36 = scalar_select %p33, %s35, %s19
    %p37 = scmp.ge.s32.totalorder %s36, 2
    %s38 = scalar_select %p37, 0, %s36
    %s39 = ssub.s32 %s19, %s38
    %s40 = ssub.s32 %s21, %s30
    %s41 = sor.u32 %s39, %s40
    %s42 = ssub.s32 %s20, %s34
    %s43 = sor.u32 %s41, %s42
    %p44 = scmp.eq.s32.totalorder %s43, 0
    %s46 = sadd.s32 %s45, 1
    %s47 = scalar_select %p44, %s45, %s46
    %p50 = pneg %p44
    %p51 = scmp.eq.s32.totalorder %s12, 1
    %p52 = por %p50, %p51
    %p53 = scmp.ne.s32.totalorder %s45, %s48
    %p54 = scmp.eq.s32.totalorder %s12, 0
    %p55 = por %p53, %p54
    %p56 = scmp.ne.s32.totalorder %s45, %s48
    %p57 = scmp.eq.s32.totalorder %s17, 1
    %p58 = por %p56, %p57
    %p59 = scmp.ne.s32.totalorder %s48, %s49
    %p60 = scmp.eq.s32.totalorder %s17, 0
    %p61 = por %p59, %p60
    %p62 = scmp.ne.s32.totalorder %s48, %s49
    %p63 = scmp.eq.s32.totalorder %s18, 1
    %p64 = por %p62, %p63
    %p66 = scmp.ne.s32.totalorder %s49, %s65
    %p67 = scmp.eq.s32.totalorder %s18, 0
    %p68 = por %p66, %p67
    %s69 = ssub.s32 %s19, %s38
    %s70 = ssub.s32 %s21, %s30
    %s71 = sor.u32 %s69, %s70
    %s72 = ssub.s32 %s20, %s34
    %s73 = sor.u32 %s71, %s72
    %p74 = scmp.eq.s32.totalorder %s73, 0
    %s76 = sadd.s32 %s75, 1
    %s77 = scalar_select %p74, %s75, %s76
    %p80 = pneg %p74
    %p81 = scmp.eq.s32.totalorder %s12, 1
    %p82 = por %p80, %p81
    %p83 = scmp.ne.s32.totalorder %s75, %s78
    %p84 = scmp.eq.s32.totalorder %s12, 0
    %p85 = por %p83, %p84
    %p86 = scmp.ne.s32.totalorder %s75, %s78
    %p87 = scmp.eq.s32.totalorder %s17, 1
    %p88 = por %p86, %p87
    %p89 = scmp.ne.s32.totalorder %s78, %s79
    %p90 = scmp.eq.s32.totalorder %s17, 0
    %p91 = por %p89, %p90
    %p92 = scmp.ne.s32.totalorder %s78, %s79
    %p93 = scmp.eq.s32.totalorder %s18, 1
    %p94 = por %p92, %p93
    %p96 = scmp.ne.s32.totalorder %s79, %s95
    %p97 = scmp.eq.s32.totalorder %s18, 0
    %p98 = por %p96, %p97
    %s99 = ssub.s32 %s20, %s34
    %p100 = scmp.eq.s32.totalorder %s99, 0
    %s102 = sadd.s32 %s101, 1
    %s103 = scalar_select %p100, %s101, %s102
    %p106 = pneg %p100
    %p107 = scmp.eq.s32.totalorder %s12, 1
    %p108 = por %p106, %p107
    %p109 = scmp.ne.s32.totalorder %s101, %s104
    %p110 = scmp.eq.s32.totalorder %s12, 0
    %p111 = por %p109, %p110
    %p112 = scmp.ne.s32.totalorder %s101, %s104
    %p113 = scmp.eq.s32.totalorder %s17, 1
    %p114 = por %p112, %p113
    %p115 = scmp.ne.s32.totalorder %s104, %s105
    %p116 = scmp.eq.s32.totalorder %s17, 0
    %p117 = por %p115, %p116
    %p118 = scmp.ne.s32.totalorder %s104, %s105
    %p119 = scmp.eq.s32.totalorder %s18, 1
    %p120 = por %p118, %p119
    %p122 = scmp.ne.s32.totalorder %s105, %s121
    %p123 = scmp.eq.s32.totalorder %s18, 0
    %p124 = por %p122, %p123
    %s125 = ssub.s32 %s20, %s34
    %p126 = scmp.eq.s32.totalorder %s125, 0
    %s128 = sadd.s32 %s127, 1
    %s129 = scalar_select %p126, %s127, %s128
    %p132 = pneg %p126
    %p133 = scmp.eq.s32.totalorder %s12, 1
    %p134 = por %p132, %p133
    %p135 = scmp.ne.s32.totalorder %s127, %s130
    %p136 = scmp.eq.s32.totalorder %s12, 0
    %p137 = por %p135, %p136
    %p138 = scmp.ne.s32.totalorder %s127, %s130
    %p139 = scmp.eq.s32.totalorder %s17, 1
    %p140 = por %p138, %p139
    %p141 = scmp.ne.s32.totalorder %s130, %s131
    %p142 = scmp.eq.s32.totalorder %s17, 0
    %p143 = por %p141, %p142
    %p144 = scmp.ne.s32.totalorder %s130, %s131
    %p145 = scmp.eq.s32.totalorder %s18, 1
    %p146 = por %p144, %p145
    %p148 = scmp.ne.s32.totalorder %s131, %s147
    %p149 = scmp.eq.s32.totalorder %s18, 0
    %p150 = por %p148, %p149
    %s151 = ssub.s32 %s20, %s34
    %p152 = scmp.eq.s32.totalorder %s151, 0
    %s154 = sadd.s32 %s153, 1
    %s155 = scalar_select %p152, %s153, %s154
    %p158 = pneg %p152
    %p159 = scmp.eq.s32.totalorder %s12, 1
    %p160 = por %p158, %p159
    %p161 = scmp.ne.s32.totalorder %s153, %s156
    %p162 = scmp.eq.s32.totalorder %s12, 0
    %p163 = por %p161, %p162
    %p164 = scmp.ne.s32.totalorder %s153, %s156
    %p165 = scmp.eq.s32.totalorder %s17, 1
    %p166 = por %p164, %p165
    %p167 = scmp.ne.s32.totalorder %s156, %s157
    %p168 = scmp.eq.s32.totalorder %s17, 0
    %p169 = por %p167, %p168
    %p170 = scmp.ne.s32.totalorder %s156, %s157
    %p171 = scmp.eq.s32.totalorder %s18, 1
    %p172 = por %p170, %p171
    %p174 = scmp.ne.s32.totalorder %s157, %s173
    %p175 = scmp.eq.s32.totalorder %s18, 0
    %p176 = por %p174, %p175
    %s177 = ssub.s32 %s20, %s34
    %p178 = scmp.eq.s32.totalorder %s177, 0
    %s180 = sadd.s32 %s179, 1
    %s181 = scalar_select %p178, %s179, %s180
    %p184 = pneg %p178
    %p185 = scmp.eq.s32.totalorder %s12, 1
    %p186 = por %p184, %p185
    %p187 = scmp.ne.s32.totalorder %s179, %s182
    %p188 = scmp.eq.s32.totalorder %s12, 0
    %p189 = por %p187, %p188
    %p190 = scmp.ne.s32.totalorder %s179, %s182
    %p191 = scmp.eq.s32.totalorder %s17, 1
    %p192 = por %p190, %p191
    %p193 = scmp.ne.s32.totalorder %s182, %s183
    %p194 = scmp.eq.s32.totalorder %s17, 0
    %p195 = por %p193, %p194
    %p196 = scmp.ne.s32.totalorder %s182, %s183
    %p197 = scmp.eq.s32.totalorder %s18, 1
    %p198 = por %p196, %p197
    %p200 = scmp.ne.s32.totalorder %s183, %s199
    %p201 = scmp.eq.s32.totalorder %s18, 0
    %p202 = por %p200, %p201
    %s203 = ssub.s32 %s19, %s38
    %s204 = ssub.s32 %s20, %s34
    %s205 = sor.u32 %s203, %s204
    %s206 = ssub.s32 %s21, %s30
    %s207 = sor.u32 %s205, %s206
    %p208 = scmp.eq.s32.totalorder %s207, 0
    %s210 = sadd.s32 %s209, 1
    %s211 = scalar_select %p208, %s209, %s210
    %p214 = pneg %p208
    %p215 = scmp.eq.s32.totalorder %s12, 1
    %p216 = por %p214, %p215
    %p217 = scmp.ne.s32.totalorder %s209, %s212
    %p218 = scmp.eq.s32.totalorder %s12, 0
    %p219 = por %p217, %p218
    %p220 = scmp.ne.s32.totalorder %s209, %s212
    %p221 = scmp.eq.s32.totalorder %s17, 1
    %p222 = por %p220, %p221
    %p223 = scmp.ne.s32.totalorder %s212, %s213
    %p224 = scmp.eq.s32.totalorder %s17, 0
    %p225 = por %p223, %p224
    %p226 = scmp.ne.s32.totalorder %s212, %s213
    %p227 = scmp.eq.s32.totalorder %s18, 1
    %p228 = por %p226, %p227
    %p230 = scmp.ne.s32.totalorder %s213, %s229
    %p231 = scmp.eq.s32.totalorder %s18, 0
    %p232 = por %p230, %p231
    %p233 = scmp.le.s32.totalorder 1, %s12
    %p234 = scmp.lt.s32.totalorder %s12, 3
    %p235 = pnand %p233, %p234
    %p236 = pneg %p235
    // Predicated region
    $region9: #{basic_down_block.5} parent=5 // pred_check
      _
    $region10: #{basic_down_block.5} parent=5 // pred_check_branch
      %238 = sbr.rel (%p235) target = $region12
    $region11: #{basic_down_block.5} parent=5 // pred_region
      %s239 = ssub.s32 %s12, 1
      // Predicated region
      $region13: #{basic_down_block.5} parent=11 // pred_check
        %p240 = pneg %p117
      $region14: #{basic_down_block.5} parent=11 // pred_check_branch
        %242 = sbr.rel (%p240) target = $region16
      $region15: #{basic_down_block.5} parent=11 // pred_region
        %p243 = scmp.lt.s32.totalorder %s23, 0
        %s244 = scalar_select %p243, %s23, 0
        %s245 = scalar_lea.vmem %s2, %s244
      $region16: #{basic_down_block.5} parent=11 // pred_fallthru
        _
      // Predicated region
      $region17: #{basic_down_block.5} parent=11 // pred_check
        %p246 = pneg %p143
      $region18: #{basic_down_block.5} parent=11 // pred_check_branch
        %248 = sbr.rel (%p246) target = $region20
      $region19: #{basic_down_block.5} parent=11 // pred_region
        %p249 = scmp.lt.s32.totalorder %s23, 0
        %s250 = scalar_select %p249, %s23, 0
        %s251 = scalar_lea.vmem %s3, %s250
      $region20: #{basic_down_block.5} parent=11 // pred_fallthru
        _
      // Predicated region
      $region21: #{basic_down_block.5} parent=11 // pred_check
        %p252 = pneg %p169
      $region22: #{basic_down_block.5} parent=11 // pred_check_branch
        %254 = sbr.rel (%p252) target = $region24
      $region23: #{basic_down_block.5} parent=11 // pred_region
        %p255 = scmp.lt.s32.totalorder %s23, 0
        %s256 = scalar_select %p255, %s23, 0
        %s257 = scalar_lea.vmem %s4, %s256
      $region24: #{basic_down_block.5} parent=11 // pred_fallthru
        _
      // Predicated region
      $region25: #{basic_down_block.5} parent=11 // pred_check
        %p258 = pneg %p195
      $region26: #{basic_down_block.5} parent=11 // pred_check_branch
        %260 = sbr.rel (%p258) target = $region28
      $region27: #{basic_down_block.5} parent=11 // pred_region
        %p261 = scmp.lt.s32.totalorder %s23, 0
        %s262 = scalar_select %p261, %s23, 0
        %s263 = scalar_lea.vmem %s5, %s262
      $region28: #{basic_down_block.5} parent=11 // pred_fallthru
        _
    $region12: #{basic_down_block.5} parent=5 // pred_fallthru
      _
    %p264 = scmp.lt.s32.totalorder %s12, 2
    // Predicated region
    $region29: #{basic_down_block.5} parent=5 // pred_check
      %p265 = pneg %p264
    $region30: #{basic_down_block.5} parent=5 // pred_check_branch
      %267 = sbr.rel (%p265) target = $region32
    $region31: #{basic_down_block.5} parent=5 // pred_region
      // Predicated region
      $region33: #{basic_down_block.5} parent=31 // pred_check
        %p268 = pneg %p55
      $region34: #{basic_down_block.5} parent=31 // pred_check_branch
        %270 = sbr.rel (%p268) target = $region36
      $region35: #{basic_down_block.5} parent=31 // pred_region
        %s271 = smul.u32 8, %s21
        %p272 = scmp.lt.s32.totalorder %s19, 1
        %s273 = scalar_select %p272, %s19, 1
        %p274 = scmp.lt.s32.totalorder %s271, 7
        %s275 = scalar_select %p274, %s271, 7
        %p276 = scmp.lt.s32.totalorder %s20, 0
        %s277 = scalar_select %p276, %s20, 0
        %s278 = sadd.s32 %s277, %s275
        %s279 = smul.addr %s273, 8
        %s280 = sadd.s32 %s278, %s279
        %s281 = smul.addr %s280, 8
        %s282 = scalar_lea.vmem %s0, %s281
        %s283 = smul.u32 8, %s21
      $region36: #{basic_down_block.5} parent=31 // pred_fallthru
        _
      // Predicated region
      $region37: #{basic_down_block.5} parent=31 // pred_check
        %p284 = pneg %p85
      $region38: #{basic_down_block.5} parent=31 // pred_check_branch
        %286 = sbr.rel (%p284) target = $region40
      $region39: #{basic_down_block.5} parent=31 // pred_region
        %s287 = smul.u32 8, %s21
        %p288 = scmp.lt.s32.totalorder %s19, 1
        %s289 = scalar_select %p288, %s19, 1
        %p290 = scmp.lt.s32.totalorder %s287, 7
        %s291 = scalar_select %p290, %s287, 7
        %p292 = scmp.lt.s32.totalorder %s20, 0
        %s293 = scalar_select %p292, %s20, 0
        %s294 = sadd.s32 %s293, %s291
        %s295 = smul.addr %s289, 8
        %s296 = sadd.s32 %s294, %s295
        %s297 = smul.addr %s296, 8
        %s298 = scalar_lea.vmem %s1, %s297
        %s299 = smul.u32 8, %s21
      $region40: #{basic_down_block.5} parent=31 // pred_fallthru
        _
    $region32: #{basic_down_block.5} parent=5 // pred_fallthru
      _
    %p300 = scmp.le.s32.totalorder 1, %s12
    %p301 = scmp.lt.s32.totalorder %s12, 3
    %p302 = pnand %p300, %p301
    %p303 = pneg %p302
    // Predicated region
    $region41: #{basic_down_block.5} parent=5 // pred_check
      _
    $region42: #{basic_down_block.5} parent=5 // pred_check_branch
      %305 = sbr.rel (%p302) target = $region44
    $region43: #{basic_down_block.5} parent=5 // pred_region
      %s306 = ssub.s32 %s12, 1
      %s307 = smul.u32 8, %s24
      %p308 = scmp.lt.s32.totalorder %s22, 1
      %s309 = scalar_select %p308, %s22, 1
      %p310 = scmp.lt.s32.totalorder %s307, 7
      %s311 = scalar_select %p310, %s307, 7
      %p312 = scmp.lt.s32.totalorder %s23, 0
      %s313 = scalar_select %p312, %s23, 0
      %s314 = sadd.s32 %s313, %s311
      %s315 = smul.addr %s309, 8
      %s316 = sadd.s32 %s314, %s315
      %s317 = smul.addr %s316, 8
      %s318 = scalar_lea.vmem %s0, %s317
      %p319 = pneg %p61
      %p320 = pneg %p58
      %s321 = smul.u32 8, %s24
      %p322 = scmp.lt.s32.totalorder %s22, 1
      %s323 = scalar_select %p322, %s22, 1
      %p324 = scmp.lt.s32.totalorder %s321, 7
      %s325 = scalar_select %p324, %s321, 7
      %p326 = scmp.lt.s32.totalorder %s23, 0
      %s327 = scalar_select %p326, %s23, 0
      %s328 = sadd.s32 %s327, %s325
      %s329 = smul.addr %s323, 8
      %s330 = sadd.s32 %s328, %s329
      %s331 = smul.addr %s330, 8
      %s332 = scalar_lea.vmem %s1, %s331
      %p333 = pneg %p91
      %p334 = pneg %p88
      %p335 = scmp.lt.s32.totalorder %s23, 0
      %s336 = scalar_select %p335, %s23, 0
      %s337 = scalar_lea.vmem %s2, %s336
      %p338 = pneg %p117
      %p339 = pneg %p114
      %p340 = scmp.lt.s32.totalorder %s23, 0
      %s341 = scalar_select %p340, %s23, 0
      %s342 = scalar_lea.vmem %s3, %s341
      %p343 = pneg %p143
      %p344 = pneg %p140
      %p345 = scmp.lt.s32.totalorder %s23, 0
      %s346 = scalar_select %p345, %s23, 0
      %s347 = scalar_lea.vmem %s4, %s346
      %p348 = pneg %p169
      %p349 = pneg %p166
      %p350 = scmp.lt.s32.totalorder %s23, 0
      %s351 = scalar_select %p350, %s23, 0
      %s352 = scalar_lea.vmem %s5, %s351
      %p353 = pneg %p195
      %p354 = pneg %p192
      %p355 = pneg %p225
      %p356 = pneg %p222
      %s357 = smul.u32 16, %s23
      %p358 = scmp.lt.s32.totalorder %s22, 1
      %s359 = scalar_select %p358, %s22, 1
      %p360 = scmp.lt.s32.totalorder %s357, 15
      %s361 = scalar_select %p360, %s357, 15
      %p362 = scmp.lt.s32.totalorder %s24, 0
      %s363 = scalar_select %p362, %s24, 0
      %s364 = sadd.s32 %s363, %s361
      %s365 = smul.addr %s359, 16
      %s366 = sadd.s32 %s364, %s365
      %s367 = smul.addr %s366, 8
      %s368 = scalar_lea.vmem %s6, %s367
      %s369 = smul.u32 8, %s24
      %p370 = scmp.lt.s32.totalorder %s22, 1
      %s371 = scalar_select %p370, %s22, 1
      %p372 = scmp.lt.s32.totalorder %s369, 7
      %s373 = scalar_select %p372, %s369, 7
      %p374 = scmp.lt.s32.totalorder %s23, 0
      %s375 = scalar_select %p374, %s23, 0
      %s376 = sadd.s32 %s375, %s373
      %s377 = smul.addr %s371, 8
      %s378 = sadd.s32 %s376, %s377
      %s379 = smul.addr %s378, 8
      %s380 = scalar_lea.vmem %s0, %s379
      %s381 = smul.u32 8, %s24
      %s382 = smul.u32 8, %s24
      %p383 = scmp.lt.s32.totalorder %s22, 1
      %s384 = scalar_select %p383, %s22, 1
      %p385 = scmp.lt.s32.totalorder %s382, 7
      %s386 = scalar_select %p385, %s382, 7
      %p387 = scmp.lt.s32.totalorder %s23, 0
      %s388 = scalar_select %p387, %s23, 0
      %s389 = sadd.s32 %s388, %s386
      %s390 = smul.addr %s384, 8
      %s391 = sadd.s32 %s389, %s390
      %s392 = smul.addr %s391, 8
      %s393 = scalar_lea.vmem %s1, %s392
      %s394 = smul.u32 8, %s24
      %p395 = scmp.lt.s32.totalorder %s23, 0
      %s396 = scalar_select %p395, %s23, 0
      %s397 = scalar_lea.vmem %s2, %s396
      %p398 = scmp.lt.s32.totalorder %s23, 0
      %s399 = scalar_select %p398, %s23, 0
      %s400 = scalar_lea.vmem %s3, %s399
      %p401 = scmp.lt.s32.totalorder %s23, 0
      %s402 = scalar_select %p401, %s23, 0
      %s403 = scalar_lea.vmem %s4, %s402
      %p404 = scmp.lt.s32.totalorder %s23, 0
      %s405 = scalar_select %p404, %s23, 0
      %s406 = scalar_lea.vmem %s5, %s405
      %s407 = smul.u32 16, %s23
      %p408 = scmp.lt.s32.totalorder %s22, 1
      %s409 = scalar_select %p408, %s22, 1
      %p410 = scmp.lt.s32.totalorder %s407, 15
      %s411 = scalar_select %p410, %s407, 15
      %p412 = scmp.lt.s32.totalorder %s24, 0
      %s413 = scalar_select %p412, %s24, 0
      %s414 = sadd.s32 %s413, %s411
      %s415 = smul.addr %s409, 16
      %s416 = sadd.s32 %s414, %s415
      %s417 = smul.addr %s416, 8
      %s418 = scalar_lea.vmem %s6, %s417
      %s419 = smul.u32 16, %s23
      %v420 = vld [vmem:[%s380] sm:$0xff]
      %v421 = vld [vmem:[%s380 + $0x8] sm:$0xff]
      %v422 = vld [vmem:[%s380 + $0x10] sm:$0xff]
      %v423 = vld [vmem:[%s380 + $0x18] sm:$0xff]
      %v424 = vld [vmem:[%s380 + $0x20] sm:$0xff]
      %v425 = vld [vmem:[%s380 + $0x28] sm:$0xff]
      %v426 = vld [vmem:[%s380 + $0x30] sm:$0xff]
      %v427 = vld [vmem:[%s380 + $0x38] sm:$0xff]
      %v428 = vld [vmem:[%s397] sm:$0x1]
      %v430 = vlaneseq
      %v431 = vshrl.u32 %v430, 7
      %v432 = vsub.s32 0, %v431
      %v433 = vrot.slane %v428, %v432
      %v435 = vmul.f32 %v420, %v433
      %v436 = vmul.f32 %v421, %v433
      %v437 = vmul.f32 %v422, %v433
      %v438 = vmul.f32 %v423, %v433
      %v439 = vmul.f32 %v424, %v433
      %v440 = vmul.f32 %v425, %v433
      %v441 = vmul.f32 %v426, %v433
      %v442 = vmul.f32 %v427, %v433
      %v443 = vld [vmem:[%s400] sm:$0x1]
      %v445 = vlaneseq
      %v446 = vshrl.u32 %v445, 7
      %v447 = vsub.s32 0, %v446
      %v448 = vrot.slane %v443, %v447
      %v450 = vadd.f32 %v435, %v448
      %v451 = vadd.f32 %v436, %v448
      %v452 = vadd.f32 %v437, %v448
      %v453 = vadd.f32 %v438, %v448
      %v454 = vadd.f32 %v439, %v448
      %v455 = vadd.f32 %v440, %v448
      %v456 = vadd.f32 %v441, %v448
      %v457 = vadd.f32 %v442, %v448
      %v458 = vld [vmem:[%s393] sm:$0xff]
      %v459 = vld [vmem:[%s393 + $0x8] sm:$0xff]
      %v460 = vld [vmem:[%s393 + $0x10] sm:$0xff]
      %v461 = vld [vmem:[%s393 + $0x18] sm:$0xff]
      %v462 = vld [vmem:[%s393 + $0x20] sm:$0xff]
      %v463 = vld [vmem:[%s393 + $0x28] sm:$0xff]
      %v464 = vld [vmem:[%s393 + $0x30] sm:$0xff]
      %v465 = vld [vmem:[%s393 + $0x38] sm:$0xff]
      %v466 = vld [vmem:[%s403] sm:$0x1]
      %v468 = vlaneseq
      %v469 = vshrl.u32 %v468, 7
      %v470 = vsub.s32 0, %v469
      %v471 = vrot.slane %v466, %v470
      %v473 = vmul.f32 %v458, %v471
      %v474 = vmul.f32 %v459, %v471
      %v475 = vmul.f32 %v460, %v471
      %v476 = vmul.f32 %v461, %v471
      %v477 = vmul.f32 %v462, %v471
      %v478 = vmul.f32 %v463, %v471
      %v479 = vmul.f32 %v464, %v471
      %v480 = vmul.f32 %v465, %v471
      %v481 = vadd.f32 %v450, %v473
      %v482 = vadd.f32 %v451, %v474
      %v483 = vadd.f32 %v452, %v475
      %v484 = vadd.f32 %v453, %v476
      %v485 = vadd.f32 %v454, %v477
      %v486 = vadd.f32 %v455, %v478
      %v487 = vadd.f32 %v456, %v479
      %v488 = vadd.f32 %v457, %v480
      %v489 = vld [vmem:[%s406] sm:$0x1]
      %v491 = vlaneseq
      %v492 = vshrl.u32 %v491, 7
      %v493 = vsub.s32 0, %v492
      %v494 = vrot.slane %v489, %v493
      %v496 = vadd.f32 %v481, %v494
      %v497 = vadd.f32 %v482, %v494
      %v498 = vadd.f32 %v483, %v494
      %v499 = vadd.f32 %v484, %v494
      %v500 = vadd.f32 %v485, %v494
      %v501 = vadd.f32 %v486, %v494
      %v502 = vadd.f32 %v487, %v494
      %v503 = vadd.f32 %v488, %v494
      %v504 = vmax.f32 %v496, 0.0
      %v505 = vmax.f32 %v497, 0.0
      %v506 = vmax.f32 %v498, 0.0
      %v507 = vmax.f32 %v499, 0.0
      %v508 = vmax.f32 %v500, 0.0
      %v509 = vmax.f32 %v501, 0.0
      %v510 = vmax.f32 %v502, 0.0
      %v511 = vmax.f32 %v503, 0.0
      %512 = vxpose.xlu0.b32.start [1/16] %v504, 128
      %513 = vxpose.xlu0.b32.cont [2/16] %v505, 128
      %514 = vxpose.xlu0.b32.cont [3/16] %v506, 128
      %515 = vxpose.xlu0.b32.cont [4/16] %v507, 128
      %516 = vxpose.xlu0.b32.cont [5/16] %v508, 128
      %517 = vxpose.xlu0.b32.cont [6/16] %v509, 128
      %518 = vxpose.xlu0.b32.cont [7/16] %v510, 128
      %519 = vxpose.xlu0.b32.cont [8/16] %v511, 128
      %520 = vxpose.xlu0.b32.cont [9/16] 0.0, 128
      %521 = vxpose.xlu0.b32.cont [10/16] 0.0, 128
      %522 = vxpose.xlu0.b32.cont [11/16] 0.0, 128
      %523 = vxpose.xlu0.b32.cont [12/16] 0.0, 128
      %524 = vxpose.xlu0.b32.cont [13/16] 0.0, 128
      %525 = vxpose.xlu0.b32.cont [14/16] 0.0, 128
      %526 = vxpose.xlu0.b32.cont [15/16] 0.0, 128
      %527 = vxpose.xlu0.b32.end [16/16] 0.0, 128
      %v528 = vpop.trf.xlu0
      %v529 = vpop.trf.xlu0
      %v530 = vpop.trf.xlu0
      %v531 = vpop.trf.xlu0
      %v532 = vpop.trf.xlu0
      %v533 = vpop.trf.xlu0
      %v534 = vpop.trf.xlu0
      %v535 = vpop.trf.xlu0
      %v536 = vpop.trf.xlu0
      %v537 = vpop.trf.xlu0
      %v538 = vpop.trf.xlu0
      %v539 = vpop.trf.xlu0
      %v540 = vpop.trf.xlu0
      %v541 = vpop.trf.xlu0
      %v542 = vpop.trf.xlu0
      %v543 = vpop.trf.xlu0
      %vm544 = vcmask 523264
      %545 = vst.msk [vmem:[%s418] sm:$0xff] %vm544, %v528
      %546 = vst.msk [vmem:[%s418 + $0x8] sm:$0xff] %vm544, %v529
      %547 = vst.msk [vmem:[%s418 + $0x10] sm:$0xff] %vm544, %v530
      %548 = vst.msk [vmem:[%s418 + $0x18] sm:$0xff] %vm544, %v531
      %549 = vst.msk [vmem:[%s418 + $0x20] sm:$0xff] %vm544, %v532
      %550 = vst.msk [vmem:[%s418 + $0x28] sm:$0xff] %vm544, %v533
      %551 = vst.msk [vmem:[%s418 + $0x30] sm:$0xff] %vm544, %v534
      %552 = vst.msk [vmem:[%s418 + $0x38] sm:$0xff] %vm544, %v535
      %553 = vst.msk [vmem:[%s418 + $0x40] sm:$0xff] %vm544, %v536
      %554 = vst.msk [vmem:[%s418 + $0x48] sm:$0xff] %vm544, %v537
      %555 = vst.msk [vmem:[%s418 + $0x50] sm:$0xff] %vm544, %v538
      %556 = vst.msk [vmem:[%s418 + $0x58] sm:$0xff] %vm544, %v539
      %557 = vst.msk [vmem:[%s418 + $0x60] sm:$0xff] %vm544, %v540
      %558 = vst.msk [vmem:[%s418 + $0x68] sm:$0xff] %vm544, %v541
      %559 = vst.msk [vmem:[%s418 + $0x70] sm:$0xff] %vm544, %v542
      %560 = vst.msk [vmem:[%s418 + $0x78] sm:$0xff] %vm544, %v543
      %s561 = smul.u32 16, %s23
      %p562 = scmp.lt.s32.totalorder %s22, 1
      %s563 = scalar_select %p562, %s22, 1
      %p564 = scmp.lt.s32.totalorder %s561, 15
      %s565 = scalar_select %p564, %s561, 15
      %p566 = scmp.lt.s32.totalorder %s24, 0
      %s567 = scalar_select %p566, %s24, 0
      %s568 = sadd.s32 %s567, %s565
      %s569 = smul.addr %s563, 16
      %s570 = sadd.s32 %s568, %s569
      %s571 = smul.addr %s570, 8
      %s572 = scalar_lea.vmem %s6, %s571
      // Predicated region
      $region45: #{basic_down_block.5} parent=43 // pred_check
        %p573 = pneg %p222
      $region46: #{basic_down_block.5} parent=43 // pred_check_branch
        %575 = sbr.rel (%p573) target = $region48
      $region47: #{basic_down_block.5} parent=43 // pred_region
        %s576 = smul.u32 16, %s23
      $region48: #{basic_down_block.5} parent=43 // pred_fallthru
        _
    $region44: #{basic_down_block.5} parent=5 // pred_fallthru
      _
    %p577 = scmp.le.s32.totalorder 2, %s12
    // Predicated region
    $region49: #{basic_down_block.5} parent=5 // pred_check
      %p578 = pneg %p577
    $region50: #{basic_down_block.5} parent=5 // pred_check_branch
      %580 = sbr.rel (%p578) target = $region52
    $region51: #{basic_down_block.5} parent=5 // pred_region
      %s581 = ssub.s32 %s12, 2
      // Predicated region
      $region53: #{basic_down_block.5} parent=51 // pred_check
        %p582 = pneg %p228
      $region54: #{basic_down_block.5} parent=51 // pred_check_branch
        %584 = sbr.rel (%p582) target = $region56
      $region55: #{basic_down_block.5} parent=51 // pred_region
        %s585 = smul.u32 16, %s26
        %p586 = scmp.lt.s32.totalorder %s25, 1
        %s587 = scalar_select %p586, %s25, 1
        %p588 = scmp.lt.s32.totalorder %s585, 15
        %s589 = scalar_select %p588, %s585, 15
        %p590 = scmp.lt.s32.totalorder %s27, 0
        %s591 = scalar_select %p590, %s27, 0
        %s592 = sadd.s32 %s591, %s589
        %s593 = smul.addr %s587, 16
        %s594 = sadd.s32 %s592, %s593
        %s595 = smul.addr %s594, 8
        %s596 = scalar_lea.vmem %s6, %s595
      $region56: #{basic_down_block.5} parent=51 // pred_fallthru
        _
    $region52: #{basic_down_block.5} parent=5 // pred_fallthru
      _
  $region6: #{basic_down_block.5} parent=0 // loop_footer
    %s16 = sadd.s32 1, %s12
  $region7: #{basic_down_block.5} parent=0 // loop_footer_branch
    %11 = sbr.rel target = $region3
  $region8: #{basic_down_block.5} parent=0 // loop_exit
    _

// kernel: basic_down_block.3
$region0: #{basic_down_block.3}
  #allocation0 [shape = 'u32[]', space=smem, size = 0x4, offset = 0x4, fixed_abs, tag = 'smem constant byte address 0x4 - core index']
  #allocation1 [shape = 'u32[144,128]{1,0:T(1,128)}', space=vmem, size = 0x12000, scoped, tag = 'internal scratch']
  %s0 = inlined_call_operand.vmem [shape: f32[2,4,9,9,128], index: 0, kind: input, shape index: {}, may-alias: {0,1}]
  %s1 = inlined_call_operand.vmem [shape: f32[2,4,9,9,128], index: 1, kind: input, shape index: {}, may-alias: {0,1}]
  %s2 = inlined_call_operand.vmem [shape: f32[9,128,128], index: 2, kind: input, shape index: {}]
  %s3 = inlined_call_operand.vmem [shape: f32[128,128], index: 3, kind: input, shape index: {}]
  %s4 = inlined_call_operand.vmem [shape: f32[2,8,8,128], index: 4, kind: output, shape index: {0}]
  %s5 = inlined_call_operand.vmem [shape: f32[2,8,8,128], index: 5, kind: output, shape index: {1}]
  %s6 = inlined_call_operand.vmem [shape: f32[2,1,2,128], index: 6, kind: output, shape index: {2}]
  %s7 = inlined_call_operand.vmem [shape: f32[2,1,2,128], index: 7, kind: output, shape index: {3}]
  %8 = xla_tuple %s4, %s5, %s6, %s7
  %s9 = sld [smem:[#allocation0]]
  $region163: #{basic_down_block.3} parent=0
    _
  %s11 = ssub.s32 1, %s9
  %s12 = scalar_select 0, %s11, %s9
  $region1: #{basic_down_block.3} parent=0
    #allocation2 [shape = 'u8[524288]{0}', space=vmem, size = 0x80000, scoped, tag = 'input window, operand 0']
    #allocation3 [shape = 'u8[65536]{0}', space=vmem, size = 0x10000, scoped, tag = 'input window, operand 1']
    loop: start=0, step=1, limit=4
    $region2: #{basic_down_block.3} parent=1 // loop_pre_header
      _
    $region3: #{basic_down_block.3} parent=1 // loop_header
      %s14 = sphi 0, %s18
      %p15 = scmp.ge.s32.totalorder %s14, 4
      %s21 = sphi 0, %s40
      %s22 = sphi 0, %s36
      %s23 = sphi 0, %s32
      %s24 = sphi 0, %s21
      %s25 = sphi 0, %s22
      %s26 = sphi 0, %s23
      %s27 = sphi 0, %s24
      %s28 = sphi 0, %s25
      %s29 = sphi 0, %s26
      %s45 = sphi 0, %s47
      %s48 = sphi 0, %s45
      %s49 = sphi 0, %s48
      %s65 = sphi 0, %s49
      %s77 = sphi 0, %s79
      %s80 = sphi 0, %s77
      %s81 = sphi 0, %s80
      %s97 = sphi 0, %s81
      %s103 = sphi 0, %s105
      %s106 = sphi 0, %s103
      %s107 = sphi 0, %s106
      %s123 = sphi 0, %s107
      %s129 = sphi 0, %s131
      %s132 = sphi 0, %s129
      %s133 = sphi 0, %s132
      %s149 = sphi 0, %s133
      %s159 = sphi 0, %s161
      %s162 = sphi 0, %s159
      %s163 = sphi 0, %s162
      %s179 = sphi 0, %s163
      %s189 = sphi 0, %s191
      %s192 = sphi 0, %s189
      %s193 = sphi 0, %s192
      %s209 = sphi 0, %s193
      %s219 = sphi 0, %s221
      %s222 = sphi 0, %s219
      %s223 = sphi 0, %s222
      %s239 = sphi 0, %s223
      %s249 = sphi 0, %s251
      %s252 = sphi 0, %s249
      %s253 = sphi 0, %s252
      %s269 = sphi 0, %s253
    $region4: #{basic_down_block.3} parent=1 // loop_header_branch
      %17 = sbr.rel (%p15) target = $region8
    $region5: #{basic_down_block.3} parent=1 // loop_body
      %s19 = ssub.s32 %s14, 1
      %s20 = ssub.s32 %s14, 2
      %s30 = sadd.s32 1, %s23
      %p31 = scmp.ge.s32.totalorder %s30, 1
      %s32 = scalar_select %p31, 0, %s30
      %s33 = sadd.s32 1, %s22
      %s34 = scalar_select %p31, %s33, %s22
      %p35 = scmp.ge.s32.totalorder %s34, 2
      %s36 = scalar_select %p35, 0, %s34
      %s37 = sadd.s32 1, %s21
      %s38 = scalar_select %p35, %s37, %s21
      %p39 = scmp.ge.s32.totalorder %s38, 1
      %s40 = scalar_select %p39, 0, %s38
      %s41 = ssub.s32 %s22, %s36
      %s42 = ssub.s32 %s23, %s32
      %s43 = sor.u32 %s41, %s42
      %p44 = scmp.eq.s32.totalorder %s43, 0
      %s46 = sadd.s32 %s45, 1
      %s47 = scalar_select %p44, %s45, %s46
      %p50 = pneg %p44
      %p51 = scmp.eq.s32.totalorder %s14, 1
      %p52 = por %p50, %p51
      %p53 = scmp.ne.s32.totalorder %s45, %s48
      %p54 = scmp.eq.s32.totalorder %s14, 0
      %p55 = por %p53, %p54
      %p56 = scmp.ne.s32.totalorder %s45, %s48
      %p57 = scmp.eq.s32.totalorder %s19, 1
      %p58 = por %p56, %p57
      %p59 = scmp.ne.s32.totalorder %s48, %s49
      %p60 = scmp.eq.s32.totalorder %s19, 0
      %p61 = por %p59, %p60
      %p62 = scmp.ne.s32.totalorder %s48, %s49
      %p63 = scmp.eq.s32.totalorder %s20, 1
      %p64 = por %p62, %p63
      %p66 = scmp.ne.s32.totalorder %s49, %s65
      %p67 = scmp.eq.s32.totalorder %s20, 0
      %p68 = por %p66, %p67
      %s69 = smul.u32 %s23, 8
      %s70 = sadd.s32 %s69, 8
      %s71 = smul.u32 %s32, 8
      %s72 = sadd.s32 %s71, 8
      %s73 = ssub.s32 %s22, %s36
      %s74 = ssub.s32 %s70, %s72
      %s75 = sor.u32 %s73, %s74
      %p76 = scmp.eq.s32.totalorder %s75, 0
      %s78 = sadd.s32 %s77, 1
      %s79 = scalar_select %p76, %s77, %s78
      %p82 = pneg %p76
      %p83 = scmp.eq.s32.totalorder %s14, 1
      %p84 = por %p82, %p83
      %p85 = scmp.ne.s32.totalorder %s77, %s80
      %p86 = scmp.eq.s32.totalorder %s14, 0
      %p87 = por %p85, %p86
      %p88 = scmp.ne.s32.totalorder %s77, %s80
      %p89 = scmp.eq.s32.totalorder %s19, 1
      %p90 = por %p88, %p89
      %p91 = scmp.ne.s32.totalorder %s80, %s81
      %p92 = scmp.eq.s32.totalorder %s19, 0
      %p93 = por %p91, %p92
      %p94 = scmp.ne.s32.totalorder %s80, %s81
      %p95 = scmp.eq.s32.totalorder %s20, 1
      %p96 = por %p94, %p95
      %p98 = scmp.ne.s32.totalorder %s81, %s97
      %p99 = scmp.eq.s32.totalorder %s20, 0
      %p100 = por %p98, %p99
      %s101 = ssub.s32 %s21, %s40
      %p102 = scmp.eq.s32.totalorder %s101, 0
      %s104 = sadd.s32 %s103, 1
      %s105 = scalar_select %p102, %s103, %s104
      %p108 = pneg %p102
      %p109 = scmp.eq.s32.totalorder %s14, 1
      %p110 = por %p108, %p109
      %p111 = scmp.ne.s32.totalorder %s103, %s106
      %p112 = scmp.eq.s32.totalorder %s14, 0
      %p113 = por %p111, %p112
      %p114 = scmp.ne.s32.totalorder %s103, %s106
      %p115 = scmp.eq.s32.totalorder %s19, 1
      %p116 = por %p114, %p115
      %p117 = scmp.ne.s32.totalorder %s106, %s107
      %p118 = scmp.eq.s32.totalorder %s19, 0
      %p119 = por %p117, %p118
      %p120 = scmp.ne.s32.totalorder %s106, %s107
      %p121 = scmp.eq.s32.totalorder %s20, 1
      %p122 = por %p120, %p121
      %p124 = scmp.ne.s32.totalorder %s107, %s123
      %p125 = scmp.eq.s32.totalorder %s20, 0
      %p126 = por %p124, %p125
      %s127 = ssub.s32 %s21, %s40
      %p128 = scmp.eq.s32.totalorder %s127, 0
      %s130 = sadd.s32 %s129, 1
      %s131 = scalar_select %p128, %s129, %s130
      %p134 = pneg %p128
      %p135 = scmp.eq.s32.totalorder %s14, 1
      %p136 = por %p134, %p135
      %p137 = scmp.ne.s32.totalorder %s129, %s132
      %p138 = scmp.eq.s32.totalorder %s14, 0
      %p139 = por %p137, %p138
      %p140 = scmp.ne.s32.totalorder %s129, %s132
      %p141 = scmp.eq.s32.totalorder %s19, 1
      %p142 = por %p140, %p141
      %p143 = scmp.ne.s32.totalorder %s132, %s133
      %p144 = scmp.eq.s32.totalorder %s19, 0
      %p145 = por %p143, %p144
      %p146 = scmp.ne.s32.totalorder %s132, %s133
      %p147 = scmp.eq.s32.totalorder %s20, 1
      %p148 = por %p146, %p147
      %p150 = scmp.ne.s32.totalorder %s133, %s149
      %p151 = scmp.eq.s32.totalorder %s20, 0
      %p152 = por %p150, %p151
      %s153 = ssub.s32 %s22, %s36
      %s154 = ssub.s32 %s23, %s32
      %s155 = sor.u32 %s153, %s154
      %s156 = ssub.s32 %s21, %s40
      %s157 = sor.u32 %s155, %s156
      %p158 = scmp.eq.s32.totalorder %s157, 0
      %s160 = sadd.s32 %s159, 1
      %s161 = scalar_select %p158, %s159, %s160
      %p164 = pneg %p158
      %p165 = scmp.eq.s32.totalorder %s14, 1
      %p166 = por %p164, %p165
      %p167 = scmp.ne.s32.totalorder %s159, %s162
      %p168 = scmp.eq.s32.totalorder %s14, 0
      %p169 = por %p167, %p168
      %p170 = scmp.ne.s32.totalorder %s159, %s162
      %p171 = scmp.eq.s32.totalorder %s19, 1
      %p172 = por %p170, %p171
      %p173 = scmp.ne.s32.totalorder %s162, %s163
      %p174 = scmp.eq.s32.totalorder %s19, 0
      %p175 = por %p173, %p174
      %p176 = scmp.ne.s32.totalorder %s162, %s163
      %p177 = scmp.eq.s32.totalorder %s20, 1
      %p178 = por %p176, %p177
      %p180 = scmp.ne.s32.totalorder %s163, %s179
      %p181 = scmp.eq.s32.totalorder %s20, 0
      %p182 = por %p180, %p181
      %s183 = ssub.s32 %s22, %s36
      %s184 = ssub.s32 %s23, %s32
      %s185 = sor.u32 %s183, %s184
      %s186 = ssub.s32 %s21, %s40
      %s187 = sor.u32 %s185, %s186
      %p188 = scmp.eq.s32.totalorder %s187, 0
      %s190 = sadd.s32 %s189, 1
      %s191 = scalar_select %p188, %s189, %s190
      %p194 = pneg %p188
      %p195 = scmp.eq.s32.totalorder %s14, 1
      %p196 = por %p194, %p195
      %p197 = scmp.ne.s32.totalorder %s189, %s192
      %p198 = scmp.eq.s32.totalorder %s14, 0
      %p199 = por %p197, %p198
      %p200 = scmp.ne.s32.totalorder %s189, %s192
      %p201 = scmp.eq.s32.totalorder %s19, 1
      %p202 = por %p200, %p201
      %p203 = scmp.ne.s32.totalorder %s192, %s193
      %p204 = scmp.eq.s32.totalorder %s19, 0
      %p205 = por %p203, %p204
      %p206 = scmp.ne.s32.totalorder %s192, %s193
      %p207 = scmp.eq.s32.totalorder %s20, 1
      %p208 = por %p206, %p207
      %p210 = scmp.ne.s32.totalorder %s193, %s209
      %p211 = scmp.eq.s32.totalorder %s20, 0
      %p212 = por %p210, %p211
      %s213 = ssub.s32 %s22, %s36
      %s214 = ssub.s32 %s23, %s32
      %s215 = sor.u32 %s213, %s214
      %s216 = ssub.s32 %s21, %s40
      %s217 = sor.u32 %s215, %s216
      %p218 = scmp.eq.s32.totalorder %s217, 0
      %s220 = sadd.s32 %s219, 1
      %s221 = scalar_select %p218, %s219, %s220
      %p224 = pneg %p218
      %p225 = scmp.eq.s32.totalorder %s14, 1
      %p226 = por %p224, %p225
      %p227 = scmp.ne.s32.totalorder %s219, %s222
      %p228 = scmp.eq.s32.totalorder %s14, 0
      %p229 = por %p227, %p228
      %p230 = scmp.ne.s32.totalorder %s219, %s222
      %p231 = scmp.eq.s32.totalorder %s19, 1
      %p232 = por %p230, %p231
      %p233 = scmp.ne.s32.totalorder %s222, %s223
      %p234 = scmp.eq.s32.totalorder %s19, 0
      %p235 = por %p233, %p234
      %p236 = scmp.ne.s32.totalorder %s222, %s223
      %p237 = scmp.eq.s32.totalorder %s20, 1
      %p238 = por %p236, %p237
      %p240 = scmp.ne.s32.totalorder %s223, %s239
      %p241 = scmp.eq.s32.totalorder %s20, 0
      %p242 = por %p240, %p241
      %s243 = ssub.s32 %s22, %s36
      %s244 = ssub.s32 %s23, %s32
      %s245 = sor.u32 %s243, %s244
      %s246 = ssub.s32 %s21, %s40
      %s247 = sor.u32 %s245, %s246
      %p248 = scmp.eq.s32.totalorder %s247, 0
      %s250 = sadd.s32 %s249, 1
      %s251 = scalar_select %p248, %s249, %s250
      %p254 = pneg %p248
      %p255 = scmp.eq.s32.totalorder %s14, 1
      %p256 = por %p254, %p255
      %p257 = scmp.ne.s32.totalorder %s249, %s252
      %p258 = scmp.eq.s32.totalorder %s14, 0
      %p259 = por %p257, %p258
      %p260 = scmp.ne.s32.totalorder %s249, %s252
      %p261 = scmp.eq.s32.totalorder %s19, 1
      %p262 = por %p260, %p261
      %p263 = scmp.ne.s32.totalorder %s252, %s253
      %p264 = scmp.eq.s32.totalorder %s19, 0
      %p265 = por %p263, %p264
      %p266 = scmp.ne.s32.totalorder %s252, %s253
      %p267 = scmp.eq.s32.totalorder %s20, 1
      %p268 = por %p266, %p267
      %p270 = scmp.ne.s32.totalorder %s253, %s269
      %p271 = scmp.eq.s32.totalorder %s20, 0
      %p272 = por %p270, %p271
      %p273 = scmp.le.s32.totalorder 1, %s14
      %p274 = scmp.lt.s32.totalorder %s14, 3
      %p275 = pnand %p273, %p274
      %p276 = pneg %p275
      // Predicated region
      $region9: #{basic_down_block.3} parent=5 // pred_check
        _
      $region10: #{basic_down_block.3} parent=5 // pred_check_branch
        %278 = sbr.rel (%p275) target = $region12
      $region11: #{basic_down_block.3} parent=5 // pred_region
        %s279 = ssub.s32 %s14, 1
        // Predicated region
        $region13: #{basic_down_block.3} parent=11 // pred_check
          %p280 = pneg %p119
        $region14: #{basic_down_block.3} parent=11 // pred_check_branch
          %282 = sbr.rel (%p280) target = $region16
        $region15: #{basic_down_block.3} parent=11 // pred_region
          %p283 = scmp.lt.s32.totalorder %s24, 0
          %s284 = scalar_select %p283, %s24, 0
          %s285 = smul.addr %s284, 8
          %s286 = scalar_lea.vmem %s2, %s285
        $region16: #{basic_down_block.3} parent=11 // pred_fallthru
          _
        // Predicated region
        $region17: #{basic_down_block.3} parent=11 // pred_check
          %p287 = pneg %p145
        $region18: #{basic_down_block.3} parent=11 // pred_check_branch
          %289 = sbr.rel (%p287) target = $region20
        $region19: #{basic_down_block.3} parent=11 // pred_region
          %p290 = scmp.lt.s32.totalorder %s24, 0
          %s291 = scalar_select %p290, %s24, 0
          %s292 = smul.addr %s291, 8
          %s293 = scalar_lea.vmem %s3, %s292
        $region20: #{basic_down_block.3} parent=11 // pred_fallthru
          _
      $region12: #{basic_down_block.3} parent=5 // pred_fallthru
        _
      %p294 = scmp.lt.s32.totalorder %s14, 2
      // Predicated region
      $region21: #{basic_down_block.3} parent=5 // pred_check
        %p295 = pneg %p294
      $region22: #{basic_down_block.3} parent=5 // pred_check_branch
        %297 = sbr.rel (%p295) target = $region24
      $region23: #{basic_down_block.3} parent=5 // pred_region
        // Predicated region
        $region25: #{basic_down_block.3} parent=23 // pred_check
          %p298 = pneg %p55
        $region26: #{basic_down_block.3} parent=23 // pred_check_branch
          %300 = sbr.rel (%p298) target = $region28
        $region27: #{basic_down_block.3} parent=23 // pred_region
          %s301 = sand.u32 %s45, 1
          %s302 = sand.u32 %s45, 1
          %s303 = smul.addr %s302, 512
          %s304 = scalar_lea.vmem [#allocation2], %s303
          %s305 = smul.u32 8, %s23
          %s306 = ssub.s32 9, %s305
          %p307 = scmp.lt.s32.totalorder %s306, 8
          %s308 = scalar_select %p307, %s306, 8
          %s309 = smul.u32 512, %s308
          %s310 = smul.u32 %s309, 2
          %p311 = scmp.ne.s32.totalorder 0, %s310
          %s312 = smul.addr %s305, 2
          %s313 = smul.addr %s22, 72
          %s314 = sadd.s32 %s312, %s313
          %s315 = smul.addr %s314, 8
          %s316 = scalar_lea.vmem %s0, %s315
          %s317 = smul.u32 %s308, 2
          // Predicated region
          $region29: #{basic_down_block.3} parent=27 // pred_check
            %p318 = pneg %p311
          $region30: #{basic_down_block.3} parent=27 // pred_check_branch
            %320 = sbr.rel (%p318) target = $region32
          $region31: #{basic_down_block.3} parent=27 // pred_region
            // Predicated region
            $region33: #{basic_down_block.3} parent=31 // pred_check
              _
            $region34: #{basic_down_block.3} parent=31 // pred_check_branch
              %322 = sbr.rel (0) target = $region36
            $region35: #{basic_down_block.3} parent=31 // pred_region
              // Predicated region
              $region55: #{basic_down_block.3} parent=35 // pred_check
                _
              $region56: #{basic_down_block.3} parent=35 // pred_check_branch
                %503 = sbr.rel (0) target = $region58
              $region57: #{basic_down_block.3} parent=35 // pred_region
                %s504 = sshrl.u32 %s317, 4
                // While loop
                $region59: #{basic_down_block.3} parent=57 // loop_pre_header
                  _
                $region60: #{basic_down_block.3} parent=57 // loop_header
                  %s506 = sphi 0, %s508
                  %p507 = scmp.ge.s32.totalorder %s506, %s504
                  %s511 = sphi 0, %s644
                  %s512 = sphi %s316, %s647
                  %s513 = sphi %s304, %s648
                $region61: #{basic_down_block.3} parent=57 // loop_header_branch
                  %510 = sbr.rel (%p507) target = $region65
                $region62: #{basic_down_block.3} parent=57 // loop_body
                  %v514 = vld [vmem:[%s512] sm:$0xff]
                  %515 = vst [vmem:[%s513] sm:$0xff] %v514
                  %v516 = vld [vmem:[%s512 + $0x8] sm:$0xff]
                  %517 = vst [vmem:[%s513 + $0x8] sm:$0xff] %v516
                  %v518 = vld [vmem:[%s512 + $0x10] sm:$0xff]
                  %519 = vst [vmem:[%s513 + $0x10] sm:$0xff] %v518
                  %v520 = vld [vmem:[%s512 + $0x18] sm:$0xff]
                  %521 = vst [vmem:[%s513 + $0x18] sm:$0xff] %v520
                  %v522 = vld [vmem:[%s512 + $0x20] sm:$0xff]
                  %523 = vst [vmem:[%s513 + $0x20] sm:$0xff] %v522
                  %v524 = vld [vmem:[%s512 + $0x28] sm:$0xff]
                  %525 = vst [vmem:[%s513 + $0x28] sm:$0xff] %v524
                  %v526 = vld [vmem:[%s512 + $0x30] sm:$0xff]
                  %527 = vst [vmem:[%s513 + $0x30] sm:$0xff] %v526
                  %v528 = vld [vmem:[%s512 + $0x38] sm:$0xff]
                  %529 = vst [vmem:[%s513 + $0x38] sm:$0xff] %v528
                  %v530 = vld [vmem:[%s512 + $0x40] sm:$0xff]
                  %531 = vst [vmem:[%s513 + $0x40] sm:$0xff] %v530
                  %v532 = vld [vmem:[%s512 + $0x48] sm:$0xff]
                  %533 = vst [vmem:[%s513 + $0x48] sm:$0xff] %v532
                  %v534 = vld [vmem:[%s512 + $0x50] sm:$0xff]
                  %535 = vst [vmem:[%s513 + $0x50] sm:$0xff] %v534
                  %v536 = vld [vmem:[%s512 + $0x58] sm:$0xff]
                  %537 = vst [vmem:[%s513 + $0x58] sm:$0xff] %v536
                  %v538 = vld [vmem:[%s512 + $0x60] sm:$0xff]
                  %539 = vst [vmem:[%s513 + $0x60] sm:$0xff] %v538
                  %v540 = vld [vmem:[%s512 + $0x68] sm:$0xff]
                  %541 = vst [vmem:[%s513 + $0x68] sm:$0xff] %v540
                  %v542 = vld [vmem:[%s512 + $0x70] sm:$0xff]
                  %543 = vst [vmem:[%s513 + $0x70] sm:$0xff] %v542
                  %v544 = vld [vmem:[%s512 + $0x78] sm:$0xff]
                  %545 = vst [vmem:[%s513 + $0x78] sm:$0xff] %v544
                  %v546 = vld [vmem:[%s512 + $0x90] sm:$0xff]
                  %547 = vst [vmem:[%s513 + $0x80] sm:$0xff] %v546
                  %v548 = vld [vmem:[%s512 + $0x98] sm:$0xff]
                  %549 = vst [vmem:[%s513 + $0x88] sm:$0xff] %v548
                  %v550 = vld [vmem:[%s512 + $0xa0] sm:$0xff]
                  %551 = vst [vmem:[%s513 + $0x90] sm:$0xff] %v550
                  %v552 = vld [vmem:[%s512 + $0xa8] sm:$0xff]
                  %553 = vst [vmem:[%s513 + $0x98] sm:$0xff] %v552
                  %v554 = vld [vmem:[%s512 + $0xb0] sm:$0xff]
                  %555 = vst [vmem:[%s513 + $0xa0] sm:$0xff] %v554
                  %v556 = vld [vmem:[%s512 + $0xb8] sm:$0xff]
                  %557 = vst [vmem:[%s513 + $0xa8] sm:$0xff] %v556
                  %v558 = vld [vmem:[%s512 + $0xc0] sm:$0xff]
                  %559 = vst [vmem:[%s513 + $0xb0] sm:$0xff] %v558
                  %v560 = vld [vmem:[%s512 + $0xc8] sm:$0xff]
                  %561 = vst [vmem:[%s513 + $0xb8] sm:$0xff] %v560
                  %v562 = vld [vmem:[%s512 + $0xd0] sm:$0xff]
                  %563 = vst [vmem:[%s513 + $0xc0] sm:$0xff] %v562
                  %v564 = vld [vmem:[%s512 + $0xd8] sm:$0xff]
                  %565 = vst [vmem:[%s513 + $0xc8] sm:$0xff] %v564
                  %v566 = vld [vmem:[%s512 + $0xe0] sm:$0xff]
                  %567 = vst [vmem:[%s513 + $0xd0] sm:$0xff] %v566
                  %v568 = vld [vmem:[%s512 + $0xe8] sm:$0xff]
                  %569 = vst [vmem:[%s513 + $0xd8] sm:$0xff] %v568
                  %v570 = vld [vmem:[%s512 + $0xf0] sm:$0xff]
                  %571 = vst [vmem:[%s513 + $0xe0] sm:$0xff] %v570
                  %v572 = vld [vmem:[%s512 + $0xf8] sm:$0xff]
                  %573 = vst [vmem:[%s513 + $0xe8] sm:$0xff] %v572
                  %v574 = vld [vmem:[%s512 + $0x100] sm:$0xff]
                  %575 = vst [vmem:[%s513 + $0xf0] sm:$0xff] %v574
                  %v576 = vld [vmem:[%s512 + $0x108] sm:$0xff]
                  %577 = vst [vmem:[%s513 + $0xf8] sm:$0xff] %v576
                  %v578 = vld [vmem:[%s512 + $0x120] sm:$0xff]
                  %579 = vst [vmem:[%s513 + $0x100] sm:$0xff] %v578
                  %v580 = vld [vmem:[%s512 + $0x128] sm:$0xff]
                  %581 = vst [vmem:[%s513 + $0x108] sm:$0xff] %v580
                  %v582 = vld [vmem:[%s512 + $0x130] sm:$0xff]
                  %583 = vst [vmem:[%s513 + $0x110] sm:$0xff] %v582
                  %v584 = vld [vmem:[%s512 + $0x138] sm:$0xff]
                  %585 = vst [vmem:[%s513 + $0x118] sm:$0xff] %v584
                  %v586 = vld [vmem:[%s512 + $0x140] sm:$0xff]
                  %587 = vst [vmem:[%s513 + $0x120] sm:$0xff] %v586
                  %v588 = vld [vmem:[%s512 + $0x148] sm:$0xff]
                  %589 = vst [vmem:[%s513 + $0x128] sm:$0xff] %v588
                  %v590 = vld [vmem:[%s512 + $0x150] sm:$0xff]
                  %591 = vst [vmem:[%s513 + $0x130] sm:$0xff] %v590
                  %v592 = vld [vmem:[%s512 + $0x158] sm:$0xff]
                  %593 = vst [vmem:[%s513 + $0x138] sm:$0xff] %v592
                  %v594 = vld [vmem:[%s512 + $0x160] sm:$0xff]
                  %595 = vst [vmem:[%s513 + $0x140] sm:$0xff] %v594
                  %v596 = vld [vmem:[%s512 + $0x168] sm:$0xff]
                  %597 = vst [vmem:[%s513 + $0x148] sm:$0xff] %v596
                  %v598 = vld [vmem:[%s512 + $0x170] sm:$0xff]
                  %599 = vst [vmem:[%s513 + $0x150] sm:$0xff] %v598
                  %v600 = vld [vmem:[%s512 + $0x178] sm:$0xff]
                  %601 = vst [vmem:[%s513 + $0x158] sm:$0xff] %v600
                  %v602 = vld [vmem:[%s512 + $0x180] sm:$0xff]
                  %603 = vst [vmem:[%s513 + $0x160] sm:$0xff] %v602
                  %v604 = vld [vmem:[%s512 + $0x188] sm:$0xff]
                  %605 = vst [vmem:[%s513 + $0x168] sm:$0xff] %v604
                  %v606 = vld [vmem:[%s512 + $0x190] sm:$0xff]
                  %607 = vst [vmem:[%s513 + $0x170] sm:$0xff] %v606
                  %v608 = vld [vmem:[%s512 + $0x198] sm:$0xff]
                  %609 = vst [vmem:[%s513 + $0x178] sm:$0xff] %v608
                  %v610 = vld [vmem:[%s512 + $0x1b0] sm:$0xff]
                  %611 = vst [vmem:[%s513 + $0x180] sm:$0xff] %v610
                  %v612 = vld [vmem:[%s512 + $0x1b8] sm:$0xff]
                  %613 = vst [vmem:[%s513 + $0x188] sm:$0xff] %v612
                  %v614 = vld [vmem:[%s512 + $0x1c0] sm:$0xff]
                  %615 = vst [vmem:[%s513 + $0x190] sm:$0xff] %v614
                  %v616 = vld [vmem:[%s512 + $0x1c8] sm:$0xff]
                  %617 = vst [vmem:[%s513 + $0x198] sm:$0xff] %v616
                  %v618 = vld [vmem:[%s512 + $0x1d0] sm:$0xff]
                  %619 = vst [vmem:[%s513 + $0x1a0] sm:$0xff] %v618
                  %v620 = vld [vmem:[%s512 + $0x1d8] sm:$0xff]
                  %621 = vst [vmem:[%s513 + $0x1a8] sm:$0xff] %v620
                  %v622 = vld [vmem:[%s512 + $0x1e0] sm:$0xff]
                  %623 = vst [vmem:[%s513 + $0x1b0] sm:$0xff] %v622
                  %v624 = vld [vmem:[%s512 + $0x1e8] sm:$0xff]
                  %625 = vst [vmem:[%s513 + $0x1b8] sm:$0xff] %v624
                  %v626 = vld [vmem:[%s512 + $0x1f0] sm:$0xff]
                  %627 = vst [vmem:[%s513 + $0x1c0] sm:$0xff] %v626
                  %v628 = vld [vmem:[%s512 + $0x1f8] sm:$0xff]
                  %629 = vst [vmem:[%s513 + $0x1c8] sm:$0xff] %v628
                  %v630 = vld [vmem:[%s512 + $0x200] sm:$0xff]
                  %631 = vst [vmem:[%s513 + $0x1d0] sm:$0xff] %v630
                  %v632 = vld [vmem:[%s512 + $0x208] sm:$0xff]
                  %633 = vst [vmem:[%s513 + $0x1d8] sm:$0xff] %v632
                  %v634 = vld [vmem:[%s512 + $0x210] sm:$0xff]
                  %635 = vst [vmem:[%s513 + $0x1e0] sm:$0xff] %v634
                  %v636 = vld [vmem:[%s512 + $0x218] sm:$0xff]
                  %637 = vst [vmem:[%s513 + $0x1e8] sm:$0xff] %v636
                  %v638 = vld [vmem:[%s512 + $0x220] sm:$0xff]
                  %639 = vst [vmem:[%s513 + $0x1f0] sm:$0xff] %v638
                  %v640 = vld [vmem:[%s512 + $0x228] sm:$0xff]
                  %641 = vst [vmem:[%s513 + $0x1f8] sm:$0xff] %v640
                  %s642 = sadd.s32 1, %s511
                  %p643 = scmp.ge.s32.totalorder %s642, %s504
                  %s644 = scalar_select %p643, 0, %s642
                  %s645 = smul.u32 %s644, 128
                  %s646 = smul.u32 %s644, 128
                  %s647 = scalar_lea.vmem %s316, %s645
                  %s648 = scalar_lea.vmem %s304, %s646 [#allocation2]
                $region63: #{basic_down_block.3} parent=57 // loop_footer
                  %s508 = sadd.s32 %s506, 1
                $region64: #{basic_down_block.3} parent=57 // loop_footer_branch
                  %505 = sbr.rel target = $region60
                $region65: #{basic_down_block.3} parent=57 // loop_exit
                  _
                %s649 = sshrl.u32 %s317, 4
                %s650 = sand.u32 %s317, 15
                %s651 = smul.u32 %s649, 16
                %s652 = smul.u32 8, %s651
                %s653 = scalar_lea.vmem %s316, %s652
                %s654 = smul.u32 8, %s651
                %s655 = scalar_lea.vmem %s304, %s654 [#allocation2]
                // While loop
                $region66: #{basic_down_block.3} parent=57 // loop_pre_header
                  _
                $region67: #{basic_down_block.3} parent=57 // loop_header
                  %s657 = sphi 0, %s659
                  %p658 = scmp.ge.s32.totalorder %s657, %s650
                  %s662 = sphi 0, %s675
                  %s663 = sphi %s653, %s678
                  %s664 = sphi %s655, %s679
                $region68: #{basic_down_block.3} parent=57 // loop_header_branch
                  %661 = sbr.rel (%p658) target = $region72
                $region69: #{basic_down_block.3} parent=57 // loop_body
                  %v665 = vld [vmem:[%s663] sm:$0xff]
                  %666 = vst [vmem:[%s664] sm:$0xff] %v665
                  %v667 = vld [vmem:[%s663 + $0x90] sm:$0xff]
                  %668 = vst [vmem:[%s664 + $0x80] sm:$0xff] %v667
                  %v669 = vld [vmem:[%s663 + $0x120] sm:$0xff]
                  %670 = vst [vmem:[%s664 + $0x100] sm:$0xff] %v669
                  %v671 = vld [vmem:[%s663 + $0x1b0] sm:$0xff]
                  %672 = vst [vmem:[%s664 + $0x180] sm:$0xff] %v671
                  %s673 = sadd.s32 1, %s662
                  %p674 = scmp.ge.s32.totalorder %s673, %s650
                  %s675 = scalar_select %p674, 0, %s673
                  %s676 = smul.u32 %s675, 8
                  %s677 = smul.u32 %s675, 8
                  %s678 = scalar_lea.vmem %s653, %s676
                  %s679 = scalar_lea.vmem %s655, %s677 [#allocation2]
                $region70: #{basic_down_block.3} parent=57 // loop_footer
                  %s659 = sadd.s32 %s657, 1
                $region71: #{basic_down_block.3} parent=57 // loop_footer_branch
                  %656 = sbr.rel target = $region67
                $region72: #{basic_down_block.3} parent=57 // loop_exit
                  _
              $region58: #{basic_down_block.3} parent=35 // pred_fallthru
                _
              // Predicated region
              $region73: #{basic_down_block.3} parent=35 // pred_check
                _
              $region74: #{basic_down_block.3} parent=35 // pred_check_branch
                %681 = sbr.rel target = $region76
              $region75: #{basic_down_block.3} parent=35 // pred_region
                _
              $region76: #{basic_down_block.3} parent=35 // pred_fallthru
                _
            $region36: #{basic_down_block.3} parent=31 // pred_fallthru
              _
            // Predicated region
            $region37: #{basic_down_block.3} parent=31 // pred_check
              _
            $region38: #{basic_down_block.3} parent=31 // pred_check_branch
              %324 = sbr.rel target = $region40
            $region39: #{basic_down_block.3} parent=31 // pred_region
              %s326 = sshrl.u32 %s317, 4
              // While loop
              $region41: #{basic_down_block.3} parent=39 // loop_pre_header
                _
              $region42: #{basic_down_block.3} parent=39 // loop_header
                %s328 = sphi 0, %s330
                %p329 = scmp.ge.s32.totalorder %s328, %s326
                %s333 = sphi 0, %s466
                %s334 = sphi %s316, %s469
                %s335 = sphi %s304, %s470
              $region43: #{basic_down_block.3} parent=39 // loop_header_branch
                %332 = sbr.rel (%p329) target = $region47
              $region44: #{basic_down_block.3} parent=39 // loop_body
                %v336 = vld [vmem:[%s334] sm:$0xff]
                %337 = vst [vmem:[%s335] sm:$0xff] %v336
                %v338 = vld [vmem:[%s334 + $0x8] sm:$0xff]
                %339 = vst [vmem:[%s335 + $0x8] sm:$0xff] %v338
                %v340 = vld [vmem:[%s334 + $0x10] sm:$0xff]
                %341 = vst [vmem:[%s335 + $0x10] sm:$0xff] %v340
                %v342 = vld [vmem:[%s334 + $0x18] sm:$0xff]
                %343 = vst [vmem:[%s335 + $0x18] sm:$0xff] %v342
                %v344 = vld [vmem:[%s334 + $0x20] sm:$0xff]
                %345 = vst [vmem:[%s335 + $0x20] sm:$0xff] %v344
                %v346 = vld [vmem:[%s334 + $0x28] sm:$0xff]
                %347 = vst [vmem:[%s335 + $0x28] sm:$0xff] %v346
                %v348 = vld [vmem:[%s334 + $0x30] sm:$0xff]
                %349 = vst [vmem:[%s335 + $0x30] sm:$0xff] %v348
                %v350 = vld [vmem:[%s334 + $0x38] sm:$0xff]
                %351 = vst [vmem:[%s335 + $0x38] sm:$0xff] %v350
                %v352 = vld [vmem:[%s334 + $0x40] sm:$0xff]
                %353 = vst [vmem:[%s335 + $0x40] sm:$0xff] %v352
                %v354 = vld [vmem:[%s334 + $0x48] sm:$0xff]
                %355 = vst [vmem:[%s335 + $0x48] sm:$0xff] %v354
                %v356 = vld [vmem:[%s334 + $0x50] sm:$0xff]
                %357 = vst [vmem:[%s335 + $0x50] sm:$0xff] %v356
                %v358 = vld [vmem:[%s334 + $0x58] sm:$0xff]
                %359 = vst [vmem:[%s335 + $0x58] sm:$0xff] %v358
                %v360 = vld [vmem:[%s334 + $0x60] sm:$0xff]
                %361 = vst [vmem:[%s335 + $0x60] sm:$0xff] %v360
                %v362 = vld [vmem:[%s334 + $0x68] sm:$0xff]
                %363 = vst [vmem:[%s335 + $0x68] sm:$0xff] %v362
                %v364 = vld [vmem:[%s334 + $0x70] sm:$0xff]
                %365 = vst [vmem:[%s335 + $0x70] sm:$0xff] %v364
                %v366 = vld [vmem:[%s334 + $0x78] sm:$0xff]
                %367 = vst [vmem:[%s335 + $0x78] sm:$0xff] %v366
                %v368 = vld [vmem:[%s334 + $0x90] sm:$0xff]
                %369 = vst [vmem:[%s335 + $0x80] sm:$0xff] %v368
                %v370 = vld [vmem:[%s334 + $0x98] sm:$0xff]
                %371 = vst [vmem:[%s335 + $0x88] sm:$0xff] %v370
                %v372 = vld [vmem:[%s334 + $0xa0] sm:$0xff]
                %373 = vst [vmem:[%s335 + $0x90] sm:$0xff] %v372
                %v374 = vld [vmem:[%s334 + $0xa8] sm:$0xff]
                %375 = vst [vmem:[%s335 + $0x98] sm:$0xff] %v374
                %v376 = vld [vmem:[%s334 + $0xb0] sm:$0xff]
                %377 = vst [vmem:[%s335 + $0xa0] sm:$0xff] %v376
                %v378 = vld [vmem:[%s334 + $0xb8] sm:$0xff]
                %379 = vst [vmem:[%s335 + $0xa8] sm:$0xff] %v378
                %v380 = vld [vmem:[%s334 + $0xc0] sm:$0xff]
                %381 = vst [vmem:[%s335 + $0xb0] sm:$0xff] %v380
                %v382 = vld [vmem:[%s334 + $0xc8] sm:$0xff]
                %383 = vst [vmem:[%s335 + $0xb8] sm:$0xff] %v382
                %v384 = vld [vmem:[%s334 + $0xd0] sm:$0xff]
                %385 = vst [vmem:[%s335 + $0xc0] sm:$0xff] %v384
                %v386 = vld [vmem:[%s334 + $0xd8] sm:$0xff]
                %387 = vst [vmem:[%s335 + $0xc8] sm:$0xff] %v386
                %v388 = vld [vmem:[%s334 + $0xe0] sm:$0xff]
                %389 = vst [vmem:[%s335 + $0xd0] sm:$0xff] %v388
                %v390 = vld [vmem:[%s334 + $0xe8] sm:$0xff]
                %391 = vst [vmem:[%s335 + $0xd8] sm:$0xff] %v390
                %v392 = vld [vmem:[%s334 + $0xf0] sm:$0xff]
                %393 = vst [vmem:[%s335 + $0xe0] sm:$0xff] %v392
                %v394 = vld [vmem:[%s334 + $0xf8] sm:$0xff]
                %395 = vst [vmem:[%s335 + $0xe8] sm:$0xff] %v394
                %v396 = vld [vmem:[%s334 + $0x100] sm:$0xff]
                %397 = vst [vmem:[%s335 + $0xf0] sm:$0xff] %v396
                %v398 = vld [vmem:[%s334 + $0x108] sm:$0xff]
                %399 = vst [vmem:[%s335 + $0xf8] sm:$0xff] %v398
                %v400 = vld [vmem:[%s334 + $0x120] sm:$0xff]
                %401 = vst [vmem:[%s335 + $0x100] sm:$0xff] %v400
                %v402 = vld [vmem:[%s334 + $0x128] sm:$0xff]
                %403 = vst [vmem:[%s335 + $0x108] sm:$0xff] %v402
                %v404 = vld [vmem:[%s334 + $0x130] sm:$0xff]
                %405 = vst [vmem:[%s335 + $0x110] sm:$0xff] %v404
                %v406 = vld [vmem:[%s334 + $0x138] sm:$0xff]
                %407 = vst [vmem:[%s335 + $0x118] sm:$0xff] %v406
                %v408 = vld [vmem:[%s334 + $0x140] sm:$0xff]
                %409 = vst [vmem:[%s335 + $0x120] sm:$0xff] %v408
                %v410 = vld [vmem:[%s334 + $0x148] sm:$0xff]
                %411 = vst [vmem:[%s335 + $0x128] sm:$0xff] %v410
                %v412 = vld [vmem:[%s334 + $0x150] sm:$0xff]
                %413 = vst [vmem:[%s335 + $0x130] sm:$0xff] %v412
                %v414 = vld [vmem:[%s334 + $0x158] sm:$0xff]
                %415 = vst [vmem:[%s335 + $0x138] sm:$0xff] %v414
                %v416 = vld [vmem:[%s334 + $0x160] sm:$0xff]
                %417 = vst [vmem:[%s335 + $0x140] sm:$0xff] %v416
                %v418 = vld [vmem:[%s334 + $0x168] sm:$0xff]
                %419 = vst [vmem:[%s335 + $0x148] sm:$0xff] %v418
                %v420 = vld [vmem:[%s334 + $0x170] sm:$0xff]
                %421 = vst [vmem:[%s335 + $0x150] sm:$0xff] %v420
                %v422 = vld [vmem:[%s334 + $0x178] sm:$0xff]
                %423 = vst [vmem:[%s335 + $0x158] sm:$0xff] %v422
                %v424 = vld [vmem:[%s334 + $0x180] sm:$0xff]
                %425 = vst [vmem:[%s335 + $0x160] sm:$0xff] %v424
                %v426 = vld [vmem:[%s334 + $0x188] sm:$0xff]
                %427 = vst [vmem:[%s335 + $0x168] sm:$0xff] %v426
                %v428 = vld [vmem:[%s334 + $0x190] sm:$0xff]
                %429 = vst [vmem:[%s335 + $0x170] sm:$0xff] %v428
                %v430 = vld [vmem:[%s334 + $0x198] sm:$0xff]
                %431 = vst [vmem:[%s335 + $0x178] sm:$0xff] %v430
                %v432 = vld [vmem:[%s334 + $0x1b0] sm:$0xff]
                %433 = vst [vmem:[%s335 + $0x180] sm:$0xff] %v432
                %v434 = vld [vmem:[%s334 + $0x1b8] sm:$0xff]
                %435 = vst [vmem:[%s335 + $0x188] sm:$0xff] %v434
                %v436 = vld [vmem:[%s334 + $0x1c0] sm:$0xff]
                %437 = vst [vmem:[%s335 + $0x190] sm:$0xff] %v436
                %v438 = vld [vmem:[%s334 + $0x1c8] sm:$0xff]
                %439 = vst [vmem:[%s335 + $0x198] sm:$0xff] %v438
                %v440 = vld [vmem:[%s334 + $0x1d0] sm:$0xff]
                %441 = vst [vmem:[%s335 + $0x1a0] sm:$0xff] %v440
                %v442 = vld [vmem:[%s334 + $0x1d8] sm:$0xff]
                %443 = vst [vmem:[%s335 + $0x1a8] sm:$0xff] %v442
                %v444 = vld [vmem:[%s334 + $0x1e0] sm:$0xff]
                %445 = vst [vmem:[%s335 + $0x1b0] sm:$0xff] %v444
                %v446 = vld [vmem:[%s334 + $0x1e8] sm:$0xff]
                %447 = vst [vmem:[%s335 + $0x1b8] sm:$0xff] %v446
                %v448 = vld [vmem:[%s334 + $0x1f0] sm:$0xff]
                %449 = vst [vmem:[%s335 + $0x1c0] sm:$0xff] %v448
                %v450 = vld [vmem:[%s334 + $0x1f8] sm:$0xff]
                %451 = vst [vmem:[%s335 + $0x1c8] sm:$0xff] %v450
                %v452 = vld [vmem:[%s334 + $0x200] sm:$0xff]
                %453 = vst [vmem:[%s335 + $0x1d0] sm:$0xff] %v452
                %v454 = vld [vmem:[%s334 + $0x208] sm:$0xff]
                %455 = vst [vmem:[%s335 + $0x1d8] sm:$0xff] %v454
                %v456 = vld [vmem:[%s334 + $0x210] sm:$0xff]
                %457 = vst [vmem:[%s335 + $0x1e0] sm:$0xff] %v456
                %v458 = vld [vmem:[%s334 + $0x218] sm:$0xff]
                %459 = vst [vmem:[%s335 + $0x1e8] sm:$0xff] %v458
                %v460 = vld [vmem:[%s334 + $0x220] sm:$0xff]
                %461 = vst [vmem:[%s335 + $0x1f0] sm:$0xff] %v460
                %v462 = vld [vmem:[%s334 + $0x228] sm:$0xff]
                %463 = vst [vmem:[%s335 + $0x1f8] sm:$0xff] %v462
                %s464 = sadd.s32 1, %s333
                %p465 = scmp.ge.s32.totalorder %s464, %s326
                %s466 = scalar_select %p465, 0, %s464
                %s467 = smul.u32 %s466, 128
                %s468 = smul.u32 %s466, 128
                %s469 = scalar_lea.vmem %s316, %s467
                %s470 = scalar_lea.vmem %s304, %s468 [#allocation2]
              $region45: #{basic_down_block.3} parent=39 // loop_footer
                %s330 = sadd.s32 %s328, 1
              $region46: #{basic_down_block.3} parent=39 // loop_footer_branch
                %327 = sbr.rel target = $region42
              $region47: #{basic_down_block.3} parent=39 // loop_exit
                _
              %s471 = sshrl.u32 %s317, 4
              %s472 = sand.u32 %s317, 15
              %s473 = smul.u32 %s471, 16
              %s474 = smul.u32 8, %s473
              %s475 = scalar_lea.vmem %s316, %s474
              %s476 = smul.u32 8, %s473
              %s477 = scalar_lea.vmem %s304, %s476 [#allocation2]
              // While loop
              $region48: #{basic_down_block.3} parent=39 // loop_pre_header
                _
              $region49: #{basic_down_block.3} parent=39 // loop_header
                %s479 = sphi 0, %s481
                %p480 = scmp.ge.s32.totalorder %s479, %s472
                %s484 = sphi 0, %s497
                %s485 = sphi %s475, %s500
                %s486 = sphi %s477, %s501
              $region50: #{basic_down_block.3} parent=39 // loop_header_branch
                %483 = sbr.rel (%p480) target = $region54
              $region51: #{basic_down_block.3} parent=39 // loop_body
                %v487 = vld [vmem:[%s485] sm:$0xff]
                %488 = vst [vmem:[%s486] sm:$0xff] %v487
                %v489 = vld [vmem:[%s485 + $0x90] sm:$0xff]
                %490 = vst [vmem:[%s486 + $0x80] sm:$0xff] %v489
                %v491 = vld [vmem:[%s485 + $0x120] sm:$0xff]
                %492 = vst [vmem:[%s486 + $0x100] sm:$0xff] %v491
                %v493 = vld [vmem:[%s485 + $0x1b0] sm:$0xff]
                %494 = vst [vmem:[%s486 + $0x180] sm:$0xff] %v493
                %s495 = sadd.s32 1, %s484
                %p496 = scmp.ge.s32.totalorder %s495, %s472
                %s497 = scalar_select %p496, 0, %s495
                %s498 = smul.u32 %s497, 8
                %s499 = smul.u32 %s497, 8
                %s500 = scalar_lea.vmem %s475, %s498
                %s501 = scalar_lea.vmem %s477, %s499 [#allocation2]
              $region52: #{basic_down_block.3} parent=39 // loop_footer
                %s481 = sadd.s32 %s479, 1
              $region53: #{basic_down_block.3} parent=39 // loop_footer_branch
                %478 = sbr.rel target = $region49
              $region54: #{basic_down_block.3} parent=39 // loop_exit
                _
            $region40: #{basic_down_block.3} parent=31 // pred_fallthru
              _
          $region32: #{basic_down_block.3} parent=27 // pred_fallthru
            _
          %682 = vnop
        $region28: #{basic_down_block.3} parent=23 // pred_fallthru
          _
        // Predicated region
        $region77: #{basic_down_block.3} parent=23 // pred_check
          %p683 = pneg %p87
        $region78: #{basic_down_block.3} parent=23 // pred_check_branch
          %685 = sbr.rel (%p683) target = $region80
        $region79: #{basic_down_block.3} parent=23 // pred_region
          %s686 = sand.u32 %s77, 1
          %s687 = sand.u32 %s77, 1
          %s688 = smul.addr %s687, 64
          %s689 = scalar_lea.vmem [#allocation3], %s688
          %s690 = smul.u32 %s23, 8
          %s691 = sadd.s32 %s690, 8
          %s692 = smul.addr %s691, 2
          %s693 = smul.addr %s22, 72
          %s694 = sadd.s32 %s692, %s693
          %s695 = smul.addr %s694, 8
          %s696 = scalar_lea.vmem %s1, %s695
          // Predicated region
          $region81: #{basic_down_block.3} parent=79 // pred_check
            _
          $region82: #{basic_down_block.3} parent=79 // pred_check_branch
            %698 = sbr.rel (0) target = $region84
          $region83: #{basic_down_block.3} parent=79 // pred_region
            // Predicated region
            $region85: #{basic_down_block.3} parent=83 // pred_check
              _
            $region86: #{basic_down_block.3} parent=83 // pred_check_branch
              %700 = sbr.rel (0) target = $region88
            $region87: #{basic_down_block.3} parent=83 // pred_region
              // Predicated region
              $region100: #{basic_down_block.3} parent=87 // pred_check
                _
              $region101: #{basic_down_block.3} parent=87 // pred_check_branch
                %729 = sbr.rel (0) target = $region103
              $region102: #{basic_down_block.3} parent=87 // pred_region
                loop: start=0, step=1, limit=1
                $region104: #{basic_down_block.3} parent=102 // loop_pre_header
                  _
                $region105: #{basic_down_block.3} parent=102 // loop_header
                  %s731 = sphi 0, %s735
                  %p732 = scmp.ge.s32.totalorder %s731, 1
                  %s736 = sphi %s696, %s696
                  %s737 = sphi %s689, %s689
                $region106: #{basic_down_block.3} parent=102 // loop_header_branch
                  %734 = sbr.rel (%p732) target = $region110
                $region107: #{basic_down_block.3} parent=102 // loop_body
                  %v738 = vld [vmem:[%s736] sm:$0xff]
                  %739 = vst [vmem:[%s737] sm:$0xff] %v738
                  %v740 = vld [vmem:[%s736 + $0x8] sm:$0xff]
                  %741 = vst [vmem:[%s737 + $0x8] sm:$0xff] %v740
                  %v742 = vld [vmem:[%s736 + $0x90] sm:$0xff]
                  %743 = vst [vmem:[%s737 + $0x10] sm:$0xff] %v742
                  %v744 = vld [vmem:[%s736 + $0x98] sm:$0xff]
                  %745 = vst [vmem:[%s737 + $0x18] sm:$0xff] %v744
                  %v746 = vld [vmem:[%s736 + $0x120] sm:$0xff]
                  %747 = vst [vmem:[%s737 + $0x20] sm:$0xff] %v746
                  %v748 = vld [vmem:[%s736 + $0x128] sm:$0xff]
                  %749 = vst [vmem:[%s737 + $0x28] sm:$0xff] %v748
                  %v750 = vld [vmem:[%s736 + $0x1b0] sm:$0xff]
                  %751 = vst [vmem:[%s737 + $0x30] sm:$0xff] %v750
                  %v752 = vld [vmem:[%s736 + $0x1b8] sm:$0xff]
                  %753 = vst [vmem:[%s737 + $0x38] sm:$0xff] %v752
                $region108: #{basic_down_block.3} parent=102 // loop_footer
                  %s735 = sadd.s32 1, %s731
                $region109: #{basic_down_block.3} parent=102 // loop_footer_branch
                  %730 = sbr.rel target = $region105
                $region110: #{basic_down_block.3} parent=102 // loop_exit
                  _
              $region103: #{basic_down_block.3} parent=87 // pred_fallthru
                _
              // Predicated region
              $region111: #{basic_down_block.3} parent=87 // pred_check
                _
              $region112: #{basic_down_block.3} parent=87 // pred_check_branch
                %755 = sbr.rel target = $region114
              $region113: #{basic_down_block.3} parent=87 // pred_region
                _
              $region114: #{basic_down_block.3} parent=87 // pred_fallthru
                _
            $region88: #{basic_down_block.3} parent=83 // pred_fallthru
              _
            // Predicated region
            $region89: #{basic_down_block.3} parent=83 // pred_check
              _
            $region90: #{basic_down_block.3} parent=83 // pred_check_branch
              %702 = sbr.rel target = $region92
            $region91: #{basic_down_block.3} parent=83 // pred_region
              loop: start=0, step=1, limit=1
              $region93: #{basic_down_block.3} parent=91 // loop_pre_header
                _
              $region94: #{basic_down_block.3} parent=91 // loop_header
                %s705 = sphi 0, %s709
                %p706 = scmp.ge.s32.totalorder %s705, 1
                %s710 = sphi %s696, %s696
                %s711 = sphi %s689, %s689
              $region95: #{basic_down_block.3} parent=91 // loop_header_branch
                %708 = sbr.rel (%p706) target = $region99
              $region96: #{basic_down_block.3} parent=91 // loop_body
                %v712 = vld [vmem:[%s710] sm:$0xff]
                %713 = vst [vmem:[%s711] sm:$0xff] %v712
                %v714 = vld [vmem:[%s710 + $0x8] sm:$0xff]
                %715 = vst [vmem:[%s711 + $0x8] sm:$0xff] %v714
                %v716 = vld [vmem:[%s710 + $0x90] sm:$0xff]
                %717 = vst [vmem:[%s711 + $0x10] sm:$0xff] %v716
                %v718 = vld [vmem:[%s710 + $0x98] sm:$0xff]
                %719 = vst [vmem:[%s711 + $0x18] sm:$0xff] %v718
                %v720 = vld [vmem:[%s710 + $0x120] sm:$0xff]
                %721 = vst [vmem:[%s711 + $0x20] sm:$0xff] %v720
                %v722 = vld [vmem:[%s710 + $0x128] sm:$0xff]
                %723 = vst [vmem:[%s711 + $0x28] sm:$0xff] %v722
                %v724 = vld [vmem:[%s710 + $0x1b0] sm:$0xff]
                %725 = vst [vmem:[%s711 + $0x30] sm:$0xff] %v724
                %v726 = vld [vmem:[%s710 + $0x1b8] sm:$0xff]
                %727 = vst [vmem:[%s711 + $0x38] sm:$0xff] %v726
              $region97: #{basic_down_block.3} parent=91 // loop_footer
                %s709 = sadd.s32 1, %s705
              $region98: #{basic_down_block.3} parent=91 // loop_footer_branch
                %704 = sbr.rel target = $region94
              $region99: #{basic_down_block.3} parent=91 // loop_exit
                _
            $region92: #{basic_down_block.3} parent=83 // pred_fallthru
              _
          $region84: #{basic_down_block.3} parent=79 // pred_fallthru
            _
          %756 = vnop
        $region80: #{basic_down_block.3} parent=23 // pred_fallthru
          _
      $region24: #{basic_down_block.3} parent=5 // pred_fallthru
        _
      %p757 = scmp.le.s32.totalorder 1, %s14
      %p758 = scmp.lt.s32.totalorder %s14, 3
      %p759 = pnand %p757, %p758
      %p760 = pneg %p759
      // Predicated region
      $region115: #{basic_down_block.3} parent=5 // pred_check
        _
      $region116: #{basic_down_block.3} parent=5 // pred_check_branch
        %762 = sbr.rel (%p759) target = $region118
      $region117: #{basic_down_block.3} parent=5 // pred_region
        %s763 = ssub.s32 %s14, 1
        %s764 = sand.u32 %s48, 1
        %s765 = sand.u32 %s48, 1
        %s766 = smul.addr %s765, 512
        %s767 = scalar_lea.vmem [#allocation2], %s766
        // Predicated region
        $region119: #{basic_down_block.3} parent=117 // pred_check
          %p768 = pneg %p61
        $region120: #{basic_down_block.3} parent=117 // pred_check_branch
          %770 = sbr.rel (%p768) target = $region122
        $region121: #{basic_down_block.3} parent=117 // pred_region
          _
        $region122: #{basic_down_block.3} parent=117 // pred_fallthru
          _
        %s771 = sand.u32 %s80, 1
        %s772 = sand.u32 %s80, 1
        %s773 = smul.addr %s772, 64
        %s774 = scalar_lea.vmem [#allocation3], %s773
        // Predicated region
        $region123: #{basic_down_block.3} parent=117 // pred_check
          %p775 = pneg %p93
        $region124: #{basic_down_block.3} parent=117 // pred_check_branch
          %777 = sbr.rel (%p775) target = $region126
        $region125: #{basic_down_block.3} parent=117 // pred_region
          _
        $region126: #{basic_down_block.3} parent=117 // pred_fallthru
          _
        %s778 = sand.u32 %s48, 1
        %s779 = sand.u32 %s48, 1
        %s780 = smul.addr %s779, 512
        %s781 = scalar_lea.vmem [#allocation2], %s780
        %p782 = pneg %p61
        %p783 = pneg %p58
        %s784 = sand.u32 %s80, 1
        %s785 = sand.u32 %s80, 1
        %s786 = smul.addr %s785, 64
        %s787 = scalar_lea.vmem [#allocation3], %s786
        %p788 = pneg %p93
        %p789 = pneg %p90
        %p790 = scmp.lt.s32.totalorder %s24, 0
        %s791 = scalar_select %p790, %s24, 0
        %s792 = smul.addr %s791, 8
        %s793 = scalar_lea.vmem %s2, %s792
        %p794 = pneg %p119
        %p795 = pneg %p116
        %p796 = scmp.lt.s32.totalorder %s24, 0
        %s797 = scalar_select %p796, %s24, 0
        %s798 = smul.addr %s797, 8
        %s799 = scalar_lea.vmem %s3, %s798
        %p800 = pneg %p145
        %p801 = pneg %p142
        %p802 = pneg %p175
        %p803 = pneg %p172
        %s804 = smul.u32 8, %s26
        %p805 = scmp.lt.s32.totalorder %s25, 1
        %s806 = scalar_select %p805, %s25, 1
        %p807 = scmp.lt.s32.totalorder %s804, 7
        %s808 = scalar_select %p807, %s804, 7
        %p809 = scmp.lt.s32.totalorder %s24, 0
        %s810 = scalar_select %p809, %s24, 0
        %s811 = sadd.s32 %s810, %s808
        %s812 = smul.addr %s806, 8
        %s813 = sadd.s32 %s811, %s812
        %s814 = smul.addr %s813, 8
        %s815 = scalar_lea.vmem %s4, %s814
        %p816 = pneg %p205
        %p817 = pneg %p202
        %s818 = smul.u32 8, %s26
        %p819 = scmp.lt.s32.totalorder %s25, 1
        %s820 = scalar_select %p819, %s25, 1
        %p821 = scmp.lt.s32.totalorder %s818, 7
        %s822 = scalar_select %p821, %s818, 7
        %p823 = scmp.lt.s32.totalorder %s24, 0
        %s824 = scalar_select %p823, %s24, 0
        %s825 = sadd.s32 %s824, %s822
        %s826 = smul.addr %s820, 8
        %s827 = sadd.s32 %s825, %s826
        %s828 = smul.addr %s827, 8
        %s829 = scalar_lea.vmem %s5, %s828
        %p830 = pneg %p235
        %p831 = pneg %p232
        %p832 = scmp.lt.s32.totalorder %s25, 1
        %s833 = scalar_select %p832, %s25, 1
        %p834 = scmp.lt.s32.totalorder %s26, 0
        %s835 = scalar_select %p834, %s26, 0
        %p836 = scmp.lt.s32.totalorder %s24, 0
        %s837 = scalar_select %p836, %s24, 0
        %s838 = sadd.s32 %s837, %s835
        %s839 = sadd.s32 %s838, %s833
        %s840 = smul.addr %s839, 2
        %s841 = scalar_lea.vmem %s6, %s840
        %p842 = pneg %p265
        %p843 = pneg %p262
        %p844 = scmp.lt.s32.totalorder %s25, 1
        %s845 = scalar_select %p844, %s25, 1
        %p846 = scmp.lt.s32.totalorder %s26, 0
        %s847 = scalar_select %p846, %s26, 0
        %p848 = scmp.lt.s32.totalorder %s24, 0
        %s849 = scalar_select %p848, %s24, 0
        %s850 = sadd.s32 %s849, %s847
        %s851 = sadd.s32 %s850, %s845
        %s852 = smul.addr %s851, 2
        %s853 = scalar_lea.vmem %s7, %s852
        %s854 = smul.u32 8, %s26
        %s855 = ssub.s32 9, %s854
        %p856 = scmp.lt.s32.totalorder %s855, 8
        %s857 = scalar_select %p856, %s855, 8
        %s858 = smul.u32 512, %s857
        %s859 = smul.u32 %s858, 2
        %s860 = smul.u32 %s26, 8
        %s861 = sadd.s32 %s860, 8
        %p862 = scmp.lt.s32.totalorder %s24, 0
        %s863 = scalar_select %p862, %s24, 0
        %s864 = smul.addr %s863, 8
        %s865 = scalar_lea.vmem %s2, %s864
        %p866 = scmp.lt.s32.totalorder %s24, 0
        %s867 = scalar_select %p866, %s24, 0
        %s868 = smul.addr %s867, 8
        %s869 = scalar_lea.vmem %s3, %s868
        %s870 = smul.u32 8, %s26
        %p871 = scmp.lt.s32.totalorder %s25, 1
        %s872 = scalar_select %p871, %s25, 1
        %p873 = scmp.lt.s32.totalorder %s870, 7
        %s874 = scalar_select %p873, %s870, 7
        %p875 = scmp.lt.s32.totalorder %s24, 0
        %s876 = scalar_select %p875, %s24, 0
        %s877 = sadd.s32 %s876, %s874
        %s878 = smul.addr %s872, 8
        %s879 = sadd.s32 %s877, %s878
        %s880 = smul.addr %s879, 8
        %s881 = scalar_lea.vmem %s4, %s880
        %s882 = smul.u32 8, %s26
        %s883 = smul.u32 8, %s26
        %p884 = scmp.lt.s32.totalorder %s25, 1
        %s885 = scalar_select %p884, %s25, 1
        %p886 = scmp.lt.s32.totalorder %s883, 7
        %s887 = scalar_select %p886, %s883, 7
        %p888 = scmp.lt.s32.totalorder %s24, 0
        %s889 = scalar_select %p888, %s24, 0
        %s890 = sadd.s32 %s889, %s887
        %s891 = smul.addr %s885, 8
        %s892 = sadd.s32 %s890, %s891
        %s893 = smul.addr %s892, 8
        %s894 = scalar_lea.vmem %s5, %s893
        %s895 = smul.u32 8, %s26
        %p896 = scmp.lt.s32.totalorder %s25, 1
        %s897 = scalar_select %p896, %s25, 1
        %p898 = scmp.lt.s32.totalorder %s26, 0
        %s899 = scalar_select %p898, %s26, 0
        %p900 = scmp.lt.s32.totalorder %s24, 0
        %s901 = scalar_select %p900, %s24, 0
        %s902 = sadd.s32 %s901, %s899
        %s903 = sadd.s32 %s902, %s897
        %s904 = smul.addr %s903, 2
        %s905 = scalar_lea.vmem %s6, %s904
        %p906 = scmp.lt.s32.totalorder %s25, 1
        %s907 = scalar_select %p906, %s25, 1
        %p908 = scmp.lt.s32.totalorder %s26, 0
        %s909 = scalar_select %p908, %s26, 0
        %p910 = scmp.lt.s32.totalorder %s24, 0
        %s911 = scalar_select %p910, %s24, 0
        %s912 = sadd.s32 %s911, %s909
        %s913 = sadd.s32 %s912, %s907
        %s914 = smul.addr %s913, 2
        %s915 = scalar_lea.vmem %s7, %s914
        %v916 = vld [vmem:[%s767] sm:$0xff]
        %v917 = vld [vmem:[%s767 + $0x8] sm:$0x1]
        %v918 = vld [vmem:[%s767 + $0x10] sm:$0xff]
        %v919 = vld [vmem:[%s767 + $0x18] sm:$0x1]
        %v920 = vld [vmem:[%s767 + $0x20] sm:$0xff]
        %v921 = vld [vmem:[%s767 + $0x28] sm:$0x1]
        %v922 = vld [vmem:[%s767 + $0x30] sm:$0xff]
        %v923 = vld [vmem:[%s767 + $0x38] sm:$0x1]
        %v924 = vld [vmem:[%s767 + $0x40] sm:$0xff]
        %v925 = vld [vmem:[%s767 + $0x48] sm:$0x1]
        %v926 = vld [vmem:[%s767 + $0x50] sm:$0xff]
        %v927 = vld [vmem:[%s767 + $0x58] sm:$0x1]
        %v928 = vld [vmem:[%s767 + $0x60] sm:$0xff]
        %v929 = vld [vmem:[%s767 + $0x68] sm:$0x1]
        %v930 = vld [vmem:[%s767 + $0x70] sm:$0xff]
        %v931 = vld [vmem:[%s767 + $0x78] sm:$0x1]
        %v932 = vld [vmem:[%s774] sm:$0xff]
        %v933 = vld [vmem:[%s774 + $0x8] sm:$0x1]
        %s934 = scalar_lea.vmem %s767, 128 [#allocation2]
        %v935 = vld [vmem:[%s934] sm:$0xff]
        %v936 = vld [vmem:[%s934 + $0x10] sm:$0xff]
        %v937 = vld [vmem:[%s934 + $0x20] sm:$0xff]
        %v938 = vld [vmem:[%s934 + $0x30] sm:$0xff]
        %v939 = vld [vmem:[%s934 + $0x40] sm:$0xff]
        %v940 = vld [vmem:[%s934 + $0x50] sm:$0xff]
        %v941 = vld [vmem:[%s934 + $0x60] sm:$0xff]
        %v942 = vld [vmem:[%s934 + $0x70] sm:$0xff]
        %s943 = scalar_lea.vmem %s774, 16 [#allocation3]
        %v944 = vld [vmem:[%s943] sm:$0xff]
        %s945 = scalar_lea.vmem %s767, 256 [#allocation2]
        %v946 = vld [vmem:[%s945] sm:$0xff]
        %v947 = vld [vmem:[%s945 + $0x8] sm:$0x1]
        %v948 = vld [vmem:[%s945 + $0x10] sm:$0xff]
        %v949 = vld [vmem:[%s945 + $0x18] sm:$0x1]
        %v950 = vld [vmem:[%s945 + $0x20] sm:$0xff]
        %v951 = vld [vmem:[%s945 + $0x28] sm:$0x1]
        %v952 = vld [vmem:[%s945 + $0x30] sm:$0xff]
        %v953 = vld [vmem:[%s945 + $0x38] sm:$0x1]
        %v954 = vld [vmem:[%s945 + $0x40] sm:$0xff]
        %v955 = vld [vmem:[%s945 + $0x48] sm:$0x1]
        %v956 = vld [vmem:[%s945 + $0x50] sm:$0xff]
        %v957 = vld [vmem:[%s945 + $0x58] sm:$0x1]
        %v958 = vld [vmem:[%s945 + $0x60] sm:$0xff]
        %v959 = vld [vmem:[%s945 + $0x68] sm:$0x1]
        %v960 = vld [vmem:[%s945 + $0x70] sm:$0xff]
        %v961 = vld [vmem:[%s945 + $0x78] sm:$0x1]
        %s962 = scalar_lea.vmem %s767, 384 [#allocation2]
        %v963 = vld [vmem:[%s962] sm:$0xff]
        %v964 = vld [vmem:[%s962 + $0x10] sm:$0xff]
        %v965 = vld [vmem:[%s962 + $0x20] sm:$0xff]
        %v966 = vld [vmem:[%s962 + $0x30] sm:$0xff]
        %v967 = vld [vmem:[%s962 + $0x40] sm:$0xff]
        %v968 = vld [vmem:[%s962 + $0x50] sm:$0xff]
        %v969 = vld [vmem:[%s962 + $0x60] sm:$0xff]
        %v970 = vld [vmem:[%s962 + $0x70] sm:$0xff]
        %v971 = vld [vmem:[%s865] sm:$0xff]
        %v972 = vld [vmem:[%s865 + $0x8] sm:$0xff]
        %v973 = vld [vmem:[%s865 + $0x10] sm:$0xff]
        %v974 = vld [vmem:[%s865 + $0x18] sm:$0xff]
        %v975 = vld [vmem:[%s865 + $0x20] sm:$0xff]
        %v976 = vld [vmem:[%s865 + $0x28] sm:$0xff]
        %v977 = vld [vmem:[%s865 + $0x30] sm:$0xff]
        %v978 = vld [vmem:[%s865 + $0x38] sm:$0xff]
        %v979 = vld [vmem:[%s865 + $0x40] sm:$0xff]
        %v980 = vld [vmem:[%s865 + $0x48] sm:$0xff]
        %v981 = vld [vmem:[%s865 + $0x50] sm:$0xff]
        %v982 = vld [vmem:[%s865 + $0x58] sm:$0xff]
        %v983 = vld [vmem:[%s865 + $0x60] sm:$0xff]
        %v984 = vld [vmem:[%s865 + $0x68] sm:$0xff]
        %v985 = vld [vmem:[%s865 + $0x70] sm:$0xff]
        %v986 = vld [vmem:[%s865 + $0x78] sm:$0xff]
        %s987 = scalar_lea.vmem %s865, 128
        %v988 = vld [vmem:[%s987] sm:$0xff]
        %v989 = vld [vmem:[%s987 + $0x8] sm:$0xff]
        %v990 = vld [vmem:[%s987 + $0x10] sm:$0xff]
        %v991 = vld [vmem:[%s987 + $0x18] sm:$0xff]
        %v992 = vld [vmem:[%s987 + $0x20] sm:$0xff]
        %v993 = vld [vmem:[%s987 + $0x28] sm:$0xff]
        %v994 = vld [vmem:[%s987 + $0x30] sm:$0xff]
        %v995 = vld [vmem:[%s987 + $0x38] sm:$0xff]
        %v996 = vld [vmem:[%s987 + $0x40] sm:$0xff]
        %v997 = vld [vmem:[%s987 + $0x48] sm:$0xff]
        %v998 = vld [vmem:[%s987 + $0x50] sm:$0xff]
        %v999 = vld [vmem:[%s987 + $0x58] sm:$0xff]
        %v1000 = vld [vmem:[%s987 + $0x60] sm:$0xff]
        %v1001 = vld [vmem:[%s987 + $0x68] sm:$0xff]
        %v1002 = vld [vmem:[%s987 + $0x70] sm:$0xff]
        %v1003 = vld [vmem:[%s987 + $0x78] sm:$0xff]
        %1004 = vmatprep.subr.mxu0 0.0
        %1005 = vmatpush1.msra.mxu0 %v988
        %1006 = vmatprep.subr.mxu0 0.0
        %1007 = vmatpush1.msra.mxu0 %v989
        %1008 = vmatprep.subr.mxu0 0.0
        %1009 = vmatpush1.msra.mxu0 %v990
        %1010 = vmatprep.subr.mxu0 0.0
        %1011 = vmatpush1.msra.mxu0 %v991
        %1012 = vmatprep.subr.mxu0 0.0
        %1013 = vmatpush1.msra.mxu0 %v992
        %1014 = vmatprep.subr.mxu0 0.0
        %1015 = vmatpush1.msra.mxu0 %v993
        %1016 = vmatprep.subr.mxu0 0.0
        %1017 = vmatpush1.msra.mxu0 %v994
        %1018 = vmatprep.subr.mxu0 0.0
        %1019 = vmatpush1.msra.mxu0 %v995
        %1020 = vmatprep.subr.mxu0 0.0
        %1021 = vmatpush1.msra.mxu0 %v996
        %1022 = vmatprep.subr.mxu0 0.0
        %1023 = vmatpush1.msra.mxu0 %v997
        %1024 = vmatprep.subr.mxu0 0.0
        %1025 = vmatpush1.msra.mxu0 %v998
        %1026 = vmatprep.subr.mxu0 0.0
        %1027 = vmatpush1.msra.mxu0 %v999
        %1028 = vmatprep.subr.mxu0 0.0
        %1029 = vmatpush1.msra.mxu0 %v1000
        %1030 = vmatprep.subr.mxu0 0.0
        %1031 = vmatpush1.msra.mxu0 %v1001
        %1032 = vmatprep.subr.mxu0 0.0
        %1033 = vmatpush1.msra.mxu0 %v1002
        %1034 = vmatprep.subr.mxu0 0.0
        %1035 = vmatpush1.msra.mxu0 %v1003
        %1036 = vmatprep.subr.mxu0 0.0
        %1037 = vmatpush1.msra.mxu0 0.0
        %1038 = vmatprep.subr.mxu0 0.0
        %1039 = vmatpush1.msra.mxu0 0.0
        %1040 = vmatprep.subr.mxu0 0.0
        %1041 = vmatpush1.msra.mxu0 0.0
        %1042 = vmatprep.subr.mxu0 0.0
        %1043 = vmatpush1.msra.mxu0 0.0
        %1044 = vmatprep.subr.mxu0 0.0
        %1045 = vmatpush1.msra.mxu0 0.0
        %1046 = vmatprep.subr.mxu0 0.0
        %1047 = vmatpush1.msra.mxu0 0.0
        %1048 = vmatprep.subr.mxu0 0.0
        %1049 = vmatpush1.msra.mxu0 0.0
        %1050 = vmatprep.subr.mxu0 0.0
        %1051 = vmatpush1.msra.mxu0 0.0
        %1052 = vmatprep.subr.mxu0 0.0
        %1053 = vmatpush1.msra.mxu0 0.0
        %1054 = vmatprep.subr.mxu0 0.0
        %1055 = vmatpush1.msra.mxu0 0.0
        %1056 = vmatprep.subr.mxu0 0.0
        %1057 = vmatpush1.msra.mxu0 0.0
        %1058 = vmatprep.subr.mxu0 0.0
        %1059 = vmatpush1.msra.mxu0 0.0
        %1060 = vmatprep.subr.mxu0 0.0
        %1061 = vmatpush1.msra.mxu0 0.0
        %1062 = vmatprep.subr.mxu0 0.0
        %1063 = vmatpush1.msra.mxu0 0.0
        %1064 = vmatprep.subr.mxu0 0.0
        %1065 = vmatpush1.msra.mxu0 0.0
        %1066 = vmatprep.subr.mxu0 0.0
        %1067 = vmatpush1.msra.mxu0 0.0
        %1068 = vmatprep.mubr.f32.mxu0 0.0
        %1069 = vmatmul.mubr.f32.gmra.mrb[0].mxu0 %v935
        %v1070 = vpop.f32.mrb[0].mxu0
        %v1071 = vadd.f32 0.0, %v1070
        %v1072 = vpop.f32.mrb[0].mxu0
        %1073 = vmatprep.mubr.f32.mxu0 0.0
        %1074 = vmatmul.mubr.f32.gmra.mrb[0].mxu0 %v936
        %v1075 = vpop.f32.mrb[0].mxu0
        %v1076 = vadd.f32 0.0, %v1075
        %v1077 = vpop.f32.mrb[0].mxu0
        %1078 = vmatprep.mubr.f32.mxu0 0.0
        %1079 = vmatmul.mubr.f32.gmra.mrb[0].mxu0 %v937
        %v1080 = vpop.f32.mrb[0].mxu0
        %v1081 = vadd.f32 0.0, %v1080
        %v1082 = vpop.f32.mrb[0].mxu0
        %1083 = vmatprep.mubr.f32.mxu0 0.0
        %1084 = vmatmul.mubr.f32.gmra.mrb[0].mxu0 %v938
        %v1085 = vpop.f32.mrb[0].mxu0
        %v1086 = vadd.f32 0.0, %v1085
        %v1087 = vpop.f32.mrb[0].mxu0
        %1088 = vmatprep.mubr.f32.mxu0 0.0
        %1089 = vmatmul.mubr.f32.gmra.mrb[0].mxu0 %v939
        %v1090 = vpop.f32.mrb[0].mxu0
        %v1091 = vadd.f32 0.0, %v1090
        %v1092 = vpop.f32.mrb[0].mxu0
        %1093 = vmatprep.mubr.f32.mxu0 0.0
        %1094 = vmatmul.mubr.f32.gmra.mrb[0].mxu0 %v940
        %v1095 = vpop.f32.mrb[0].mxu0
        %v1096 = vadd.f32 0.0, %v1095
        %v1097 = vpop.f32.mrb[0].mxu0
        %1098 = vmatprep.mubr.f32.mxu0 0.0
        %1099 = vmatmul.mubr.f32.gmra.mrb[0].mxu0 %v941
        %v1100 = vpop.f32.mrb[0].mxu0
        %v1101 = vadd.f32 0.0, %v1100
        %v1102 = vpop.f32.mrb[0].mxu0
        %1103 = vmatprep.mubr.f32.mxu0 0.0
        %1104 = vmatmul.mubr.f32.gmra.mrb[0].mxu0 %v942
        %v1105 = vpop.f32.mrb[0].mxu0
        %v1106 = vadd.f32 0.0, %v1105
        %v1107 = vpop.f32.mrb[0].mxu0
        %1108 = vdwg.mxu0
        %1109 = vmatprep.subr.mxu0 0.0
        %1110 = vmatpush1.msra.mxu0 %v971
        %1111 = vmatprep.subr.mxu0 0.0
        %1112 = vmatpush1.msra.mxu0 %v972
        %1113 = vmatprep.subr.mxu0 0.0
        %1114 = vmatpush1.msra.mxu0 %v973
        %1115 = vmatprep.subr.mxu0 0.0
        %1116 = vmatpush1.msra.mxu0 %v974
        %1117 = vmatprep.subr.mxu0 0.0
        %1118 = vmatpush1.msra.mxu0 %v975
        %1119 = vmatprep.subr.mxu0 0.0
        %1120 = vmatpush1.msra.mxu0 %v976
        %1121 = vmatprep.subr.mxu0 0.0
        %1122 = vmatpush1.msra.mxu0 %v977
        %1123 = vmatprep.subr.mxu0 0.0
        %1124 = vmatpush1.msra.mxu0 %v978
        %1125 = vmatprep.subr.mxu0 0.0
        %1126 = vmatpush1.msra.mxu0 %v979
        %1127 = vmatprep.subr.mxu0 0.0
        %1128 = vmatpush1.msra.mxu0 %v980
        %1129 = vmatprep.subr.mxu0 0.0
        %1130 = vmatpush1.msra.mxu0 %v981
        %1131 = vmatprep.subr.mxu0 0.0
        %1132 = vmatpush1.msra.mxu0 %v982
        %1133 = vmatprep.subr.mxu0 0.0
        %1134 = vmatpush1.msra.mxu0 %v983
        %1135 = vmatprep.subr.mxu0 0.0
        %1136 = vmatpush1.msra.mxu0 %v984
        %1137 = vmatprep.subr.mxu0 0.0
        %1138 = vmatpush1.msra.mxu0 %v985
        %1139 = vmatprep.subr.mxu0 0.0
        %1140 = vmatpush1.msra.mxu0 %v986
        %1141 = vmatprep.subr.mxu0 0.0
        %1142 = vmatpush1.msra.mxu0 0.0
        %1143 = vmatprep.subr.mxu0 0.0
        %1144 = vmatpush1.msra.mxu0 0.0
        %1145 = vmatprep.subr.mxu0 0.0
        %1146 = vmatpush1.msra.mxu0 0.0
        %1147 = vmatprep.subr.mxu0 0.0
        %1148 = vmatpush1.msra.mxu0 0.0
        %1149 = vmatprep.subr.mxu0 0.0
        %1150 = vmatpush1.msra.mxu0 0.0
        %1151 = vmatprep.subr.mxu0 0.0
        %1152 = vmatpush1.msra.mxu0 0.0
        %1153 = vmatprep.subr.mxu0 0.0
        %1154 = vmatpush1.msra.mxu0 0.0
        %1155 = vmatprep.subr.mxu0 0.0
        %1156 = vmatpush1.msra.mxu0 0.0
        %1157 = vmatprep.subr.mxu0 0.0
        %1158 = vmatpush1.msra.mxu0 0.0
        %1159 = vmatprep.subr.mxu0 0.0
        %1160 = vmatpush1.msra.mxu0 0.0
        %1161 = vmatprep.subr.mxu0 0.0
        %1162 = vmatpush1.msra.mxu0 0.0
        %1163 = vmatprep.subr.mxu0 0.0
        %1164 = vmatpush1.msra.mxu0 0.0
        %1165 = vmatprep.subr.mxu0 0.0
        %1166 = vmatpush1.msra.mxu0 0.0
        %1167 = vmatprep.subr.mxu0 0.0
        %1168 = vmatpush1.msra.mxu0 0.0
        %1169 = vmatprep.subr.mxu0 0.0
        %1170 = vmatpush1.msra.mxu0 0.0
        %1171 = vmatprep.subr.mxu0 0.0
        %1172 = vmatpush1.msra.mxu0 0.0
        %1173 = vmatprep.mubr.f32.mxu0 0.0
        %1174 = vmatmul.mubr.f32.gmra.mrb[0].mxu0 %v916
        %v1175 = vpop.f32.mrb[0].mxu0
        %v1176 = vadd.f32 %v1071, %v1175
        %v1177 = vpop.f32.mrb[0].mxu0
        %1178 = vmatprep.mubr.f32.mxu0 0.0
        %1179 = vmatmul.mubr.f32.gmra.mrb[0].mxu0 %v918
        %v1180 = vpop.f32.mrb[0].mxu0
        %v1181 = vadd.f32 %v1076, %v1180
        %v1182 = vpop.f32.mrb[0].mxu0
        %1183 = vmatprep.mubr.f32.mxu0 0.0
        %1184 = vmatmul.mubr.f32.gmra.mrb[0].mxu0 %v920
        %v1185 = vpop.f32.mrb[0].mxu0
        %v1186 = vadd.f32 %v1081, %v1185
        %v1187 = vpop.f32.mrb[0].mxu0
        %1188 = vmatprep.mubr.f32.mxu0 0.0
        %1189 = vmatmul.mubr.f32.gmra.mrb[0].mxu0 %v922
        %v1190 = vpop.f32.mrb[0].mxu0
        %v1191 = vadd.f32 %v1086, %v1190
        %v1192 = vpop.f32.mrb[0].mxu0
        %1193 = vmatprep.mubr.f32.mxu0 0.0
        %1194 = vmatmul.mubr.f32.gmra.mrb[0].mxu0 %v924
        %v1195 = vpop.f32.mrb[0].mxu0
        %v1196 = vadd.f32 %v1091, %v1195
        %v1197 = vpop.f32.mrb[0].mxu0
        %1198 = vmatprep.mubr.f32.mxu0 0.0
        %1199 = vmatmul.mubr.f32.gmra.mrb[0].mxu0 %v926
        %v1200 = vpop.f32.mrb[0].mxu0
        %v1201 = vadd.f32 %v1096, %v1200
        %v1202 = vpop.f32.mrb[0].mxu0
        %1203 = vmatprep.mubr.f32.mxu0 0.0
        %1204 = vmatmul.mubr.f32.gmra.mrb[0].mxu0 %v928
        %v1205 = vpop.f32.mrb[0].mxu0
        %v1206 = vadd.f32 %v1101, %v1205
        %v1207 = vpop.f32.mrb[0].mxu0
        %1208 = vmatprep.mubr.f32.mxu0 0.0
        %1209 = vmatmul.mubr.f32.gmra.mrb[0].mxu0 %v930
        %v1210 = vpop.f32.mrb[0].mxu0
        %v1211 = vadd.f32 %v1106, %v1210
        %v1212 = vpop.f32.mrb[0].mxu0
        %1213 = vdwg.mxu0
        %vm1230 = vcmask 1046528
        %v1231 = vrot.slane %v916, 1
        %v1232 = vrot.slane %v917, 1
        %v1233 = vsel %vm1230, %v1231, %v1232
        %v1234 = vrot.slane %v918, 1
        %v1235 = vrot.slane %v919, 1
        %v1236 = vsel %vm1230, %v1234, %v1235
        %v1237 = vrot.slane %v920, 1
        %v1238 = vrot.slane %v921, 1
        %v1239 = vsel %vm1230, %v1237, %v1238
        %v1240 = vrot.slane %v922, 1
        %v1241 = vrot.slane %v923, 1
        %v1242 = vsel %vm1230, %v1240, %v1241
        %v1243 = vrot.slane %v924, 1
        %v1244 = vrot.slane %v925, 1
        %v1245 = vsel %vm1230, %v1243, %v1244
        %v1246 = vrot.slane %v926, 1
        %v1247 = vrot.slane %v927, 1
        %v1248 = vsel %vm1230, %v1246, %v1247
        %v1249 = vrot.slane %v928, 1
        %v1250 = vrot.slane %v929, 1
        %v1251 = vsel %vm1230, %v1249, %v1250
        %v1252 = vrot.slane %v930, 1
        %v1253 = vrot.slane %v931, 1
        %v1254 = vsel %vm1230, %v1252, %v1253
        %s1263 = scalar_lea.vmem %s865, 256
        %v1264 = vld [vmem:[%s1263] sm:$0xff]
        %v1265 = vld [vmem:[%s1263 + $0x8] sm:$0xff]
        %v1266 = vld [vmem:[%s1263 + $0x10] sm:$0xff]
        %v1267 = vld [vmem:[%s1263 + $0x18] sm:$0xff]
        %v1268 = vld [vmem:[%s1263 + $0x20] sm:$0xff]
        %v1269 = vld [vmem:[%s1263 + $0x28] sm:$0xff]
        %v1270 = vld [vmem:[%s1263 + $0x30] sm:$0xff]
        %v1271 = vld [vmem:[%s1263 + $0x38] sm:$0xff]
        %v1272 = vld [vmem:[%s1263 + $0x40] sm:$0xff]
        %v1273 = vld [vmem:[%s1263 + $0x48] sm:$0xff]
        %v1274 = vld [vmem:[%s1263 + $0x50] sm:$0xff]
        %v1275 = vld [vmem:[%s1263 + $0x58] sm:$0xff]
        %v1276 = vld [vmem:[%s1263 + $0x60] sm:$0xff]
        %v1277 = vld [vmem:[%s1263 + $0x68] sm:$0xff]
        %v1278 = vld [vmem:[%s1263 + $0x70] sm:$0xff]
        %v1279 = vld [vmem:[%s1263 + $0x78] sm:$0xff]
        %1280 = vmatprep.subr.mxu0 0.0
        %1281 = vmatpush1.msra.mxu0 %v1264
        %1282 = vmatprep.subr.mxu0 0.0
        %1283 = vmatpush1.msra.mxu0 %v1265
        %1284 = vmatprep.subr.mxu0 0.0
        %1285 = vmatpush1.msra.mxu0 %v1266
        %1286 = vmatprep.subr.mxu0 0.0
        %1287 = vmatpush1.msra.mxu0 %v1267
        %1288 = vmatprep.subr.mxu0 0.0
        %1289 = vmatpush1.msra.mxu0 %v1268
        %1290 = vmatprep.subr.mxu0 0.0
        %1291 = vmatpush1.msra.mxu0 %v1269
        %1292 = vmatprep.subr.mxu0 0.0
        %1293 = vmatpush1.msra.mxu0 %v1270
        %1294 = vmatprep.subr.mxu0 0.0
        %1295 = vmatpush1.msra.mxu0 %v1271
        %1296 = vmatprep.subr.mxu0 0.0
        %1297 = vmatpush1.msra.mxu0 %v1272
        %1298 = vmatprep.subr.mxu0 0.0
        %1299 = vmatpush1.msra.mxu0 %v1273
        %1300 = vmatprep.subr.mxu0 0.0
        %1301 = vmatpush1.msra.mxu0 %v1274
        %1302 = vmatprep.subr.mxu0 0.0
        %1303 = vmatpush1.msra.mxu0 %v1275
        %1304 = vmatprep.subr.mxu0 0.0
        %1305 = vmatpush1.msra.mxu0 %v1276
        %1306 = vmatprep.subr.mxu0 0.0
        %1307 = vmatpush1.msra.mxu0 %v1277
        %1308 = vmatprep.subr.mxu0 0.0
        %1309 = vmatpush1.msra.mxu0 %v1278
        %1310 = vmatprep.subr.mxu0 0.0
        %1311 = vmatpush1.msra.mxu0 %v1279
        %1312 = vmatprep.subr.mxu0 0.0
        %1313 = vmatpush1.msra.mxu0 0.0
        %1314 = vmatprep.subr.mxu0 0.0
        %1315 = vmatpush1.msra.mxu0 0.0
        %1316 = vmatprep.subr.mxu0 0.0
        %1317 = vmatpush1.msra.mxu0 0.0
        %1318 = vmatprep.subr.mxu0 0.0
        %1319 = vmatpush1.msra.mxu0 0.0
        %1320 = vmatprep.subr.mxu0 0.0
        %1321 = vmatpush1.msra.mxu0 0.0
        %1322 = vmatprep.subr.mxu0 0.0
        %1323 = vmatpush1.msra.mxu0 0.0
        %1324 = vmatprep.subr.mxu0 0.0
        %1325 = vmatpush1.msra.mxu0 0.0
        %1326 = vmatprep.subr.mxu0 0.0
        %1327 = vmatpush1.msra.mxu0 0.0
        %1328 = vmatprep.subr.mxu0 0.0
        %1329 = vmatpush1.msra.mxu0 0.0
        %1330 = vmatprep.subr.mxu0 0.0
        %1331 = vmatpush1.msra.mxu0 0.0
        %1332 = vmatprep.subr.mxu0 0.0
        %1333 = vmatpush1.msra.mxu0 0.0
        %1334 = vmatprep.subr.mxu0 0.0
        %1335 = vmatpush1.msra.mxu0 0.0
        %1336 = vmatprep.subr.mxu0 0.0
        %1337 = vmatpush1.msra.mxu0 0.0
        %1338 = vmatprep.subr.mxu0 0.0
        %1339 = vmatpush1.msra.mxu0 0.0
        %1340 = vmatprep.subr.mxu0 0.0
        %1341 = vmatpush1.msra.mxu0 0.0
        %1342 = vmatprep.subr.mxu0 0.0
        %1343 = vmatpush1.msra.mxu0 0.0
        %1344 = vmatprep.mubr.f32.mxu0 0.0
        %1345 = vmatmul.mubr.f32.gmra.mrb[0].mxu0 %v1233
        %v1346 = vpop.f32.mrb[0].mxu0
        %v1347 = vadd.f32 0.0, %v1346
        %v1348 = vpop.f32.mrb[0].mxu0
        %1349 = vmatprep.mubr.f32.mxu0 0.0
        %1350 = vmatmul.mubr.f32.gmra.mrb[0].mxu0 %v1236
        %v1351 = vpop.f32.mrb[0].mxu0
        %v1352 = vadd.f32 0.0, %v1351
        %v1353 = vpop.f32.mrb[0].mxu0
        %1354 = vmatprep.mubr.f32.mxu0 0.0
        %1355 = vmatmul.mubr.f32.gmra.mrb[0].mxu0 %v1239
        %v1356 = vpop.f32.mrb[0].mxu0
        %v1357 = vadd.f32 0.0, %v1356
        %v1358 = vpop.f32.mrb[0].mxu0
        %1359 = vmatprep.mubr.f32.mxu0 0.0
        %1360 = vmatmul.mubr.f32.gmra.mrb[0].mxu0 %v1242
        %v1361 = vpop.f32.mrb[0].mxu0
        %v1362 = vadd.f32 0.0, %v1361
        %v1363 = vpop.f32.mrb[0].mxu0
        %1364 = vmatprep.mubr.f32.mxu0 0.0
        %1365 = vmatmul.mubr.f32.gmra.mrb[0].mxu0 %v1245
        %v1366 = vpop.f32.mrb[0].mxu0
        %v1367 = vadd.f32 0.0, %v1366
        %v1368 = vpop.f32.mrb[0].mxu0
        %1369 = vmatprep.mubr.f32.mxu0 0.0
        %1370 = vmatmul.mubr.f32.gmra.mrb[0].mxu0 %v1248
        %v1371 = vpop.f32.mrb[0].mxu0
        %v1372 = vadd.f32 0.0, %v1371
        %v1373 = vpop.f32.mrb[0].mxu0
        %1374 = vmatprep.mubr.f32.mxu0 0.0
        %1375 = vmatmul.mubr.f32.gmra.mrb[0].mxu0 %v1251
        %v1376 = vpop.f32.mrb[0].mxu0
        %v1377 = vadd.f32 0.0, %v1376
        %v1378 = vpop.f32.mrb[0].mxu0
        %1379 = vmatprep.mubr.f32.mxu0 0.0
        %1380 = vmatmul.mubr.f32.gmra.mrb[0].mxu0 %v1254
        %v1381 = vpop.f32.mrb[0].mxu0
        %v1382 = vadd.f32 0.0, %v1381
        %v1383 = vpop.f32.mrb[0].mxu0
        %1384 = vdwg.mxu0
        %v1385 = vadd.f32 %v1176, %v1347
        %v1386 = vadd.f32 %v1181, %v1352
        %v1387 = vadd.f32 %v1186, %v1357
        %v1388 = vadd.f32 %v1191, %v1362
        %v1389 = vadd.f32 %v1196, %v1367
        %v1390 = vadd.f32 %v1201, %v1372
        %v1391 = vadd.f32 %v1206, %v1377
        %v1392 = vadd.f32 %v1211, %v1382
        %s1393 = scalar_lea.vmem %s865, 384
        %v1394 = vld [vmem:[%s1393] sm:$0xff]
        %v1395 = vld [vmem:[%s1393 + $0x8] sm:$0xff]
        %v1396 = vld [vmem:[%s1393 + $0x10] sm:$0xff]
        %v1397 = vld [vmem:[%s1393 + $0x18] sm:$0xff]
        %v1398 = vld [vmem:[%s1393 + $0x20] sm:$0xff]
        %v1399 = vld [vmem:[%s1393 + $0x28] sm:$0xff]
        %v1400 = vld [vmem:[%s1393 + $0x30] sm:$0xff]
        %v1401 = vld [vmem:[%s1393 + $0x38] sm:$0xff]
        %v1402 = vld [vmem:[%s1393 + $0x40] sm:$0xff]
        %v1403 = vld [vmem:[%s1393 + $0x48] sm:$0xff]
        %v1404 = vld [vmem:[%s1393 + $0x50] sm:$0xff]
        %v1405 = vld [vmem:[%s1393 + $0x58] sm:$0xff]
        %v1406 = vld [vmem:[%s1393 + $0x60] sm:$0xff]
        %v1407 = vld [vmem:[%s1393 + $0x68] sm:$0xff]
        %v1408 = vld [vmem:[%s1393 + $0x70] sm:$0xff]
        %v1409 = vld [vmem:[%s1393 + $0x78] sm:$0xff]
        %1410 = vmatprep.subr.mxu0 0.0
        %1411 = vmatpush1.msra.mxu0 %v1394
        %1412 = vmatprep.subr.mxu0 0.0
        %1413 = vmatpush1.msra.mxu0 %v1395
        %1414 = vmatprep.subr.mxu0 0.0
        %1415 = vmatpush1.msra.mxu0 %v1396
        %1416 = vmatprep.subr.mxu0 0.0
        %1417 = vmatpush1.msra.mxu0 %v1397
        %1418 = vmatprep.subr.mxu0 0.0
        %1419 = vmatpush1.msra.mxu0 %v1398
        %1420 = vmatprep.subr.mxu0 0.0
        %1421 = vmatpush1.msra.mxu0 %v1399
        %1422 = vmatprep.subr.mxu0 0.0
        %1423 = vmatpush1.msra.mxu0 %v1400
        %1424 = vmatprep.subr.mxu0 0.0
        %1425 = vmatpush1.msra.mxu0 %v1401
        %1426 = vmatprep.subr.mxu0 0.0
        %1427 = vmatpush1.msra.mxu0 %v1402
        %1428 = vmatprep.subr.mxu0 0.0
        %1429 = vmatpush1.msra.mxu0 %v1403
        %1430 = vmatprep.subr.mxu0 0.0
        %1431 = vmatpush1.msra.mxu0 %v1404
        %1432 = vmatprep.subr.mxu0 0.0
        %1433 = vmatpush1.msra.mxu0 %v1405
        %1434 = vmatprep.subr.mxu0 0.0
        %1435 = vmatpush1.msra.mxu0 %v1406
        %1436 = vmatprep.subr.mxu0 0.0
        %1437 = vmatpush1.msra.mxu0 %v1407
        %1438 = vmatprep.subr.mxu0 0.0
        %1439 = vmatpush1.msra.mxu0 %v1408
        %1440 = vmatprep.subr.mxu0 0.0
        %1441 = vmatpush1.msra.mxu0 %v1409
        %1442 = vmatprep.subr.mxu0 0.0
        %1443 = vmatpush1.msra.mxu0 0.0
        %1444 = vmatprep.subr.mxu0 0.0
        %1445 = vmatpush1.msra.mxu0 0.0
        %1446 = vmatprep.subr.mxu0 0.0
        %1447 = vmatpush1.msra.mxu0 0.0
        %1448 = vmatprep.subr.mxu0 0.0
        %1449 = vmatpush1.msra.mxu0 0.0
        %1450 = vmatprep.subr.mxu0 0.0
        %1451 = vmatpush1.msra.mxu0 0.0
        %1452 = vmatprep.subr.mxu0 0.0
        %1453 = vmatpush1.msra.mxu0 0.0
        %1454 = vmatprep.subr.mxu0 0.0
        %1455 = vmatpush1.msra.mxu0 0.0
        %1456 = vmatprep.subr.mxu0 0.0
        %1457 = vmatpush1.msra.mxu0 0.0
        %1458 = vmatprep.subr.mxu0 0.0
        %1459 = vmatpush1.msra.mxu0 0.0
        %1460 = vmatprep.subr.mxu0 0.0
        %1461 = vmatpush1.msra.mxu0 0.0
        %1462 = vmatprep.subr.mxu0 0.0
        %1463 = vmatpush1.msra.mxu0 0.0
        %1464 = vmatprep.subr.mxu0 0.0
        %1465 = vmatpush1.msra.mxu0 0.0
        %1466 = vmatprep.subr.mxu0 0.0
        %1467 = vmatpush1.msra.mxu0 0.0
        %1468 = vmatprep.subr.mxu0 0.0
        %1469 = vmatpush1.msra.mxu0 0.0
        %1470 = vmatprep.subr.mxu0 0.0
        %1471 = vmatpush1.msra.mxu0 0.0
        %1472 = vmatprep.subr.mxu0 0.0
        %1473 = vmatpush1.msra.mxu0 0.0
        %1474 = vmatprep.mubr.f32.mxu0 0.0
        %1475 = vmatmul.mubr.f32.gmra.mrb[0].mxu0 %v946
        %v1476 = vpop.f32.mrb[0].mxu0
        %v1477 = vadd.f32 0.0, %v1476
        %v1478 = vpop.f32.mrb[0].mxu0
        %1479 = vmatprep.mubr.f32.mxu0 0.0
        %1480 = vmatmul.mubr.f32.gmra.mrb[0].mxu0 %v948
        %v1481 = vpop.f32.mrb[0].mxu0
        %v1482 = vadd.f32 0.0, %v1481
        %v1483 = vpop.f32.mrb[0].mxu0
        %1484 = vmatprep.mubr.f32.mxu0 0.0
        %1485 = vmatmul.mubr.f32.gmra.mrb[0].mxu0 %v950
        %v1486 = vpop.f32.mrb[0].mxu0
        %v1487 = vadd.f32 0.0, %v1486
        %v1488 = vpop.f32.mrb[0].mxu0
        %1489 = vmatprep.mubr.f32.mxu0 0.0
        %1490 = vmatmul.mubr.f32.gmra.mrb[0].mxu0 %v952
        %v1491 = vpop.f32.mrb[0].mxu0
        %v1492 = vadd.f32 0.0, %v1491
        %v1493 = vpop.f32.mrb[0].mxu0
        %1494 = vmatprep.mubr.f32.mxu0 0.0
        %1495 = vmatmul.mubr.f32.gmra.mrb[0].mxu0 %v954
        %v1496 = vpop.f32.mrb[0].mxu0
        %v1497 = vadd.f32 0.0, %v1496
        %v1498 = vpop.f32.mrb[0].mxu0
        %1499 = vmatprep.mubr.f32.mxu0 0.0
        %1500 = vmatmul.mubr.f32.gmra.mrb[0].mxu0 %v956
        %v1501 = vpop.f32.mrb[0].mxu0
        %v1502 = vadd.f32 0.0, %v1501
        %v1503 = vpop.f32.mrb[0].mxu0
        %1504 = vmatprep.mubr.f32.mxu0 0.0
        %1505 = vmatmul.mubr.f32.gmra.mrb[0].mxu0 %v958
        %v1506 = vpop.f32.mrb[0].mxu0
        %v1507 = vadd.f32 0.0, %v1506
        %v1508 = vpop.f32.mrb[0].mxu0
        %1509 = vmatprep.mubr.f32.mxu0 0.0
        %1510 = vmatmul.mubr.f32.gmra.mrb[0].mxu0 %v960
        %v1511 = vpop.f32.mrb[0].mxu0
        %v1512 = vadd.f32 0.0, %v1511
        %v1513 = vpop.f32.mrb[0].mxu0
        %1514 = vdwg.mxu0
        %v1515 = vadd.f32 %v1385, %v1477
        %v1516 = vadd.f32 %v1386, %v1482
        %v1517 = vadd.f32 %v1387, %v1487
        %v1518 = vadd.f32 %v1388, %v1492
        %v1519 = vadd.f32 %v1389, %v1497
        %v1520 = vadd.f32 %v1390, %v1502
        %v1521 = vadd.f32 %v1391, %v1507
        %v1522 = vadd.f32 %v1392, %v1512
        %s1523 = scalar_lea.vmem %s865, 512
        %v1524 = vld [vmem:[%s1523] sm:$0xff]
        %v1525 = vld [vmem:[%s1523 + $0x8] sm:$0xff]
        %v1526 = vld [vmem:[%s1523 + $0x10] sm:$0xff]
        %v1527 = vld [vmem:[%s1523 + $0x18] sm:$0xff]
        %v1528 = vld [vmem:[%s1523 + $0x20] sm:$0xff]
        %v1529 = vld [vmem:[%s1523 + $0x28] sm:$0xff]
        %v1530 = vld [vmem:[%s1523 + $0x30] sm:$0xff]
        %v1531 = vld [vmem:[%s1523 + $0x38] sm:$0xff]
        %v1532 = vld [vmem:[%s1523 + $0x40] sm:$0xff]
        %v1533 = vld [vmem:[%s1523 + $0x48] sm:$0xff]
        %v1534 = vld [vmem:[%s1523 + $0x50] sm:$0xff]
        %v1535 = vld [vmem:[%s1523 + $0x58] sm:$0xff]
        %v1536 = vld [vmem:[%s1523 + $0x60] sm:$0xff]
        %v1537 = vld [vmem:[%s1523 + $0x68] sm:$0xff]
        %v1538 = vld [vmem:[%s1523 + $0x70] sm:$0xff]
        %v1539 = vld [vmem:[%s1523 + $0x78] sm:$0xff]
        %1540 = vmatprep.subr.mxu0 0.0
        %1541 = vmatpush1.msra.mxu0 %v1524
        %1542 = vmatprep.subr.mxu0 0.0
        %1543 = vmatpush1.msra.mxu0 %v1525
        %1544 = vmatprep.subr.mxu0 0.0
        %1545 = vmatpush1.msra.mxu0 %v1526
        %1546 = vmatprep.subr.mxu0 0.0
        %1547 = vmatpush1.msra.mxu0 %v1527
        %1548 = vmatprep.subr.mxu0 0.0
        %1549 = vmatpush1.msra.mxu0 %v1528
        %1550 = vmatprep.subr.mxu0 0.0
        %1551 = vmatpush1.msra.mxu0 %v1529
        %1552 = vmatprep.subr.mxu0 0.0
        %1553 = vmatpush1.msra.mxu0 %v1530
        %1554 = vmatprep.subr.mxu0 0.0
        %1555 = vmatpush1.msra.mxu0 %v1531
        %1556 = vmatprep.subr.mxu0 0.0
        %1557 = vmatpush1.msra.mxu0 %v1532
        %1558 = vmatprep.subr.mxu0 0.0
        %1559 = vmatpush1.msra.mxu0 %v1533
        %1560 = vmatprep.subr.mxu0 0.0
        %1561 = vmatpush1.msra.mxu0 %v1534
        %1562 = vmatprep.subr.mxu0 0.0
        %1563 = vmatpush1.msra.mxu0 %v1535
        %1564 = vmatprep.subr.mxu0 0.0
        %1565 = vmatpush1.msra.mxu0 %v1536
        %1566 = vmatprep.subr.mxu0 0.0
        %1567 = vmatpush1.msra.mxu0 %v1537
        %1568 = vmatprep.subr.mxu0 0.0
        %1569 = vmatpush1.msra.mxu0 %v1538
        %1570 = vmatprep.subr.mxu0 0.0
        %1571 = vmatpush1.msra.mxu0 %v1539
        %1572 = vmatprep.subr.mxu0 0.0
        %1573 = vmatpush1.msra.mxu0 0.0
        %1574 = vmatprep.subr.mxu0 0.0
        %1575 = vmatpush1.msra.mxu0 0.0
        %1576 = vmatprep.subr.mxu0 0.0
        %1577 = vmatpush1.msra.mxu0 0.0
        %1578 = vmatprep.subr.mxu0 0.0
        %1579 = vmatpush1.msra.mxu0 0.0
        %1580 = vmatprep.subr.mxu0 0.0
        %1581 = vmatpush1.msra.mxu0 0.0
        %1582 = vmatprep.subr.mxu0 0.0
        %1583 = vmatpush1.msra.mxu0 0.0
        %1584 = vmatprep.subr.mxu0 0.0
        %1585 = vmatpush1.msra.mxu0 0.0
        %1586 = vmatprep.subr.mxu0 0.0
        %1587 = vmatpush1.msra.mxu0 0.0
        %1588 = vmatprep.subr.mxu0 0.0
        %1589 = vmatpush1.msra.mxu0 0.0
        %1590 = vmatprep.subr.mxu0 0.0
        %1591 = vmatpush1.msra.mxu0 0.0
        %1592 = vmatprep.subr.mxu0 0.0
        %1593 = vmatpush1.msra.mxu0 0.0
        %1594 = vmatprep.subr.mxu0 0.0
        %1595 = vmatpush1.msra.mxu0 0.0
        %1596 = vmatprep.subr.mxu0 0.0
        %1597 = vmatpush1.msra.mxu0 0.0
        %1598 = vmatprep.subr.mxu0 0.0
        %1599 = vmatpush1.msra.mxu0 0.0
        %1600 = vmatprep.subr.mxu0 0.0
        %1601 = vmatpush1.msra.mxu0 0.0
        %1602 = vmatprep.subr.mxu0 0.0
        %1603 = vmatpush1.msra.mxu0 0.0
        %1604 = vmatprep.mubr.f32.mxu0 0.0
        %1605 = vmatmul.mubr.f32.gmra.mrb[0].mxu0 %v963
        %v1606 = vpop.f32.mrb[0].mxu0
        %v1607 = vadd.f32 0.0, %v1606
        %v1608 = vpop.f32.mrb[0].mxu0
        %1609 = vmatprep.mubr.f32.mxu0 0.0
        %1610 = vmatmul.mubr.f32.gmra.mrb[0].mxu0 %v964
        %v1611 = vpop.f32.mrb[0].mxu0
        %v1612 = vadd.f32 0.0, %v1611
        %v1613 = vpop.f32.mrb[0].mxu0
        %1614 = vmatprep.mubr.f32.mxu0 0.0
        %1615 = vmatmul.mubr.f32.gmra.mrb[0].mxu0 %v965
        %v1616 = vpop.f32.mrb[0].mxu0
        %v1617 = vadd.f32 0.0, %v1616
        %v1618 = vpop.f32.mrb[0].mxu0
        %1619 = vmatprep.mubr.f32.mxu0 0.0
        %1620 = vmatmul.mubr.f32.gmra.mrb[0].mxu0 %v966
        %v1621 = vpop.f32.mrb[0].mxu0
        %v1622 = vadd.f32 0.0, %v1621
        %v1623 = vpop.f32.mrb[0].mxu0
        %1624 = vmatprep.mubr.f32.mxu0 0.0
        %1625 = vmatmul.mubr.f32.gmra.mrb[0].mxu0 %v967
        %v1626 = vpop.f32.mrb[0].mxu0
        %v1627 = vadd.f32 0.0, %v1626
        %v1628 = vpop.f32.mrb[0].mxu0
        %1629 = vmatprep.mubr.f32.mxu0 0.0
        %1630 = vmatmul.mubr.f32.gmra.mrb[0].mxu0 %v968
        %v1631 = vpop.f32.mrb[0].mxu0
        %v1632 = vadd.f32 0.0, %v1631
        %v1633 = vpop.f32.mrb[0].mxu0
        %1634 = vmatprep.mubr.f32.mxu0 0.0
        %1635 = vmatmul.mubr.f32.gmra.mrb[0].mxu0 %v969
        %v1636 = vpop.f32.mrb[0].mxu0
        %v1637 = vadd.f32 0.0, %v1636
        %v1638 = vpop.f32.mrb[0].mxu0
        %1639 = vmatprep.mubr.f32.mxu0 0.0
        %1640 = vmatmul.mubr.f32.gmra.mrb[0].mxu0 %v970
        %v1641 = vpop.f32.mrb[0].mxu0
        %v1642 = vadd.f32 0.0, %v1641
        %v1643 = vpop.f32.mrb[0].mxu0
        %1644 = vdwg.mxu0
        %v1645 = vadd.f32 %v1515, %v1607
        %v1646 = vadd.f32 %v1516, %v1612
        %v1647 = vadd.f32 %v1517, %v1617
        %v1648 = vadd.f32 %v1518, %v1622
        %v1649 = vadd.f32 %v1519, %v1627
        %v1650 = vadd.f32 %v1520, %v1632
        %v1651 = vadd.f32 %v1521, %v1637
        %v1652 = vadd.f32 %v1522, %v1642
        %v1669 = vrot.slane %v946, 1
        %v1670 = vrot.slane %v947, 1
        %v1671 = vsel %vm1230, %v1669, %v1670
        %v1672 = vrot.slane %v948, 1
        %v1673 = vrot.slane %v949, 1
        %v1674 = vsel %vm1230, %v1672, %v1673
        %v1675 = vrot.slane %v950, 1
        %v1676 = vrot.slane %v951, 1
        %v1677 = vsel %vm1230, %v1675, %v1676
        %v1678 = vrot.slane %v952, 1
        %v1679 = vrot.slane %v953, 1
        %v1680 = vsel %vm1230, %v1678, %v1679
        %v1681 = vrot.slane %v954, 1
        %v1682 = vrot.slane %v955, 1
        %v1683 = vsel %vm1230, %v1681, %v1682
        %v1684 = vrot.slane %v956, 1
        %v1685 = vrot.slane %v957, 1
        %v1686 = vsel %vm1230, %v1684, %v1685
        %v1687 = vrot.slane %v958, 1
        %v1688 = vrot.slane %v959, 1
        %v1689 = vsel %vm1230, %v1687, %v1688
        %v1690 = vrot.slane %v960, 1
        %v1691 = vrot.slane %v961, 1
        %v1692 = vsel %vm1230, %v1690, %v1691
        %s1701 = scalar_lea.vmem %s865, 640
        %v1702 = vld [vmem:[%s1701] sm:$0xff]
        %v1703 = vld [vmem:[%s1701 + $0x8] sm:$0xff]
        %v1704 = vld [vmem:[%s1701 + $0x10] sm:$0xff]
        %v1705 = vld [vmem:[%s1701 + $0x18] sm:$0xff]
        %v1706 = vld [vmem:[%s1701 + $0x20] sm:$0xff]
        %v1707 = vld [vmem:[%s1701 + $0x28] sm:$0xff]
        %v1708 = vld [vmem:[%s1701 + $0x30] sm:$0xff]
        %v1709 = vld [vmem:[%s1701 + $0x38] sm:$0xff]
        %v1710 = vld [vmem:[%s1701 + $0x40] sm:$0xff]
        %v1711 = vld [vmem:[%s1701 + $0x48] sm:$0xff]
        %v1712 = vld [vmem:[%s1701 + $0x50] sm:$0xff]
        %v1713 = vld [vmem:[%s1701 + $0x58] sm:$0xff]
        %v1714 = vld [vmem:[%s1701 + $0x60] sm:$0xff]
        %v1715 = vld [vmem:[%s1701 + $0x68] sm:$0xff]
        %v1716 = vld [vmem:[%s1701 + $0x70] sm:$0xff]
        %v1717 = vld [vmem:[%s1701 + $0x78] sm:$0xff]
        %1718 = vmatprep.subr.mxu0 0.0
        %1719 = vmatpush1.msra.mxu0 %v1702
        %1720 = vmatprep.subr.mxu0 0.0
        %1721 = vmatpush1.msra.mxu0 %v1703
        %1722 = vmatprep.subr.mxu0 0.0
        %1723 = vmatpush1.msra.mxu0 %v1704
        %1724 = vmatprep.subr.mxu0 0.0
        %1725 = vmatpush1.msra.mxu0 %v1705
        %1726 = vmatprep.subr.mxu0 0.0
        %1727 = vmatpush1.msra.mxu0 %v1706
        %1728 = vmatprep.subr.mxu0 0.0
        %1729 = vmatpush1.msra.mxu0 %v1707
        %1730 = vmatprep.subr.mxu0 0.0
        %1731 = vmatpush1.msra.mxu0 %v1708
        %1732 = vmatprep.subr.mxu0 0.0
        %1733 = vmatpush1.msra.mxu0 %v1709
        %1734 = vmatprep.subr.mxu0 0.0
        %1735 = vmatpush1.msra.mxu0 %v1710
        %1736 = vmatprep.subr.mxu0 0.0
        %1737 = vmatpush1.msra.mxu0 %v1711
        %1738 = vmatprep.subr.mxu0 0.0
        %1739 = vmatpush1.msra.mxu0 %v1712
        %1740 = vmatprep.subr.mxu0 0.0
        %1741 = vmatpush1.msra.mxu0 %v1713
        %1742 = vmatprep.subr.mxu0 0.0
        %1743 = vmatpush1.msra.mxu0 %v1714
        %1744 = vmatprep.subr.mxu0 0.0
        %1745 = vmatpush1.msra.mxu0 %v1715
        %1746 = vmatprep.subr.mxu0 0.0
        %1747 = vmatpush1.msra.mxu0 %v1716
        %1748 = vmatprep.subr.mxu0 0.0
        %1749 = vmatpush1.msra.mxu0 %v1717
        %1750 = vmatprep.subr.mxu0 0.0
        %1751 = vmatpush1.msra.mxu0 0.0
        %1752 = vmatprep.subr.mxu0 0.0
        %1753 = vmatpush1.msra.mxu0 0.0
        %1754 = vmatprep.subr.mxu0 0.0
        %1755 = vmatpush1.msra.mxu0 0.0
        %1756 = vmatprep.subr.mxu0 0.0
        %1757 = vmatpush1.msra.mxu0 0.0
        %1758 = vmatprep.subr.mxu0 0.0
        %1759 = vmatpush1.msra.mxu0 0.0
        %1760 = vmatprep.subr.mxu0 0.0
        %1761 = vmatpush1.msra.mxu0 0.0
        %1762 = vmatprep.subr.mxu0 0.0
        %1763 = vmatpush1.msra.mxu0 0.0
        %1764 = vmatprep.subr.mxu0 0.0
        %1765 = vmatpush1.msra.mxu0 0.0
        %1766 = vmatprep.subr.mxu0 0.0
        %1767 = vmatpush1.msra.mxu0 0.0
        %1768 = vmatprep.subr.mxu0 0.0
        %1769 = vmatpush1.msra.mxu0 0.0
        %1770 = vmatprep.subr.mxu0 0.0
        %1771 = vmatpush1.msra.mxu0 0.0
        %1772 = vmatprep.subr.mxu0 0.0
        %1773 = vmatpush1.msra.mxu0 0.0
        %1774 = vmatprep.subr.mxu0 0.0
        %1775 = vmatpush1.msra.mxu0 0.0
        %1776 = vmatprep.subr.mxu0 0.0
        %1777 = vmatpush1.msra.mxu0 0.0
        %1778 = vmatprep.subr.mxu0 0.0
        %1779 = vmatpush1.msra.mxu0 0.0
        %1780 = vmatprep.subr.mxu0 0.0
        %1781 = vmatpush1.msra.mxu0 0.0
        %1782 = vmatprep.mubr.f32.mxu0 0.0
        %1783 = vmatmul.mubr.f32.gmra.mrb[0].mxu0 %v1671
        %v1784 = vpop.f32.mrb[0].mxu0
        %v1785 = vadd.f32 0.0, %v1784
        %v1786 = vpop.f32.mrb[0].mxu0
        %1787 = vmatprep.mubr.f32.mxu0 0.0
        %1788 = vmatmul.mubr.f32.gmra.mrb[0].mxu0 %v1674
        %v1789 = vpop.f32.mrb[0].mxu0
        %v1790 = vadd.f32 0.0, %v1789
        %v1791 = vpop.f32.mrb[0].mxu0
        %1792 = vmatprep.mubr.f32.mxu0 0.0
        %1793 = vmatmul.mubr.f32.gmra.mrb[0].mxu0 %v1677
        %v1794 = vpop.f32.mrb[0].mxu0
        %v1795 = vadd.f32 0.0, %v1794
        %v1796 = vpop.f32.mrb[0].mxu0
        %1797 = vmatprep.mubr.f32.mxu0 0.0
        %1798 = vmatmul.mubr.f32.gmra.mrb[0].mxu0 %v1680
        %v1799 = vpop.f32.mrb[0].mxu0
        %v1800 = vadd.f32 0.0, %v1799
        %v1801 = vpop.f32.mrb[0].mxu0
        %1802 = vmatprep.mubr.f32.mxu0 0.0
        %1803 = vmatmul.mubr.f32.gmra.mrb[0].mxu0 %v1683
        %v1804 = vpop.f32.mrb[0].mxu0
        %v1805 = vadd.f32 0.0, %v1804
        %v1806 = vpop.f32.mrb[0].mxu0
        %1807 = vmatprep.mubr.f32.mxu0 0.0
        %1808 = vmatmul.mubr.f32.gmra.mrb[0].mxu0 %v1686
        %v1809 = vpop.f32.mrb[0].mxu0
        %v1810 = vadd.f32 0.0, %v1809
        %v1811 = vpop.f32.mrb[0].mxu0
        %1812 = vmatprep.mubr.f32.mxu0 0.0
        %1813 = vmatmul.mubr.f32.gmra.mrb[0].mxu0 %v1689
        %v1814 = vpop.f32.mrb[0].mxu0
        %v1815 = vadd.f32 0.0, %v1814
        %v1816 = vpop.f32.mrb[0].mxu0
        %1817 = vmatprep.mubr.f32.mxu0 0.0
        %1818 = vmatmul.mubr.f32.gmra.mrb[0].mxu0 %v1692
        %v1819 = vpop.f32.mrb[0].mxu0
        %v1820 = vadd.f32 0.0, %v1819
        %v1821 = vpop.f32.mrb[0].mxu0
        %1822 = vdwg.mxu0
        %v1823 = vadd.f32 %v1645, %v1785
        %v1824 = vadd.f32 %v1646, %v1790
        %v1825 = vadd.f32 %v1647, %v1795
        %v1826 = vadd.f32 %v1648, %v1800
        %v1827 = vadd.f32 %v1649, %v1805
        %v1828 = vadd.f32 %v1650, %v1810
        %v1829 = vadd.f32 %v1651, %v1815
        %v1830 = vadd.f32 %v1652, %v1820
        %s1831 = scalar_lea.vmem %s865, 768
        %v1832 = vld [vmem:[%s1831] sm:$0xff]
        %v1833 = vld [vmem:[%s1831 + $0x8] sm:$0xff]
        %v1834 = vld [vmem:[%s1831 + $0x10] sm:$0xff]
        %v1835 = vld [vmem:[%s1831 + $0x18] sm:$0xff]
        %v1836 = vld [vmem:[%s1831 + $0x20] sm:$0xff]
        %v1837 = vld [vmem:[%s1831 + $0x28] sm:$0xff]
        %v1838 = vld [vmem:[%s1831 + $0x30] sm:$0xff]
        %v1839 = vld [vmem:[%s1831 + $0x38] sm:$0xff]
        %v1840 = vld [vmem:[%s1831 + $0x40] sm:$0xff]
        %v1841 = vld [vmem:[%s1831 + $0x48] sm:$0xff]
        %v1842 = vld [vmem:[%s1831 + $0x50] sm:$0xff]
        %v1843 = vld [vmem:[%s1831 + $0x58] sm:$0xff]
        %v1844 = vld [vmem:[%s1831 + $0x60] sm:$0xff]
        %v1845 = vld [vmem:[%s1831 + $0x68] sm:$0xff]
        %v1846 = vld [vmem:[%s1831 + $0x70] sm:$0xff]
        %v1847 = vld [vmem:[%s1831 + $0x78] sm:$0xff]
        %1848 = vmatprep.subr.mxu0 0.0
        %1849 = vmatpush1.msra.mxu0 %v1832
        %1850 = vmatprep.subr.mxu0 0.0
        %1851 = vmatpush1.msra.mxu0 %v1833
        %1852 = vmatprep.subr.mxu0 0.0
        %1853 = vmatpush1.msra.mxu0 %v1834
        %1854 = vmatprep.subr.mxu0 0.0
        %1855 = vmatpush1.msra.mxu0 %v1835
        %1856 = vmatprep.subr.mxu0 0.0
        %1857 = vmatpush1.msra.mxu0 %v1836
        %1858 = vmatprep.subr.mxu0 0.0
        %1859 = vmatpush1.msra.mxu0 %v1837
        %1860 = vmatprep.subr.mxu0 0.0
        %1861 = vmatpush1.msra.mxu0 %v1838
        %1862 = vmatprep.subr.mxu0 0.0
        %1863 = vmatpush1.msra.mxu0 %v1839
        %1864 = vmatprep.subr.mxu0 0.0
        %1865 = vmatpush1.msra.mxu0 %v1840
        %1866 = vmatprep.subr.mxu0 0.0
        %1867 = vmatpush1.msra.mxu0 %v1841
        %1868 = vmatprep.subr.mxu0 0.0
        %1869 = vmatpush1.msra.mxu0 %v1842
        %1870 = vmatprep.subr.mxu0 0.0
        %1871 = vmatpush1.msra.mxu0 %v1843
        %1872 = vmatprep.subr.mxu0 0.0
        %1873 = vmatpush1.msra.mxu0 %v1844
        %1874 = vmatprep.subr.mxu0 0.0
        %1875 = vmatpush1.msra.mxu0 %v1845
        %1876 = vmatprep.subr.mxu0 0.0
        %1877 = vmatpush1.msra.mxu0 %v1846
        %1878 = vmatprep.subr.mxu0 0.0
        %1879 = vmatpush1.msra.mxu0 %v1847
        %1880 = vmatprep.subr.mxu0 0.0
        %1881 = vmatpush1.msra.mxu0 0.0
        %1882 = vmatprep.subr.mxu0 0.0
        %1883 = vmatpush1.msra.mxu0 0.0
        %1884 = vmatprep.subr.mxu0 0.0
        %1885 = vmatpush1.msra.mxu0 0.0
        %1886 = vmatprep.subr.mxu0 0.0
        %1887 = vmatpush1.msra.mxu0 0.0
        %1888 = vmatprep.subr.mxu0 0.0
        %1889 = vmatpush1.msra.mxu0 0.0
        %1890 = vmatprep.subr.mxu0 0.0
        %1891 = vmatpush1.msra.mxu0 0.0
        %1892 = vmatprep.subr.mxu0 0.0
        %1893 = vmatpush1.msra.mxu0 0.0
        %1894 = vmatprep.subr.mxu0 0.0
        %1895 = vmatpush1.msra.mxu0 0.0
        %1896 = vmatprep.subr.mxu0 0.0
        %1897 = vmatpush1.msra.mxu0 0.0
        %1898 = vmatprep.subr.mxu0 0.0
        %1899 = vmatpush1.msra.mxu0 0.0
        %1900 = vmatprep.subr.mxu0 0.0
        %1901 = vmatpush1.msra.mxu0 0.0
        %1902 = vmatprep.subr.mxu0 0.0
        %1903 = vmatpush1.msra.mxu0 0.0
        %1904 = vmatprep.subr.mxu0 0.0
        %1905 = vmatpush1.msra.mxu0 0.0
        %1906 = vmatprep.subr.mxu0 0.0
        %1907 = vmatpush1.msra.mxu0 0.0
        %1908 = vmatprep.subr.mxu0 0.0
        %1909 = vmatpush1.msra.mxu0 0.0
        %1910 = vmatprep.subr.mxu0 0.0
        %1911 = vmatpush1.msra.mxu0 0.0
        %1912 = vmatprep.mubr.f32.mxu0 0.0
        %1913 = vmatmul.mubr.f32.gmra.mrb[0].mxu0 %v918
        %v1914 = vpop.f32.mrb[0].mxu0
        %v1915 = vadd.f32 0.0, %v1914
        %v1916 = vpop.f32.mrb[0].mxu0
        %1917 = vmatprep.mubr.f32.mxu0 0.0
        %1918 = vmatmul.mubr.f32.gmra.mrb[0].mxu0 %v920
        %v1919 = vpop.f32.mrb[0].mxu0
        %v1920 = vadd.f32 0.0, %v1919
        %v1921 = vpop.f32.mrb[0].mxu0
        %1922 = vmatprep.mubr.f32.mxu0 0.0
        %1923 = vmatmul.mubr.f32.gmra.mrb[0].mxu0 %v922
        %v1924 = vpop.f32.mrb[0].mxu0
        %v1925 = vadd.f32 0.0, %v1924
        %v1926 = vpop.f32.mrb[0].mxu0
        %1927 = vmatprep.mubr.f32.mxu0 0.0
        %1928 = vmatmul.mubr.f32.gmra.mrb[0].mxu0 %v924
        %v1929 = vpop.f32.mrb[0].mxu0
        %v1930 = vadd.f32 0.0, %v1929
        %v1931 = vpop.f32.mrb[0].mxu0
        %1932 = vmatprep.mubr.f32.mxu0 0.0
        %1933 = vmatmul.mubr.f32.gmra.mrb[0].mxu0 %v926
        %v1934 = vpop.f32.mrb[0].mxu0
        %v1935 = vadd.f32 0.0, %v1934
        %v1936 = vpop.f32.mrb[0].mxu0
        %1937 = vmatprep.mubr.f32.mxu0 0.0
        %1938 = vmatmul.mubr.f32.gmra.mrb[0].mxu0 %v928
        %v1939 = vpop.f32.mrb[0].mxu0
        %v1940 = vadd.f32 0.0, %v1939
        %v1941 = vpop.f32.mrb[0].mxu0
        %1942 = vmatprep.mubr.f32.mxu0 0.0
        %1943 = vmatmul.mubr.f32.gmra.mrb[0].mxu0 %v930
        %v1944 = vpop.f32.mrb[0].mxu0
        %v1945 = vadd.f32 0.0, %v1944
        %v1946 = vpop.f32.mrb[0].mxu0
        %1947 = vmatprep.mubr.f32.mxu0 0.0
        %1948 = vmatmul.mubr.f32.gmra.mrb[0].mxu0 %v932
        %v1949 = vpop.f32.mrb[0].mxu0
        %v1950 = vadd.f32 0.0, %v1949
        %v1951 = vpop.f32.mrb[0].mxu0
        %1952 = vdwg.mxu0
        %v1953 = vadd.f32 %v1823, %v1915
        %v1954 = vadd.f32 %v1824, %v1920
        %v1955 = vadd.f32 %v1825, %v1925
        %v1956 = vadd.f32 %v1826, %v1930
        %v1957 = vadd.f32 %v1827, %v1935
        %v1958 = vadd.f32 %v1828, %v1940
        %v1959 = vadd.f32 %v1829, %v1945
        %v1960 = vadd.f32 %v1830, %v1950
        %s1961 = scalar_lea.vmem %s865, 896
        %v1962 = vld [vmem:[%s1961] sm:$0xff]
        %v1963 = vld [vmem:[%s1961 + $0x8] sm:$0xff]
        %v1964 = vld [vmem:[%s1961 + $0x10] sm:$0xff]
        %v1965 = vld [vmem:[%s1961 + $0x18] sm:$0xff]
        %v1966 = vld [vmem:[%s1961 + $0x20] sm:$0xff]
        %v1967 = vld [vmem:[%s1961 + $0x28] sm:$0xff]
        %v1968 = vld [vmem:[%s1961 + $0x30] sm:$0xff]
        %v1969 = vld [vmem:[%s1961 + $0x38] sm:$0xff]
        %v1970 = vld [vmem:[%s1961 + $0x40] sm:$0xff]
        %v1971 = vld [vmem:[%s1961 + $0x48] sm:$0xff]
        %v1972 = vld [vmem:[%s1961 + $0x50] sm:$0xff]
        %v1973 = vld [vmem:[%s1961 + $0x58] sm:$0xff]
        %v1974 = vld [vmem:[%s1961 + $0x60] sm:$0xff]
        %v1975 = vld [vmem:[%s1961 + $0x68] sm:$0xff]
        %v1976 = vld [vmem:[%s1961 + $0x70] sm:$0xff]
        %v1977 = vld [vmem:[%s1961 + $0x78] sm:$0xff]
        %1978 = vmatprep.subr.mxu0 0.0
        %1979 = vmatpush1.msra.mxu0 %v1962
        %1980 = vmatprep.subr.mxu0 0.0
        %1981 = vmatpush1.msra.mxu0 %v1963
        %1982 = vmatprep.subr.mxu0 0.0
        %1983 = vmatpush1.msra.mxu0 %v1964
        %1984 = vmatprep.subr.mxu0 0.0
        %1985 = vmatpush1.msra.mxu0 %v1965
        %1986 = vmatprep.subr.mxu0 0.0
        %1987 = vmatpush1.msra.mxu0 %v1966
        %1988 = vmatprep.subr.mxu0 0.0
        %1989 = vmatpush1.msra.mxu0 %v1967
        %1990 = vmatprep.subr.mxu0 0.0
        %1991 = vmatpush1.msra.mxu0 %v1968
        %1992 = vmatprep.subr.mxu0 0.0
        %1993 = vmatpush1.msra.mxu0 %v1969
        %1994 = vmatprep.subr.mxu0 0.0
        %1995 = vmatpush1.msra.mxu0 %v1970
        %1996 = vmatprep.subr.mxu0 0.0
        %1997 = vmatpush1.msra.mxu0 %v1971
        %1998 = vmatprep.subr.mxu0 0.0
        %1999 = vmatpush1.msra.mxu0 %v1972
        %2000 = vmatprep.subr.mxu0 0.0
        %2001 = vmatpush1.msra.mxu0 %v1973
        %2002 = vmatprep.subr.mxu0 0.0
        %2003 = vmatpush1.msra.mxu0 %v1974
        %2004 = vmatprep.subr.mxu0 0.0
        %2005 = vmatpush1.msra.mxu0 %v1975
        %2006 = vmatprep.subr.mxu0 0.0
        %2007 = vmatpush1.msra.mxu0 %v1976
        %2008 = vmatprep.subr.mxu0 0.0
        %2009 = vmatpush1.msra.mxu0 %v1977
        %2010 = vmatprep.subr.mxu0 0.0
        %2011 = vmatpush1.msra.mxu0 0.0
        %2012 = vmatprep.subr.mxu0 0.0
        %2013 = vmatpush1.msra.mxu0 0.0
        %2014 = vmatprep.subr.mxu0 0.0
        %2015 = vmatpush1.msra.mxu0 0.0
        %2016 = vmatprep.subr.mxu0 0.0
        %2017 = vmatpush1.msra.mxu0 0.0
        %2018 = vmatprep.subr.mxu0 0.0
        %2019 = vmatpush1.msra.mxu0 0.0
        %2020 = vmatprep.subr.mxu0 0.0
        %2021 = vmatpush1.msra.mxu0 0.0
        %2022 = vmatprep.subr.mxu0 0.0
        %2023 = vmatpush1.msra.mxu0 0.0
        %2024 = vmatprep.subr.mxu0 0.0
        %2025 = vmatpush1.msra.mxu0 0.0
        %2026 = vmatprep.subr.mxu0 0.0
        %2027 = vmatpush1.msra.mxu0 0.0
        %2028 = vmatprep.subr.mxu0 0.0
        %2029 = vmatpush1.msra.mxu0 0.0
        %2030 = vmatprep.subr.mxu0 0.0
        %2031 = vmatpush1.msra.mxu0 0.0
        %2032 = vmatprep.subr.mxu0 0.0
        %2033 = vmatpush1.msra.mxu0 0.0
        %2034 = vmatprep.subr.mxu0 0.0
        %2035 = vmatpush1.msra.mxu0 0.0
        %2036 = vmatprep.subr.mxu0 0.0
        %2037 = vmatpush1.msra.mxu0 0.0
        %2038 = vmatprep.subr.mxu0 0.0
        %2039 = vmatpush1.msra.mxu0 0.0
        %2040 = vmatprep.subr.mxu0 0.0
        %2041 = vmatpush1.msra.mxu0 0.0
        %2042 = vmatprep.mubr.f32.mxu0 0.0
        %2043 = vmatmul.mubr.f32.gmra.mrb[0].mxu0 %v936
        %v2044 = vpop.f32.mrb[0].mxu0
        %v2045 = vadd.f32 0.0, %v2044
        %v2046 = vpop.f32.mrb[0].mxu0
        %2047 = vmatprep.mubr.f32.mxu0 0.0
        %2048 = vmatmul.mubr.f32.gmra.mrb[0].mxu0 %v937
        %v2049 = vpop.f32.mrb[0].mxu0
        %v2050 = vadd.f32 0.0, %v2049
        %v2051 = vpop.f32.mrb[0].mxu0
        %2052 = vmatprep.mubr.f32.mxu0 0.0
        %2053 = vmatmul.mubr.f32.gmra.mrb[0].mxu0 %v938
        %v2054 = vpop.f32.mrb[0].mxu0
        %v2055 = vadd.f32 0.0, %v2054
        %v2056 = vpop.f32.mrb[0].mxu0
        %2057 = vmatprep.mubr.f32.mxu0 0.0
        %2058 = vmatmul.mubr.f32.gmra.mrb[0].mxu0 %v939
        %v2059 = vpop.f32.mrb[0].mxu0
        %v2060 = vadd.f32 0.0, %v2059
        %v2061 = vpop.f32.mrb[0].mxu0
        %2062 = vmatprep.mubr.f32.mxu0 0.0
        %2063 = vmatmul.mubr.f32.gmra.mrb[0].mxu0 %v940
        %v2064 = vpop.f32.mrb[0].mxu0
        %v2065 = vadd.f32 0.0, %v2064
        %v2066 = vpop.f32.mrb[0].mxu0
        %2067 = vmatprep.mubr.f32.mxu0 0.0
        %2068 = vmatmul.mubr.f32.gmra.mrb[0].mxu0 %v941
        %v2069 = vpop.f32.mrb[0].mxu0
        %v2070 = vadd.f32 0.0, %v2069
        %v2071 = vpop.f32.mrb[0].mxu0
        %2072 = vmatprep.mubr.f32.mxu0 0.0
        %2073 = vmatmul.mubr.f32.gmra.mrb[0].mxu0 %v942
        %v2074 = vpop.f32.mrb[0].mxu0
        %v2075 = vadd.f32 0.0, %v2074
        %v2076 = vpop.f32.mrb[0].mxu0
        %2077 = vmatprep.mubr.f32.mxu0 0.0
        %2078 = vmatmul.mubr.f32.gmra.mrb[0].mxu0 %v944
        %v2079 = vpop.f32.mrb[0].mxu0
        %v2080 = vadd.f32 0.0, %v2079
        %v2081 = vpop.f32.mrb[0].mxu0
        %2082 = vdwg.mxu0
        %v2083 = vadd.f32 %v1953, %v2045
        %v2084 = vadd.f32 %v1954, %v2050
        %v2085 = vadd.f32 %v1955, %v2055
        %v2086 = vadd.f32 %v1956, %v2060
        %v2087 = vadd.f32 %v1957, %v2065
        %v2088 = vadd.f32 %v1958, %v2070
        %v2089 = vadd.f32 %v1959, %v2075
        %v2090 = vadd.f32 %v1960, %v2080
        %v2093 = vrot.slane %v932, 1
        %v2094 = vrot.slane %v933, 1
        %v2095 = vsel %vm1230, %v2093, %v2094
        %s2097 = scalar_lea.vmem %s865, 1024
        %v2098 = vld [vmem:[%s2097] sm:$0xff]
        %v2099 = vld [vmem:[%s2097 + $0x8] sm:$0xff]
        %v2100 = vld [vmem:[%s2097 + $0x10] sm:$0xff]
        %v2101 = vld [vmem:[%s2097 + $0x18] sm:$0xff]
        %v2102 = vld [vmem:[%s2097 + $0x20] sm:$0xff]
        %v2103 = vld [vmem:[%s2097 + $0x28] sm:$0xff]
        %v2104 = vld [vmem:[%s2097 + $0x30] sm:$0xff]
        %v2105 = vld [vmem:[%s2097 + $0x38] sm:$0xff]
        %v2106 = vld [vmem:[%s2097 + $0x40] sm:$0xff]
        %v2107 = vld [vmem:[%s2097 + $0x48] sm:$0xff]
        %v2108 = vld [vmem:[%s2097 + $0x50] sm:$0xff]
        %v2109 = vld [vmem:[%s2097 + $0x58] sm:$0xff]
        %v2110 = vld [vmem:[%s2097 + $0x60] sm:$0xff]
        %v2111 = vld [vmem:[%s2097 + $0x68] sm:$0xff]
        %v2112 = vld [vmem:[%s2097 + $0x70] sm:$0xff]
        %v2113 = vld [vmem:[%s2097 + $0x78] sm:$0xff]
        %2114 = vmatprep.subr.mxu0 0.0
        %2115 = vmatpush1.msra.mxu0 %v2098
        %2116 = vmatprep.subr.mxu0 0.0
        %2117 = vmatpush1.msra.mxu0 %v2099
        %2118 = vmatprep.subr.mxu0 0.0
        %2119 = vmatpush1.msra.mxu0 %v2100
        %2120 = vmatprep.subr.mxu0 0.0
        %2121 = vmatpush1.msra.mxu0 %v2101
        %2122 = vmatprep.subr.mxu0 0.0
        %2123 = vmatpush1.msra.mxu0 %v2102
        %2124 = vmatprep.subr.mxu0 0.0
        %2125 = vmatpush1.msra.mxu0 %v2103
        %2126 = vmatprep.subr.mxu0 0.0
        %2127 = vmatpush1.msra.mxu0 %v2104
        %2128 = vmatprep.subr.mxu0 0.0
        %2129 = vmatpush1.msra.mxu0 %v2105
        %2130 = vmatprep.subr.mxu0 0.0
        %2131 = vmatpush1.msra.mxu0 %v2106
        %2132 = vmatprep.subr.mxu0 0.0
        %2133 = vmatpush1.msra.mxu0 %v2107
        %2134 = vmatprep.subr.mxu0 0.0
        %2135 = vmatpush1.msra.mxu0 %v2108
        %2136 = vmatprep.subr.mxu0 0.0
        %2137 = vmatpush1.msra.mxu0 %v2109
        %2138 = vmatprep.subr.mxu0 0.0
        %2139 = vmatpush1.msra.mxu0 %v2110
        %2140 = vmatprep.subr.mxu0 0.0
        %2141 = vmatpush1.msra.mxu0 %v2111
        %2142 = vmatprep.subr.mxu0 0.0
        %2143 = vmatpush1.msra.mxu0 %v2112
        %2144 = vmatprep.subr.mxu0 0.0
        %2145 = vmatpush1.msra.mxu0 %v2113
        %2146 = vmatprep.subr.mxu0 0.0
        %2147 = vmatpush1.msra.mxu0 0.0
        %2148 = vmatprep.subr.mxu0 0.0
        %2149 = vmatpush1.msra.mxu0 0.0
        %2150 = vmatprep.subr.mxu0 0.0
        %2151 = vmatpush1.msra.mxu0 0.0
        %2152 = vmatprep.subr.mxu0 0.0
        %2153 = vmatpush1.msra.mxu0 0.0
        %2154 = vmatprep.subr.mxu0 0.0
        %2155 = vmatpush1.msra.mxu0 0.0
        %2156 = vmatprep.subr.mxu0 0.0
        %2157 = vmatpush1.msra.mxu0 0.0
        %2158 = vmatprep.subr.mxu0 0.0
        %2159 = vmatpush1.msra.mxu0 0.0
        %2160 = vmatprep.subr.mxu0 0.0
        %2161 = vmatpush1.msra.mxu0 0.0
        %2162 = vmatprep.subr.mxu0 0.0
        %2163 = vmatpush1.msra.mxu0 0.0
        %2164 = vmatprep.subr.mxu0 0.0
        %2165 = vmatpush1.msra.mxu0 0.0
        %2166 = vmatprep.subr.mxu0 0.0
        %2167 = vmatpush1.msra.mxu0 0.0
        %2168 = vmatprep.subr.mxu0 0.0
        %2169 = vmatpush1.msra.mxu0 0.0
        %2170 = vmatprep.subr.mxu0 0.0
        %2171 = vmatpush1.msra.mxu0 0.0
        %2172 = vmatprep.subr.mxu0 0.0
        %2173 = vmatpush1.msra.mxu0 0.0
        %2174 = vmatprep.subr.mxu0 0.0
        %2175 = vmatpush1.msra.mxu0 0.0
        %2176 = vmatprep.subr.mxu0 0.0
        %2177 = vmatpush1.msra.mxu0 0.0
        %2178 = vmatprep.mubr.f32.mxu0 0.0
        %2179 = vmatmul.mubr.f32.gmra.mrb[0].mxu0 %v1236
        %v2180 = vpop.f32.mrb[0].mxu0
        %v2181 = vadd.f32 0.0, %v2180
        %v2182 = vpop.f32.mrb[0].mxu0
        %2183 = vmatprep.mubr.f32.mxu0 0.0
        %2184 = vmatmul.mubr.f32.gmra.mrb[0].mxu0 %v1239
        %v2185 = vpop.f32.mrb[0].mxu0
        %v2186 = vadd.f32 0.0, %v2185
        %v2187 = vpop.f32.mrb[0].mxu0
        %2188 = vmatprep.mubr.f32.mxu0 0.0
        %2189 = vmatmul.mubr.f32.gmra.mrb[0].mxu0 %v1242
        %v2190 = vpop.f32.mrb[0].mxu0
        %v2191 = vadd.f32 0.0, %v2190
        %v2192 = vpop.f32.mrb[0].mxu0
        %2193 = vmatprep.mubr.f32.mxu0 0.0
        %2194 = vmatmul.mubr.f32.gmra.mrb[0].mxu0 %v1245
        %v2195 = vpop.f32.mrb[0].mxu0
        %v2196 = vadd.f32 0.0, %v2195
        %v2197 = vpop.f32.mrb[0].mxu0
        %2198 = vmatprep.mubr.f32.mxu0 0.0
        %2199 = vmatmul.mubr.f32.gmra.mrb[0].mxu0 %v1248
        %v2200 = vpop.f32.mrb[0].mxu0
        %v2201 = vadd.f32 0.0, %v2200
        %v2202 = vpop.f32.mrb[0].mxu0
        %2203 = vmatprep.mubr.f32.mxu0 0.0
        %2204 = vmatmul.mubr.f32.gmra.mrb[0].mxu0 %v1251
        %v2205 = vpop.f32.mrb[0].mxu0
        %v2206 = vadd.f32 0.0, %v2205
        %v2207 = vpop.f32.mrb[0].mxu0
        %2208 = vmatprep.mubr.f32.mxu0 0.0
        %2209 = vmatmul.mubr.f32.gmra.mrb[0].mxu0 %v1254
        %v2210 = vpop.f32.mrb[0].mxu0
        %v2211 = vadd.f32 0.0, %v2210
        %v2212 = vpop.f32.mrb[0].mxu0
        %2213 = vmatprep.mubr.f32.mxu0 0.0
        %2214 = vmatmul.mubr.f32.gmra.mrb[0].mxu0 %v2095
        %v2215 = vpop.f32.mrb[0].mxu0
        %v2216 = vadd.f32 0.0, %v2215
        %v2217 = vpop.f32.mrb[0].mxu0
        %2218 = vdwg.mxu0
        %v2219 = vadd.f32 %v2083, %v2181
        %v2220 = vadd.f32 %v2084, %v2186
        %v2221 = vadd.f32 %v2085, %v2191
        %v2222 = vadd.f32 %v2086, %v2196
        %v2223 = vadd.f32 %v2087, %v2201
        %v2224 = vadd.f32 %v2088, %v2206
        %v2225 = vadd.f32 %v2089, %v2211
        %v2226 = vadd.f32 %v2090, %v2216
        %v2227 = vld [vmem:[%s869] sm:$0xff]
        %v2228 = vld [vmem:[%s869 + $0x8] sm:$0xff]
        %v2229 = vld [vmem:[%s869 + $0x10] sm:$0xff]
        %v2230 = vld [vmem:[%s869 + $0x18] sm:$0xff]
        %v2231 = vld [vmem:[%s869 + $0x20] sm:$0xff]
        %v2232 = vld [vmem:[%s869 + $0x28] sm:$0xff]
        %v2233 = vld [vmem:[%s869 + $0x30] sm:$0xff]
        %v2234 = vld [vmem:[%s869 + $0x38] sm:$0xff]
        %v2235 = vld [vmem:[%s869 + $0x40] sm:$0xff]
        %v2236 = vld [vmem:[%s869 + $0x48] sm:$0xff]
        %v2237 = vld [vmem:[%s869 + $0x50] sm:$0xff]
        %v2238 = vld [vmem:[%s869 + $0x58] sm:$0xff]
        %v2239 = vld [vmem:[%s869 + $0x60] sm:$0xff]
        %v2240 = vld [vmem:[%s869 + $0x68] sm:$0xff]
        %v2241 = vld [vmem:[%s869 + $0x70] sm:$0xff]
        %v2242 = vld [vmem:[%s869 + $0x78] sm:$0xff]
        %2243 = vmatprep.subr.mxu0 0.0
        %2244 = vmatpush1.msra.mxu0 %v2227
        %2245 = vmatprep.subr.mxu0 0.0
        %2246 = vmatpush1.msra.mxu0 %v2228
        %2247 = vmatprep.subr.mxu0 0.0
        %2248 = vmatpush1.msra.mxu0 %v2229
        %2249 = vmatprep.subr.mxu0 0.0
        %2250 = vmatpush1.msra.mxu0 %v2230
        %2251 = vmatprep.subr.mxu0 0.0
        %2252 = vmatpush1.msra.mxu0 %v2231
        %2253 = vmatprep.subr.mxu0 0.0
        %2254 = vmatpush1.msra.mxu0 %v2232
        %2255 = vmatprep.subr.mxu0 0.0
        %2256 = vmatpush1.msra.mxu0 %v2233
        %2257 = vmatprep.subr.mxu0 0.0
        %2258 = vmatpush1.msra.mxu0 %v2234
        %2259 = vmatprep.subr.mxu0 0.0
        %2260 = vmatpush1.msra.mxu0 %v2235
        %2261 = vmatprep.subr.mxu0 0.0
        %2262 = vmatpush1.msra.mxu0 %v2236
        %2263 = vmatprep.subr.mxu0 0.0
        %2264 = vmatpush1.msra.mxu0 %v2237
        %2265 = vmatprep.subr.mxu0 0.0
        %2266 = vmatpush1.msra.mxu0 %v2238
        %2267 = vmatprep.subr.mxu0 0.0
        %2268 = vmatpush1.msra.mxu0 %v2239
        %2269 = vmatprep.subr.mxu0 0.0
        %2270 = vmatpush1.msra.mxu0 %v2240
        %2271 = vmatprep.subr.mxu0 0.0
        %2272 = vmatpush1.msra.mxu0 %v2241
        %2273 = vmatprep.subr.mxu0 0.0
        %2274 = vmatpush1.msra.mxu0 %v2242
        %2275 = vmatprep.subr.mxu0 0.0
        %2276 = vmatpush1.msra.mxu0 0.0
        %2277 = vmatprep.subr.mxu0 0.0
        %2278 = vmatpush1.msra.mxu0 0.0
        %2279 = vmatprep.subr.mxu0 0.0
        %2280 = vmatpush1.msra.mxu0 0.0
        %2281 = vmatprep.subr.mxu0 0.0
        %2282 = vmatpush1.msra.mxu0 0.0
        %2283 = vmatprep.subr.mxu0 0.0
        %2284 = vmatpush1.msra.mxu0 0.0
        %2285 = vmatprep.subr.mxu0 0.0
        %2286 = vmatpush1.msra.mxu0 0.0
        %2287 = vmatprep.subr.mxu0 0.0
        %2288 = vmatpush1.msra.mxu0 0.0
        %2289 = vmatprep.subr.mxu0 0.0
        %2290 = vmatpush1.msra.mxu0 0.0
        %2291 = vmatprep.subr.mxu0 0.0
        %2292 = vmatpush1.msra.mxu0 0.0
        %2293 = vmatprep.subr.mxu0 0.0
        %2294 = vmatpush1.msra.mxu0 0.0
        %2295 = vmatprep.subr.mxu0 0.0
        %2296 = vmatpush1.msra.mxu0 0.0
        %2297 = vmatprep.subr.mxu0 0.0
        %2298 = vmatpush1.msra.mxu0 0.0
        %2299 = vmatprep.subr.mxu0 0.0
        %2300 = vmatpush1.msra.mxu0 0.0
        %2301 = vmatprep.subr.mxu0 0.0
        %2302 = vmatpush1.msra.mxu0 0.0
        %2303 = vmatprep.subr.mxu0 0.0
        %2304 = vmatpush1.msra.mxu0 0.0
        %2305 = vmatprep.subr.mxu0 0.0
        %2306 = vmatpush1.msra.mxu0 0.0
        %2307 = vmatprep.mubr.f32.mxu0 0.0
        %2308 = vmatmul.mubr.f32.gmra.mrb[0].mxu0 %v963
        %v2309 = vpop.f32.mrb[0].mxu0
        %v2310 = vadd.f32 0.0, %v2309
        %v2311 = vpop.f32.mrb[0].mxu0
        %2312 = vmatprep.mubr.f32.mxu0 0.0
        %2313 = vmatmul.mubr.f32.gmra.mrb[0].mxu0 %v964
        %v2314 = vpop.f32.mrb[0].mxu0
        %v2315 = vadd.f32 0.0, %v2314
        %v2316 = vpop.f32.mrb[0].mxu0
        %2317 = vmatprep.mubr.f32.mxu0 0.0
        %2318 = vmatmul.mubr.f32.gmra.mrb[0].mxu0 %v965
        %v2319 = vpop.f32.mrb[0].mxu0
        %v2320 = vadd.f32 0.0, %v2319
        %v2321 = vpop.f32.mrb[0].mxu0
        %2322 = vmatprep.mubr.f32.mxu0 0.0
        %2323 = vmatmul.mubr.f32.gmra.mrb[0].mxu0 %v966
        %v2324 = vpop.f32.mrb[0].mxu0
        %v2325 = vadd.f32 0.0, %v2324
        %v2326 = vpop.f32.mrb[0].mxu0
        %2327 = vmatprep.mubr.f32.mxu0 0.0
        %2328 = vmatmul.mubr.f32.gmra.mrb[0].mxu0 %v967
        %v2329 = vpop.f32.mrb[0].mxu0
        %v2330 = vadd.f32 0.0, %v2329
        %v2331 = vpop.f32.mrb[0].mxu0
        %2332 = vmatprep.mubr.f32.mxu0 0.0
        %2333 = vmatmul.mubr.f32.gmra.mrb[0].mxu0 %v968
        %v2334 = vpop.f32.mrb[0].mxu0
        %v2335 = vadd.f32 0.0, %v2334
        %v2336 = vpop.f32.mrb[0].mxu0
        %2337 = vmatprep.mubr.f32.mxu0 0.0
        %2338 = vmatmul.mubr.f32.gmra.mrb[0].mxu0 %v969
        %v2339 = vpop.f32.mrb[0].mxu0
        %v2340 = vadd.f32 0.0, %v2339
        %v2341 = vpop.f32.mrb[0].mxu0
        %2342 = vmatprep.mubr.f32.mxu0 0.0
        %2343 = vmatmul.mubr.f32.gmra.mrb[0].mxu0 %v970
        %v2344 = vpop.f32.mrb[0].mxu0
        %v2345 = vadd.f32 0.0, %v2344
        %v2346 = vpop.f32.mrb[0].mxu0
        %2347 = vdwg.mxu0
        %vm2348 = vcmask 523264
        %v2350 = vsel %vm2348, 1.0, 0
        %2352 = vmatprep.subr.mxu0 0.0
        %2353 = vmatpush1.msra.mxu0 %v2219
        %2354 = vmatprep.subr.mxu0 0.0
        %2355 = vmatpush1.msra.mxu0 %v2220
        %2356 = vmatprep.subr.mxu0 0.0
        %2357 = vmatpush1.msra.mxu0 %v2221
        %2358 = vmatprep.subr.mxu0 0.0
        %2359 = vmatpush1.msra.mxu0 %v2222
        %2360 = vmatprep.subr.mxu0 0.0
        %2361 = vmatpush1.msra.mxu0 %v2223
        %2362 = vmatprep.subr.mxu0 0.0
        %2363 = vmatpush1.msra.mxu0 %v2224
        %2364 = vmatprep.subr.mxu0 0.0
        %2365 = vmatpush1.msra.mxu0 %v2225
        %2366 = vmatprep.subr.mxu0 0.0
        %2367 = vmatpush1.msra.mxu0 %v2226
        %2368 = vmatprep.subr.mxu0 0.0
        %2369 = vmatpush1.msra.mxu0 0.0
        %2370 = vmatprep.subr.mxu0 0.0
        %2371 = vmatpush1.msra.mxu0 0.0
        %2372 = vmatprep.subr.mxu0 0.0
        %2373 = vmatpush1.msra.mxu0 0.0
        %2374 = vmatprep.subr.mxu0 0.0
        %2375 = vmatpush1.msra.mxu0 0.0
        %2376 = vmatprep.subr.mxu0 0.0
        %2377 = vmatpush1.msra.mxu0 0.0
        %2378 = vmatprep.subr.mxu0 0.0
        %2379 = vmatpush1.msra.mxu0 0.0
        %2380 = vmatprep.subr.mxu0 0.0
        %2381 = vmatpush1.msra.mxu0 0.0
        %2382 = vmatprep.subr.mxu0 0.0
        %2383 = vmatpush1.msra.mxu0 0.0
        %2384 = vmatprep.subr.mxu0 0.0
        %2385 = vmatpush1.msra.mxu0 0.0
        %2386 = vmatprep.subr.mxu0 0.0
        %2387 = vmatpush1.msra.mxu0 0.0
        %2388 = vmatprep.subr.mxu0 0.0
        %2389 = vmatpush1.msra.mxu0 0.0
        %2390 = vmatprep.subr.mxu0 0.0
        %2391 = vmatpush1.msra.mxu0 0.0
        %2392 = vmatprep.subr.mxu0 0.0
        %2393 = vmatpush1.msra.mxu0 0.0
        %2394 = vmatprep.subr.mxu0 0.0
        %2395 = vmatpush1.msra.mxu0 0.0
        %2396 = vmatprep.subr.mxu0 0.0
        %2397 = vmatpush1.msra.mxu0 0.0
        %2398 = vmatprep.subr.mxu0 0.0
        %2399 = vmatpush1.msra.mxu0 0.0
        %2400 = vmatprep.subr.mxu0 0.0
        %2401 = vmatpush1.msra.mxu0 0.0
        %2402 = vmatprep.subr.mxu0 0.0
        %2403 = vmatpush1.msra.mxu0 0.0
        %2404 = vmatprep.subr.mxu0 0.0
        %2405 = vmatpush1.msra.mxu0 0.0
        %2406 = vmatprep.subr.mxu0 0.0
        %2407 = vmatpush1.msra.mxu0 0.0
        %2408 = vmatprep.subr.mxu0 0.0
        %2409 = vmatpush1.msra.mxu0 0.0
        %2410 = vmatprep.subr.mxu0 0.0
        %2411 = vmatpush1.msra.mxu0 0.0
        %2412 = vmatprep.subr.mxu0 0.0
        %2413 = vmatpush1.msra.mxu0 0.0
        %2414 = vmatprep.subr.mxu0 0.0
        %2415 = vmatpush1.msra.mxu0 0.0
        %2416 = vmatprep.mubr.f32.mxu0 0.0
        %2417 = vmatmul.mubr.f32.gmra.mrb[0].mxu0 %v2350
        %v2418 = vpop.f32.mrb[0].mxu0
        %v2419 = vadd.f32 0.0, %v2418
        %v2420 = vpop.f32.mrb[0].mxu0
        %2421 = vdwg.mxu0
        %v2422 = vmul.f32 %v2219, %v2219
        %v2423 = vmul.f32 %v2220, %v2220
        %v2424 = vmul.f32 %v2221, %v2221
        %v2425 = vmul.f32 %v2222, %v2222
        %v2426 = vmul.f32 %v2223, %v2223
        %v2427 = vmul.f32 %v2224, %v2224
        %v2428 = vmul.f32 %v2225, %v2225
        %v2429 = vmul.f32 %v2226, %v2226
        %2430 = vmatprep.subr.mxu0 0.0
        %2431 = vmatpush1.msra.mxu0 %v2422
        %2432 = vmatprep.subr.mxu0 0.0
        %2433 = vmatpush1.msra.mxu0 %v2423
        %2434 = vmatprep.subr.mxu0 0.0
        %2435 = vmatpush1.msra.mxu0 %v2424
        %2436 = vmatprep.subr.mxu0 0.0
        %2437 = vmatpush1.msra.mxu0 %v2425
        %2438 = vmatprep.subr.mxu0 0.0
        %2439 = vmatpush1.msra.mxu0 %v2426
        %2440 = vmatprep.subr.mxu0 0.0
        %2441 = vmatpush1.msra.mxu0 %v2427
        %2442 = vmatprep.subr.mxu0 0.0
        %2443 = vmatpush1.msra.mxu0 %v2428
        %2444 = vmatprep.subr.mxu0 0.0
        %2445 = vmatpush1.msra.mxu0 %v2429
        %2446 = vmatprep.subr.mxu0 0.0
        %2447 = vmatpush1.msra.mxu0 0.0
        %2448 = vmatprep.subr.mxu0 0.0
        %2449 = vmatpush1.msra.mxu0 0.0
        %2450 = vmatprep.subr.mxu0 0.0
        %2451 = vmatpush1.msra.mxu0 0.0
        %2452 = vmatprep.subr.mxu0 0.0
        %2453 = vmatpush1.msra.mxu0 0.0
        %2454 = vmatprep.subr.mxu0 0.0
        %2455 = vmatpush1.msra.mxu0 0.0
        %2456 = vmatprep.subr.mxu0 0.0
        %2457 = vmatpush1.msra.mxu0 0.0
        %2458 = vmatprep.subr.mxu0 0.0
        %2459 = vmatpush1.msra.mxu0 0.0
        %2460 = vmatprep.subr.mxu0 0.0
        %2461 = vmatpush1.msra.mxu0 0.0
        %2462 = vmatprep.subr.mxu0 0.0
        %2463 = vmatpush1.msra.mxu0 0.0
        %2464 = vmatprep.subr.mxu0 0.0
        %2465 = vmatpush1.msra.mxu0 0.0
        %2466 = vmatprep.subr.mxu0 0.0
        %2467 = vmatpush1.msra.mxu0 0.0
        %2468 = vmatprep.subr.mxu0 0.0
        %2469 = vmatpush1.msra.mxu0 0.0
        %2470 = vmatprep.subr.mxu0 0.0
        %2471 = vmatpush1.msra.mxu0 0.0
        %2472 = vmatprep.subr.mxu0 0.0
        %2473 = vmatpush1.msra.mxu0 0.0
        %2474 = vmatprep.subr.mxu0 0.0
        %2475 = vmatpush1.msra.mxu0 0.0
        %2476 = vmatprep.subr.mxu0 0.0
        %2477 = vmatpush1.msra.mxu0 0.0
        %2478 = vmatprep.subr.mxu0 0.0
        %2479 = vmatpush1.msra.mxu0 0.0
        %2480 = vmatprep.subr.mxu0 0.0
        %2481 = vmatpush1.msra.mxu0 0.0
        %2482 = vmatprep.subr.mxu0 0.0
        %2483 = vmatpush1.msra.mxu0 0.0
        %2484 = vmatprep.subr.mxu0 0.0
        %2485 = vmatpush1.msra.mxu0 0.0
        %2486 = vmatprep.subr.mxu0 0.0
        %2487 = vmatpush1.msra.mxu0 0.0
        %2488 = vmatprep.subr.mxu0 0.0
        %2489 = vmatpush1.msra.mxu0 0.0
        %2490 = vmatprep.subr.mxu0 0.0
        %2491 = vmatpush1.msra.mxu0 0.0
        %2492 = vmatprep.subr.mxu0 0.0
        %2493 = vmatpush1.msra.mxu0 0.0
        %2494 = vmatprep.mubr.f32.mxu0 0.0
        %2495 = vmatmul.mubr.f32.gmra.mrb[0].mxu0 %v2350
        %v2496 = vpop.f32.mrb[0].mxu0
        %v2497 = vadd.f32 0.0, %v2496
        %v2498 = vpop.f32.mrb[0].mxu0
        %2499 = vdwg.mxu0
        %v2501 = vrot.slane %v2497, 7
        %vm2503 = vcmask 1040384
        %v2504 = vsel %vm2503, %v2419, %v2501
        %2505 = vst [vmem:[%s905] sm:$0x3] %v2504
        %2506 = vmatprep.subr.mxu0 0.0
        %2507 = vmatpush1.msra.mxu0 %v2310
        %2508 = vmatprep.subr.mxu0 0.0
        %2509 = vmatpush1.msra.mxu0 %v2315
        %2510 = vmatprep.subr.mxu0 0.0
        %2511 = vmatpush1.msra.mxu0 %v2320
        %2512 = vmatprep.subr.mxu0 0.0
        %2513 = vmatpush1.msra.mxu0 %v2325
        %2514 = vmatprep.subr.mxu0 0.0
        %2515 = vmatpush1.msra.mxu0 %v2330
        %2516 = vmatprep.subr.mxu0 0.0
        %2517 = vmatpush1.msra.mxu0 %v2335
        %2518 = vmatprep.subr.mxu0 0.0
        %2519 = vmatpush1.msra.mxu0 %v2340
        %2520 = vmatprep.subr.mxu0 0.0
        %2521 = vmatpush1.msra.mxu0 %v2345
        %2522 = vmatprep.subr.mxu0 0.0
        %2523 = vmatpush1.msra.mxu0 0.0
        %2524 = vmatprep.subr.mxu0 0.0
        %2525 = vmatpush1.msra.mxu0 0.0
        %2526 = vmatprep.subr.mxu0 0.0
        %2527 = vmatpush1.msra.mxu0 0.0
        %2528 = vmatprep.subr.mxu0 0.0
        %2529 = vmatpush1.msra.mxu0 0.0
        %2530 = vmatprep.subr.mxu0 0.0
        %2531 = vmatpush1.msra.mxu0 0.0
        %2532 = vmatprep.subr.mxu0 0.0
        %2533 = vmatpush1.msra.mxu0 0.0
        %2534 = vmatprep.subr.mxu0 0.0
        %2535 = vmatpush1.msra.mxu0 0.0
        %2536 = vmatprep.subr.mxu0 0.0
        %2537 = vmatpush1.msra.mxu0 0.0
        %2538 = vmatprep.subr.mxu0 0.0
        %2539 = vmatpush1.msra.mxu0 0.0
        %2540 = vmatprep.subr.mxu0 0.0
        %2541 = vmatpush1.msra.mxu0 0.0
        %2542 = vmatprep.subr.mxu0 0.0
        %2543 = vmatpush1.msra.mxu0 0.0
        %2544 = vmatprep.subr.mxu0 0.0
        %2545 = vmatpush1.msra.mxu0 0.0
        %2546 = vmatprep.subr.mxu0 0.0
        %2547 = vmatpush1.msra.mxu0 0.0
        %2548 = vmatprep.subr.mxu0 0.0
        %2549 = vmatpush1.msra.mxu0 0.0
        %2550 = vmatprep.subr.mxu0 0.0
        %2551 = vmatpush1.msra.mxu0 0.0
        %2552 = vmatprep.subr.mxu0 0.0
        %2553 = vmatpush1.msra.mxu0 0.0
        %2554 = vmatprep.subr.mxu0 0.0
        %2555 = vmatpush1.msra.mxu0 0.0
        %2556 = vmatprep.subr.mxu0 0.0
        %2557 = vmatpush1.msra.mxu0 0.0
        %2558 = vmatprep.subr.mxu0 0.0
        %2559 = vmatpush1.msra.mxu0 0.0
        %2560 = vmatprep.subr.mxu0 0.0
        %2561 = vmatpush1.msra.mxu0 0.0
        %2562 = vmatprep.subr.mxu0 0.0
        %2563 = vmatpush1.msra.mxu0 0.0
        %2564 = vmatprep.subr.mxu0 0.0
        %2565 = vmatpush1.msra.mxu0 0.0
        %2566 = vmatprep.subr.mxu0 0.0
        %2567 = vmatpush1.msra.mxu0 0.0
        %2568 = vmatprep.subr.mxu0 0.0
        %2569 = vmatpush1.msra.mxu0 0.0
        %2570 = vmatprep.mubr.f32.mxu0 0.0
        %2571 = vmatmul.mubr.f32.gmra.mrb[0].mxu0 %v2350
        %v2572 = vpop.f32.mrb[0].mxu0
        %v2573 = vadd.f32 0.0, %v2572
        %v2574 = vpop.f32.mrb[0].mxu0
        %2575 = vdwg.mxu0
        %v2576 = vmul.f32 %v2310, %v2310
        %v2577 = vmul.f32 %v2315, %v2315
        %v2578 = vmul.f32 %v2320, %v2320
        %v2579 = vmul.f32 %v2325, %v2325
        %v2580 = vmul.f32 %v2330, %v2330
        %v2581 = vmul.f32 %v2335, %v2335
        %v2582 = vmul.f32 %v2340, %v2340
        %v2583 = vmul.f32 %v2345, %v2345
        %2584 = vmatprep.subr.mxu0 0.0
        %2585 = vmatpush1.msra.mxu0 %v2576
        %2586 = vmatprep.subr.mxu0 0.0
        %2587 = vmatpush1.msra.mxu0 %v2577
        %2588 = vmatprep.subr.mxu0 0.0
        %2589 = vmatpush1.msra.mxu0 %v2578
        %2590 = vmatprep.subr.mxu0 0.0
        %2591 = vmatpush1.msra.mxu0 %v2579
        %2592 = vmatprep.subr.mxu0 0.0
        %2593 = vmatpush1.msra.mxu0 %v2580
        %2594 = vmatprep.subr.mxu0 0.0
        %2595 = vmatpush1.msra.mxu0 %v2581
        %2596 = vmatprep.subr.mxu0 0.0
        %2597 = vmatpush1.msra.mxu0 %v2582
        %2598 = vmatprep.subr.mxu0 0.0
        %2599 = vmatpush1.msra.mxu0 %v2583
        %2600 = vmatprep.subr.mxu0 0.0
        %2601 = vmatpush1.msra.mxu0 0.0
        %2602 = vmatprep.subr.mxu0 0.0
        %2603 = vmatpush1.msra.mxu0 0.0
        %2604 = vmatprep.subr.mxu0 0.0
        %2605 = vmatpush1.msra.mxu0 0.0
        %2606 = vmatprep.subr.mxu0 0.0
        %2607 = vmatpush1.msra.mxu0 0.0
        %2608 = vmatprep.subr.mxu0 0.0
        %2609 = vmatpush1.msra.mxu0 0.0
        %2610 = vmatprep.subr.mxu0 0.0
        %2611 = vmatpush1.msra.mxu0 0.0
        %2612 = vmatprep.subr.mxu0 0.0
        %2613 = vmatpush1.msra.mxu0 0.0
        %2614 = vmatprep.subr.mxu0 0.0
        %2615 = vmatpush1.msra.mxu0 0.0
        %2616 = vmatprep.subr.mxu0 0.0
        %2617 = vmatpush1.msra.mxu0 0.0
        %2618 = vmatprep.subr.mxu0 0.0
        %2619 = vmatpush1.msra.mxu0 0.0
        %2620 = vmatprep.subr.mxu0 0.0
        %2621 = vmatpush1.msra.mxu0 0.0
        %2622 = vmatprep.subr.mxu0 0.0
        %2623 = vmatpush1.msra.mxu0 0.0
        %2624 = vmatprep.subr.mxu0 0.0
        %2625 = vmatpush1.msra.mxu0 0.0
        %2626 = vmatprep.subr.mxu0 0.0
        %2627 = vmatpush1.msra.mxu0 0.0
        %2628 = vmatprep.subr.mxu0 0.0
        %2629 = vmatpush1.msra.mxu0 0.0
        %2630 = vmatprep.subr.mxu0 0.0
        %2631 = vmatpush1.msra.mxu0 0.0
        %2632 = vmatprep.subr.mxu0 0.0
        %2633 = vmatpush1.msra.mxu0 0.0
        %2634 = vmatprep.subr.mxu0 0.0
        %2635 = vmatpush1.msra.mxu0 0.0
        %2636 = vmatprep.subr.mxu0 0.0
        %2637 = vmatpush1.msra.mxu0 0.0
        %2638 = vmatprep.subr.mxu0 0.0
        %2639 = vmatpush1.msra.mxu0 0.0
        %2640 = vmatprep.subr.mxu0 0.0
        %2641 = vmatpush1.msra.mxu0 0.0
        %2642 = vmatprep.subr.mxu0 0.0
        %2643 = vmatpush1.msra.mxu0 0.0
        %2644 = vmatprep.subr.mxu0 0.0
        %2645 = vmatpush1.msra.mxu0 0.0
        %2646 = vmatprep.subr.mxu0 0.0
        %2647 = vmatpush1.msra.mxu0 0.0
        %2648 = vmatprep.mubr.f32.mxu0 0.0
        %2649 = vmatmul.mubr.f32.gmra.mrb[0].mxu0 %v2350
        %v2650 = vpop.f32.mrb[0].mxu0
        %v2651 = vadd.f32 0.0, %v2650
        %v2652 = vpop.f32.mrb[0].mxu0
        %2653 = vdwg.mxu0
        %v2655 = vrot.slane %v2651, 7
        %v2657 = vsel %vm2503, %v2573, %v2655
        %2658 = vst [vmem:[%s915] sm:$0x3] %v2657
        %2659 = vst [vmem:[%s881] sm:$0xff] %v2219
        %2660 = vst [vmem:[%s881 + $0x8] sm:$0xff] %v2220
        %2661 = vst [vmem:[%s881 + $0x10] sm:$0xff] %v2221
        %2662 = vst [vmem:[%s881 + $0x18] sm:$0xff] %v2222
        %2663 = vst [vmem:[%s881 + $0x20] sm:$0xff] %v2223
        %2664 = vst [vmem:[%s881 + $0x28] sm:$0xff] %v2224
        %2665 = vst [vmem:[%s881 + $0x30] sm:$0xff] %v2225
        %2666 = vst [vmem:[%s881 + $0x38] sm:$0xff] %v2226
        %2667 = vst [vmem:[%s894] sm:$0xff] %v2310
        %2668 = vst [vmem:[%s894 + $0x8] sm:$0xff] %v2315
        %2669 = vst [vmem:[%s894 + $0x10] sm:$0xff] %v2320
        %2670 = vst [vmem:[%s894 + $0x18] sm:$0xff] %v2325
        %2671 = vst [vmem:[%s894 + $0x20] sm:$0xff] %v2330
        %2672 = vst [vmem:[%s894 + $0x28] sm:$0xff] %v2335
        %2673 = vst [vmem:[%s894 + $0x30] sm:$0xff] %v2340
        %2674 = vst [vmem:[%s894 + $0x38] sm:$0xff] %v2345
        %s2675 = smul.u32 8, %s26
        %p2676 = scmp.lt.s32.totalorder %s25, 1
        %s2677 = scalar_select %p2676, %s25, 1
        %p2678 = scmp.lt.s32.totalorder %s2675, 7
        %s2679 = scalar_select %p2678, %s2675, 7
        %p2680 = scmp.lt.s32.totalorder %s24, 0
        %s2681 = scalar_select %p2680, %s24, 0
        %s2682 = sadd.s32 %s2681, %s2679
        %s2683 = smul.addr %s2677, 8
        %s2684 = sadd.s32 %s2682, %s2683
        %s2685 = smul.addr %s2684, 8
        %s2686 = scalar_lea.vmem %s4, %s2685
        %s2687 = smul.u32 8, %s26
        %p2688 = scmp.lt.s32.totalorder %s25, 1
        %s2689 = scalar_select %p2688, %s25, 1
        %p2690 = scmp.lt.s32.totalorder %s2687, 7
        %s2691 = scalar_select %p2690, %s2687, 7
        %p2692 = scmp.lt.s32.totalorder %s24, 0
        %s2693 = scalar_select %p2692, %s24, 0
        %s2694 = sadd.s32 %s2693, %s2691
        %s2695 = smul.addr %s2689, 8
        %s2696 = sadd.s32 %s2694, %s2695
        %s2697 = smul.addr %s2696, 8
        %s2698 = scalar_lea.vmem %s5, %s2697
        %p2699 = scmp.lt.s32.totalorder %s25, 1
        %s2700 = scalar_select %p2699, %s25, 1
        %p2701 = scmp.lt.s32.totalorder %s26, 0
        %s2702 = scalar_select %p2701, %s26, 0
        %p2703 = scmp.lt.s32.totalorder %s24, 0
        %s2704 = scalar_select %p2703, %s24, 0
        %s2705 = sadd.s32 %s2704, %s2702
        %s2706 = sadd.s32 %s2705, %s2700
        %s2707 = smul.addr %s2706, 2
        %s2708 = scalar_lea.vmem %s6, %s2707
        %p2709 = scmp.lt.s32.totalorder %s25, 1
        %s2710 = scalar_select %p2709, %s25, 1
        %p2711 = scmp.lt.s32.totalorder %s26, 0
        %s2712 = scalar_select %p2711, %s26, 0
        %p2713 = scmp.lt.s32.totalorder %s24, 0
        %s2714 = scalar_select %p2713, %s24, 0
        %s2715 = sadd.s32 %s2714, %s2712
        %s2716 = sadd.s32 %s2715, %s2710
        %s2717 = smul.addr %s2716, 2
        %s2718 = scalar_lea.vmem %s7, %s2717
        // Predicated region
        $region127: #{basic_down_block.3} parent=117 // pred_check
          %p2719 = pneg %p172
        $region128: #{basic_down_block.3} parent=117 // pred_check_branch
          %2721 = sbr.rel (%p2719) target = $region130
        $region129: #{basic_down_block.3} parent=117 // pred_region
          %s2722 = smul.u32 8, %s26
        $region130: #{basic_down_block.3} parent=117 // pred_fallthru
          _
        // Predicated region
        $region131: #{basic_down_block.3} parent=117 // pred_check
          %p2723 = pneg %p202
        $region132: #{basic_down_block.3} parent=117 // pred_check_branch
          %2725 = sbr.rel (%p2723) target = $region134
        $region133: #{basic_down_block.3} parent=117 // pred_region
          %s2726 = smul.u32 8, %s26
        $region134: #{basic_down_block.3} parent=117 // pred_fallthru
          _
        // Predicated region
        $region135: #{basic_down_block.3} parent=117 // pred_check
          %p2727 = pneg %p232
        $region136: #{basic_down_block.3} parent=117 // pred_check_branch
          %2729 = sbr.rel (%p2727) target = $region138
        $region137: #{basic_down_block.3} parent=117 // pred_region
          _
        $region138: #{basic_down_block.3} parent=117 // pred_fallthru
          _
        // Predicated region
        $region139: #{basic_down_block.3} parent=117 // pred_check
          %p2730 = pneg %p262
        $region140: #{basic_down_block.3} parent=117 // pred_check_branch
          %2732 = sbr.rel (%p2730) target = $region142
        $region141: #{basic_down_block.3} parent=117 // pred_region
          _
        $region142: #{basic_down_block.3} parent=117 // pred_fallthru
          _
      $region118: #{basic_down_block.3} parent=5 // pred_fallthru
        _
      %p2733 = scmp.le.s32.totalorder 2, %s14
      // Predicated region
      $region143: #{basic_down_block.3} parent=5 // pred_check
        %p2734 = pneg %p2733
      $region144: #{basic_down_block.3} parent=5 // pred_check_branch
        %2736 = sbr.rel (%p2734) target = $region146
      $region145: #{basic_down_block.3} parent=5 // pred_region
        %s2737 = ssub.s32 %s14, 2
        // Predicated region
        $region147: #{basic_down_block.3} parent=145 // pred_check
          %p2738 = pneg %p178
        $region148: #{basic_down_block.3} parent=145 // pred_check_branch
          %2740 = sbr.rel (%p2738) target = $region150
        $region149: #{basic_down_block.3} parent=145 // pred_region
          %s2741 = smul.u32 8, %s29
          %p2742 = scmp.lt.s32.totalorder %s28, 1
          %s2743 = scalar_select %p2742, %s28, 1
          %p2744 = scmp.lt.s32.totalorder %s2741, 7
          %s2745 = scalar_select %p2744, %s2741, 7
          %p2746 = scmp.lt.s32.totalorder %s27, 0
          %s2747 = scalar_select %p2746, %s27, 0
          %s2748 = sadd.s32 %s2747, %s2745
          %s2749 = smul.addr %s2743, 8
          %s2750 = sadd.s32 %s2748, %s2749
          %s2751 = smul.addr %s2750, 8
          %s2752 = scalar_lea.vmem %s4, %s2751
        $region150: #{basic_down_block.3} parent=145 // pred_fallthru
          _
        // Predicated region
        $region151: #{basic_down_block.3} parent=145 // pred_check
          %p2753 = pneg %p208
        $region152: #{basic_down_block.3} parent=145 // pred_check_branch
          %2755 = sbr.rel (%p2753) target = $region154
        $region153: #{basic_down_block.3} parent=145 // pred_region
          %s2756 = smul.u32 8, %s29
          %p2757 = scmp.lt.s32.totalorder %s28, 1
          %s2758 = scalar_select %p2757, %s28, 1
          %p2759 = scmp.lt.s32.totalorder %s2756, 7
          %s2760 = scalar_select %p2759, %s2756, 7
          %p2761 = scmp.lt.s32.totalorder %s27, 0
          %s2762 = scalar_select %p2761, %s27, 0
          %s2763 = sadd.s32 %s2762, %s2760
          %s2764 = smul.addr %s2758, 8
          %s2765 = sadd.s32 %s2763, %s2764
          %s2766 = smul.addr %s2765, 8
          %s2767 = scalar_lea.vmem %s5, %s2766
        $region154: #{basic_down_block.3} parent=145 // pred_fallthru
          _
        // Predicated region
        $region155: #{basic_down_block.3} parent=145 // pred_check
          %p2768 = pneg %p238
        $region156: #{basic_down_block.3} parent=145 // pred_check_branch
          %2770 = sbr.rel (%p2768) target = $region158
        $region157: #{basic_down_block.3} parent=145 // pred_region
          %p2771 = scmp.lt.s32.totalorder %s28, 1
          %s2772 = scalar_select %p2771, %s28, 1
          %p2773 = scmp.lt.s32.totalorder %s29, 0
          %s2774 = scalar_select %p2773, %s29, 0
          %p2775 = scmp.lt.s32.totalorder %s27, 0
          %s2776 = scalar_select %p2775, %s27, 0
          %s2777 = sadd.s32 %s2776, %s2774
          %s2778 = sadd.s32 %s2777, %s2772
          %s2779 = smul.addr %s2778, 2
          %s2780 = scalar_lea.vmem %s6, %s2779
        $region158: #{basic_down_block.3} parent=145 // pred_fallthru
          _
        // Predicated region
        $region159: #{basic_down_block.3} parent=145 // pred_check
          %p2781 = pneg %p268
        $region160: #{basic_down_block.3} parent=145 // pred_check_branch
          %2783 = sbr.rel (%p2781) target = $region162
        $region161: #{basic_down_block.3} parent=145 // pred_region
          %p2784 = scmp.lt.s32.totalorder %s28, 1
          %s2785 = scalar_select %p2784, %s28, 1
          %p2786 = scmp.lt.s32.totalorder %s29, 0
          %s2787 = scalar_select %p2786, %s29, 0
          %p2788 = scmp.lt.s32.totalorder %s27, 0
          %s2789 = scalar_select %p2788, %s27, 0
          %s2790 = sadd.s32 %s2789, %s2787
          %s2791 = sadd.s32 %s2790, %s2785
          %s2792 = smul.addr %s2791, 2
          %s2793 = scalar_lea.vmem %s7, %s2792
        $region162: #{basic_down_block.3} parent=145 // pred_fallthru
          _
      $region146: #{basic_down_block.3} parent=5 // pred_fallthru
        _
    $region6: #{basic_down_block.3} parent=1 // loop_footer
      %s18 = sadd.s32 1, %s14
    $region7: #{basic_down_block.3} parent=1 // loop_footer_branch
      %13 = sbr.rel target = $region3
    $region8: #{basic_down_block.3} parent=1 // loop_exit
      _

// kernel: basic_down_block.4
$region0: #{basic_down_block.4}
  #allocation0 [shape = 'u32[]', space=smem, size = 0x4, offset = 0x4, fixed_abs, tag = 'smem constant byte address 0x4 - core index']
  #allocation1 [shape = 'u32[144,128]{1,0:T(1,128)}', space=vmem, size = 0x12000, scoped, tag = 'internal scratch']
  %s0 = inlined_call_operand.vmem [shape: f32[2,8,8,128], index: 0, kind: input, shape index: {}, may-alias: {0,1,2}]
  %s1 = inlined_call_operand.vmem [shape: f32[2,8,8,128], index: 1, kind: input, shape index: {}, may-alias: {0,1,2}]
  %s2 = inlined_call_operand.vmem [shape: f32[2,8,8,128], index: 2, kind: input, shape index: {}, may-alias: {0,1,2}]
  %s3 = inlined_call_operand.vmem [shape: f32[9,128,128], index: 3, kind: input, shape index: {}]
  %s4 = inlined_call_operand.vmem [shape: f32[8,8,128], index: 4, kind: input, shape index: {}]
  %s5 = inlined_call_operand.vmem [shape: f32[2,8,8,128], index: 5, kind: output, shape index: {0}]
  %s6 = inlined_call_operand.vmem [shape: f32[2,1,2,128], index: 6, kind: output, shape index: {1}]
  %7 = xla_tuple %s5, %s6
  %s8 = sld [smem:[#allocation0]]
  $region61: #{basic_down_block.4} parent=0
    _
  %s10 = ssub.s32 1, %s8
  %s11 = scalar_select 0, %s10, %s8
  loop: start=0, step=1, limit=4
  $region2: #{basic_down_block.4} parent=0 // loop_pre_header
    _
  $region3: #{basic_down_block.4} parent=0 // loop_header
    %s13 = sphi 0, %s17
    %p14 = scmp.ge.s32.totalorder %s13, 4
    %s20 = sphi 0, %s39
    %s21 = sphi 0, %s35
    %s22 = sphi 0, %s31
    %s23 = sphi 0, %s20
    %s24 = sphi 0, %s21
    %s25 = sphi 0, %s22
    %s26 = sphi 0, %s23
    %s27 = sphi 0, %s24
    %s28 = sphi 0, %s25
    %s44 = sphi 0, %s46
    %s47 = sphi 0, %s44
    %s48 = sphi 0, %s47
    %s64 = sphi 0, %s48
    %s80 = sphi 0, %s82
    %s83 = sphi 0, %s80
    %s84 = sphi 0, %s83
    %s100 = sphi 0, %s84
    %s116 = sphi 0, %s118
    %s119 = sphi 0, %s116
    %s120 = sphi 0, %s119
    %s136 = sphi 0, %s120
    %s142 = sphi 0, %s144
    %s145 = sphi 0, %s142
    %s146 = sphi 0, %s145
    %s162 = sphi 0, %s146
    %s170 = sphi 0, %s172
    %s173 = sphi 0, %s170
    %s174 = sphi 0, %s173
    %s190 = sphi 0, %s174
    %s200 = sphi 0, %s202
    %s203 = sphi 0, %s200
    %s204 = sphi 0, %s203
    %s220 = sphi 0, %s204
    %s230 = sphi 0, %s232
    %s233 = sphi 0, %s230
    %s234 = sphi 0, %s233
    %s250 = sphi 0, %s234
  $region4: #{basic_down_block.4} parent=0 // loop_header_branch
    %16 = sbr.rel (%p14) target = $region8
  $region5: #{basic_down_block.4} parent=0 // loop_body
    %s18 = ssub.s32 %s13, 1
    %s19 = ssub.s32 %s13, 2
    %s29 = sadd.s32 1, %s22
    %p30 = scmp.ge.s32.totalorder %s29, 1
    %s31 = scalar_select %p30, 0, %s29
    %s32 = sadd.s32 1, %s21
    %s33 = scalar_select %p30, %s32, %s21
    %p34 = scmp.ge.s32.totalorder %s33, 2
    %s35 = scalar_select %p34, 0, %s33
    %s36 = sadd.s32 1, %s20
    %s37 = scalar_select %p34, %s36, %s20
    %p38 = scmp.ge.s32.totalorder %s37, 1
    %s39 = scalar_select %p38, 0, %s37
    %s40 = ssub.s32 %s21, %s35
    %s41 = ssub.s32 %s22, %s31
    %s42 = sor.u32 %s40, %s41
    %p43 = scmp.eq.s32.totalorder %s42, 0
    %s45 = sadd.s32 %s44, 1
    %s46 = scalar_select %p43, %s44, %s45
    %p49 = pneg %p43
    %p50 = scmp.eq.s32.totalorder %s13, 1
    %p51 = por %p49, %p50
    %p52 = scmp.ne.s32.totalorder %s44, %s47
    %p53 = scmp.eq.s32.totalorder %s13, 0
    %p54 = por %p52, %p53
    %p55 = scmp.ne.s32.totalorder %s44, %s47
    %p56 = scmp.eq.s32.totalorder %s18, 1
    %p57 = por %p55, %p56
    %p58 = scmp.ne.s32.totalorder %s47, %s48
    %p59 = scmp.eq.s32.totalorder %s18, 0
    %p60 = por %p58, %p59
    %p61 = scmp.ne.s32.totalorder %s47, %s48
    %p62 = scmp.eq.s32.totalorder %s19, 1
    %p63 = por %p61, %p62
    %p65 = scmp.ne.s32.totalorder %s48, %s64
    %p66 = scmp.eq.s32.totalorder %s19, 0
    %p67 = por %p65, %p66
    %s68 = smul.u32 %s22, 8
    %s69 = ssub.s32 %s68, 1
    %p70 = scmp.gt.s32.totalorder %s69, 0
    %s71 = scalar_select %p70, %s69, 0
    %s72 = smul.u32 %s31, 8
    %s73 = ssub.s32 %s72, 1
    %p74 = scmp.gt.s32.totalorder %s73, 0
    %s75 = scalar_select %p74, %s73, 0
    %s76 = ssub.s32 %s21, %s35
    %s77 = ssub.s32 %s71, %s75
    %s78 = sor.u32 %s76, %s77
    %p79 = scmp.eq.s32.totalorder %s78, 0
    %s81 = sadd.s32 %s80, 1
    %s82 = scalar_select %p79, %s80, %s81
    %p85 = pneg %p79
    %p86 = scmp.eq.s32.totalorder %s13, 1
    %p87 = por %p85, %p86
    %p88 = scmp.ne.s32.totalorder %s80, %s83
    %p89 = scmp.eq.s32.totalorder %s13, 0
    %p90 = por %p88, %p89
    %p91 = scmp.ne.s32.totalorder %s80, %s83
    %p92 = scmp.eq.s32.totalorder %s18, 1
    %p93 = por %p91, %p92
    %p94 = scmp.ne.s32.totalorder %s83, %s84
    %p95 = scmp.eq.s32.totalorder %s18, 0
    %p96 = por %p94, %p95
    %p97 = scmp.ne.s32.totalorder %s83, %s84
    %p98 = scmp.eq.s32.totalorder %s19, 1
    %p99 = por %p97, %p98
    %p101 = scmp.ne.s32.totalorder %s84, %s100
    %p102 = scmp.eq.s32.totalorder %s19, 0
    %p103 = por %p101, %p102
    %s104 = smul.u32 %s22, 8
    %s105 = sadd.s32 %s104, 8
    %p106 = scmp.lt.s32.totalorder %s105, 7
    %s107 = scalar_select %p106, %s105, 7
    %s108 = smul.u32 %s31, 8
    %s109 = sadd.s32 %s108, 8
    %p110 = scmp.lt.s32.totalorder %s109, 7
    %s111 = scalar_select %p110, %s109, 7
    %s112 = ssub.s32 %s21, %s35
    %s113 = ssub.s32 %s107, %s111
    %s114 = sor.u32 %s112, %s113
    %p115 = scmp.eq.s32.totalorder %s114, 0
    %s117 = sadd.s32 %s116, 1
    %s118 = scalar_select %p115, %s116, %s117
    %p121 = pneg %p115
    %p122 = scmp.eq.s32.totalorder %s13, 1
    %p123 = por %p121, %p122
    %p124 = scmp.ne.s32.totalorder %s116, %s119
    %p125 = scmp.eq.s32.totalorder %s13, 0
    %p126 = por %p124, %p125
    %p127 = scmp.ne.s32.totalorder %s116, %s119
    %p128 = scmp.eq.s32.totalorder %s18, 1
    %p129 = por %p127, %p128
    %p130 = scmp.ne.s32.totalorder %s119, %s120
    %p131 = scmp.eq.s32.totalorder %s18, 0
    %p132 = por %p130, %p131
    %p133 = scmp.ne.s32.totalorder %s119, %s120
    %p134 = scmp.eq.s32.totalorder %s19, 1
    %p135 = por %p133, %p134
    %p137 = scmp.ne.s32.totalorder %s120, %s136
    %p138 = scmp.eq.s32.totalorder %s19, 0
    %p139 = por %p137, %p138
    %s140 = ssub.s32 %s20, %s39
    %p141 = scmp.eq.s32.totalorder %s140, 0
    %s143 = sadd.s32 %s142, 1
    %s144 = scalar_select %p141, %s142, %s143
    %p147 = pneg %p141
    %p148 = scmp.eq.s32.totalorder %s13, 1
    %p149 = por %p147, %p148
    %p150 = scmp.ne.s32.totalorder %s142, %s145
    %p151 = scmp.eq.s32.totalorder %s13, 0
    %p152 = por %p150, %p151
    %p153 = scmp.ne.s32.totalorder %s142, %s145
    %p154 = scmp.eq.s32.totalorder %s18, 1
    %p155 = por %p153, %p154
    %p156 = scmp.ne.s32.totalorder %s145, %s146
    %p157 = scmp.eq.s32.totalorder %s18, 0
    %p158 = por %p156, %p157
    %p159 = scmp.ne.s32.totalorder %s145, %s146
    %p160 = scmp.eq.s32.totalorder %s19, 1
    %p161 = por %p159, %p160
    %p163 = scmp.ne.s32.totalorder %s146, %s162
    %p164 = scmp.eq.s32.totalorder %s19, 0
    %p165 = por %p163, %p164
    %s166 = ssub.s32 %s22, %s31
    %s167 = ssub.s32 %s20, %s39
    %s168 = sor.u32 %s166, %s167
    %p169 = scmp.eq.s32.totalorder %s168, 0
    %s171 = sadd.s32 %s170, 1
    %s172 = scalar_select %p169, %s170, %s171
    %p175 = pneg %p169
    %p176 = scmp.eq.s32.totalorder %s13, 1
    %p177 = por %p175, %p176
    %p178 = scmp.ne.s32.totalorder %s170, %s173
    %p179 = scmp.eq.s32.totalorder %s13, 0
    %p180 = por %p178, %p179
    %p181 = scmp.ne.s32.totalorder %s170, %s173
    %p182 = scmp.eq.s32.totalorder %s18, 1
    %p183 = por %p181, %p182
    %p184 = scmp.ne.s32.totalorder %s173, %s174
    %p185 = scmp.eq.s32.totalorder %s18, 0
    %p186 = por %p184, %p185
    %p187 = scmp.ne.s32.totalorder %s173, %s174
    %p188 = scmp.eq.s32.totalorder %s19, 1
    %p189 = por %p187, %p188
    %p191 = scmp.ne.s32.totalorder %s174, %s190
    %p192 = scmp.eq.s32.totalorder %s19, 0
    %p193 = por %p191, %p192
    %s194 = ssub.s32 %s21, %s35
    %s195 = ssub.s32 %s22, %s31
    %s196 = sor.u32 %s194, %s195
    %s197 = ssub.s32 %s20, %s39
    %s198 = sor.u32 %s196, %s197
    %p199 = scmp.eq.s32.totalorder %s198, 0
    %s201 = sadd.s32 %s200, 1
    %s202 = scalar_select %p199, %s200, %s201
    %p205 = pneg %p199
    %p206 = scmp.eq.s32.totalorder %s13, 1
    %p207 = por %p205, %p206
    %p208 = scmp.ne.s32.totalorder %s200, %s203
    %p209 = scmp.eq.s32.totalorder %s13, 0
    %p210 = por %p208, %p209
    %p211 = scmp.ne.s32.totalorder %s200, %s203
    %p212 = scmp.eq.s32.totalorder %s18, 1
    %p213 = por %p211, %p212
    %p214 = scmp.ne.s32.totalorder %s203, %s204
    %p215 = scmp.eq.s32.totalorder %s18, 0
    %p216 = por %p214, %p215
    %p217 = scmp.ne.s32.totalorder %s203, %s204
    %p218 = scmp.eq.s32.totalorder %s19, 1
    %p219 = por %p217, %p218
    %p221 = scmp.ne.s32.totalorder %s204, %s220
    %p222 = scmp.eq.s32.totalorder %s19, 0
    %p223 = por %p221, %p222
    %s224 = ssub.s32 %s21, %s35
    %s225 = ssub.s32 %s22, %s31
    %s226 = sor.u32 %s224, %s225
    %s227 = ssub.s32 %s20, %s39
    %s228 = sor.u32 %s226, %s227
    %p229 = scmp.eq.s32.totalorder %s228, 0
    %s231 = sadd.s32 %s230, 1
    %s232 = scalar_select %p229, %s230, %s231
    %p235 = pneg %p229
    %p236 = scmp.eq.s32.totalorder %s13, 1
    %p237 = por %p235, %p236
    %p238 = scmp.ne.s32.totalorder %s230, %s233
    %p239 = scmp.eq.s32.totalorder %s13, 0
    %p240 = por %p238, %p239
    %p241 = scmp.ne.s32.totalorder %s230, %s233
    %p242 = scmp.eq.s32.totalorder %s18, 1
    %p243 = por %p241, %p242
    %p244 = scmp.ne.s32.totalorder %s233, %s234
    %p245 = scmp.eq.s32.totalorder %s18, 0
    %p246 = por %p244, %p245
    %p247 = scmp.ne.s32.totalorder %s233, %s234
    %p248 = scmp.eq.s32.totalorder %s19, 1
    %p249 = por %p247, %p248
    %p251 = scmp.ne.s32.totalorder %s234, %s250
    %p252 = scmp.eq.s32.totalorder %s19, 0
    %p253 = por %p251, %p252
    %p254 = scmp.le.s32.totalorder 1, %s13
    %p255 = scmp.lt.s32.totalorder %s13, 3
    %p256 = pnand %p254, %p255
    %p257 = pneg %p256
    // Predicated region
    $region9: #{basic_down_block.4} parent=5 // pred_check
      _
    $region10: #{basic_down_block.4} parent=5 // pred_check_branch
      %259 = sbr.rel (%p256) target = $region12
    $region11: #{basic_down_block.4} parent=5 // pred_region
      %s260 = ssub.s32 %s13, 1
      // Predicated region
      $region13: #{basic_down_block.4} parent=11 // pred_check
        %p261 = pneg %p158
      $region14: #{basic_down_block.4} parent=11 // pred_check_branch
        %263 = sbr.rel (%p261) target = $region16
      $region15: #{basic_down_block.4} parent=11 // pred_region
        %p264 = scmp.lt.s32.totalorder %s23, 0
        %s265 = scalar_select %p264, %s23, 0
        %s266 = smul.addr %s265, 8
        %s267 = scalar_lea.vmem %s3, %s266
      $region16: #{basic_down_block.4} parent=11 // pred_fallthru
        _
      // Predicated region
      $region17: #{basic_down_block.4} parent=11 // pred_check
        %p268 = pneg %p186
      $region18: #{basic_down_block.4} parent=11 // pred_check_branch
        %270 = sbr.rel (%p268) target = $region20
      $region19: #{basic_down_block.4} parent=11 // pred_region
        %s271 = smul.u32 8, %s25
        %p272 = scmp.lt.s32.totalorder %s271, 7
        %s273 = scalar_select %p272, %s271, 7
        %p274 = scmp.lt.s32.totalorder %s23, 0
        %s275 = scalar_select %p274, %s23, 0
        %s276 = sadd.s32 %s275, %s273
        %s277 = smul.addr %s276, 8
        %s278 = scalar_lea.vmem %s4, %s277
        %s279 = smul.u32 8, %s25
      $region20: #{basic_down_block.4} parent=11 // pred_fallthru
        _
    $region12: #{basic_down_block.4} parent=5 // pred_fallthru
      _
    %p280 = scmp.lt.s32.totalorder %s13, 2
    // Predicated region
    $region21: #{basic_down_block.4} parent=5 // pred_check
      %p281 = pneg %p280
    $region22: #{basic_down_block.4} parent=5 // pred_check_branch
      %283 = sbr.rel (%p281) target = $region24
    $region23: #{basic_down_block.4} parent=5 // pred_region
      // Predicated region
      $region25: #{basic_down_block.4} parent=23 // pred_check
        %p284 = pneg %p54
      $region26: #{basic_down_block.4} parent=23 // pred_check_branch
        %286 = sbr.rel (%p284) target = $region28
      $region27: #{basic_down_block.4} parent=23 // pred_region
        %s287 = smul.u32 8, %s22
        %p288 = scmp.lt.s32.totalorder %s21, 1
        %s289 = scalar_select %p288, %s21, 1
        %p290 = scmp.lt.s32.totalorder %s287, 7
        %s291 = scalar_select %p290, %s287, 7
        %s292 = smul.addr %s289, 8
        %s293 = sadd.s32 %s291, %s292
        %s294 = smul.addr %s293, 8
        %s295 = scalar_lea.vmem %s0, %s294
        %s296 = smul.u32 8, %s22
      $region28: #{basic_down_block.4} parent=23 // pred_fallthru
        _
      // Predicated region
      $region29: #{basic_down_block.4} parent=23 // pred_check
        %p297 = pneg %p90
      $region30: #{basic_down_block.4} parent=23 // pred_check_branch
        %299 = sbr.rel (%p297) target = $region32
      $region31: #{basic_down_block.4} parent=23 // pred_region
        %s300 = smul.u32 %s22, 8
        %s301 = ssub.s32 %s300, 1
        %p302 = scmp.gt.s32.totalorder %s301, 0
        %s303 = scalar_select %p302, %s301, 0
        %p304 = scmp.lt.s32.totalorder %s21, 1
        %s305 = scalar_select %p304, %s21, 1
        %p306 = scmp.lt.s32.totalorder %s303, 7
        %s307 = scalar_select %p306, %s303, 7
        %s308 = smul.addr %s305, 8
        %s309 = sadd.s32 %s307, %s308
        %s310 = smul.addr %s309, 8
        %s311 = scalar_lea.vmem %s1, %s310
        %s312 = smul.u32 %s22, 8
        %s313 = ssub.s32 %s312, 1
        %p314 = scmp.gt.s32.totalorder %s313, 0
        %s315 = scalar_select %p314, %s313, 0
      $region32: #{basic_down_block.4} parent=23 // pred_fallthru
        _
      // Predicated region
      $region33: #{basic_down_block.4} parent=23 // pred_check
        %p316 = pneg %p126
      $region34: #{basic_down_block.4} parent=23 // pred_check_branch
        %318 = sbr.rel (%p316) target = $region36
      $region35: #{basic_down_block.4} parent=23 // pred_region
        %s319 = smul.u32 %s22, 8
        %s320 = sadd.s32 %s319, 8
        %p321 = scmp.lt.s32.totalorder %s320, 7
        %s322 = scalar_select %p321, %s320, 7
        %p323 = scmp.lt.s32.totalorder %s21, 1
        %s324 = scalar_select %p323, %s21, 1
        %p325 = scmp.lt.s32.totalorder %s322, 7
        %s326 = scalar_select %p325, %s322, 7
        %s327 = smul.addr %s324, 8
        %s328 = sadd.s32 %s326, %s327
        %s329 = smul.addr %s328, 8
        %s330 = scalar_lea.vmem %s2, %s329
        %s331 = smul.u32 %s22, 8
        %s332 = sadd.s32 %s331, 8
        %p333 = scmp.lt.s32.totalorder %s332, 7
        %s334 = scalar_select %p333, %s332, 7
      $region36: #{basic_down_block.4} parent=23 // pred_fallthru
        _
    $region24: #{basic_down_block.4} parent=5 // pred_fallthru
      _
    %p335 = scmp.le.s32.totalorder 1, %s13
    %p336 = scmp.lt.s32.totalorder %s13, 3
    %p337 = pnand %p335, %p336
    %p338 = pneg %p337
    // Predicated region
    $region37: #{basic_down_block.4} parent=5 // pred_check
      _
    $region38: #{basic_down_block.4} parent=5 // pred_check_branch
      %340 = sbr.rel (%p337) target = $region40
    $region39: #{basic_down_block.4} parent=5 // pred_region
      %s341 = ssub.s32 %s13, 1
      %s342 = smul.u32 8, %s25
      %p343 = scmp.lt.s32.totalorder %s24, 1
      %s344 = scalar_select %p343, %s24, 1
      %p345 = scmp.lt.s32.totalorder %s342, 7
      %s346 = scalar_select %p345, %s342, 7
      %s347 = smul.addr %s344, 8
      %s348 = sadd.s32 %s346, %s347
      %s349 = smul.addr %s348, 8
      %s350 = scalar_lea.vmem %s0, %s349
      %p351 = pneg %p60
      %p352 = pneg %p57
      %s353 = smul.u32 %s25, 8
      %s354 = ssub.s32 %s353, 1
      %p355 = scmp.gt.s32.totalorder %s354, 0
      %s356 = scalar_select %p355, %s354, 0
      %p357 = scmp.lt.s32.totalorder %s24, 1
      %s358 = scalar_select %p357, %s24, 1
      %p359 = scmp.lt.s32.totalorder %s356, 7
      %s360 = scalar_select %p359, %s356, 7
      %s361 = smul.addr %s358, 8
      %s362 = sadd.s32 %s360, %s361
      %s363 = smul.addr %s362, 8
      %s364 = scalar_lea.vmem %s1, %s363
      %p365 = pneg %p96
      %p366 = pneg %p93
      %s367 = smul.u32 %s25, 8
      %s368 = sadd.s32 %s367, 8
      %p369 = scmp.lt.s32.totalorder %s368, 7
      %s370 = scalar_select %p369, %s368, 7
      %p371 = scmp.lt.s32.totalorder %s24, 1
      %s372 = scalar_select %p371, %s24, 1
      %p373 = scmp.lt.s32.totalorder %s370, 7
      %s374 = scalar_select %p373, %s370, 7
      %s375 = smul.addr %s372, 8
      %s376 = sadd.s32 %s374, %s375
      %s377 = smul.addr %s376, 8
      %s378 = scalar_lea.vmem %s2, %s377
      %p379 = pneg %p132
      %p380 = pneg %p129
      %p381 = scmp.lt.s32.totalorder %s23, 0
      %s382 = scalar_select %p381, %s23, 0
      %s383 = smul.addr %s382, 8
      %s384 = scalar_lea.vmem %s3, %s383
      %p385 = pneg %p158
      %p386 = pneg %p155
      %s387 = smul.u32 8, %s25
      %p388 = scmp.lt.s32.totalorder %s387, 7
      %s389 = scalar_select %p388, %s387, 7
      %p390 = scmp.lt.s32.totalorder %s23, 0
      %s391 = scalar_select %p390, %s23, 0
      %s392 = sadd.s32 %s391, %s389
      %s393 = smul.addr %s392, 8
      %s394 = scalar_lea.vmem %s4, %s393
      %p395 = pneg %p186
      %p396 = pneg %p183
      %p397 = pneg %p216
      %p398 = pneg %p213
      %s399 = smul.u32 8, %s25
      %p400 = scmp.lt.s32.totalorder %s24, 1
      %s401 = scalar_select %p400, %s24, 1
      %p402 = scmp.lt.s32.totalorder %s399, 7
      %s403 = scalar_select %p402, %s399, 7
      %p404 = scmp.lt.s32.totalorder %s23, 0
      %s405 = scalar_select %p404, %s23, 0
      %s406 = sadd.s32 %s405, %s403
      %s407 = smul.addr %s401, 8
      %s408 = sadd.s32 %s406, %s407
      %s409 = smul.addr %s408, 8
      %s410 = scalar_lea.vmem %s5, %s409
      %p411 = pneg %p246
      %p412 = pneg %p243
      %p413 = scmp.lt.s32.totalorder %s24, 1
      %s414 = scalar_select %p413, %s24, 1
      %p415 = scmp.lt.s32.totalorder %s25, 0
      %s416 = scalar_select %p415, %s25, 0
      %p417 = scmp.lt.s32.totalorder %s23, 0
      %s418 = scalar_select %p417, %s23, 0
      %s419 = sadd.s32 %s418, %s416
      %s420 = sadd.s32 %s419, %s414
      %s421 = smul.addr %s420, 2
      %s422 = scalar_lea.vmem %s6, %s421
      %s423 = smul.u32 8, %s25
      %p424 = scmp.lt.s32.totalorder %s24, 1
      %s425 = scalar_select %p424, %s24, 1
      %p426 = scmp.lt.s32.totalorder %s423, 7
      %s427 = scalar_select %p426, %s423, 7
      %s428 = smul.addr %s425, 8
      %s429 = sadd.s32 %s427, %s428
      %s430 = smul.addr %s429, 8
      %s431 = scalar_lea.vmem %s0, %s430
      %s432 = smul.u32 8, %s25
      %s433 = smul.u32 %s25, 8
      %s434 = ssub.s32 %s433, 1
      %p435 = scmp.gt.s32.totalorder %s434, 0
      %s436 = scalar_select %p435, %s434, 0
      %p437 = scmp.lt.s32.totalorder %s24, 1
      %s438 = scalar_select %p437, %s24, 1
      %p439 = scmp.lt.s32.totalorder %s436, 7
      %s440 = scalar_select %p439, %s436, 7
      %s441 = smul.addr %s438, 8
      %s442 = sadd.s32 %s440, %s441
      %s443 = smul.addr %s442, 8
      %s444 = scalar_lea.vmem %s1, %s443
      %s445 = smul.u32 %s25, 8
      %s446 = ssub.s32 %s445, 1
      %p447 = scmp.gt.s32.totalorder %s446, 0
      %s448 = scalar_select %p447, %s446, 0
      %s449 = smul.u32 %s25, 8
      %s450 = sadd.s32 %s449, 8
      %p451 = scmp.lt.s32.totalorder %s450, 7
      %s452 = scalar_select %p451, %s450, 7
      %p453 = scmp.lt.s32.totalorder %s24, 1
      %s454 = scalar_select %p453, %s24, 1
      %p455 = scmp.lt.s32.totalorder %s452, 7
      %s456 = scalar_select %p455, %s452, 7
      %s457 = smul.addr %s454, 8
      %s458 = sadd.s32 %s456, %s457
      %s459 = smul.addr %s458, 8
      %s460 = scalar_lea.vmem %s2, %s459
      %s461 = smul.u32 %s25, 8
      %s462 = sadd.s32 %s461, 8
      %p463 = scmp.lt.s32.totalorder %s462, 7
      %s464 = scalar_select %p463, %s462, 7
      %p465 = scmp.lt.s32.totalorder %s23, 0
      %s466 = scalar_select %p465, %s23, 0
      %s467 = smul.addr %s466, 8
      %s468 = scalar_lea.vmem %s3, %s467
      %s469 = smul.u32 8, %s25
      %p470 = scmp.lt.s32.totalorder %s469, 7
      %s471 = scalar_select %p470, %s469, 7
      %p472 = scmp.lt.s32.totalorder %s23, 0
      %s473 = scalar_select %p472, %s23, 0
      %s474 = sadd.s32 %s473, %s471
      %s475 = smul.addr %s474, 8
      %s476 = scalar_lea.vmem %s4, %s475
      %s477 = smul.u32 8, %s25
      %s478 = smul.u32 8, %s25
      %p479 = scmp.lt.s32.totalorder %s24, 1
      %s480 = scalar_select %p479, %s24, 1
      %p481 = scmp.lt.s32.totalorder %s478, 7
      %s482 = scalar_select %p481, %s478, 7
      %p483 = scmp.lt.s32.totalorder %s23, 0
      %s484 = scalar_select %p483, %s23, 0
      %s485 = sadd.s32 %s484, %s482
      %s486 = smul.addr %s480, 8
      %s487 = sadd.s32 %s485, %s486
      %s488 = smul.addr %s487, 8
      %s489 = scalar_lea.vmem %s5, %s488
      %s490 = smul.u32 8, %s25
      %p491 = scmp.lt.s32.totalorder %s24, 1
      %s492 = scalar_select %p491, %s24, 1
      %p493 = scmp.lt.s32.totalorder %s25, 0
      %s494 = scalar_select %p493, %s25, 0
      %p495 = scmp.lt.s32.totalorder %s23, 0
      %s496 = scalar_select %p495, %s23, 0
      %s497 = sadd.s32 %s496, %s494
      %s498 = sadd.s32 %s497, %s492
      %s499 = smul.addr %s498, 2
      %s500 = scalar_lea.vmem %s6, %s499
      %v501 = vld [vmem:[%s444] sm:$0xff]
      %v502 = vld [vmem:[%s460] sm:$0xff]
      %p503 = scmp.gt.s32.totalorder %s25, 0
      %s504 = scalar_select %p503, 1, 0
      %v505 = vstv %s504
      %vm506 = vcmp.eq.s32.totalorder %v505, 1
      %v507 = vsel %vm506, %v501, 0.0
      %p508 = scmp.lt.s32.totalorder %s25, 0
      %s509 = scalar_select %p508, 1, 0
      %v510 = vstv %s509
      %vm511 = vcmp.eq.s32.totalorder %v510, 1
      %v512 = vsel %vm511, %v502, 0.0
      %v513 = vld [vmem:[%s431] sm:$0xff]
      %v514 = vld [vmem:[%s431 + $0x8] sm:$0xff]
      %v515 = vld [vmem:[%s431 + $0x10] sm:$0xff]
      %v516 = vld [vmem:[%s431 + $0x18] sm:$0xff]
      %v517 = vld [vmem:[%s431 + $0x20] sm:$0xff]
      %v518 = vld [vmem:[%s431 + $0x28] sm:$0xff]
      %v519 = vld [vmem:[%s431 + $0x30] sm:$0xff]
      %v520 = vld [vmem:[%s431 + $0x38] sm:$0xff]
      %v531 = vrot.slane %v507, 7
      %v532 = vrot.slane %v513, 7
      %v533 = vrot.slane %v514, 7
      %v534 = vrot.slane %v515, 7
      %v535 = vrot.slane %v516, 7
      %v536 = vrot.slane %v517, 7
      %v537 = vrot.slane %v518, 7
      %v538 = vrot.slane %v519, 7
      %v539 = vrot.slane %v520, 7
      %v540 = vrot.slane %v512, 7
      %vm551 = vcmask 1040384
      %v552 = vsel %vm551, 0.0, %v531
      %v553 = vsel %vm551, 0.0, %v532
      %v554 = vsel %vm551, 0.0, %v533
      %v555 = vsel %vm551, 0.0, %v534
      %v556 = vsel %vm551, 0.0, %v535
      %v557 = vsel %vm551, 0.0, %v536
      %v558 = vsel %vm551, 0.0, %v537
      %v559 = vsel %vm551, 0.0, %v538
      %v560 = vsel %vm551, 0.0, %v539
      %v561 = vsel %vm551, 0.0, %v540
      %v562 = vsel %vm551, %v531, 0.0
      %v563 = vsel %vm551, %v532, 0.0
      %v564 = vsel %vm551, %v533, 0.0
      %v565 = vsel %vm551, %v534, 0.0
      %v566 = vsel %vm551, %v535, 0.0
      %v567 = vsel %vm551, %v536, 0.0
      %v568 = vsel %vm551, %v537, 0.0
      %v569 = vsel %vm551, %v538, 0.0
      %v570 = vsel %vm551, %v539, 0.0
      %v571 = vsel %vm551, %v540, 0.0
      %v572 = vld [vmem:[%s476] sm:$0xff]
      %v573 = vld [vmem:[%s476 + $0x8] sm:$0xff]
      %v574 = vld [vmem:[%s476 + $0x10] sm:$0xff]
      %v575 = vld [vmem:[%s476 + $0x18] sm:$0xff]
      %v576 = vld [vmem:[%s476 + $0x20] sm:$0xff]
      %v577 = vld [vmem:[%s476 + $0x28] sm:$0xff]
      %v578 = vld [vmem:[%s476 + $0x30] sm:$0xff]
      %v579 = vld [vmem:[%s476 + $0x38] sm:$0xff]
      %v580 = vld [vmem:[%s468] sm:$0xff]
      %v581 = vld [vmem:[%s468 + $0x8] sm:$0xff]
      %v582 = vld [vmem:[%s468 + $0x10] sm:$0xff]
      %v583 = vld [vmem:[%s468 + $0x18] sm:$0xff]
      %v584 = vld [vmem:[%s468 + $0x20] sm:$0xff]
      %v585 = vld [vmem:[%s468 + $0x28] sm:$0xff]
      %v586 = vld [vmem:[%s468 + $0x30] sm:$0xff]
      %v587 = vld [vmem:[%s468 + $0x38] sm:$0xff]
      %v588 = vld [vmem:[%s468 + $0x40] sm:$0xff]
      %v589 = vld [vmem:[%s468 + $0x48] sm:$0xff]
      %v590 = vld [vmem:[%s468 + $0x50] sm:$0xff]
      %v591 = vld [vmem:[%s468 + $0x58] sm:$0xff]
      %v592 = vld [vmem:[%s468 + $0x60] sm:$0xff]
      %v593 = vld [vmem:[%s468 + $0x68] sm:$0xff]
      %v594 = vld [vmem:[%s468 + $0x70] sm:$0xff]
      %v595 = vld [vmem:[%s468 + $0x78] sm:$0xff]
      %596 = vmatprep.subr.mxu0 0.0
      %597 = vmatpush1.msra.mxu0 %v580
      %598 = vmatprep.subr.mxu0 0.0
      %599 = vmatpush1.msra.mxu0 %v581
      %600 = vmatprep.subr.mxu0 0.0
      %601 = vmatpush1.msra.mxu0 %v582
      %602 = vmatprep.subr.mxu0 0.0
      %603 = vmatpush1.msra.mxu0 %v583
      %604 = vmatprep.subr.mxu0 0.0
      %605 = vmatpush1.msra.mxu0 %v584
      %606 = vmatprep.subr.mxu0 0.0
      %607 = vmatpush1.msra.mxu0 %v585
      %608 = vmatprep.subr.mxu0 0.0
      %609 = vmatpush1.msra.mxu0 %v586
      %610 = vmatprep.subr.mxu0 0.0
      %611 = vmatpush1.msra.mxu0 %v587
      %612 = vmatprep.subr.mxu0 0.0
      %613 = vmatpush1.msra.mxu0 %v588
      %614 = vmatprep.subr.mxu0 0.0
      %615 = vmatpush1.msra.mxu0 %v589
      %616 = vmatprep.subr.mxu0 0.0
      %617 = vmatpush1.msra.mxu0 %v590
      %618 = vmatprep.subr.mxu0 0.0
      %619 = vmatpush1.msra.mxu0 %v591
      %620 = vmatprep.subr.mxu0 0.0
      %621 = vmatpush1.msra.mxu0 %v592
      %622 = vmatprep.subr.mxu0 0.0
      %623 = vmatpush1.msra.mxu0 %v593
      %624 = vmatprep.subr.mxu0 0.0
      %625 = vmatpush1.msra.mxu0 %v594
      %626 = vmatprep.subr.mxu0 0.0
      %627 = vmatpush1.msra.mxu0 %v595
      %628 = vmatprep.subr.mxu0 0.0
      %629 = vmatpush1.msra.mxu0 0.0
      %630 = vmatprep.subr.mxu0 0.0
      %631 = vmatpush1.msra.mxu0 0.0
      %632 = vmatprep.subr.mxu0 0.0
      %633 = vmatpush1.msra.mxu0 0.0
      %634 = vmatprep.subr.mxu0 0.0
      %635 = vmatpush1.msra.mxu0 0.0
      %636 = vmatprep.subr.mxu0 0.0
      %637 = vmatpush1.msra.mxu0 0.0
      %638 = vmatprep.subr.mxu0 0.0
      %639 = vmatpush1.msra.mxu0 0.0
      %640 = vmatprep.subr.mxu0 0.0
      %641 = vmatpush1.msra.mxu0 0.0
      %642 = vmatprep.subr.mxu0 0.0
      %643 = vmatpush1.msra.mxu0 0.0
      %644 = vmatprep.subr.mxu0 0.0
      %645 = vmatpush1.msra.mxu0 0.0
      %646 = vmatprep.subr.mxu0 0.0
      %647 = vmatpush1.msra.mxu0 0.0
      %648 = vmatprep.subr.mxu0 0.0
      %649 = vmatpush1.msra.mxu0 0.0
      %650 = vmatprep.subr.mxu0 0.0
      %651 = vmatpush1.msra.mxu0 0.0
      %652 = vmatprep.subr.mxu0 0.0
      %653 = vmatpush1.msra.mxu0 0.0
      %654 = vmatprep.subr.mxu0 0.0
      %655 = vmatpush1.msra.mxu0 0.0
      %656 = vmatprep.subr.mxu0 0.0
      %657 = vmatpush1.msra.mxu0 0.0
      %658 = vmatprep.subr.mxu0 0.0
      %659 = vmatpush1.msra.mxu0 0.0
      %660 = vmatprep.mubr.f32.mxu0 0.0
      %661 = vmatmul.mubr.f32.gmra.mrb[0].mxu0 %v552
      %v662 = vpop.f32.mrb[0].mxu0
      %v663 = vadd.f32 0.0, %v662
      %v664 = vpop.f32.mrb[0].mxu0
      %665 = vmatprep.mubr.f32.mxu0 0.0
      %666 = vmatmul.mubr.f32.gmra.mrb[0].mxu0 %v553
      %v667 = vpop.f32.mrb[0].mxu0
      %v668 = vadd.f32 0.0, %v667
      %v669 = vpop.f32.mrb[0].mxu0
      %670 = vmatprep.mubr.f32.mxu0 0.0
      %671 = vmatmul.mubr.f32.gmra.mrb[0].mxu0 %v554
      %v672 = vpop.f32.mrb[0].mxu0
      %v673 = vadd.f32 0.0, %v672
      %v674 = vpop.f32.mrb[0].mxu0
      %675 = vmatprep.mubr.f32.mxu0 0.0
      %676 = vmatmul.mubr.f32.gmra.mrb[0].mxu0 %v555
      %v677 = vpop.f32.mrb[0].mxu0
      %v678 = vadd.f32 0.0, %v677
      %v679 = vpop.f32.mrb[0].mxu0
      %680 = vmatprep.mubr.f32.mxu0 0.0
      %681 = vmatmul.mubr.f32.gmra.mrb[0].mxu0 %v556
      %v682 = vpop.f32.mrb[0].mxu0
      %v683 = vadd.f32 0.0, %v682
      %v684 = vpop.f32.mrb[0].mxu0
      %685 = vmatprep.mubr.f32.mxu0 0.0
      %686 = vmatmul.mubr.f32.gmra.mrb[0].mxu0 %v557
      %v687 = vpop.f32.mrb[0].mxu0
      %v688 = vadd.f32 0.0, %v687
      %v689 = vpop.f32.mrb[0].mxu0
      %690 = vmatprep.mubr.f32.mxu0 0.0
      %691 = vmatmul.mubr.f32.gmra.mrb[0].mxu0 %v558
      %v692 = vpop.f32.mrb[0].mxu0
      %v693 = vadd.f32 0.0, %v692
      %v694 = vpop.f32.mrb[0].mxu0
      %695 = vmatprep.mubr.f32.mxu0 0.0
      %696 = vmatmul.mubr.f32.gmra.mrb[0].mxu0 %v559
      %v697 = vpop.f32.mrb[0].mxu0
      %v698 = vadd.f32 0.0, %v697
      %v699 = vpop.f32.mrb[0].mxu0
      %700 = vdwg.mxu0
      %v701 = vadd.f32 %v572, %v663
      %v702 = vadd.f32 %v573, %v668
      %v703 = vadd.f32 %v574, %v673
      %v704 = vadd.f32 %v575, %v678
      %v705 = vadd.f32 %v576, %v683
      %v706 = vadd.f32 %v577, %v688
      %v707 = vadd.f32 %v578, %v693
      %v708 = vadd.f32 %v579, %v698
      %vm725 = vcmask 1046528
      %v726 = vrot.slane %v552, 1
      %v727 = vrot.slane %v562, 1
      %v728 = vsel %vm725, %v726, %v727
      %v729 = vrot.slane %v553, 1
      %v730 = vrot.slane %v563, 1
      %v731 = vsel %vm725, %v729, %v730
      %v732 = vrot.slane %v554, 1
      %v733 = vrot.slane %v564, 1
      %v734 = vsel %vm725, %v732, %v733
      %v735 = vrot.slane %v555, 1
      %v736 = vrot.slane %v565, 1
      %v737 = vsel %vm725, %v735, %v736
      %v738 = vrot.slane %v556, 1
      %v739 = vrot.slane %v566, 1
      %v740 = vsel %vm725, %v738, %v739
      %v741 = vrot.slane %v557, 1
      %v742 = vrot.slane %v567, 1
      %v743 = vsel %vm725, %v741, %v742
      %v744 = vrot.slane %v558, 1
      %v745 = vrot.slane %v568, 1
      %v746 = vsel %vm725, %v744, %v745
      %v747 = vrot.slane %v559, 1
      %v748 = vrot.slane %v569, 1
      %v749 = vsel %vm725, %v747, %v748
      %s758 = scalar_lea.vmem %s468, 128
      %v759 = vld [vmem:[%s758] sm:$0xff]
      %v760 = vld [vmem:[%s758 + $0x8] sm:$0xff]
      %v761 = vld [vmem:[%s758 + $0x10] sm:$0xff]
      %v762 = vld [vmem:[%s758 + $0x18] sm:$0xff]
      %v763 = vld [vmem:[%s758 + $0x20] sm:$0xff]
      %v764 = vld [vmem:[%s758 + $0x28] sm:$0xff]
      %v765 = vld [vmem:[%s758 + $0x30] sm:$0xff]
      %v766 = vld [vmem:[%s758 + $0x38] sm:$0xff]
      %v767 = vld [vmem:[%s758 + $0x40] sm:$0xff]
      %v768 = vld [vmem:[%s758 + $0x48] sm:$0xff]
      %v769 = vld [vmem:[%s758 + $0x50] sm:$0xff]
      %v770 = vld [vmem:[%s758 + $0x58] sm:$0xff]
      %v771 = vld [vmem:[%s758 + $0x60] sm:$0xff]
      %v772 = vld [vmem:[%s758 + $0x68] sm:$0xff]
      %v773 = vld [vmem:[%s758 + $0x70] sm:$0xff]
      %v774 = vld [vmem:[%s758 + $0x78] sm:$0xff]
      %775 = vmatprep.subr.mxu0 0.0
      %776 = vmatpush1.msra.mxu0 %v759
      %777 = vmatprep.subr.mxu0 0.0
      %778 = vmatpush1.msra.mxu0 %v760
      %779 = vmatprep.subr.mxu0 0.0
      %780 = vmatpush1.msra.mxu0 %v761
      %781 = vmatprep.subr.mxu0 0.0
      %782 = vmatpush1.msra.mxu0 %v762
      %783 = vmatprep.subr.mxu0 0.0
      %784 = vmatpush1.msra.mxu0 %v763
      %785 = vmatprep.subr.mxu0 0.0
      %786 = vmatpush1.msra.mxu0 %v764
      %787 = vmatprep.subr.mxu0 0.0
      %788 = vmatpush1.msra.mxu0 %v765
      %789 = vmatprep.subr.mxu0 0.0
      %790 = vmatpush1.msra.mxu0 %v766
      %791 = vmatprep.subr.mxu0 0.0
      %792 = vmatpush1.msra.mxu0 %v767
      %793 = vmatprep.subr.mxu0 0.0
      %794 = vmatpush1.msra.mxu0 %v768
      %795 = vmatprep.subr.mxu0 0.0
      %796 = vmatpush1.msra.mxu0 %v769
      %797 = vmatprep.subr.mxu0 0.0
      %798 = vmatpush1.msra.mxu0 %v770
      %799 = vmatprep.subr.mxu0 0.0
      %800 = vmatpush1.msra.mxu0 %v771
      %801 = vmatprep.subr.mxu0 0.0
      %802 = vmatpush1.msra.mxu0 %v772
      %803 = vmatprep.subr.mxu0 0.0
      %804 = vmatpush1.msra.mxu0 %v773
      %805 = vmatprep.subr.mxu0 0.0
      %806 = vmatpush1.msra.mxu0 %v774
      %807 = vmatprep.subr.mxu0 0.0
      %808 = vmatpush1.msra.mxu0 0.0
      %809 = vmatprep.subr.mxu0 0.0
      %810 = vmatpush1.msra.mxu0 0.0
      %811 = vmatprep.subr.mxu0 0.0
      %812 = vmatpush1.msra.mxu0 0.0
      %813 = vmatprep.subr.mxu0 0.0
      %814 = vmatpush1.msra.mxu0 0.0
      %815 = vmatprep.subr.mxu0 0.0
      %816 = vmatpush1.msra.mxu0 0.0
      %817 = vmatprep.subr.mxu0 0.0
      %818 = vmatpush1.msra.mxu0 0.0
      %819 = vmatprep.subr.mxu0 0.0
      %820 = vmatpush1.msra.mxu0 0.0
      %821 = vmatprep.subr.mxu0 0.0
      %822 = vmatpush1.msra.mxu0 0.0
      %823 = vmatprep.subr.mxu0 0.0
      %824 = vmatpush1.msra.mxu0 0.0
      %825 = vmatprep.subr.mxu0 0.0
      %826 = vmatpush1.msra.mxu0 0.0
      %827 = vmatprep.subr.mxu0 0.0
      %828 = vmatpush1.msra.mxu0 0.0
      %829 = vmatprep.subr.mxu0 0.0
      %830 = vmatpush1.msra.mxu0 0.0
      %831 = vmatprep.subr.mxu0 0.0
      %832 = vmatpush1.msra.mxu0 0.0
      %833 = vmatprep.subr.mxu0 0.0
      %834 = vmatpush1.msra.mxu0 0.0
      %835 = vmatprep.subr.mxu0 0.0
      %836 = vmatpush1.msra.mxu0 0.0
      %837 = vmatprep.subr.mxu0 0.0
      %838 = vmatpush1.msra.mxu0 0.0
      %839 = vmatprep.mubr.f32.mxu0 0.0
      %840 = vmatmul.mubr.f32.gmra.mrb[0].mxu0 %v728
      %v841 = vpop.f32.mrb[0].mxu0
      %v842 = vadd.f32 0.0, %v841
      %v843 = vpop.f32.mrb[0].mxu0
      %844 = vmatprep.mubr.f32.mxu0 0.0
      %845 = vmatmul.mubr.f32.gmra.mrb[0].mxu0 %v731
      %v846 = vpop.f32.mrb[0].mxu0
      %v847 = vadd.f32 0.0, %v846
      %v848 = vpop.f32.mrb[0].mxu0
      %849 = vmatprep.mubr.f32.mxu0 0.0
      %850 = vmatmul.mubr.f32.gmra.mrb[0].mxu0 %v734
      %v851 = vpop.f32.mrb[0].mxu0
      %v852 = vadd.f32 0.0, %v851
      %v853 = vpop.f32.mrb[0].mxu0
      %854 = vmatprep.mubr.f32.mxu0 0.0
      %855 = vmatmul.mubr.f32.gmra.mrb[0].mxu0 %v737
      %v856 = vpop.f32.mrb[0].mxu0
      %v857 = vadd.f32 0.0, %v856
      %v858 = vpop.f32.mrb[0].mxu0
      %859 = vmatprep.mubr.f32.mxu0 0.0
      %860 = vmatmul.mubr.f32.gmra.mrb[0].mxu0 %v740
      %v861 = vpop.f32.mrb[0].mxu0
      %v862 = vadd.f32 0.0, %v861
      %v863 = vpop.f32.mrb[0].mxu0
      %864 = vmatprep.mubr.f32.mxu0 0.0
      %865 = vmatmul.mubr.f32.gmra.mrb[0].mxu0 %v743
      %v866 = vpop.f32.mrb[0].mxu0
      %v867 = vadd.f32 0.0, %v866
      %v868 = vpop.f32.mrb[0].mxu0
      %869 = vmatprep.mubr.f32.mxu0 0.0
      %870 = vmatmul.mubr.f32.gmra.mrb[0].mxu0 %v746
      %v871 = vpop.f32.mrb[0].mxu0
      %v872 = vadd.f32 0.0, %v871
      %v873 = vpop.f32.mrb[0].mxu0
      %874 = vmatprep.mubr.f32.mxu0 0.0
      %875 = vmatmul.mubr.f32.gmra.mrb[0].mxu0 %v749
      %v876 = vpop.f32.mrb[0].mxu0
      %v877 = vadd.f32 0.0, %v876
      %v878 = vpop.f32.mrb[0].mxu0
      %879 = vdwg.mxu0
      %v880 = vadd.f32 %v701, %v842
      %v881 = vadd.f32 %v702, %v847
      %v882 = vadd.f32 %v703, %v852
      %v883 = vadd.f32 %v704, %v857
      %v884 = vadd.f32 %v705, %v862
      %v885 = vadd.f32 %v706, %v867
      %v886 = vadd.f32 %v707, %v872
      %v887 = vadd.f32 %v708, %v877
      %vm888 = vcmask 1045504
      %v889 = vrot.slane %v552, 2
      %v890 = vrot.slane %v562, 2
      %v891 = vsel %vm888, %v889, %v890
      %v892 = vrot.slane %v553, 2
      %v893 = vrot.slane %v563, 2
      %v894 = vsel %vm888, %v892, %v893
      %v895 = vrot.slane %v554, 2
      %v896 = vrot.slane %v564, 2
      %v897 = vsel %vm888, %v895, %v896
      %v898 = vrot.slane %v555, 2
      %v899 = vrot.slane %v565, 2
      %v900 = vsel %vm888, %v898, %v899
      %v901 = vrot.slane %v556, 2
      %v902 = vrot.slane %v566, 2
      %v903 = vsel %vm888, %v901, %v902
      %v904 = vrot.slane %v557, 2
      %v905 = vrot.slane %v567, 2
      %v906 = vsel %vm888, %v904, %v905
      %v907 = vrot.slane %v558, 2
      %v908 = vrot.slane %v568, 2
      %v909 = vsel %vm888, %v907, %v908
      %v910 = vrot.slane %v559, 2
      %v911 = vrot.slane %v569, 2
      %v912 = vsel %vm888, %v910, %v911
      %s921 = scalar_lea.vmem %s468, 256
      %v922 = vld [vmem:[%s921] sm:$0xff]
      %v923 = vld [vmem:[%s921 + $0x8] sm:$0xff]
      %v924 = vld [vmem:[%s921 + $0x10] sm:$0xff]
      %v925 = vld [vmem:[%s921 + $0x18] sm:$0xff]
      %v926 = vld [vmem:[%s921 + $0x20] sm:$0xff]
      %v927 = vld [vmem:[%s921 + $0x28] sm:$0xff]
      %v928 = vld [vmem:[%s921 + $0x30] sm:$0xff]
      %v929 = vld [vmem:[%s921 + $0x38] sm:$0xff]
      %v930 = vld [vmem:[%s921 + $0x40] sm:$0xff]
      %v931 = vld [vmem:[%s921 + $0x48] sm:$0xff]
      %v932 = vld [vmem:[%s921 + $0x50] sm:$0xff]
      %v933 = vld [vmem:[%s921 + $0x58] sm:$0xff]
      %v934 = vld [vmem:[%s921 + $0x60] sm:$0xff]
      %v935 = vld [vmem:[%s921 + $0x68] sm:$0xff]
      %v936 = vld [vmem:[%s921 + $0x70] sm:$0xff]
      %v937 = vld [vmem:[%s921 + $0x78] sm:$0xff]
      %938 = vmatprep.subr.mxu0 0.0
      %939 = vmatpush1.msra.mxu0 %v922
      %940 = vmatprep.subr.mxu0 0.0
      %941 = vmatpush1.msra.mxu0 %v923
      %942 = vmatprep.subr.mxu0 0.0
      %943 = vmatpush1.msra.mxu0 %v924
      %944 = vmatprep.subr.mxu0 0.0
      %945 = vmatpush1.msra.mxu0 %v925
      %946 = vmatprep.subr.mxu0 0.0
      %947 = vmatpush1.msra.mxu0 %v926
      %948 = vmatprep.subr.mxu0 0.0
      %949 = vmatpush1.msra.mxu0 %v927
      %950 = vmatprep.subr.mxu0 0.0
      %951 = vmatpush1.msra.mxu0 %v928
      %952 = vmatprep.subr.mxu0 0.0
      %953 = vmatpush1.msra.mxu0 %v929
      %954 = vmatprep.subr.mxu0 0.0
      %955 = vmatpush1.msra.mxu0 %v930
      %956 = vmatprep.subr.mxu0 0.0
      %957 = vmatpush1.msra.mxu0 %v931
      %958 = vmatprep.subr.mxu0 0.0
      %959 = vmatpush1.msra.mxu0 %v932
      %960 = vmatprep.subr.mxu0 0.0
      %961 = vmatpush1.msra.mxu0 %v933
      %962 = vmatprep.subr.mxu0 0.0
      %963 = vmatpush1.msra.mxu0 %v934
      %964 = vmatprep.subr.mxu0 0.0
      %965 = vmatpush1.msra.mxu0 %v935
      %966 = vmatprep.subr.mxu0 0.0
      %967 = vmatpush1.msra.mxu0 %v936
      %968 = vmatprep.subr.mxu0 0.0
      %969 = vmatpush1.msra.mxu0 %v937
      %970 = vmatprep.subr.mxu0 0.0
      %971 = vmatpush1.msra.mxu0 0.0
      %972 = vmatprep.subr.mxu0 0.0
      %973 = vmatpush1.msra.mxu0 0.0
      %974 = vmatprep.subr.mxu0 0.0
      %975 = vmatpush1.msra.mxu0 0.0
      %976 = vmatprep.subr.mxu0 0.0
      %977 = vmatpush1.msra.mxu0 0.0
      %978 = vmatprep.subr.mxu0 0.0
      %979 = vmatpush1.msra.mxu0 0.0
      %980 = vmatprep.subr.mxu0 0.0
      %981 = vmatpush1.msra.mxu0 0.0
      %982 = vmatprep.subr.mxu0 0.0
      %983 = vmatpush1.msra.mxu0 0.0
      %984 = vmatprep.subr.mxu0 0.0
      %985 = vmatpush1.msra.mxu0 0.0
      %986 = vmatprep.subr.mxu0 0.0
      %987 = vmatpush1.msra.mxu0 0.0
      %988 = vmatprep.subr.mxu0 0.0
      %989 = vmatpush1.msra.mxu0 0.0
      %990 = vmatprep.subr.mxu0 0.0
      %991 = vmatpush1.msra.mxu0 0.0
      %992 = vmatprep.subr.mxu0 0.0
      %993 = vmatpush1.msra.mxu0 0.0
      %994 = vmatprep.subr.mxu0 0.0
      %995 = vmatpush1.msra.mxu0 0.0
      %996 = vmatprep.subr.mxu0 0.0
      %997 = vmatpush1.msra.mxu0 0.0
      %998 = vmatprep.subr.mxu0 0.0
      %999 = vmatpush1.msra.mxu0 0.0
      %1000 = vmatprep.subr.mxu0 0.0
      %1001 = vmatpush1.msra.mxu0 0.0
      %1002 = vmatprep.mubr.f32.mxu0 0.0
      %1003 = vmatmul.mubr.f32.gmra.mrb[0].mxu0 %v891
      %v1004 = vpop.f32.mrb[0].mxu0
      %v1005 = vadd.f32 0.0, %v1004
      %v1006 = vpop.f32.mrb[0].mxu0
      %1007 = vmatprep.mubr.f32.mxu0 0.0
      %1008 = vmatmul.mubr.f32.gmra.mrb[0].mxu0 %v894
      %v1009 = vpop.f32.mrb[0].mxu0
      %v1010 = vadd.f32 0.0, %v1009
      %v1011 = vpop.f32.mrb[0].mxu0
      %1012 = vmatprep.mubr.f32.mxu0 0.0
      %1013 = vmatmul.mubr.f32.gmra.mrb[0].mxu0 %v897
      %v1014 = vpop.f32.mrb[0].mxu0
      %v1015 = vadd.f32 0.0, %v1014
      %v1016 = vpop.f32.mrb[0].mxu0
      %1017 = vmatprep.mubr.f32.mxu0 0.0
      %1018 = vmatmul.mubr.f32.gmra.mrb[0].mxu0 %v900
      %v1019 = vpop.f32.mrb[0].mxu0
      %v1020 = vadd.f32 0.0, %v1019
      %v1021 = vpop.f32.mrb[0].mxu0
      %1022 = vmatprep.mubr.f32.mxu0 0.0
      %1023 = vmatmul.mubr.f32.gmra.mrb[0].mxu0 %v903
      %v1024 = vpop.f32.mrb[0].mxu0
      %v1025 = vadd.f32 0.0, %v1024
      %v1026 = vpop.f32.mrb[0].mxu0
      %1027 = vmatprep.mubr.f32.mxu0 0.0
      %1028 = vmatmul.mubr.f32.gmra.mrb[0].mxu0 %v906
      %v1029 = vpop.f32.mrb[0].mxu0
      %v1030 = vadd.f32 0.0, %v1029
      %v1031 = vpop.f32.mrb[0].mxu0
      %1032 = vmatprep.mubr.f32.mxu0 0.0
      %1033 = vmatmul.mubr.f32.gmra.mrb[0].mxu0 %v909
      %v1034 = vpop.f32.mrb[0].mxu0
      %v1035 = vadd.f32 0.0, %v1034
      %v1036 = vpop.f32.mrb[0].mxu0
      %1037 = vmatprep.mubr.f32.mxu0 0.0
      %1038 = vmatmul.mubr.f32.gmra.mrb[0].mxu0 %v912
      %v1039 = vpop.f32.mrb[0].mxu0
      %v1040 = vadd.f32 0.0, %v1039
      %v1041 = vpop.f32.mrb[0].mxu0
      %1042 = vdwg.mxu0
      %v1043 = vadd.f32 %v880, %v1005
      %v1044 = vadd.f32 %v881, %v1010
      %v1045 = vadd.f32 %v882, %v1015
      %v1046 = vadd.f32 %v883, %v1020
      %v1047 = vadd.f32 %v884, %v1025
      %v1048 = vadd.f32 %v885, %v1030
      %v1049 = vadd.f32 %v886, %v1035
      %v1050 = vadd.f32 %v887, %v1040
      %s1051 = scalar_lea.vmem %s468, 384
      %v1052 = vld [vmem:[%s1051] sm:$0xff]
      %v1053 = vld [vmem:[%s1051 + $0x8] sm:$0xff]
      %v1054 = vld [vmem:[%s1051 + $0x10] sm:$0xff]
      %v1055 = vld [vmem:[%s1051 + $0x18] sm:$0xff]
      %v1056 = vld [vmem:[%s1051 + $0x20] sm:$0xff]
      %v1057 = vld [vmem:[%s1051 + $0x28] sm:$0xff]
      %v1058 = vld [vmem:[%s1051 + $0x30] sm:$0xff]
      %v1059 = vld [vmem:[%s1051 + $0x38] sm:$0xff]
      %v1060 = vld [vmem:[%s1051 + $0x40] sm:$0xff]
      %v1061 = vld [vmem:[%s1051 + $0x48] sm:$0xff]
      %v1062 = vld [vmem:[%s1051 + $0x50] sm:$0xff]
      %v1063 = vld [vmem:[%s1051 + $0x58] sm:$0xff]
      %v1064 = vld [vmem:[%s1051 + $0x60] sm:$0xff]
      %v1065 = vld [vmem:[%s1051 + $0x68] sm:$0xff]
      %v1066 = vld [vmem:[%s1051 + $0x70] sm:$0xff]
      %v1067 = vld [vmem:[%s1051 + $0x78] sm:$0xff]
      %1068 = vmatprep.subr.mxu0 0.0
      %1069 = vmatpush1.msra.mxu0 %v1052
      %1070 = vmatprep.subr.mxu0 0.0
      %1071 = vmatpush1.msra.mxu0 %v1053
      %1072 = vmatprep.subr.mxu0 0.0
      %1073 = vmatpush1.msra.mxu0 %v1054
      %1074 = vmatprep.subr.mxu0 0.0
      %1075 = vmatpush1.msra.mxu0 %v1055
      %1076 = vmatprep.subr.mxu0 0.0
      %1077 = vmatpush1.msra.mxu0 %v1056
      %1078 = vmatprep.subr.mxu0 0.0
      %1079 = vmatpush1.msra.mxu0 %v1057
      %1080 = vmatprep.subr.mxu0 0.0
      %1081 = vmatpush1.msra.mxu0 %v1058
      %1082 = vmatprep.subr.mxu0 0.0
      %1083 = vmatpush1.msra.mxu0 %v1059
      %1084 = vmatprep.subr.mxu0 0.0
      %1085 = vmatpush1.msra.mxu0 %v1060
      %1086 = vmatprep.subr.mxu0 0.0
      %1087 = vmatpush1.msra.mxu0 %v1061
      %1088 = vmatprep.subr.mxu0 0.0
      %1089 = vmatpush1.msra.mxu0 %v1062
      %1090 = vmatprep.subr.mxu0 0.0
      %1091 = vmatpush1.msra.mxu0 %v1063
      %1092 = vmatprep.subr.mxu0 0.0
      %1093 = vmatpush1.msra.mxu0 %v1064
      %1094 = vmatprep.subr.mxu0 0.0
      %1095 = vmatpush1.msra.mxu0 %v1065
      %1096 = vmatprep.subr.mxu0 0.0
      %1097 = vmatpush1.msra.mxu0 %v1066
      %1098 = vmatprep.subr.mxu0 0.0
      %1099 = vmatpush1.msra.mxu0 %v1067
      %1100 = vmatprep.subr.mxu0 0.0
      %1101 = vmatpush1.msra.mxu0 0.0
      %1102 = vmatprep.subr.mxu0 0.0
      %1103 = vmatpush1.msra.mxu0 0.0
      %1104 = vmatprep.subr.mxu0 0.0
      %1105 = vmatpush1.msra.mxu0 0.0
      %1106 = vmatprep.subr.mxu0 0.0
      %1107 = vmatpush1.msra.mxu0 0.0
      %1108 = vmatprep.subr.mxu0 0.0
      %1109 = vmatpush1.msra.mxu0 0.0
      %1110 = vmatprep.subr.mxu0 0.0
      %1111 = vmatpush1.msra.mxu0 0.0
      %1112 = vmatprep.subr.mxu0 0.0
      %1113 = vmatpush1.msra.mxu0 0.0
      %1114 = vmatprep.subr.mxu0 0.0
      %1115 = vmatpush1.msra.mxu0 0.0
      %1116 = vmatprep.subr.mxu0 0.0
      %1117 = vmatpush1.msra.mxu0 0.0
      %1118 = vmatprep.subr.mxu0 0.0
      %1119 = vmatpush1.msra.mxu0 0.0
      %1120 = vmatprep.subr.mxu0 0.0
      %1121 = vmatpush1.msra.mxu0 0.0
      %1122 = vmatprep.subr.mxu0 0.0
      %1123 = vmatpush1.msra.mxu0 0.0
      %1124 = vmatprep.subr.mxu0 0.0
      %1125 = vmatpush1.msra.mxu0 0.0
      %1126 = vmatprep.subr.mxu0 0.0
      %1127 = vmatpush1.msra.mxu0 0.0
      %1128 = vmatprep.subr.mxu0 0.0
      %1129 = vmatpush1.msra.mxu0 0.0
      %1130 = vmatprep.subr.mxu0 0.0
      %1131 = vmatpush1.msra.mxu0 0.0
      %1132 = vmatprep.mubr.f32.mxu0 0.0
      %1133 = vmatmul.mubr.f32.gmra.mrb[0].mxu0 %v553
      %v1134 = vpop.f32.mrb[0].mxu0
      %v1135 = vadd.f32 0.0, %v1134
      %v1136 = vpop.f32.mrb[0].mxu0
      %1137 = vmatprep.mubr.f32.mxu0 0.0
      %1138 = vmatmul.mubr.f32.gmra.mrb[0].mxu0 %v554
      %v1139 = vpop.f32.mrb[0].mxu0
      %v1140 = vadd.f32 0.0, %v1139
      %v1141 = vpop.f32.mrb[0].mxu0
      %1142 = vmatprep.mubr.f32.mxu0 0.0
      %1143 = vmatmul.mubr.f32.gmra.mrb[0].mxu0 %v555
      %v1144 = vpop.f32.mrb[0].mxu0
      %v1145 = vadd.f32 0.0, %v1144
      %v1146 = vpop.f32.mrb[0].mxu0
      %1147 = vmatprep.mubr.f32.mxu0 0.0
      %1148 = vmatmul.mubr.f32.gmra.mrb[0].mxu0 %v556
      %v1149 = vpop.f32.mrb[0].mxu0
      %v1150 = vadd.f32 0.0, %v1149
      %v1151 = vpop.f32.mrb[0].mxu0
      %1152 = vmatprep.mubr.f32.mxu0 0.0
      %1153 = vmatmul.mubr.f32.gmra.mrb[0].mxu0 %v557
      %v1154 = vpop.f32.mrb[0].mxu0
      %v1155 = vadd.f32 0.0, %v1154
      %v1156 = vpop.f32.mrb[0].mxu0
      %1157 = vmatprep.mubr.f32.mxu0 0.0
      %1158 = vmatmul.mubr.f32.gmra.mrb[0].mxu0 %v558
      %v1159 = vpop.f32.mrb[0].mxu0
      %v1160 = vadd.f32 0.0, %v1159
      %v1161 = vpop.f32.mrb[0].mxu0
      %1162 = vmatprep.mubr.f32.mxu0 0.0
      %1163 = vmatmul.mubr.f32.gmra.mrb[0].mxu0 %v559
      %v1164 = vpop.f32.mrb[0].mxu0
      %v1165 = vadd.f32 0.0, %v1164
      %v1166 = vpop.f32.mrb[0].mxu0
      %1167 = vmatprep.mubr.f32.mxu0 0.0
      %1168 = vmatmul.mubr.f32.gmra.mrb[0].mxu0 %v560
      %v1169 = vpop.f32.mrb[0].mxu0
      %v1170 = vadd.f32 0.0, %v1169
      %v1171 = vpop.f32.mrb[0].mxu0
      %1172 = vdwg.mxu0
      %v1173 = vadd.f32 %v1043, %v1135
      %v1174 = vadd.f32 %v1044, %v1140
      %v1175 = vadd.f32 %v1045, %v1145
      %v1176 = vadd.f32 %v1046, %v1150
      %v1177 = vadd.f32 %v1047, %v1155
      %v1178 = vadd.f32 %v1048, %v1160
      %v1179 = vadd.f32 %v1049, %v1165
      %v1180 = vadd.f32 %v1050, %v1170
      %v1183 = vrot.slane %v560, 1
      %v1184 = vrot.slane %v570, 1
      %v1185 = vsel %vm725, %v1183, %v1184
      %s1187 = scalar_lea.vmem %s468, 512
      %v1188 = vld [vmem:[%s1187] sm:$0xff]
      %v1189 = vld [vmem:[%s1187 + $0x8] sm:$0xff]
      %v1190 = vld [vmem:[%s1187 + $0x10] sm:$0xff]
      %v1191 = vld [vmem:[%s1187 + $0x18] sm:$0xff]
      %v1192 = vld [vmem:[%s1187 + $0x20] sm:$0xff]
      %v1193 = vld [vmem:[%s1187 + $0x28] sm:$0xff]
      %v1194 = vld [vmem:[%s1187 + $0x30] sm:$0xff]
      %v1195 = vld [vmem:[%s1187 + $0x38] sm:$0xff]
      %v1196 = vld [vmem:[%s1187 + $0x40] sm:$0xff]
      %v1197 = vld [vmem:[%s1187 + $0x48] sm:$0xff]
      %v1198 = vld [vmem:[%s1187 + $0x50] sm:$0xff]
      %v1199 = vld [vmem:[%s1187 + $0x58] sm:$0xff]
      %v1200 = vld [vmem:[%s1187 + $0x60] sm:$0xff]
      %v1201 = vld [vmem:[%s1187 + $0x68] sm:$0xff]
      %v1202 = vld [vmem:[%s1187 + $0x70] sm:$0xff]
      %v1203 = vld [vmem:[%s1187 + $0x78] sm:$0xff]
      %1204 = vmatprep.subr.mxu0 0.0
      %1205 = vmatpush1.msra.mxu0 %v1188
      %1206 = vmatprep.subr.mxu0 0.0
      %1207 = vmatpush1.msra.mxu0 %v1189
      %1208 = vmatprep.subr.mxu0 0.0
      %1209 = vmatpush1.msra.mxu0 %v1190
      %1210 = vmatprep.subr.mxu0 0.0
      %1211 = vmatpush1.msra.mxu0 %v1191
      %1212 = vmatprep.subr.mxu0 0.0
      %1213 = vmatpush1.msra.mxu0 %v1192
      %1214 = vmatprep.subr.mxu0 0.0
      %1215 = vmatpush1.msra.mxu0 %v1193
      %1216 = vmatprep.subr.mxu0 0.0
      %1217 = vmatpush1.msra.mxu0 %v1194
      %1218 = vmatprep.subr.mxu0 0.0
      %1219 = vmatpush1.msra.mxu0 %v1195
      %1220 = vmatprep.subr.mxu0 0.0
      %1221 = vmatpush1.msra.mxu0 %v1196
      %1222 = vmatprep.subr.mxu0 0.0
      %1223 = vmatpush1.msra.mxu0 %v1197
      %1224 = vmatprep.subr.mxu0 0.0
      %1225 = vmatpush1.msra.mxu0 %v1198
      %1226 = vmatprep.subr.mxu0 0.0
      %1227 = vmatpush1.msra.mxu0 %v1199
      %1228 = vmatprep.subr.mxu0 0.0
      %1229 = vmatpush1.msra.mxu0 %v1200
      %1230 = vmatprep.subr.mxu0 0.0
      %1231 = vmatpush1.msra.mxu0 %v1201
      %1232 = vmatprep.subr.mxu0 0.0
      %1233 = vmatpush1.msra.mxu0 %v1202
      %1234 = vmatprep.subr.mxu0 0.0
      %1235 = vmatpush1.msra.mxu0 %v1203
      %1236 = vmatprep.subr.mxu0 0.0
      %1237 = vmatpush1.msra.mxu0 0.0
      %1238 = vmatprep.subr.mxu0 0.0
      %1239 = vmatpush1.msra.mxu0 0.0
      %1240 = vmatprep.subr.mxu0 0.0
      %1241 = vmatpush1.msra.mxu0 0.0
      %1242 = vmatprep.subr.mxu0 0.0
      %1243 = vmatpush1.msra.mxu0 0.0
      %1244 = vmatprep.subr.mxu0 0.0
      %1245 = vmatpush1.msra.mxu0 0.0
      %1246 = vmatprep.subr.mxu0 0.0
      %1247 = vmatpush1.msra.mxu0 0.0
      %1248 = vmatprep.subr.mxu0 0.0
      %1249 = vmatpush1.msra.mxu0 0.0
      %1250 = vmatprep.subr.mxu0 0.0
      %1251 = vmatpush1.msra.mxu0 0.0
      %1252 = vmatprep.subr.mxu0 0.0
      %1253 = vmatpush1.msra.mxu0 0.0
      %1254 = vmatprep.subr.mxu0 0.0
      %1255 = vmatpush1.msra.mxu0 0.0
      %1256 = vmatprep.subr.mxu0 0.0
      %1257 = vmatpush1.msra.mxu0 0.0
      %1258 = vmatprep.subr.mxu0 0.0
      %1259 = vmatpush1.msra.mxu0 0.0
      %1260 = vmatprep.subr.mxu0 0.0
      %1261 = vmatpush1.msra.mxu0 0.0
      %1262 = vmatprep.subr.mxu0 0.0
      %1263 = vmatpush1.msra.mxu0 0.0
      %1264 = vmatprep.subr.mxu0 0.0
      %1265 = vmatpush1.msra.mxu0 0.0
      %1266 = vmatprep.subr.mxu0 0.0
      %1267 = vmatpush1.msra.mxu0 0.0
      %1268 = vmatprep.mubr.f32.mxu0 0.0
      %1269 = vmatmul.mubr.f32.gmra.mrb[0].mxu0 %v731
      %v1270 = vpop.f32.mrb[0].mxu0
      %v1271 = vadd.f32 0.0, %v1270
      %v1272 = vpop.f32.mrb[0].mxu0
      %1273 = vmatprep.mubr.f32.mxu0 0.0
      %1274 = vmatmul.mubr.f32.gmra.mrb[0].mxu0 %v734
      %v1275 = vpop.f32.mrb[0].mxu0
      %v1276 = vadd.f32 0.0, %v1275
      %v1277 = vpop.f32.mrb[0].mxu0
      %1278 = vmatprep.mubr.f32.mxu0 0.0
      %1279 = vmatmul.mubr.f32.gmra.mrb[0].mxu0 %v737
      %v1280 = vpop.f32.mrb[0].mxu0
      %v1281 = vadd.f32 0.0, %v1280
      %v1282 = vpop.f32.mrb[0].mxu0
      %1283 = vmatprep.mubr.f32.mxu0 0.0
      %1284 = vmatmul.mubr.f32.gmra.mrb[0].mxu0 %v740
      %v1285 = vpop.f32.mrb[0].mxu0
      %v1286 = vadd.f32 0.0, %v1285
      %v1287 = vpop.f32.mrb[0].mxu0
      %1288 = vmatprep.mubr.f32.mxu0 0.0
      %1289 = vmatmul.mubr.f32.gmra.mrb[0].mxu0 %v743
      %v1290 = vpop.f32.mrb[0].mxu0
      %v1291 = vadd.f32 0.0, %v1290
      %v1292 = vpop.f32.mrb[0].mxu0
      %1293 = vmatprep.mubr.f32.mxu0 0.0
      %1294 = vmatmul.mubr.f32.gmra.mrb[0].mxu0 %v746
      %v1295 = vpop.f32.mrb[0].mxu0
      %v1296 = vadd.f32 0.0, %v1295
      %v1297 = vpop.f32.mrb[0].mxu0
      %1298 = vmatprep.mubr.f32.mxu0 0.0
      %1299 = vmatmul.mubr.f32.gmra.mrb[0].mxu0 %v749
      %v1300 = vpop.f32.mrb[0].mxu0
      %v1301 = vadd.f32 0.0, %v1300
      %v1302 = vpop.f32.mrb[0].mxu0
      %1303 = vmatprep.mubr.f32.mxu0 0.0
      %1304 = vmatmul.mubr.f32.gmra.mrb[0].mxu0 %v1185
      %v1305 = vpop.f32.mrb[0].mxu0
      %v1306 = vadd.f32 0.0, %v1305
      %v1307 = vpop.f32.mrb[0].mxu0
      %1308 = vdwg.mxu0
      %v1309 = vadd.f32 %v1173, %v1271
      %v1310 = vadd.f32 %v1174, %v1276
      %v1311 = vadd.f32 %v1175, %v1281
      %v1312 = vadd.f32 %v1176, %v1286
      %v1313 = vadd.f32 %v1177, %v1291
      %v1314 = vadd.f32 %v1178, %v1296
      %v1315 = vadd.f32 %v1179, %v1301
      %v1316 = vadd.f32 %v1180, %v1306
      %v1317 = vrot.slane %v560, 2
      %v1318 = vrot.slane %v570, 2
      %v1319 = vsel %vm888, %v1317, %v1318
      %s1321 = scalar_lea.vmem %s468, 640
      %v1322 = vld [vmem:[%s1321] sm:$0xff]
      %v1323 = vld [vmem:[%s1321 + $0x8] sm:$0xff]
      %v1324 = vld [vmem:[%s1321 + $0x10] sm:$0xff]
      %v1325 = vld [vmem:[%s1321 + $0x18] sm:$0xff]
      %v1326 = vld [vmem:[%s1321 + $0x20] sm:$0xff]
      %v1327 = vld [vmem:[%s1321 + $0x28] sm:$0xff]
      %v1328 = vld [vmem:[%s1321 + $0x30] sm:$0xff]
      %v1329 = vld [vmem:[%s1321 + $0x38] sm:$0xff]
      %v1330 = vld [vmem:[%s1321 + $0x40] sm:$0xff]
      %v1331 = vld [vmem:[%s1321 + $0x48] sm:$0xff]
      %v1332 = vld [vmem:[%s1321 + $0x50] sm:$0xff]
      %v1333 = vld [vmem:[%s1321 + $0x58] sm:$0xff]
      %v1334 = vld [vmem:[%s1321 + $0x60] sm:$0xff]
      %v1335 = vld [vmem:[%s1321 + $0x68] sm:$0xff]
      %v1336 = vld [vmem:[%s1321 + $0x70] sm:$0xff]
      %v1337 = vld [vmem:[%s1321 + $0x78] sm:$0xff]
      %1338 = vmatprep.subr.mxu0 0.0
      %1339 = vmatpush1.msra.mxu0 %v1322
      %1340 = vmatprep.subr.mxu0 0.0
      %1341 = vmatpush1.msra.mxu0 %v1323
      %1342 = vmatprep.subr.mxu0 0.0
      %1343 = vmatpush1.msra.mxu0 %v1324
      %1344 = vmatprep.subr.mxu0 0.0
      %1345 = vmatpush1.msra.mxu0 %v1325
      %1346 = vmatprep.subr.mxu0 0.0
      %1347 = vmatpush1.msra.mxu0 %v1326
      %1348 = vmatprep.subr.mxu0 0.0
      %1349 = vmatpush1.msra.mxu0 %v1327
      %1350 = vmatprep.subr.mxu0 0.0
      %1351 = vmatpush1.msra.mxu0 %v1328
      %1352 = vmatprep.subr.mxu0 0.0
      %1353 = vmatpush1.msra.mxu0 %v1329
      %1354 = vmatprep.subr.mxu0 0.0
      %1355 = vmatpush1.msra.mxu0 %v1330
      %1356 = vmatprep.subr.mxu0 0.0
      %1357 = vmatpush1.msra.mxu0 %v1331
      %1358 = vmatprep.subr.mxu0 0.0
      %1359 = vmatpush1.msra.mxu0 %v1332
      %1360 = vmatprep.subr.mxu0 0.0
      %1361 = vmatpush1.msra.mxu0 %v1333
      %1362 = vmatprep.subr.mxu0 0.0
      %1363 = vmatpush1.msra.mxu0 %v1334
      %1364 = vmatprep.subr.mxu0 0.0
      %1365 = vmatpush1.msra.mxu0 %v1335
      %1366 = vmatprep.subr.mxu0 0.0
      %1367 = vmatpush1.msra.mxu0 %v1336
      %1368 = vmatprep.subr.mxu0 0.0
      %1369 = vmatpush1.msra.mxu0 %v1337
      %1370 = vmatprep.subr.mxu0 0.0
      %1371 = vmatpush1.msra.mxu0 0.0
      %1372 = vmatprep.subr.mxu0 0.0
      %1373 = vmatpush1.msra.mxu0 0.0
      %1374 = vmatprep.subr.mxu0 0.0
      %1375 = vmatpush1.msra.mxu0 0.0
      %1376 = vmatprep.subr.mxu0 0.0
      %1377 = vmatpush1.msra.mxu0 0.0
      %1378 = vmatprep.subr.mxu0 0.0
      %1379 = vmatpush1.msra.mxu0 0.0
      %1380 = vmatprep.subr.mxu0 0.0
      %1381 = vmatpush1.msra.mxu0 0.0
      %1382 = vmatprep.subr.mxu0 0.0
      %1383 = vmatpush1.msra.mxu0 0.0
      %1384 = vmatprep.subr.mxu0 0.0
      %1385 = vmatpush1.msra.mxu0 0.0
      %1386 = vmatprep.subr.mxu0 0.0
      %1387 = vmatpush1.msra.mxu0 0.0
      %1388 = vmatprep.subr.mxu0 0.0
      %1389 = vmatpush1.msra.mxu0 0.0
      %1390 = vmatprep.subr.mxu0 0.0
      %1391 = vmatpush1.msra.mxu0 0.0
      %1392 = vmatprep.subr.mxu0 0.0
      %1393 = vmatpush1.msra.mxu0 0.0
      %1394 = vmatprep.subr.mxu0 0.0
      %1395 = vmatpush1.msra.mxu0 0.0
      %1396 = vmatprep.subr.mxu0 0.0
      %1397 = vmatpush1.msra.mxu0 0.0
      %1398 = vmatprep.subr.mxu0 0.0
      %1399 = vmatpush1.msra.mxu0 0.0
      %1400 = vmatprep.subr.mxu0 0.0
      %1401 = vmatpush1.msra.mxu0 0.0
      %1402 = vmatprep.mubr.f32.mxu0 0.0
      %1403 = vmatmul.mubr.f32.gmra.mrb[0].mxu0 %v894
      %v1404 = vpop.f32.mrb[0].mxu0
      %v1405 = vadd.f32 0.0, %v1404
      %v1406 = vpop.f32.mrb[0].mxu0
      %1407 = vmatprep.mubr.f32.mxu0 0.0
      %1408 = vmatmul.mubr.f32.gmra.mrb[0].mxu0 %v897
      %v1409 = vpop.f32.mrb[0].mxu0
      %v1410 = vadd.f32 0.0, %v1409
      %v1411 = vpop.f32.mrb[0].mxu0
      %1412 = vmatprep.mubr.f32.mxu0 0.0
      %1413 = vmatmul.mubr.f32.gmra.mrb[0].mxu0 %v900
      %v1414 = vpop.f32.mrb[0].mxu0
      %v1415 = vadd.f32 0.0, %v1414
      %v1416 = vpop.f32.mrb[0].mxu0
      %1417 = vmatprep.mubr.f32.mxu0 0.0
      %1418 = vmatmul.mubr.f32.gmra.mrb[0].mxu0 %v903
      %v1419 = vpop.f32.mrb[0].mxu0
      %v1420 = vadd.f32 0.0, %v1419
      %v1421 = vpop.f32.mrb[0].mxu0
      %1422 = vmatprep.mubr.f32.mxu0 0.0
      %1423 = vmatmul.mubr.f32.gmra.mrb[0].mxu0 %v906
      %v1424 = vpop.f32.mrb[0].mxu0
      %v1425 = vadd.f32 0.0, %v1424
      %v1426 = vpop.f32.mrb[0].mxu0
      %1427 = vmatprep.mubr.f32.mxu0 0.0
      %1428 = vmatmul.mubr.f32.gmra.mrb[0].mxu0 %v909
      %v1429 = vpop.f32.mrb[0].mxu0
      %v1430 = vadd.f32 0.0, %v1429
      %v1431 = vpop.f32.mrb[0].mxu0
      %1432 = vmatprep.mubr.f32.mxu0 0.0
      %1433 = vmatmul.mubr.f32.gmra.mrb[0].mxu0 %v912
      %v1434 = vpop.f32.mrb[0].mxu0
      %v1435 = vadd.f32 0.0, %v1434
      %v1436 = vpop.f32.mrb[0].mxu0
      %1437 = vmatprep.mubr.f32.mxu0 0.0
      %1438 = vmatmul.mubr.f32.gmra.mrb[0].mxu0 %v1319
      %v1439 = vpop.f32.mrb[0].mxu0
      %v1440 = vadd.f32 0.0, %v1439
      %v1441 = vpop.f32.mrb[0].mxu0
      %1442 = vdwg.mxu0
      %v1443 = vadd.f32 %v1309, %v1405
      %v1444 = vadd.f32 %v1310, %v1410
      %v1445 = vadd.f32 %v1311, %v1415
      %v1446 = vadd.f32 %v1312, %v1420
      %v1447 = vadd.f32 %v1313, %v1425
      %v1448 = vadd.f32 %v1314, %v1430
      %v1449 = vadd.f32 %v1315, %v1435
      %v1450 = vadd.f32 %v1316, %v1440
      %s1451 = scalar_lea.vmem %s468, 768
      %v1452 = vld [vmem:[%s1451] sm:$0xff]
      %v1453 = vld [vmem:[%s1451 + $0x8] sm:$0xff]
      %v1454 = vld [vmem:[%s1451 + $0x10] sm:$0xff]
      %v1455 = vld [vmem:[%s1451 + $0x18] sm:$0xff]
      %v1456 = vld [vmem:[%s1451 + $0x20] sm:$0xff]
      %v1457 = vld [vmem:[%s1451 + $0x28] sm:$0xff]
      %v1458 = vld [vmem:[%s1451 + $0x30] sm:$0xff]
      %v1459 = vld [vmem:[%s1451 + $0x38] sm:$0xff]
      %v1460 = vld [vmem:[%s1451 + $0x40] sm:$0xff]
      %v1461 = vld [vmem:[%s1451 + $0x48] sm:$0xff]
      %v1462 = vld [vmem:[%s1451 + $0x50] sm:$0xff]
      %v1463 = vld [vmem:[%s1451 + $0x58] sm:$0xff]
      %v1464 = vld [vmem:[%s1451 + $0x60] sm:$0xff]
      %v1465 = vld [vmem:[%s1451 + $0x68] sm:$0xff]
      %v1466 = vld [vmem:[%s1451 + $0x70] sm:$0xff]
      %v1467 = vld [vmem:[%s1451 + $0x78] sm:$0xff]
      %1468 = vmatprep.subr.mxu0 0.0
      %1469 = vmatpush1.msra.mxu0 %v1452
      %1470 = vmatprep.subr.mxu0 0.0
      %1471 = vmatpush1.msra.mxu0 %v1453
      %1472 = vmatprep.subr.mxu0 0.0
      %1473 = vmatpush1.msra.mxu0 %v1454
      %1474 = vmatprep.subr.mxu0 0.0
      %1475 = vmatpush1.msra.mxu0 %v1455
      %1476 = vmatprep.subr.mxu0 0.0
      %1477 = vmatpush1.msra.mxu0 %v1456
      %1478 = vmatprep.subr.mxu0 0.0
      %1479 = vmatpush1.msra.mxu0 %v1457
      %1480 = vmatprep.subr.mxu0 0.0
      %1481 = vmatpush1.msra.mxu0 %v1458
      %1482 = vmatprep.subr.mxu0 0.0
      %1483 = vmatpush1.msra.mxu0 %v1459
      %1484 = vmatprep.subr.mxu0 0.0
      %1485 = vmatpush1.msra.mxu0 %v1460
      %1486 = vmatprep.subr.mxu0 0.0
      %1487 = vmatpush1.msra.mxu0 %v1461
      %1488 = vmatprep.subr.mxu0 0.0
      %1489 = vmatpush1.msra.mxu0 %v1462
      %1490 = vmatprep.subr.mxu0 0.0
      %1491 = vmatpush1.msra.mxu0 %v1463
      %1492 = vmatprep.subr.mxu0 0.0
      %1493 = vmatpush1.msra.mxu0 %v1464
      %1494 = vmatprep.subr.mxu0 0.0
      %1495 = vmatpush1.msra.mxu0 %v1465
      %1496 = vmatprep.subr.mxu0 0.0
      %1497 = vmatpush1.msra.mxu0 %v1466
      %1498 = vmatprep.subr.mxu0 0.0
      %1499 = vmatpush1.msra.mxu0 %v1467
      %1500 = vmatprep.subr.mxu0 0.0
      %1501 = vmatpush1.msra.mxu0 0.0
      %1502 = vmatprep.subr.mxu0 0.0
      %1503 = vmatpush1.msra.mxu0 0.0
      %1504 = vmatprep.subr.mxu0 0.0
      %1505 = vmatpush1.msra.mxu0 0.0
      %1506 = vmatprep.subr.mxu0 0.0
      %1507 = vmatpush1.msra.mxu0 0.0
      %1508 = vmatprep.subr.mxu0 0.0
      %1509 = vmatpush1.msra.mxu0 0.0
      %1510 = vmatprep.subr.mxu0 0.0
      %1511 = vmatpush1.msra.mxu0 0.0
      %1512 = vmatprep.subr.mxu0 0.0
      %1513 = vmatpush1.msra.mxu0 0.0
      %1514 = vmatprep.subr.mxu0 0.0
      %1515 = vmatpush1.msra.mxu0 0.0
      %1516 = vmatprep.subr.mxu0 0.0
      %1517 = vmatpush1.msra.mxu0 0.0
      %1518 = vmatprep.subr.mxu0 0.0
      %1519 = vmatpush1.msra.mxu0 0.0
      %1520 = vmatprep.subr.mxu0 0.0
      %1521 = vmatpush1.msra.mxu0 0.0
      %1522 = vmatprep.subr.mxu0 0.0
      %1523 = vmatpush1.msra.mxu0 0.0
      %1524 = vmatprep.subr.mxu0 0.0
      %1525 = vmatpush1.msra.mxu0 0.0
      %1526 = vmatprep.subr.mxu0 0.0
      %1527 = vmatpush1.msra.mxu0 0.0
      %1528 = vmatprep.subr.mxu0 0.0
      %1529 = vmatpush1.msra.mxu0 0.0
      %1530 = vmatprep.subr.mxu0 0.0
      %1531 = vmatpush1.msra.mxu0 0.0
      %1532 = vmatprep.mubr.f32.mxu0 0.0
      %1533 = vmatmul.mubr.f32.gmra.mrb[0].mxu0 %v554
      %v1534 = vpop.f32.mrb[0].mxu0
      %v1535 = vadd.f32 0.0, %v1534
      %v1536 = vpop.f32.mrb[0].mxu0
      %1537 = vmatprep.mubr.f32.mxu0 0.0
      %1538 = vmatmul.mubr.f32.gmra.mrb[0].mxu0 %v555
      %v1539 = vpop.f32.mrb[0].mxu0
      %v1540 = vadd.f32 0.0, %v1539
      %v1541 = vpop.f32.mrb[0].mxu0
      %1542 = vmatprep.mubr.f32.mxu0 0.0
      %1543 = vmatmul.mubr.f32.gmra.mrb[0].mxu0 %v556
      %v1544 = vpop.f32.mrb[0].mxu0
      %v1545 = vadd.f32 0.0, %v1544
      %v1546 = vpop.f32.mrb[0].mxu0
      %1547 = vmatprep.mubr.f32.mxu0 0.0
      %1548 = vmatmul.mubr.f32.gmra.mrb[0].mxu0 %v557
      %v1549 = vpop.f32.mrb[0].mxu0
      %v1550 = vadd.f32 0.0, %v1549
      %v1551 = vpop.f32.mrb[0].mxu0
      %1552 = vmatprep.mubr.f32.mxu0 0.0
      %1553 = vmatmul.mubr.f32.gmra.mrb[0].mxu0 %v558
      %v1554 = vpop.f32.mrb[0].mxu0
      %v1555 = vadd.f32 0.0, %v1554
      %v1556 = vpop.f32.mrb[0].mxu0
      %1557 = vmatprep.mubr.f32.mxu0 0.0
      %1558 = vmatmul.mubr.f32.gmra.mrb[0].mxu0 %v559
      %v1559 = vpop.f32.mrb[0].mxu0
      %v1560 = vadd.f32 0.0, %v1559
      %v1561 = vpop.f32.mrb[0].mxu0
      %1562 = vmatprep.mubr.f32.mxu0 0.0
      %1563 = vmatmul.mubr.f32.gmra.mrb[0].mxu0 %v560
      %v1564 = vpop.f32.mrb[0].mxu0
      %v1565 = vadd.f32 0.0, %v1564
      %v1566 = vpop.f32.mrb[0].mxu0
      %1567 = vmatprep.mubr.f32.mxu0 0.0
      %1568 = vmatmul.mubr.f32.gmra.mrb[0].mxu0 %v561
      %v1569 = vpop.f32.mrb[0].mxu0
      %v1570 = vadd.f32 0.0, %v1569
      %v1571 = vpop.f32.mrb[0].mxu0
      %1572 = vdwg.mxu0
      %v1573 = vadd.f32 %v1443, %v1535
      %v1574 = vadd.f32 %v1444, %v1540
      %v1575 = vadd.f32 %v1445, %v1545
      %v1576 = vadd.f32 %v1446, %v1550
      %v1577 = vadd.f32 %v1447, %v1555
      %v1578 = vadd.f32 %v1448, %v1560
      %v1579 = vadd.f32 %v1449, %v1565
      %v1580 = vadd.f32 %v1450, %v1570
      %v1583 = vrot.slane %v561, 1
      %v1584 = vrot.slane %v571, 1
      %v1585 = vsel %vm725, %v1583, %v1584
      %s1587 = scalar_lea.vmem %s468, 896
      %v1588 = vld [vmem:[%s1587] sm:$0xff]
      %v1589 = vld [vmem:[%s1587 + $0x8] sm:$0xff]
      %v1590 = vld [vmem:[%s1587 + $0x10] sm:$0xff]
      %v1591 = vld [vmem:[%s1587 + $0x18] sm:$0xff]
      %v1592 = vld [vmem:[%s1587 + $0x20] sm:$0xff]
      %v1593 = vld [vmem:[%s1587 + $0x28] sm:$0xff]
      %v1594 = vld [vmem:[%s1587 + $0x30] sm:$0xff]
      %v1595 = vld [vmem:[%s1587 + $0x38] sm:$0xff]
      %v1596 = vld [vmem:[%s1587 + $0x40] sm:$0xff]
      %v1597 = vld [vmem:[%s1587 + $0x48] sm:$0xff]
      %v1598 = vld [vmem:[%s1587 + $0x50] sm:$0xff]
      %v1599 = vld [vmem:[%s1587 + $0x58] sm:$0xff]
      %v1600 = vld [vmem:[%s1587 + $0x60] sm:$0xff]
      %v1601 = vld [vmem:[%s1587 + $0x68] sm:$0xff]
      %v1602 = vld [vmem:[%s1587 + $0x70] sm:$0xff]
      %v1603 = vld [vmem:[%s1587 + $0x78] sm:$0xff]
      %1604 = vmatprep.subr.mxu0 0.0
      %1605 = vmatpush1.msra.mxu0 %v1588
      %1606 = vmatprep.subr.mxu0 0.0
      %1607 = vmatpush1.msra.mxu0 %v1589
      %1608 = vmatprep.subr.mxu0 0.0
      %1609 = vmatpush1.msra.mxu0 %v1590
      %1610 = vmatprep.subr.mxu0 0.0
      %1611 = vmatpush1.msra.mxu0 %v1591
      %1612 = vmatprep.subr.mxu0 0.0
      %1613 = vmatpush1.msra.mxu0 %v1592
      %1614 = vmatprep.subr.mxu0 0.0
      %1615 = vmatpush1.msra.mxu0 %v1593
      %1616 = vmatprep.subr.mxu0 0.0
      %1617 = vmatpush1.msra.mxu0 %v1594
      %1618 = vmatprep.subr.mxu0 0.0
      %1619 = vmatpush1.msra.mxu0 %v1595
      %1620 = vmatprep.subr.mxu0 0.0
      %1621 = vmatpush1.msra.mxu0 %v1596
      %1622 = vmatprep.subr.mxu0 0.0
      %1623 = vmatpush1.msra.mxu0 %v1597
      %1624 = vmatprep.subr.mxu0 0.0
      %1625 = vmatpush1.msra.mxu0 %v1598
      %1626 = vmatprep.subr.mxu0 0.0
      %1627 = vmatpush1.msra.mxu0 %v1599
      %1628 = vmatprep.subr.mxu0 0.0
      %1629 = vmatpush1.msra.mxu0 %v1600
      %1630 = vmatprep.subr.mxu0 0.0
      %1631 = vmatpush1.msra.mxu0 %v1601
      %1632 = vmatprep.subr.mxu0 0.0
      %1633 = vmatpush1.msra.mxu0 %v1602
      %1634 = vmatprep.subr.mxu0 0.0
      %1635 = vmatpush1.msra.mxu0 %v1603
      %1636 = vmatprep.subr.mxu0 0.0
      %1637 = vmatpush1.msra.mxu0 0.0
      %1638 = vmatprep.subr.mxu0 0.0
      %1639 = vmatpush1.msra.mxu0 0.0
      %1640 = vmatprep.subr.mxu0 0.0
      %1641 = vmatpush1.msra.mxu0 0.0
      %1642 = vmatprep.subr.mxu0 0.0
      %1643 = vmatpush1.msra.mxu0 0.0
      %1644 = vmatprep.subr.mxu0 0.0
      %1645 = vmatpush1.msra.mxu0 0.0
      %1646 = vmatprep.subr.mxu0 0.0
      %1647 = vmatpush1.msra.mxu0 0.0
      %1648 = vmatprep.subr.mxu0 0.0
      %1649 = vmatpush1.msra.mxu0 0.0
      %1650 = vmatprep.subr.mxu0 0.0
      %1651 = vmatpush1.msra.mxu0 0.0
      %1652 = vmatprep.subr.mxu0 0.0
      %1653 = vmatpush1.msra.mxu0 0.0
      %1654 = vmatprep.subr.mxu0 0.0
      %1655 = vmatpush1.msra.mxu0 0.0
      %1656 = vmatprep.subr.mxu0 0.0
      %1657 = vmatpush1.msra.mxu0 0.0
      %1658 = vmatprep.subr.mxu0 0.0
      %1659 = vmatpush1.msra.mxu0 0.0
      %1660 = vmatprep.subr.mxu0 0.0
      %1661 = vmatpush1.msra.mxu0 0.0
      %1662 = vmatprep.subr.mxu0 0.0
      %1663 = vmatpush1.msra.mxu0 0.0
      %1664 = vmatprep.subr.mxu0 0.0
      %1665 = vmatpush1.msra.mxu0 0.0
      %1666 = vmatprep.subr.mxu0 0.0
      %1667 = vmatpush1.msra.mxu0 0.0
      %1668 = vmatprep.mubr.f32.mxu0 0.0
      %1669 = vmatmul.mubr.f32.gmra.mrb[0].mxu0 %v734
      %v1670 = vpop.f32.mrb[0].mxu0
      %v1671 = vadd.f32 0.0, %v1670
      %v1672 = vpop.f32.mrb[0].mxu0
      %1673 = vmatprep.mubr.f32.mxu0 0.0
      %1674 = vmatmul.mubr.f32.gmra.mrb[0].mxu0 %v737
      %v1675 = vpop.f32.mrb[0].mxu0
      %v1676 = vadd.f32 0.0, %v1675
      %v1677 = vpop.f32.mrb[0].mxu0
      %1678 = vmatprep.mubr.f32.mxu0 0.0
      %1679 = vmatmul.mubr.f32.gmra.mrb[0].mxu0 %v740
      %v1680 = vpop.f32.mrb[0].mxu0
      %v1681 = vadd.f32 0.0, %v1680
      %v1682 = vpop.f32.mrb[0].mxu0
      %1683 = vmatprep.mubr.f32.mxu0 0.0
      %1684 = vmatmul.mubr.f32.gmra.mrb[0].mxu0 %v743
      %v1685 = vpop.f32.mrb[0].mxu0
      %v1686 = vadd.f32 0.0, %v1685
      %v1687 = vpop.f32.mrb[0].mxu0
      %1688 = vmatprep.mubr.f32.mxu0 0.0
      %1689 = vmatmul.mubr.f32.gmra.mrb[0].mxu0 %v746
      %v1690 = vpop.f32.mrb[0].mxu0
      %v1691 = vadd.f32 0.0, %v1690
      %v1692 = vpop.f32.mrb[0].mxu0
      %1693 = vmatprep.mubr.f32.mxu0 0.0
      %1694 = vmatmul.mubr.f32.gmra.mrb[0].mxu0 %v749
      %v1695 = vpop.f32.mrb[0].mxu0
      %v1696 = vadd.f32 0.0, %v1695
      %v1697 = vpop.f32.mrb[0].mxu0
      %1698 = vmatprep.mubr.f32.mxu0 0.0
      %1699 = vmatmul.mubr.f32.gmra.mrb[0].mxu0 %v1185
      %v1700 = vpop.f32.mrb[0].mxu0
      %v1701 = vadd.f32 0.0, %v1700
      %v1702 = vpop.f32.mrb[0].mxu0
      %1703 = vmatprep.mubr.f32.mxu0 0.0
      %1704 = vmatmul.mubr.f32.gmra.mrb[0].mxu0 %v1585
      %v1705 = vpop.f32.mrb[0].mxu0
      %v1706 = vadd.f32 0.0, %v1705
      %v1707 = vpop.f32.mrb[0].mxu0
      %1708 = vdwg.mxu0
      %v1709 = vadd.f32 %v1573, %v1671
      %v1710 = vadd.f32 %v1574, %v1676
      %v1711 = vadd.f32 %v1575, %v1681
      %v1712 = vadd.f32 %v1576, %v1686
      %v1713 = vadd.f32 %v1577, %v1691
      %v1714 = vadd.f32 %v1578, %v1696
      %v1715 = vadd.f32 %v1579, %v1701
      %v1716 = vadd.f32 %v1580, %v1706
      %v1717 = vrot.slane %v561, 2
      %v1718 = vrot.slane %v571, 2
      %v1719 = vsel %vm888, %v1717, %v1718
      %s1721 = scalar_lea.vmem %s468, 1024
      %v1722 = vld [vmem:[%s1721] sm:$0xff]
      %v1723 = vld [vmem:[%s1721 + $0x8] sm:$0xff]
      %v1724 = vld [vmem:[%s1721 + $0x10] sm:$0xff]
      %v1725 = vld [vmem:[%s1721 + $0x18] sm:$0xff]
      %v1726 = vld [vmem:[%s1721 + $0x20] sm:$0xff]
      %v1727 = vld [vmem:[%s1721 + $0x28] sm:$0xff]
      %v1728 = vld [vmem:[%s1721 + $0x30] sm:$0xff]
      %v1729 = vld [vmem:[%s1721 + $0x38] sm:$0xff]
      %v1730 = vld [vmem:[%s1721 + $0x40] sm:$0xff]
      %v1731 = vld [vmem:[%s1721 + $0x48] sm:$0xff]
      %v1732 = vld [vmem:[%s1721 + $0x50] sm:$0xff]
      %v1733 = vld [vmem:[%s1721 + $0x58] sm:$0xff]
      %v1734 = vld [vmem:[%s1721 + $0x60] sm:$0xff]
      %v1735 = vld [vmem:[%s1721 + $0x68] sm:$0xff]
      %v1736 = vld [vmem:[%s1721 + $0x70] sm:$0xff]
      %v1737 = vld [vmem:[%s1721 + $0x78] sm:$0xff]
      %1738 = vmatprep.subr.mxu0 0.0
      %1739 = vmatpush1.msra.mxu0 %v1722
      %1740 = vmatprep.subr.mxu0 0.0
      %1741 = vmatpush1.msra.mxu0 %v1723
      %1742 = vmatprep.subr.mxu0 0.0
      %1743 = vmatpush1.msra.mxu0 %v1724
      %1744 = vmatprep.subr.mxu0 0.0
      %1745 = vmatpush1.msra.mxu0 %v1725
      %1746 = vmatprep.subr.mxu0 0.0
      %1747 = vmatpush1.msra.mxu0 %v1726
      %1748 = vmatprep.subr.mxu0 0.0
      %1749 = vmatpush1.msra.mxu0 %v1727
      %1750 = vmatprep.subr.mxu0 0.0
      %1751 = vmatpush1.msra.mxu0 %v1728
      %1752 = vmatprep.subr.mxu0 0.0
      %1753 = vmatpush1.msra.mxu0 %v1729
      %1754 = vmatprep.subr.mxu0 0.0
      %1755 = vmatpush1.msra.mxu0 %v1730
      %1756 = vmatprep.subr.mxu0 0.0
      %1757 = vmatpush1.msra.mxu0 %v1731
      %1758 = vmatprep.subr.mxu0 0.0
      %1759 = vmatpush1.msra.mxu0 %v1732
      %1760 = vmatprep.subr.mxu0 0.0
      %1761 = vmatpush1.msra.mxu0 %v1733
      %1762 = vmatprep.subr.mxu0 0.0
      %1763 = vmatpush1.msra.mxu0 %v1734
      %1764 = vmatprep.subr.mxu0 0.0
      %1765 = vmatpush1.msra.mxu0 %v1735
      %1766 = vmatprep.subr.mxu0 0.0
      %1767 = vmatpush1.msra.mxu0 %v1736
      %1768 = vmatprep.subr.mxu0 0.0
      %1769 = vmatpush1.msra.mxu0 %v1737
      %1770 = vmatprep.subr.mxu0 0.0
      %1771 = vmatpush1.msra.mxu0 0.0
      %1772 = vmatprep.subr.mxu0 0.0
      %1773 = vmatpush1.msra.mxu0 0.0
      %1774 = vmatprep.subr.mxu0 0.0
      %1775 = vmatpush1.msra.mxu0 0.0
      %1776 = vmatprep.subr.mxu0 0.0
      %1777 = vmatpush1.msra.mxu0 0.0
      %1778 = vmatprep.subr.mxu0 0.0
      %1779 = vmatpush1.msra.mxu0 0.0
      %1780 = vmatprep.subr.mxu0 0.0
      %1781 = vmatpush1.msra.mxu0 0.0
      %1782 = vmatprep.subr.mxu0 0.0
      %1783 = vmatpush1.msra.mxu0 0.0
      %1784 = vmatprep.subr.mxu0 0.0
      %1785 = vmatpush1.msra.mxu0 0.0
      %1786 = vmatprep.subr.mxu0 0.0
      %1787 = vmatpush1.msra.mxu0 0.0
      %1788 = vmatprep.subr.mxu0 0.0
      %1789 = vmatpush1.msra.mxu0 0.0
      %1790 = vmatprep.subr.mxu0 0.0
      %1791 = vmatpush1.msra.mxu0 0.0
      %1792 = vmatprep.subr.mxu0 0.0
      %1793 = vmatpush1.msra.mxu0 0.0
      %1794 = vmatprep.subr.mxu0 0.0
      %1795 = vmatpush1.msra.mxu0 0.0
      %1796 = vmatprep.subr.mxu0 0.0
      %1797 = vmatpush1.msra.mxu0 0.0
      %1798 = vmatprep.subr.mxu0 0.0
      %1799 = vmatpush1.msra.mxu0 0.0
      %1800 = vmatprep.subr.mxu0 0.0
      %1801 = vmatpush1.msra.mxu0 0.0
      %1802 = vmatprep.mubr.f32.mxu0 0.0
      %1803 = vmatmul.mubr.f32.gmra.mrb[0].mxu0 %v897
      %v1804 = vpop.f32.mrb[0].mxu0
      %v1805 = vadd.f32 0.0, %v1804
      %v1806 = vpop.f32.mrb[0].mxu0
      %1807 = vmatprep.mubr.f32.mxu0 0.0
      %1808 = vmatmul.mubr.f32.gmra.mrb[0].mxu0 %v900
      %v1809 = vpop.f32.mrb[0].mxu0
      %v1810 = vadd.f32 0.0, %v1809
      %v1811 = vpop.f32.mrb[0].mxu0
      %1812 = vmatprep.mubr.f32.mxu0 0.0
      %1813 = vmatmul.mubr.f32.gmra.mrb[0].mxu0 %v903
      %v1814 = vpop.f32.mrb[0].mxu0
      %v1815 = vadd.f32 0.0, %v1814
      %v1816 = vpop.f32.mrb[0].mxu0
      %1817 = vmatprep.mubr.f32.mxu0 0.0
      %1818 = vmatmul.mubr.f32.gmra.mrb[0].mxu0 %v906
      %v1819 = vpop.f32.mrb[0].mxu0
      %v1820 = vadd.f32 0.0, %v1819
      %v1821 = vpop.f32.mrb[0].mxu0
      %1822 = vmatprep.mubr.f32.mxu0 0.0
      %1823 = vmatmul.mubr.f32.gmra.mrb[0].mxu0 %v909
      %v1824 = vpop.f32.mrb[0].mxu0
      %v1825 = vadd.f32 0.0, %v1824
      %v1826 = vpop.f32.mrb[0].mxu0
      %1827 = vmatprep.mubr.f32.mxu0 0.0
      %1828 = vmatmul.mubr.f32.gmra.mrb[0].mxu0 %v912
      %v1829 = vpop.f32.mrb[0].mxu0
      %v1830 = vadd.f32 0.0, %v1829
      %v1831 = vpop.f32.mrb[0].mxu0
      %1832 = vmatprep.mubr.f32.mxu0 0.0
      %1833 = vmatmul.mubr.f32.gmra.mrb[0].mxu0 %v1319
      %v1834 = vpop.f32.mrb[0].mxu0
      %v1835 = vadd.f32 0.0, %v1834
      %v1836 = vpop.f32.mrb[0].mxu0
      %1837 = vmatprep.mubr.f32.mxu0 0.0
      %1838 = vmatmul.mubr.f32.gmra.mrb[0].mxu0 %v1719
      %v1839 = vpop.f32.mrb[0].mxu0
      %v1840 = vadd.f32 0.0, %v1839
      %v1841 = vpop.f32.mrb[0].mxu0
      %1842 = vdwg.mxu0
      %v1843 = vadd.f32 %v1709, %v1805
      %v1844 = vadd.f32 %v1710, %v1810
      %v1845 = vadd.f32 %v1711, %v1815
      %v1846 = vadd.f32 %v1712, %v1820
      %v1847 = vadd.f32 %v1713, %v1825
      %v1848 = vadd.f32 %v1714, %v1830
      %v1849 = vadd.f32 %v1715, %v1835
      %v1850 = vadd.f32 %v1716, %v1840
      %vm1851 = vcmask 523264
      %v1853 = vsel %vm1851, 1.0, 0
      %1855 = vmatprep.subr.mxu0 0.0
      %1856 = vmatpush1.msra.mxu0 %v1843
      %1857 = vmatprep.subr.mxu0 0.0
      %1858 = vmatpush1.msra.mxu0 %v1844
      %1859 = vmatprep.subr.mxu0 0.0
      %1860 = vmatpush1.msra.mxu0 %v1845
      %1861 = vmatprep.subr.mxu0 0.0
      %1862 = vmatpush1.msra.mxu0 %v1846
      %1863 = vmatprep.subr.mxu0 0.0
      %1864 = vmatpush1.msra.mxu0 %v1847
      %1865 = vmatprep.subr.mxu0 0.0
      %1866 = vmatpush1.msra.mxu0 %v1848
      %1867 = vmatprep.subr.mxu0 0.0
      %1868 = vmatpush1.msra.mxu0 %v1849
      %1869 = vmatprep.subr.mxu0 0.0
      %1870 = vmatpush1.msra.mxu0 %v1850
      %1871 = vmatprep.subr.mxu0 0.0
      %1872 = vmatpush1.msra.mxu0 0.0
      %1873 = vmatprep.subr.mxu0 0.0
      %1874 = vmatpush1.msra.mxu0 0.0
      %1875 = vmatprep.subr.mxu0 0.0
      %1876 = vmatpush1.msra.mxu0 0.0
      %1877 = vmatprep.subr.mxu0 0.0
      %1878 = vmatpush1.msra.mxu0 0.0
      %1879 = vmatprep.subr.mxu0 0.0
      %1880 = vmatpush1.msra.mxu0 0.0
      %1881 = vmatprep.subr.mxu0 0.0
      %1882 = vmatpush1.msra.mxu0 0.0
      %1883 = vmatprep.subr.mxu0 0.0
      %1884 = vmatpush1.msra.mxu0 0.0
      %1885 = vmatprep.subr.mxu0 0.0
      %1886 = vmatpush1.msra.mxu0 0.0
      %1887 = vmatprep.subr.mxu0 0.0
      %1888 = vmatpush1.msra.mxu0 0.0
      %1889 = vmatprep.subr.mxu0 0.0
      %1890 = vmatpush1.msra.mxu0 0.0
      %1891 = vmatprep.subr.mxu0 0.0
      %1892 = vmatpush1.msra.mxu0 0.0
      %1893 = vmatprep.subr.mxu0 0.0
      %1894 = vmatpush1.msra.mxu0 0.0
      %1895 = vmatprep.subr.mxu0 0.0
      %1896 = vmatpush1.msra.mxu0 0.0
      %1897 = vmatprep.subr.mxu0 0.0
      %1898 = vmatpush1.msra.mxu0 0.0
      %1899 = vmatprep.subr.mxu0 0.0
      %1900 = vmatpush1.msra.mxu0 0.0
      %1901 = vmatprep.subr.mxu0 0.0
      %1902 = vmatpush1.msra.mxu0 0.0
      %1903 = vmatprep.subr.mxu0 0.0
      %1904 = vmatpush1.msra.mxu0 0.0
      %1905 = vmatprep.subr.mxu0 0.0
      %1906 = vmatpush1.msra.mxu0 0.0
      %1907 = vmatprep.subr.mxu0 0.0
      %1908 = vmatpush1.msra.mxu0 0.0
      %1909 = vmatprep.subr.mxu0 0.0
      %1910 = vmatpush1.msra.mxu0 0.0
      %1911 = vmatprep.subr.mxu0 0.0
      %1912 = vmatpush1.msra.mxu0 0.0
      %1913 = vmatprep.subr.mxu0 0.0
      %1914 = vmatpush1.msra.mxu0 0.0
      %1915 = vmatprep.subr.mxu0 0.0
      %1916 = vmatpush1.msra.mxu0 0.0
      %1917 = vmatprep.subr.mxu0 0.0
      %1918 = vmatpush1.msra.mxu0 0.0
      %1919 = vmatprep.mubr.f32.mxu0 0.0
      %1920 = vmatmul.mubr.f32.gmra.mrb[0].mxu0 %v1853
      %v1921 = vpop.f32.mrb[0].mxu0
      %v1922 = vadd.f32 0.0, %v1921
      %v1923 = vpop.f32.mrb[0].mxu0
      %1924 = vdwg.mxu0
      %v1925 = vmul.f32 %v1843, %v1843
      %v1926 = vmul.f32 %v1844, %v1844
      %v1927 = vmul.f32 %v1845, %v1845
      %v1928 = vmul.f32 %v1846, %v1846
      %v1929 = vmul.f32 %v1847, %v1847
      %v1930 = vmul.f32 %v1848, %v1848
      %v1931 = vmul.f32 %v1849, %v1849
      %v1932 = vmul.f32 %v1850, %v1850
      %1933 = vmatprep.subr.mxu0 0.0
      %1934 = vmatpush1.msra.mxu0 %v1925
      %1935 = vmatprep.subr.mxu0 0.0
      %1936 = vmatpush1.msra.mxu0 %v1926
      %1937 = vmatprep.subr.mxu0 0.0
      %1938 = vmatpush1.msra.mxu0 %v1927
      %1939 = vmatprep.subr.mxu0 0.0
      %1940 = vmatpush1.msra.mxu0 %v1928
      %1941 = vmatprep.subr.mxu0 0.0
      %1942 = vmatpush1.msra.mxu0 %v1929
      %1943 = vmatprep.subr.mxu0 0.0
      %1944 = vmatpush1.msra.mxu0 %v1930
      %1945 = vmatprep.subr.mxu0 0.0
      %1946 = vmatpush1.msra.mxu0 %v1931
      %1947 = vmatprep.subr.mxu0 0.0
      %1948 = vmatpush1.msra.mxu0 %v1932
      %1949 = vmatprep.subr.mxu0 0.0
      %1950 = vmatpush1.msra.mxu0 0.0
      %1951 = vmatprep.subr.mxu0 0.0
      %1952 = vmatpush1.msra.mxu0 0.0
      %1953 = vmatprep.subr.mxu0 0.0
      %1954 = vmatpush1.msra.mxu0 0.0
      %1955 = vmatprep.subr.mxu0 0.0
      %1956 = vmatpush1.msra.mxu0 0.0
      %1957 = vmatprep.subr.mxu0 0.0
      %1958 = vmatpush1.msra.mxu0 0.0
      %1959 = vmatprep.subr.mxu0 0.0
      %1960 = vmatpush1.msra.mxu0 0.0
      %1961 = vmatprep.subr.mxu0 0.0
      %1962 = vmatpush1.msra.mxu0 0.0
      %1963 = vmatprep.subr.mxu0 0.0
      %1964 = vmatpush1.msra.mxu0 0.0
      %1965 = vmatprep.subr.mxu0 0.0
      %1966 = vmatpush1.msra.mxu0 0.0
      %1967 = vmatprep.subr.mxu0 0.0
      %1968 = vmatpush1.msra.mxu0 0.0
      %1969 = vmatprep.subr.mxu0 0.0
      %1970 = vmatpush1.msra.mxu0 0.0
      %1971 = vmatprep.subr.mxu0 0.0
      %1972 = vmatpush1.msra.mxu0 0.0
      %1973 = vmatprep.subr.mxu0 0.0
      %1974 = vmatpush1.msra.mxu0 0.0
      %1975 = vmatprep.subr.mxu0 0.0
      %1976 = vmatpush1.msra.mxu0 0.0
      %1977 = vmatprep.subr.mxu0 0.0
      %1978 = vmatpush1.msra.mxu0 0.0
      %1979 = vmatprep.subr.mxu0 0.0
      %1980 = vmatpush1.msra.mxu0 0.0
      %1981 = vmatprep.subr.mxu0 0.0
      %1982 = vmatpush1.msra.mxu0 0.0
      %1983 = vmatprep.subr.mxu0 0.0
      %1984 = vmatpush1.msra.mxu0 0.0
      %1985 = vmatprep.subr.mxu0 0.0
      %1986 = vmatpush1.msra.mxu0 0.0
      %1987 = vmatprep.subr.mxu0 0.0
      %1988 = vmatpush1.msra.mxu0 0.0
      %1989 = vmatprep.subr.mxu0 0.0
      %1990 = vmatpush1.msra.mxu0 0.0
      %1991 = vmatprep.subr.mxu0 0.0
      %1992 = vmatpush1.msra.mxu0 0.0
      %1993 = vmatprep.subr.mxu0 0.0
      %1994 = vmatpush1.msra.mxu0 0.0
      %1995 = vmatprep.subr.mxu0 0.0
      %1996 = vmatpush1.msra.mxu0 0.0
      %1997 = vmatprep.mubr.f32.mxu0 0.0
      %1998 = vmatmul.mubr.f32.gmra.mrb[0].mxu0 %v1853
      %v1999 = vpop.f32.mrb[0].mxu0
      %v2000 = vadd.f32 0.0, %v1999
      %v2001 = vpop.f32.mrb[0].mxu0
      %2002 = vdwg.mxu0
      %v2004 = vrot.slane %v2000, 7
      %v2006 = vsel %vm551, %v1922, %v2004
      %2007 = vst [vmem:[%s500] sm:$0x3] %v2006
      %2008 = vst [vmem:[%s489] sm:$0xff] %v1843
      %2009 = vst [vmem:[%s489 + $0x8] sm:$0xff] %v1844
      %2010 = vst [vmem:[%s489 + $0x10] sm:$0xff] %v1845
      %2011 = vst [vmem:[%s489 + $0x18] sm:$0xff] %v1846
      %2012 = vst [vmem:[%s489 + $0x20] sm:$0xff] %v1847
      %2013 = vst [vmem:[%s489 + $0x28] sm:$0xff] %v1848
      %2014 = vst [vmem:[%s489 + $0x30] sm:$0xff] %v1849
      %2015 = vst [vmem:[%s489 + $0x38] sm:$0xff] %v1850
      %s2016 = smul.u32 8, %s25
      %p2017 = scmp.lt.s32.totalorder %s24, 1
      %s2018 = scalar_select %p2017, %s24, 1
      %p2019 = scmp.lt.s32.totalorder %s2016, 7
      %s2020 = scalar_select %p2019, %s2016, 7
      %p2021 = scmp.lt.s32.totalorder %s23, 0
      %s2022 = scalar_select %p2021, %s23, 0
      %s2023 = sadd.s32 %s2022, %s2020
      %s2024 = smul.addr %s2018, 8
      %s2025 = sadd.s32 %s2023, %s2024
      %s2026 = smul.addr %s2025, 8
      %s2027 = scalar_lea.vmem %s5, %s2026
      %p2028 = scmp.lt.s32.totalorder %s24, 1
      %s2029 = scalar_select %p2028, %s24, 1
      %p2030 = scmp.lt.s32.totalorder %s25, 0
      %s2031 = scalar_select %p2030, %s25, 0
      %p2032 = scmp.lt.s32.totalorder %s23, 0
      %s2033 = scalar_select %p2032, %s23, 0
      %s2034 = sadd.s32 %s2033, %s2031
      %s2035 = sadd.s32 %s2034, %s2029
      %s2036 = smul.addr %s2035, 2
      %s2037 = scalar_lea.vmem %s6, %s2036
      // Predicated region
      $region41: #{basic_down_block.4} parent=39 // pred_check
        %p2038 = pneg %p213
      $region42: #{basic_down_block.4} parent=39 // pred_check_branch
        %2040 = sbr.rel (%p2038) target = $region44
      $region43: #{basic_down_block.4} parent=39 // pred_region
        %s2041 = smul.u32 8, %s25
      $region44: #{basic_down_block.4} parent=39 // pred_fallthru
        _
      // Predicated region
      $region45: #{basic_down_block.4} parent=39 // pred_check
        %p2042 = pneg %p243
      $region46: #{basic_down_block.4} parent=39 // pred_check_branch
        %2044 = sbr.rel (%p2042) target = $region48
      $region47: #{basic_down_block.4} parent=39 // pred_region
        _
      $region48: #{basic_down_block.4} parent=39 // pred_fallthru
        _
    $region40: #{basic_down_block.4} parent=5 // pred_fallthru
      _
    %p2045 = scmp.le.s32.totalorder 2, %s13
    // Predicated region
    $region49: #{basic_down_block.4} parent=5 // pred_check
      %p2046 = pneg %p2045
    $region50: #{basic_down_block.4} parent=5 // pred_check_branch
      %2048 = sbr.rel (%p2046) target = $region52
    $region51: #{basic_down_block.4} parent=5 // pred_region
      %s2049 = ssub.s32 %s13, 2
      // Predicated region
      $region53: #{basic_down_block.4} parent=51 // pred_check
        %p2050 = pneg %p219
      $region54: #{basic_down_block.4} parent=51 // pred_check_branch
        %2052 = sbr.rel (%p2050) target = $region56
      $region55: #{basic_down_block.4} parent=51 // pred_region
        %s2053 = smul.u32 8, %s28
        %p2054 = scmp.lt.s32.totalorder %s27, 1
        %s2055 = scalar_select %p2054, %s27, 1
        %p2056 = scmp.lt.s32.totalorder %s2053, 7
        %s2057 = scalar_select %p2056, %s2053, 7
        %p2058 = scmp.lt.s32.totalorder %s26, 0
        %s2059 = scalar_select %p2058, %s26, 0
        %s2060 = sadd.s32 %s2059, %s2057
        %s2061 = smul.addr %s2055, 8
        %s2062 = sadd.s32 %s2060, %s2061
        %s2063 = smul.addr %s2062, 8
        %s2064 = scalar_lea.vmem %s5, %s2063
      $region56: #{basic_down_block.4} parent=51 // pred_fallthru
        _
      // Predicated region
      $region57: #{basic_down_block.4} parent=51 // pred_check
        %p2065 = pneg %p249
      $region58: #{basic_down_block.4} parent=51 // pred_check_branch
        %2067 = sbr.rel (%p2065) target = $region60
      $region59: #{basic_down_block.4} parent=51 // pred_region
        %p2068 = scmp.lt.s32.totalorder %s27, 1
        %s2069 = scalar_select %p2068, %s27, 1
        %p2070 = scmp.lt.s32.totalorder %s28, 0
        %s2071 = scalar_select %p2070, %s28, 0
        %p2072 = scmp.lt.s32.totalorder %s26, 0
        %s2073 = scalar_select %p2072, %s26, 0
        %s2074 = sadd.s32 %s2073, %s2071
        %s2075 = sadd.s32 %s2074, %s2069
        %s2076 = smul.addr %s2075, 2
        %s2077 = scalar_lea.vmem %s6, %s2076
      $region60: #{basic_down_block.4} parent=51 // pred_fallthru
        _
    $region52: #{basic_down_block.4} parent=5 // pred_fallthru
      _
  $region6: #{basic_down_block.4} parent=0 // loop_footer
    %s17 = sadd.s32 1, %s13
  $region7: #{basic_down_block.4} parent=0 // loop_footer_branch
    %12 = sbr.rel target = $region3
  $region8: #{basic_down_block.4} parent=0 // loop_exit
    _

</llo_original>
